<compile_context>
chip_gen: v7x
topology: tpu7x:2x2x1
jax: 0.10.0
libtpu: 0.0.40
codegen_flags: <defaults>
</compile_context>

<pallas_src>
import jax
import jax.numpy as jnp
from jax import lax
from jax.experimental import pallas as pl
from jax.experimental.pallas import tpu as pltpu

PAD = 10  # max halo needed by any conv (the 21-tap strip convs use padding=10)

# Column offsets inside the packed depthwise-weight maps.
_OFF_5x5 = 0
_OFF_1x7 = 25
_OFF_1x11 = 32
_OFF_1x21 = 43
_OFF_7x1 = 64
_OFF_11x1 = 71
_OFF_21x1 = 82
_NTAP = 103


def _cdiv(a, b):
    return -(-a // b)


def _pick_bt(B, C, gfit):
    """Largest divisor of B that keeps >=2 grid steps (v7x megacore) and whose
    Bt*C slabs still fit in one packed lane row."""
    cands = [d for d in range(1, B + 1) if B % d == 0 and (B // d >= 2 or B == 1)]
    feas = [d for d in cands if d * C <= gfit]
    return max(feas) if feas else 1


def _pick_g(S, W, gfit):
    """Packing factor minimizing padded vreg area (ties -> larger g)."""
    best = None
    for g in range(1, max(1, min(S, gfit)) + 1):
        La = g * W + (g - 1) * PAD
        area = _cdiv(S, g) * _cdiv(La, 128)
        key = (area, -g)
        if best is None or key < best[0]:
            best = (key, g)
    return best[1]


def _pack_maps(w, g, G, W):
    """w: (T, S) per-slab scalars -> (T, G, La) lane maps (zero in gap lanes)."""
    T, S = w.shape
    m = jnp.broadcast_to(w[:, :, None], (T, S, W)).astype(jnp.float32)
    if G * g > S:
        m = jnp.pad(m, ((0, 0), (0, G * g - S), (0, 0)))
    m = jnp.pad(m, ((0, 0), (0, 0), (0, PAD)))          # (T, G*g, W+PAD)
    m = m.reshape(T, G, g * (W + PAD))
    return m[:, :, :g * W + (g - 1) * PAD]               # drop trailing gap -> La


def _pack_input(x, Bt, g, G):
    """x: (B,C,H,W) -> (nblk*G, H+2*PAD, PAD + g*(W+PAD)) zero-padded packed layout."""
    B, C, H, W = x.shape
    nblk = B // Bt
    S = Bt * C
    xs = x.astype(jnp.float32).reshape(nblk, S, H, W)
    if G * g > S:
        xs = jnp.pad(xs, ((0, 0), (0, G * g - S), (0, 0), (0, 0)))
    xs = jnp.pad(xs, ((0, 0), (0, 0), (0, 0), (0, PAD)))          # per-slab right gap
    xs = xs.reshape(nblk, G, g, H, W + PAD)
    xs = xs.transpose(0, 1, 3, 2, 4).reshape(nblk, G, H, g * (W + PAD))
    xs = jnp.pad(xs, ((0, 0), (0, 0), (PAD, PAD), (PAD, 0)))      # rows + global left
    return xs.reshape(nblk * G, H + 2 * PAD, PAD + g * (W + PAD))


def msam_pallas(x, params, block_batch=None):
    B, C, H, W = x.shape
    f32 = jnp.float32

    gfit = max(1, (128 + PAD) // (W + PAD))
    Bt = block_batch if block_batch is not None else _pick_bt(B, C, gfit)
    assert B % Bt == 0, "block_batch must divide the batch size"
    nblk = B // Bt
    S = Bt * C
    g = _pick_g(S, W, gfit)
    G = _cdiv(S, g)
    La = g * W + (g - 1) * PAD          # packed accumulator lane width
    L = La + 2 * PAD                    # packed padded-buffer lane width
    Hp = H + 2 * PAD
    R_sa = _cdiv(2 * Bt, g)             # rows used by the spatial-attention maps
    CPA = G                             # scratch region A rows
    CPB = max(G, R_sa)                  # scratch region B rows

    # ---------- host-side packing (pure layout plumbing, done by XLA) ----------
    xp = _pack_input(x, Bt, g, G)

    wC = jnp.concatenate(
        [params['w0'].reshape(C, 25),
         params['w01'].reshape(C, 7),
         params['w11'].reshape(C, 11),
         params['w21'].reshape(C, 21),
         params['w02'].reshape(C, 7),
         params['w12'].reshape(C, 11),
         params['w22'].reshape(C, 21)], axis=1).astype(f32)          # (C, 103)
    bC = jnp.stack([params['b0'], params['b01'], params['b11'], params['b21'],
                    params['b02'], params['b12'], params['b22']], axis=1).astype(f32)
    wmap = _pack_maps(jnp.tile(wC, (Bt, 1)).T, g, G, W)              # (103, G, La)
    bmap = _pack_maps(jnp.tile(bC, (Bt, 1)).T, g, G, W)              # (7,   G, La)
    wsa = params['wsa'].reshape(2, 49).astype(f32)
    wsamap = _pack_maps(jnp.tile(wsa, (Bt, 1)).T, g, R_sa, W)        # (49, R_sa, La)
    w3b = jnp.concatenate([params['w3'].reshape(C, C),
                           params['b3'].reshape(C, 1)], axis=1).astype(f32)  # SMEM

    # ---------- VMEM accounting with (8,128)-padded tile sizes ----------
    def _pb(shape):
        s = list(shape)
        s[-1] = _cdiv(s[-1], 128) * 128
        if len(s) >= 2:
            s[-2] = _cdiv(s[-2], 8) * 8
        n = 4
        for d in s:
            n *= d
        return n

    est = (2 * _pb((G, Hp, L)) + 2 * _pb((Bt, C, H, W)) + 2 * _pb((_NTAP, G, La))
           + 2 * _pb((7, G, La)) + 2 * _pb((49, R_sa, La))
           + _pb((CPA + CPB, Hp, L)) + _pb((S, H, W)))
    vmem_limit = int(min(48 << 20, max(32 << 20, 2 * est)))

    # ---------- kernel ----------
    def kernel(xp_ref, wmap_ref, bmap_ref, wsamap_ref, w3b_ref, o_ref, scr_ref, ca_ref):
        rows = CPA + CPB

        # Zero only the PAD-wide borders (interiors are always rewritten with zero gap
        # lanes before being read).  Done per step -> megacore-safe.
        scr_ref[:, 0:PAD, :] = jnp.zeros((rows, PAD, L), f32)
        scr_ref[:, PAD + H:Hp, :] = jnp.zeros((rows, PAD, L), f32)
        scr_ref[:, PAD:PAD + H, 0:PAD] = jnp.zeros((rows, H, PAD), f32)
        scr_ref[:, PAD:PAD + H, PAD + La:L] = jnp.zeros((rows, H, PAD), f32)

        def wtap(t):
            return wmap_ref[t][:, None, :]          # (G,1,La) lane map, 0 in gaps

        def btap(t):
            return bmap_ref[t][:, None, :]

        def read_in(dr, dc):
            return xp_ref[:, PAD + dr:PAD + dr + H, PAD + dc:PAD + dc + La]

        def read_a(dr, dc):
            return scr_ref[0:G, PAD + dr:PAD + dr + H, PAD + dc:PAD + dc + La]

        def read_b(dr, dc):
            return scr_ref[CPA:CPA + G, PAD + dr:PAD + dr + H, PAD + dc:PAD + dc + La]

        def put_a(v):
            scr_ref[0:G, PAD:PAD + H, PAD:PAD + La] = v

        def put_b(v):
            scr_ref[CPA:CPA + G, PAD:PAD + H, PAD:PAD + La] = v

        # ---- MSCAAttention conv0: 5x5 depthwise (padding 2), read straight from the
        # pre-padded packed input block (x is never kept live across the kernel).
        attn = read_in(-2, -2) * wtap(_OFF_5x5) + btap(0)
        for t in range(1, 25):
            di, dj = divmod(t, 5)
            attn = attn + read_in(di - 2, dj - 2) * wtap(_OFF_5x5 + t)
        put_a(attn)

        # Accumulator = attn + (second-stage biases folded in); attn dies here.
        acc = attn + (bmap_ref[4] + bmap_ref[5] + bmap_ref[6])[:, None, :]

        # ---- Strip-conv branches (1xk then kx1), one branch at a time so at most two
        # full packed slabs (acc + the branch intermediate) are live at once.
        for o1, k, o2, bi in ((_OFF_1x7, 7, _OFF_7x1, 1),
                              (_OFF_1x11, 11, _OFF_11x1, 2),
                              (_OFF_1x21, 21, _OFF_21x1, 3)):
            ph = k // 2
            a = read_a(0, -ph) * wtap(o1) + btap(bi)
            for j in range(1, k):
                a = a + read_a(0, j - ph) * wtap(o1 + j)
            put_b(a)
            for i in range(k):
                acc = acc + read_b(i - ph, 0) * wtap(o2 + i)

        # Park acc in region A; the channel-mix loop reads slices from the ref instead
        # of keeping a live packed value around (lower vreg pressure at large C).
        put_a(acc)

        if R_sa > G:  # only possible for C == 1: make the extra spatial rows clean
            scr_ref[CPA + G:CPA + R_sa, PAD:PAD + H, :] = jnp.zeros((R_sa - G, H, L), f32)

        # ---- 1x1 channel mix (conv3 + b3) fused with attn*u and channel mean/max.
        # TODO(synk): MXU matmul path for C >= ~32 (see module docstring).
        inv_c = 1.0 / C
        for bt in range(Bt):
            sum_c = jnp.zeros((H, W), f32)
            max_c = jnp.full((H, W), -jnp.inf, f32)
            for co in range(C):
                s = bt * C + co
                m = jnp.full((H, W), w3b_ref[co, C], f32)            # bias b3[co]
                for ci in range(C):
                    si = bt * C + ci
                    ri, ki = divmod(si, g)
                    c0 = PAD + ki * (W + PAD)
                    m = m + scr_ref[ri, PAD:PAD + H, c0:c0 + W] * w3b_ref[co, ci]
                ro, ko = divmod(s, g)
                c0 = PAD + ko * (W + PAD)
                u = xp_ref[ro, PAD:PAD + H, c0:c0 + W]               # re-read x (channel co)
                ca = m * u
                ca_ref[s:s + 1, :, :] = ca[None]                     # stage in f32 scratch
                sum_c = sum_c + ca
                max_c = jnp.maximum(max_c, ca)
            # place this image's channel-mean / channel-max maps into region B segments
            for k2, v in ((0, sum_c * inv_c), (1, max_c)):
                mi = 2 * bt + k2
                rm, km = divmod(mi, g)
                c0 = PAD + km * (W + PAD)
                scr_ref[CPA + rm:CPA + rm + 1, PAD:PAD + H, c0:c0 + W] = v[None]

        # ---- SpatialAttention: 7x7 conv over the packed [mean | max] maps.
        sacc = (scr_ref[CPA:CPA + R_sa, PAD - 3:PAD - 3 + H, PAD - 3:PAD - 3 + La]
                * wsamap_ref[0][:, None, :])
        for t in range(1, 49):
            di, dj = divmod(t, 7)
            sacc = sacc + (scr_ref[CPA:CPA + R_sa,
                                   PAD - 3 + di:PAD - 3 + di + H,
                                   PAD - 3 + dj:PAD - 3 + dj + La]
                           * wsamap_ref[t][:, None, :])

        # ---- gate (sigmoid on the EUP tanh path) and a single store per output slab.
        for bt in range(Bt):
            rm0, km0 = divmod(2 * bt, g)
            rm1, km1 = divmod(2 * bt + 1, g)
            s_map = (sacc[rm0, :, km0 * (W + PAD):km0 * (W + PAD) + W]
                     + sacc[rm1, :, km1 * (W + PAD):km1 * (W + PAD) + W])
            gate = 0.5 * (jnp.tanh(0.5 * s_map) + 1.0)
            for c in range(C):
                s = bt * C + c
                o_ref[bt:bt + 1, c:c + 1, :, :] = (
                    (ca_ref[s, :, :] * gate)[None, None].astype(o_ref.dtype))

    grid_spec = pltpu.PrefetchScalarGridSpec(
        num_scalar_prefetch=0,
        grid=(nblk,),
        in_specs=[
            pl.BlockSpec((G, Hp, L), lambda i: (i, 0, 0)),
            pl.BlockSpec((_NTAP, G, La), lambda i: (0, 0, 0)),
            pl.BlockSpec((7, G, La), lambda i: (0, 0, 0)),
            pl.BlockSpec((49, R_sa, La), lambda i: (0, 0, 0)),
            pl.BlockSpec(memory_space=pltpu.MemorySpace.SMEM),
        ],
        out_specs=pl.BlockSpec((Bt, C, H, W), lambda i: (i, 0, 0, 0)),
        scratch_shapes=[
            pltpu.VMEM((CPA + CPB, Hp, L), f32),   # padded conv scratch (regions A|B)
            pltpu.VMEM((S, H, W), f32),            # staged ca (channel-attention output)
        ],
    )

    return pl.pallas_call(
        kernel,
        out_shape=jax.ShapeDtypeStruct((B, C, H, W), x.dtype),
        grid_spec=grid_spec,
        compiler_params=pltpu.CompilerParams(
            dimension_semantics=("parallel",),     # batch blocks are independent
            vmem_limit_bytes=vmem_limit),
    )(xp, wmap, bmap, wsamap, w3b)


# ---------- deterministic parameter init (PyTorch-shaped weights) ----------
def init_params(key, C):
    ks = jax.random.split(key, 17)

    def u(k, shape, fan_in):
        bound = 1.0 / (fan_in ** 0.5)
        return jax.random.uniform(k, shape, jnp.float32, -bound, bound)

    return {
        'w0':  u(ks[0], (C, 1, 5, 5), 25),   'b0':  u(ks[1], (C,), 25),
        'w01': u(ks[2], (C, 1, 1, 7), 7),    'b01': u(ks[3], (C,), 7),
        'w02': u(ks[4], (C, 1, 7, 1), 7),    'b02': u(ks[5], (C,), 7),
        'w11': u(ks[6], (C, 1, 1, 11), 11),  'b11': u(ks[7], (C,), 11),
        'w12': u(ks[8], (C, 1, 11, 1), 11),  'b12': u(ks[9], (C,), 11),
        'w21': u(ks[10], (C, 1, 1, 21), 21), 'b21': u(ks[11], (C,), 21),
        'w22': u(ks[12], (C, 1, 21, 1), 21), 'b22': u(ks[13], (C,), 21),
        'w3':  u(ks[14], (C, C, 1, 1), C),   'b3':  u(ks[15], (C,), C),
        'wsa': u(ks[16], (1, 2, 7, 7), 2 * 49),
    }


# ---------- pure-JAX reference (for the correctness check) ----------
def msam_ref(x, p):
    C = x.shape[1]
    dn = ('NCHW', 'OIHW', 'NCHW')

    def dw(z, w, b, ph, pw):
        y = lax.conv_general_dilated(z, w, (1, 1), [(ph, ph), (pw, pw)],
                                     dimension_numbers=dn, feature_group_count=C)
        return y + b[None, :, None, None]

    attn = dw(x, p['w0'], p['b0'], 2, 2)
    a0 = dw(dw(attn, p['w01'], p['b01'], 0, 3), p['w02'], p['b02'], 3, 0)
    a1 = dw(dw(attn, p['w11'], p['b11'], 0, 5), p['w12'], p['b12'], 5, 0)
    a2 = dw(dw(attn, p['w21'], p['b21'], 0, 10), p['w22'], p['b22'], 10, 0)
    attn = attn + a0 + a1 + a2
    attn = lax.conv_general_dilated(attn, p['w3'], (1, 1), [(0, 0), (0, 0)],
                                    dimension_numbers=dn) + p['b3'][None, :, None, None]
    ca = attn * x
    cat = jnp.concatenate([jnp.mean(ca, 1, keepdims=True),
                           jnp.max(ca, 1, keepdims=True)], axis=1)
    s = lax.conv_general_dilated(cat, p['wsa'], (1, 1), [(3, 3), (3, 3)],
                                 dimension_numbers=dn)
    return ca * jax.nn.sigmoid(s)


if __name__ == "__main__":
    key = jax.random.PRNGKey(0)
    kx, kp = jax.random.split(key)
    B, C, H, W = 2, 4, 16, 16
    x = jax.random.normal(kx, (B, C, H, W), jnp.float32)
    params = init_params(kp, C)

    out = jax.block_until_ready(msam_pallas(x, params))

    ref = msam_ref(x, params)
    assert out.shape == ref.shape == (B, C, H, W)
    err = float(jnp.max(jnp.abs(out - ref)))
    assert err < 1e-3, f"mismatch vs reference: max abs err = {err}"
    print("KERNEL_OK")
</pallas_src>

<mosaic_0001>
module attributes {stable_mosaic.version = 11 : i64} {
  func.func @kernel(%arg0: i32, %arg1: memref<1x36x114xf32, #tpu.memory_space<vmem>>, %arg2: memref<103x1x94xf32, #tpu.memory_space<vmem>>, %arg3: memref<7x1x94xf32, #tpu.memory_space<vmem>>, %arg4: memref<49x1x94xf32, #tpu.memory_space<vmem>>, %arg5: memref<4x5xf32, #tpu.memory_space<smem>>, %arg6: memref<1x4x16x16xf32, #tpu.memory_space<vmem>>, %arg7: memref<2x36x114xf32, #tpu.memory_space<vmem>>, %arg8: memref<4x16x16xf32, #tpu.memory_space<vmem>>) attributes {dimension_semantics = [#tpu.dimension_semantics<parallel>], iteration_bounds = array<i64: 2>, scalar_prefetch = 0 : i64, scratch_operands = 2 : i64, tpu.core_type = #tpu.core_type<tc>, window_params = [{transform_indices = @transform_0, window_bounds = array<i64: 1, 36, 114>}, {pipeline_mode = #tpu.pipeline_mode<synchronous>, transform_indices = @transform_1, window_bounds = array<i64: 103, 1, 94>}, {pipeline_mode = #tpu.pipeline_mode<synchronous>, transform_indices = @transform_2, window_bounds = array<i64: 7, 1, 94>}, {pipeline_mode = #tpu.pipeline_mode<synchronous>, transform_indices = @transform_3, window_bounds = array<i64: 49, 1, 94>}, {transform_indices = @transform_4, window_bounds = array<i64: 4, 5>}, {transform_indices = @transform_5, window_bounds = array<i64: 1, 4, 16, 16>}]} {
    %cst = arith.constant 0.000000e+00 : f32
    %0 = vector.broadcast %cst : f32 to vector<2x10x114xf32>
    %c0 = arith.constant 0 : index
    %c0_0 = arith.constant 0 : index
    %c0_1 = arith.constant 0 : index
    %1 = vector.load %arg7[%c0, %c0_0, %c0_1] : memref<2x36x114xf32, #tpu.memory_space<vmem>>, vector<2x10x114xf32>
    tpu.vector_store %arg7[%c0, %c0_0, %c0_1], %0 {strides = array<i32>} : memref<2x36x114xf32, #tpu.memory_space<vmem>>, vector<2x10x114xf32>,
    %cst_2 = arith.constant 0.000000e+00 : f32
    %2 = vector.broadcast %cst_2 : f32 to vector<2x10x114xf32>
    %c0_3 = arith.constant 0 : index
    %c26 = arith.constant 26 : index
    %c0_4 = arith.constant 0 : index
    %3 = vector.load %arg7[%c0_3, %c26, %c0_4] : memref<2x36x114xf32, #tpu.memory_space<vmem>>, vector<2x10x114xf32>
    tpu.vector_store %arg7[%c0_3, %c26, %c0_4], %2 {strides = array<i32>} : memref<2x36x114xf32, #tpu.memory_space<vmem>>, vector<2x10x114xf32>,
    %cst_5 = arith.constant 0.000000e+00 : f32
    %4 = vector.broadcast %cst_5 : f32 to vector<2x16x10xf32>
    %c0_6 = arith.constant 0 : index
    %c10 = arith.constant 10 : index
    %c0_7 = arith.constant 0 : index
    %5 = vector.load %arg7[%c0_6, %c10, %c0_7] : memref<2x36x114xf32, #tpu.memory_space<vmem>>, vector<2x16x10xf32>
    tpu.vector_store %arg7[%c0_6, %c10, %c0_7], %4 {strides = array<i32>} : memref<2x36x114xf32, #tpu.memory_space<vmem>>, vector<2x16x10xf32>,
    %cst_8 = arith.constant 0.000000e+00 : f32
    %6 = vector.broadcast %cst_8 : f32 to vector<2x16x10xf32>
    %c0_9 = arith.constant 0 : index
    %c10_10 = arith.constant 10 : index
    %c104 = arith.constant 104 : index
    %7 = vector.load %arg7[%c0_9, %c10_10, %c104] : memref<2x36x114xf32, #tpu.memory_space<vmem>>, vector<2x16x10xf32>
    tpu.vector_store %arg7[%c0_9, %c10_10, %c104], %6 {strides = array<i32>} : memref<2x36x114xf32, #tpu.memory_space<vmem>>, vector<2x16x10xf32>,
    %c0_11 = arith.constant 0 : index
    %c8 = arith.constant 8 : index
    %c8_12 = arith.constant 8 : index
    %8 = vector.load %arg1[%c0_11, %c8, %c8_12] : memref<1x36x114xf32, #tpu.memory_space<vmem>>, vector<1x16x94xf32>
    %c0_13 = arith.constant 0 : index
    %c0_14 = arith.constant 0 : index
    %c0_15 = arith.constant 0 : index
    %9 = vector.load %arg2[%c0_13, %c0_14, %c0_15] : memref<103x1x94xf32, #tpu.memory_space<vmem>>, vector<1x1x94xf32>
    %10 = vector.shape_cast %9 : vector<1x1x94xf32> to vector<1x94xf32>
    %11 = vector.shape_cast %10 : vector<1x94xf32> to vector<1x1x94xf32>
    %12 = vector.broadcast %11 : vector<1x1x94xf32> to vector<1x16x94xf32>
    %13 = arith.mulf %8, %12 : vector<1x16x94xf32>
    %c0_16 = arith.constant 0 : index
    %c0_17 = arith.constant 0 : index
    %c0_18 = arith.constant 0 : index
    %14 = vector.load %arg3[%c0_16, %c0_17, %c0_18] : memref<7x1x94xf32, #tpu.memory_space<vmem>>, vector<1x1x94xf32>
    %15 = vector.shape_cast %14 : vector<1x1x94xf32> to vector<1x94xf32>
    %16 = vector.shape_cast %15 : vector<1x94xf32> to vector<1x1x94xf32>
    %17 = vector.broadcast %16 : vector<1x1x94xf32> to vector<1x16x94xf32>
    %18 = arith.addf %13, %17 : vector<1x16x94xf32>
    %c0_19 = arith.constant 0 : index
    %c8_20 = arith.constant 8 : index
    %c9 = arith.constant 9 : index
    %19 = vector.load %arg1[%c0_19, %c8_20, %c9] : memref<1x36x114xf32, #tpu.memory_space<vmem>>, vector<1x16x94xf32>
    %c1 = arith.constant 1 : index
    %c0_21 = arith.constant 0 : index
    %c0_22 = arith.constant 0 : index
    %20 = vector.load %arg2[%c1, %c0_21, %c0_22] : memref<103x1x94xf32, #tpu.memory_space<vmem>>, vector<1x1x94xf32>
    %21 = vector.shape_cast %20 : vector<1x1x94xf32> to vector<1x94xf32>
    %22 = vector.shape_cast %21 : vector<1x94xf32> to vector<1x1x94xf32>
    %23 = vector.broadcast %22 : vector<1x1x94xf32> to vector<1x16x94xf32>
    %24 = arith.mulf %19, %23 : vector<1x16x94xf32>
    %25 = arith.addf %18, %24 : vector<1x16x94xf32>
    %c0_23 = arith.constant 0 : index
    %c8_24 = arith.constant 8 : index
    %c10_25 = arith.constant 10 : index
    %26 = vector.load %arg1[%c0_23, %c8_24, %c10_25] : memref<1x36x114xf32, #tpu.memory_space<vmem>>, vector<1x16x94xf32>
    %c2 = arith.constant 2 : index
    %c0_26 = arith.constant 0 : index
    %c0_27 = arith.constant 0 : index
    %27 = vector.load %arg2[%c2, %c0_26, %c0_27] : memref<103x1x94xf32, #tpu.memory_space<vmem>>, vector<1x1x94xf32>
    %28 = vector.shape_cast %27 : vector<1x1x94xf32> to vector<1x94xf32>
    %29 = vector.shape_cast %28 : vector<1x94xf32> to vector<1x1x94xf32>
    %30 = vector.broadcast %29 : vector<1x1x94xf32> to vector<1x16x94xf32>
    %31 = arith.mulf %26, %30 : vector<1x16x94xf32>
    %32 = arith.addf %25, %31 : vector<1x16x94xf32>
    %c0_28 = arith.constant 0 : index
    %c8_29 = arith.constant 8 : index
    %c11 = arith.constant 11 : index
    %33 = vector.load %arg1[%c0_28, %c8_29, %c11] : memref<1x36x114xf32, #tpu.memory_space<vmem>>, vector<1x16x94xf32>
    %c3 = arith.constant 3 : index
    %c0_30 = arith.constant 0 : index
    %c0_31 = arith.constant 0 : index
    %34 = vector.load %arg2[%c3, %c0_30, %c0_31] : memref<103x1x94xf32, #tpu.memory_space<vmem>>, vector<1x1x94xf32>
    %35 = vector.shape_cast %34 : vector<1x1x94xf32> to vector<1x94xf32>
    %36 = vector.shape_cast %35 : vector<1x94xf32> to vector<1x1x94xf32>
    %37 = vector.broadcast %36 : vector<1x1x94xf32> to vector<1x16x94xf32>
    %38 = arith.mulf %33, %37 : vector<1x16x94xf32>
    %39 = arith.addf %32, %38 : vector<1x16x94xf32>
    %c0_32 = arith.constant 0 : index
    %c8_33 = arith.constant 8 : index
    %c12 = arith.constant 12 : index
    %40 = vector.load %arg1[%c0_32, %c8_33, %c12] : memref<1x36x114xf32, #tpu.memory_space<vmem>>, vector<1x16x94xf32>
    %c4 = arith.constant 4 : index
    %c0_34 = arith.constant 0 : index
    %c0_35 = arith.constant 0 : index
    %41 = vector.load %arg2[%c4, %c0_34, %c0_35] : memref<103x1x94xf32, #tpu.memory_space<vmem>>, vector<1x1x94xf32>
    %42 = vector.shape_cast %41 : vector<1x1x94xf32> to vector<1x94xf32>
    %43 = vector.shape_cast %42 : vector<1x94xf32> to vector<1x1x94xf32>
    %44 = vector.broadcast %43 : vector<1x1x94xf32> to vector<1x16x94xf32>
    %45 = arith.mulf %40, %44 : vector<1x16x94xf32>
    %46 = arith.addf %39, %45 : vector<1x16x94xf32>
    %c0_36 = arith.constant 0 : index
    %c9_37 = arith.constant 9 : index
    %c8_38 = arith.constant 8 : index
    %47 = vector.load %arg1[%c0_36, %c9_37, %c8_38] : memref<1x36x114xf32, #tpu.memory_space<vmem>>, vector<1x16x94xf32>
    %c5 = arith.constant 5 : index
    %c0_39 = arith.constant 0 : index
    %c0_40 = arith.constant 0 : index
    %48 = vector.load %arg2[%c5, %c0_39, %c0_40] : memref<103x1x94xf32, #tpu.memory_space<vmem>>, vector<1x1x94xf32>
    %49 = vector.shape_cast %48 : vector<1x1x94xf32> to vector<1x94xf32>
    %50 = vector.shape_cast %49 : vector<1x94xf32> to vector<1x1x94xf32>
    %51 = vector.broadcast %50 : vector<1x1x94xf32> to vector<1x16x94xf32>
    %52 = arith.mulf %47, %51 : vector<1x16x94xf32>
    %53 = arith.addf %46, %52 : vector<1x16x94xf32>
    %c0_41 = arith.constant 0 : index
    %c9_42 = arith.constant 9 : index
    %c9_43 = arith.constant 9 : index
    %54 = vector.load %arg1[%c0_41, %c9_42, %c9_43] : memref<1x36x114xf32, #tpu.memory_space<vmem>>, vector<1x16x94xf32>
    %c6 = arith.constant 6 : index
    %c0_44 = arith.constant 0 : index
    %c0_45 = arith.constant 0 : index
    %55 = vector.load %arg2[%c6, %c0_44, %c0_45] : memref<103x1x94xf32, #tpu.memory_space<vmem>>, vector<1x1x94xf32>
    %56 = vector.shape_cast %55 : vector<1x1x94xf32> to vector<1x94xf32>
    %57 = vector.shape_cast %56 : vector<1x94xf32> to vector<1x1x94xf32>
    %58 = vector.broadcast %57 : vector<1x1x94xf32> to vector<1x16x94xf32>
    %59 = arith.mulf %54, %58 : vector<1x16x94xf32>
    %60 = arith.addf %53, %59 : vector<1x16x94xf32>
    %c0_46 = arith.constant 0 : index
    %c9_47 = arith.constant 9 : index
    %c10_48 = arith.constant 10 : index
    %61 = vector.load %arg1[%c0_46, %c9_47, %c10_48] : memref<1x36x114xf32, #tpu.memory_space<vmem>>, vector<1x16x94xf32>
    %c7 = arith.constant 7 : index
    %c0_49 = arith.constant 0 : index
    %c0_50 = arith.constant 0 : index
    %62 = vector.load %arg2[%c7, %c0_49, %c0_50] : memref<103x1x94xf32, #tpu.memory_space<vmem>>, vector<1x1x94xf32>
    %63 = vector.shape_cast %62 : vector<1x1x94xf32> to vector<1x94xf32>
    %64 = vector.shape_cast %63 : vector<1x94xf32> to vector<1x1x94xf32>
    %65 = vector.broadcast %64 : vector<1x1x94xf32> to vector<1x16x94xf32>
    %66 = arith.mulf %61, %65 : vector<1x16x94xf32>
    %67 = arith.addf %60, %66 : vector<1x16x94xf32>
    %c0_51 = arith.constant 0 : index
    %c9_52 = arith.constant 9 : index
    %c11_53 = arith.constant 11 : index
    %68 = vector.load %arg1[%c0_51, %c9_52, %c11_53] : memref<1x36x114xf32, #tpu.memory_space<vmem>>, vector<1x16x94xf32>
    %c8_54 = arith.constant 8 : index
    %c0_55 = arith.constant 0 : index
    %c0_56 = arith.constant 0 : index
    %69 = vector.load %arg2[%c8_54, %c0_55, %c0_56] : memref<103x1x94xf32, #tpu.memory_space<vmem>>, vector<1x1x94xf32>
    %70 = vector.shape_cast %69 : vector<1x1x94xf32> to vector<1x94xf32>
    %71 = vector.shape_cast %70 : vector<1x94xf32> to vector<1x1x94xf32>
    %72 = vector.broadcast %71 : vector<1x1x94xf32> to vector<1x16x94xf32>
    %73 = arith.mulf %68, %72 : vector<1x16x94xf32>
    %74 = arith.addf %67, %73 : vector<1x16x94xf32>
    %c0_57 = arith.constant 0 : index
    %c9_58 = arith.constant 9 : index
    %c12_59 = arith.constant 12 : index
    %75 = vector.load %arg1[%c0_57, %c9_58, %c12_59] : memref<1x36x114xf32, #tpu.memory_space<vmem>>, vector<1x16x94xf32>
    %c9_60 = arith.constant 9 : index
    %c0_61 = arith.constant 0 : index
    %c0_62 = arith.constant 0 : index
    %76 = vector.load %arg2[%c9_60, %c0_61, %c0_62] : memref<103x1x94xf32, #tpu.memory_space<vmem>>, vector<1x1x94xf32>
    %77 = vector.shape_cast %76 : vector<1x1x94xf32> to vector<1x94xf32>
    %78 = vector.shape_cast %77 : vector<1x94xf32> to vector<1x1x94xf32>
    %79 = vector.broadcast %78 : vector<1x1x94xf32> to vector<1x16x94xf32>
    %80 = arith.mulf %75, %79 : vector<1x16x94xf32>
    %81 = arith.addf %74, %80 : vector<1x16x94xf32>
    %c0_63 = arith.constant 0 : index
    %c10_64 = arith.constant 10 : index
    %c8_65 = arith.constant 8 : index
    %82 = vector.load %arg1[%c0_63, %c10_64, %c8_65] : memref<1x36x114xf32, #tpu.memory_space<vmem>>, vector<1x16x94xf32>
    %c10_66 = arith.constant 10 : index
    %c0_67 = arith.constant 0 : index
    %c0_68 = arith.constant 0 : index
    %83 = vector.load %arg2[%c10_66, %c0_67, %c0_68] : memref<103x1x94xf32, #tpu.memory_space<vmem>>, vector<1x1x94xf32>
    %84 = vector.shape_cast %83 : vector<1x1x94xf32> to vector<1x94xf32>
    %85 = vector.shape_cast %84 : vector<1x94xf32> to vector<1x1x94xf32>
    %86 = vector.broadcast %85 : vector<1x1x94xf32> to vector<1x16x94xf32>
    %87 = arith.mulf %82, %86 : vector<1x16x94xf32>
    %88 = arith.addf %81, %87 : vector<1x16x94xf32>
    %c0_69 = arith.constant 0 : index
    %c10_70 = arith.constant 10 : index
    %c9_71 = arith.constant 9 : index
    %89 = vector.load %arg1[%c0_69, %c10_70, %c9_71] : memref<1x36x114xf32, #tpu.memory_space<vmem>>, vector<1x16x94xf32>
    %c11_72 = arith.constant 11 : index
    %c0_73 = arith.constant 0 : index
    %c0_74 = arith.constant 0 : index
    %90 = vector.load %arg2[%c11_72, %c0_73, %c0_74] : memref<103x1x94xf32, #tpu.memory_space<vmem>>, vector<1x1x94xf32>
    %91 = vector.shape_cast %90 : vector<1x1x94xf32> to vector<1x94xf32>
    %92 = vector.shape_cast %91 : vector<1x94xf32> to vector<1x1x94xf32>
    %93 = vector.broadcast %92 : vector<1x1x94xf32> to vector<1x16x94xf32>
    %94 = arith.mulf %89, %93 : vector<1x16x94xf32>
    %95 = arith.addf %88, %94 : vector<1x16x94xf32>
    %c0_75 = arith.constant 0 : index
    %c10_76 = arith.constant 10 : index
    %c10_77 = arith.constant 10 : index
    %96 = vector.load %arg1[%c0_75, %c10_76, %c10_77] : memref<1x36x114xf32, #tpu.memory_space<vmem>>, vector<1x16x94xf32>
    %c12_78 = arith.constant 12 : index
    %c0_79 = arith.constant 0 : index
    %c0_80 = arith.constant 0 : index
    %97 = vector.load %arg2[%c12_78, %c0_79, %c0_80] : memref<103x1x94xf32, #tpu.memory_space<vmem>>, vector<1x1x94xf32>
    %98 = vector.shape_cast %97 : vector<1x1x94xf32> to vector<1x94xf32>
    %99 = vector.shape_cast %98 : vector<1x94xf32> to vector<1x1x94xf32>
    %100 = vector.broadcast %99 : vector<1x1x94xf32> to vector<1x16x94xf32>
    %101 = arith.mulf %96, %100 : vector<1x16x94xf32>
    %102 = arith.addf %95, %101 : vector<1x16x94xf32>
    %c0_81 = arith.constant 0 : index
    %c10_82 = arith.constant 10 : index
    %c11_83 = arith.constant 11 : index
    %103 = vector.load %arg1[%c0_81, %c10_82, %c11_83] : memref<1x36x114xf32, #tpu.memory_space<vmem>>, vector<1x16x94xf32>
    %c13 = arith.constant 13 : index
    %c0_84 = arith.constant 0 : index
    %c0_85 = arith.constant 0 : index
    %104 = vector.load %arg2[%c13, %c0_84, %c0_85] : memref<103x1x94xf32, #tpu.memory_space<vmem>>, vector<1x1x94xf32>
    %105 = vector.shape_cast %104 : vector<1x1x94xf32> to vector<1x94xf32>
    %106 = vector.shape_cast %105 : vector<1x94xf32> to vector<1x1x94xf32>
    %107 = vector.broadcast %106 : vector<1x1x94xf32> to vector<1x16x94xf32>
    %108 = arith.mulf %103, %107 : vector<1x16x94xf32>
    %109 = arith.addf %102, %108 : vector<1x16x94xf32>
    %c0_86 = arith.constant 0 : index
    %c10_87 = arith.constant 10 : index
    %c12_88 = arith.constant 12 : index
    %110 = vector.load %arg1[%c0_86, %c10_87, %c12_88] : memref<1x36x114xf32, #tpu.memory_space<vmem>>, vector<1x16x94xf32>
    %c14 = arith.constant 14 : index
    %c0_89 = arith.constant 0 : index
    %c0_90 = arith.constant 0 : index
    %111 = vector.load %arg2[%c14, %c0_89, %c0_90] : memref<103x1x94xf32, #tpu.memory_space<vmem>>, vector<1x1x94xf32>
    %112 = vector.shape_cast %111 : vector<1x1x94xf32> to vector<1x94xf32>
    %113 = vector.shape_cast %112 : vector<1x94xf32> to vector<1x1x94xf32>
    %114 = vector.broadcast %113 : vector<1x1x94xf32> to vector<1x16x94xf32>
    %115 = arith.mulf %110, %114 : vector<1x16x94xf32>
    %116 = arith.addf %109, %115 : vector<1x16x94xf32>
    %c0_91 = arith.constant 0 : index
    %c11_92 = arith.constant 11 : index
    %c8_93 = arith.constant 8 : index
    %117 = vector.load %arg1[%c0_91, %c11_92, %c8_93] : memref<1x36x114xf32, #tpu.memory_space<vmem>>, vector<1x16x94xf32>
    %c15 = arith.constant 15 : index
    %c0_94 = arith.constant 0 : index
    %c0_95 = arith.constant 0 : index
    %118 = vector.load %arg2[%c15, %c0_94, %c0_95] : memref<103x1x94xf32, #tpu.memory_space<vmem>>, vector<1x1x94xf32>
    %119 = vector.shape_cast %118 : vector<1x1x94xf32> to vector<1x94xf32>
    %120 = vector.shape_cast %119 : vector<1x94xf32> to vector<1x1x94xf32>
    %121 = vector.broadcast %120 : vector<1x1x94xf32> to vector<1x16x94xf32>
    %122 = arith.mulf %117, %121 : vector<1x16x94xf32>
    %123 = arith.addf %116, %122 : vector<1x16x94xf32>
    %c0_96 = arith.constant 0 : index
    %c11_97 = arith.constant 11 : index
    %c9_98 = arith.constant 9 : index
    %124 = vector.load %arg1[%c0_96, %c11_97, %c9_98] : memref<1x36x114xf32, #tpu.memory_space<vmem>>, vector<1x16x94xf32>
    %c16 = arith.constant 16 : index
    %c0_99 = arith.constant 0 : index
    %c0_100 = arith.constant 0 : index
    %125 = vector.load %arg2[%c16, %c0_99, %c0_100] : memref<103x1x94xf32, #tpu.memory_space<vmem>>, vector<1x1x94xf32>
    %126 = vector.shape_cast %125 : vector<1x1x94xf32> to vector<1x94xf32>
    %127 = vector.shape_cast %126 : vector<1x94xf32> to vector<1x1x94xf32>
    %128 = vector.broadcast %127 : vector<1x1x94xf32> to vector<1x16x94xf32>
    %129 = arith.mulf %124, %128 : vector<1x16x94xf32>
    %130 = arith.addf %123, %129 : vector<1x16x94xf32>
    %c0_101 = arith.constant 0 : index
    %c11_102 = arith.constant 11 : index
    %c10_103 = arith.constant 10 : index
    %131 = vector.load %arg1[%c0_101, %c11_102, %c10_103] : memref<1x36x114xf32, #tpu.memory_space<vmem>>, vector<1x16x94xf32>
    %c17 = arith.constant 17 : index
    %c0_104 = arith.constant 0 : index
    %c0_105 = arith.constant 0 : index
    %132 = vector.load %arg2[%c17, %c0_104, %c0_105] : memref<103x1x94xf32, #tpu.memory_space<vmem>>, vector<1x1x94xf32>
    %133 = vector.shape_cast %132 : vector<1x1x94xf32> to vector<1x94xf32>
    %134 = vector.shape_cast %133 : vector<1x94xf32> to vector<1x1x94xf32>
    %135 = vector.broadcast %134 : vector<1x1x94xf32> to vector<1x16x94xf32>
    %136 = arith.mulf %131, %135 : vector<1x16x94xf32>
    %137 = arith.addf %130, %136 : vector<1x16x94xf32>
    %c0_106 = arith.constant 0 : index
    %c11_107 = arith.constant 11 : index
    %c11_108 = arith.constant 11 : index
    %138 = vector.load %arg1[%c0_106, %c11_107, %c11_108] : memref<1x36x114xf32, #tpu.memory_space<vmem>>, vector<1x16x94xf32>
    %c18 = arith.constant 18 : index
    %c0_109 = arith.constant 0 : index
    %c0_110 = arith.constant 0 : index
    %139 = vector.load %arg2[%c18, %c0_109, %c0_110] : memref<103x1x94xf32, #tpu.memory_space<vmem>>, vector<1x1x94xf32>
    %140 = vector.shape_cast %139 : vector<1x1x94xf32> to vector<1x94xf32>
    %141 = vector.shape_cast %140 : vector<1x94xf32> to vector<1x1x94xf32>
    %142 = vector.broadcast %141 : vector<1x1x94xf32> to vector<1x16x94xf32>
    %143 = arith.mulf %138, %142 : vector<1x16x94xf32>
    %144 = arith.addf %137, %143 : vector<1x16x94xf32>
    %c0_111 = arith.constant 0 : index
    %c11_112 = arith.constant 11 : index
    %c12_113 = arith.constant 12 : index
    %145 = vector.load %arg1[%c0_111, %c11_112, %c12_113] : memref<1x36x114xf32, #tpu.memory_space<vmem>>, vector<1x16x94xf32>
    %c19 = arith.constant 19 : index
    %c0_114 = arith.constant 0 : index
    %c0_115 = arith.constant 0 : index
    %146 = vector.load %arg2[%c19, %c0_114, %c0_115] : memref<103x1x94xf32, #tpu.memory_space<vmem>>, vector<1x1x94xf32>
    %147 = vector.shape_cast %146 : vector<1x1x94xf32> to vector<1x94xf32>
    %148 = vector.shape_cast %147 : vector<1x94xf32> to vector<1x1x94xf32>
    %149 = vector.broadcast %148 : vector<1x1x94xf32> to vector<1x16x94xf32>
    %150 = arith.mulf %145, %149 : vector<1x16x94xf32>
    %151 = arith.addf %144, %150 : vector<1x16x94xf32>
    %c0_116 = arith.constant 0 : index
    %c12_117 = arith.constant 12 : index
    %c8_118 = arith.constant 8 : index
    %152 = vector.load %arg1[%c0_116, %c12_117, %c8_118] : memref<1x36x114xf32, #tpu.memory_space<vmem>>, vector<1x16x94xf32>
    %c20 = arith.constant 20 : index
    %c0_119 = arith.constant 0 : index
    %c0_120 = arith.constant 0 : index
    %153 = vector.load %arg2[%c20, %c0_119, %c0_120] : memref<103x1x94xf32, #tpu.memory_space<vmem>>, vector<1x1x94xf32>
    %154 = vector.shape_cast %153 : vector<1x1x94xf32> to vector<1x94xf32>
    %155 = vector.shape_cast %154 : vector<1x94xf32> to vector<1x1x94xf32>
    %156 = vector.broadcast %155 : vector<1x1x94xf32> to vector<1x16x94xf32>
    %157 = arith.mulf %152, %156 : vector<1x16x94xf32>
    %158 = arith.addf %151, %157 : vector<1x16x94xf32>
    %c0_121 = arith.constant 0 : index
    %c12_122 = arith.constant 12 : index
    %c9_123 = arith.constant 9 : index
    %159 = vector.load %arg1[%c0_121, %c12_122, %c9_123] : memref<1x36x114xf32, #tpu.memory_space<vmem>>, vector<1x16x94xf32>
    %c21 = arith.constant 21 : index
    %c0_124 = arith.constant 0 : index
    %c0_125 = arith.constant 0 : index
    %160 = vector.load %arg2[%c21, %c0_124, %c0_125] : memref<103x1x94xf32, #tpu.memory_space<vmem>>, vector<1x1x94xf32>
    %161 = vector.shape_cast %160 : vector<1x1x94xf32> to vector<1x94xf32>
    %162 = vector.shape_cast %161 : vector<1x94xf32> to vector<1x1x94xf32>
    %163 = vector.broadcast %162 : vector<1x1x94xf32> to vector<1x16x94xf32>
    %164 = arith.mulf %159, %163 : vector<1x16x94xf32>
    %165 = arith.addf %158, %164 : vector<1x16x94xf32>
    %c0_126 = arith.constant 0 : index
    %c12_127 = arith.constant 12 : index
    %c10_128 = arith.constant 10 : index
    %166 = vector.load %arg1[%c0_126, %c12_127, %c10_128] : memref<1x36x114xf32, #tpu.memory_space<vmem>>, vector<1x16x94xf32>
    %c22 = arith.constant 22 : index
    %c0_129 = arith.constant 0 : index
    %c0_130 = arith.constant 0 : index
    %167 = vector.load %arg2[%c22, %c0_129, %c0_130] : memref<103x1x94xf32, #tpu.memory_space<vmem>>, vector<1x1x94xf32>
    %168 = vector.shape_cast %167 : vector<1x1x94xf32> to vector<1x94xf32>
    %169 = vector.shape_cast %168 : vector<1x94xf32> to vector<1x1x94xf32>
    %170 = vector.broadcast %169 : vector<1x1x94xf32> to vector<1x16x94xf32>
    %171 = arith.mulf %166, %170 : vector<1x16x94xf32>
    %172 = arith.addf %165, %171 : vector<1x16x94xf32>
    %c0_131 = arith.constant 0 : index
    %c12_132 = arith.constant 12 : index
    %c11_133 = arith.constant 11 : index
    %173 = vector.load %arg1[%c0_131, %c12_132, %c11_133] : memref<1x36x114xf32, #tpu.memory_space<vmem>>, vector<1x16x94xf32>
    %c23 = arith.constant 23 : index
    %c0_134 = arith.constant 0 : index
    %c0_135 = arith.constant 0 : index
    %174 = vector.load %arg2[%c23, %c0_134, %c0_135] : memref<103x1x94xf32, #tpu.memory_space<vmem>>, vector<1x1x94xf32>
    %175 = vector.shape_cast %174 : vector<1x1x94xf32> to vector<1x94xf32>
    %176 = vector.shape_cast %175 : vector<1x94xf32> to vector<1x1x94xf32>
    %177 = vector.broadcast %176 : vector<1x1x94xf32> to vector<1x16x94xf32>
    %178 = arith.mulf %173, %177 : vector<1x16x94xf32>
    %179 = arith.addf %172, %178 : vector<1x16x94xf32>
    %c0_136 = arith.constant 0 : index
    %c12_137 = arith.constant 12 : index
    %c12_138 = arith.constant 12 : index
    %180 = vector.load %arg1[%c0_136, %c12_137, %c12_138] : memref<1x36x114xf32, #tpu.memory_space<vmem>>, vector<1x16x94xf32>
    %c24 = arith.constant 24 : index
    %c0_139 = arith.constant 0 : index
    %c0_140 = arith.constant 0 : index
    %181 = vector.load %arg2[%c24, %c0_139, %c0_140] : memref<103x1x94xf32, #tpu.memory_space<vmem>>, vector<1x1x94xf32>
    %182 = vector.shape_cast %181 : vector<1x1x94xf32> to vector<1x94xf32>
    %183 = vector.shape_cast %182 : vector<1x94xf32> to vector<1x1x94xf32>
    %184 = vector.broadcast %183 : vector<1x1x94xf32> to vector<1x16x94xf32>
    %185 = arith.mulf %180, %184 : vector<1x16x94xf32>
    %186 = arith.addf %179, %185 : vector<1x16x94xf32>
    %c0_141 = arith.constant 0 : index
    %c10_142 = arith.constant 10 : index
    %c10_143 = arith.constant 10 : index
    %187 = vector.load %arg7[%c0_141, %c10_142, %c10_143] : memref<2x36x114xf32, #tpu.memory_space<vmem>>, vector<1x16x94xf32>
    tpu.vector_store %arg7[%c0_141, %c10_142, %c10_143], %186 {strides = array<i32>} : memref<2x36x114xf32, #tpu.memory_space<vmem>>, vector<1x16x94xf32>,
    %c4_144 = arith.constant 4 : index
    %c0_145 = arith.constant 0 : index
    %c0_146 = arith.constant 0 : index
    %188 = vector.load %arg3[%c4_144, %c0_145, %c0_146] : memref<7x1x94xf32, #tpu.memory_space<vmem>>, vector<1x1x94xf32>
    %189 = vector.shape_cast %188 : vector<1x1x94xf32> to vector<1x94xf32>
    %c5_147 = arith.constant 5 : index
    %c0_148 = arith.constant 0 : index
    %c0_149 = arith.constant 0 : index
    %190 = vector.load %arg3[%c5_147, %c0_148, %c0_149] : memref<7x1x94xf32, #tpu.memory_space<vmem>>, vector<1x1x94xf32>
    %191 = vector.shape_cast %190 : vector<1x1x94xf32> to vector<1x94xf32>
    %192 = arith.addf %189, %191 : vector<1x94xf32>
    %c6_150 = arith.constant 6 : index
    %c0_151 = arith.constant 0 : index
    %c0_152 = arith.constant 0 : index
    %193 = vector.load %arg3[%c6_150, %c0_151, %c0_152] : memref<7x1x94xf32, #tpu.memory_space<vmem>>, vector<1x1x94xf32>
    %194 = vector.shape_cast %193 : vector<1x1x94xf32> to vector<1x94xf32>
    %195 = arith.addf %192, %194 : vector<1x94xf32>
    %196 = vector.shape_cast %195 : vector<1x94xf32> to vector<1x1x94xf32>
    %197 = vector.broadcast %196 : vector<1x1x94xf32> to vector<1x16x94xf32>
    %198 = arith.addf %186, %197 : vector<1x16x94xf32>
    %c0_153 = arith.constant 0 : index
    %c10_154 = arith.constant 10 : index
    %c7_155 = arith.constant 7 : index
    %199 = vector.load %arg7[%c0_153, %c10_154, %c7_155] : memref<2x36x114xf32, #tpu.memory_space<vmem>>, vector<1x16x94xf32>
    %c25 = arith.constant 25 : index
    %c0_156 = arith.constant 0 : index
    %c0_157 = arith.constant 0 : index
    %200 = vector.load %arg2[%c25, %c0_156, %c0_157] : memref<103x1x94xf32, #tpu.memory_space<vmem>>, vector<1x1x94xf32>
    %201 = vector.shape_cast %200 : vector<1x1x94xf32> to vector<1x94xf32>
    %202 = vector.shape_cast %201 : vector<1x94xf32> to vector<1x1x94xf32>
    %203 = vector.broadcast %202 : vector<1x1x94xf32> to vector<1x16x94xf32>
    %204 = arith.mulf %199, %203 : vector<1x16x94xf32>
    %c1_158 = arith.constant 1 : index
    %c0_159 = arith.constant 0 : index
    %c0_160 = arith.constant 0 : index
    %205 = vector.load %arg3[%c1_158, %c0_159, %c0_160] : memref<7x1x94xf32, #tpu.memory_space<vmem>>, vector<1x1x94xf32>
    %206 = vector.shape_cast %205 : vector<1x1x94xf32> to vector<1x94xf32>
    %207 = vector.shape_cast %206 : vector<1x94xf32> to vector<1x1x94xf32>
    %208 = vector.broadcast %207 : vector<1x1x94xf32> to vector<1x16x94xf32>
    %209 = arith.addf %204, %208 : vector<1x16x94xf32>
    %c0_161 = arith.constant 0 : index
    %c10_162 = arith.constant 10 : index
    %c8_163 = arith.constant 8 : index
    %210 = vector.load %arg7[%c0_161, %c10_162, %c8_163] : memref<2x36x114xf32, #tpu.memory_space<vmem>>, vector<1x16x94xf32>
    %c26_164 = arith.constant 26 : index
    %c0_165 = arith.constant 0 : index
    %c0_166 = arith.constant 0 : index
    %211 = vector.load %arg2[%c26_164, %c0_165, %c0_166] : memref<103x1x94xf32, #tpu.memory_space<vmem>>, vector<1x1x94xf32>
    %212 = vector.shape_cast %211 : vector<1x1x94xf32> to vector<1x94xf32>
    %213 = vector.shape_cast %212 : vector<1x94xf32> to vector<1x1x94xf32>
    %214 = vector.broadcast %213 : vector<1x1x94xf32> to vector<1x16x94xf32>
    %215 = arith.mulf %210, %214 : vector<1x16x94xf32>
    %216 = arith.addf %209, %215 : vector<1x16x94xf32>
    %c0_167 = arith.constant 0 : index
    %c10_168 = arith.constant 10 : index
    %c9_169 = arith.constant 9 : index
    %217 = vector.load %arg7[%c0_167, %c10_168, %c9_169] : memref<2x36x114xf32, #tpu.memory_space<vmem>>, vector<1x16x94xf32>
    %c27 = arith.constant 27 : index
    %c0_170 = arith.constant 0 : index
    %c0_171 = arith.constant 0 : index
    %218 = vector.load %arg2[%c27, %c0_170, %c0_171] : memref<103x1x94xf32, #tpu.memory_space<vmem>>, vector<1x1x94xf32>
    %219 = vector.shape_cast %218 : vector<1x1x94xf32> to vector<1x94xf32>
    %220 = vector.shape_cast %219 : vector<1x94xf32> to vector<1x1x94xf32>
    %221 = vector.broadcast %220 : vector<1x1x94xf32> to vector<1x16x94xf32>
    %222 = arith.mulf %217, %221 : vector<1x16x94xf32>
    %223 = arith.addf %216, %222 : vector<1x16x94xf32>
    %c0_172 = arith.constant 0 : index
    %c10_173 = arith.constant 10 : index
    %c10_174 = arith.constant 10 : index
    %224 = vector.load %arg7[%c0_172, %c10_173, %c10_174] : memref<2x36x114xf32, #tpu.memory_space<vmem>>, vector<1x16x94xf32>
    %c28 = arith.constant 28 : index
    %c0_175 = arith.constant 0 : index
    %c0_176 = arith.constant 0 : index
    %225 = vector.load %arg2[%c28, %c0_175, %c0_176] : memref<103x1x94xf32, #tpu.memory_space<vmem>>, vector<1x1x94xf32>
    %226 = vector.shape_cast %225 : vector<1x1x94xf32> to vector<1x94xf32>
    %227 = vector.shape_cast %226 : vector<1x94xf32> to vector<1x1x94xf32>
    %228 = vector.broadcast %227 : vector<1x1x94xf32> to vector<1x16x94xf32>
    %229 = arith.mulf %224, %228 : vector<1x16x94xf32>
    %230 = arith.addf %223, %229 : vector<1x16x94xf32>
    %c0_177 = arith.constant 0 : index
    %c10_178 = arith.constant 10 : index
    %c11_179 = arith.constant 11 : index
    %231 = vector.load %arg7[%c0_177, %c10_178, %c11_179] : memref<2x36x114xf32, #tpu.memory_space<vmem>>, vector<1x16x94xf32>
    %c29 = arith.constant 29 : index
    %c0_180 = arith.constant 0 : index
    %c0_181 = arith.constant 0 : index
    %232 = vector.load %arg2[%c29, %c0_180, %c0_181] : memref<103x1x94xf32, #tpu.memory_space<vmem>>, vector<1x1x94xf32>
    %233 = vector.shape_cast %232 : vector<1x1x94xf32> to vector<1x94xf32>
    %234 = vector.shape_cast %233 : vector<1x94xf32> to vector<1x1x94xf32>
    %235 = vector.broadcast %234 : vector<1x1x94xf32> to vector<1x16x94xf32>
    %236 = arith.mulf %231, %235 : vector<1x16x94xf32>
    %237 = arith.addf %230, %236 : vector<1x16x94xf32>
    %c0_182 = arith.constant 0 : index
    %c10_183 = arith.constant 10 : index
    %c12_184 = arith.constant 12 : index
    %238 = vector.load %arg7[%c0_182, %c10_183, %c12_184] : memref<2x36x114xf32, #tpu.memory_space<vmem>>, vector<1x16x94xf32>
    %c30 = arith.constant 30 : index
    %c0_185 = arith.constant 0 : index
    %c0_186 = arith.constant 0 : index
    %239 = vector.load %arg2[%c30, %c0_185, %c0_186] : memref<103x1x94xf32, #tpu.memory_space<vmem>>, vector<1x1x94xf32>
    %240 = vector.shape_cast %239 : vector<1x1x94xf32> to vector<1x94xf32>
    %241 = vector.shape_cast %240 : vector<1x94xf32> to vector<1x1x94xf32>
    %242 = vector.broadcast %241 : vector<1x1x94xf32> to vector<1x16x94xf32>
    %243 = arith.mulf %238, %242 : vector<1x16x94xf32>
    %244 = arith.addf %237, %243 : vector<1x16x94xf32>
    %c0_187 = arith.constant 0 : index
    %c10_188 = arith.constant 10 : index
    %c13_189 = arith.constant 13 : index
    %245 = vector.load %arg7[%c0_187, %c10_188, %c13_189] : memref<2x36x114xf32, #tpu.memory_space<vmem>>, vector<1x16x94xf32>
    %c31 = arith.constant 31 : index
    %c0_190 = arith.constant 0 : index
    %c0_191 = arith.constant 0 : index
    %246 = vector.load %arg2[%c31, %c0_190, %c0_191] : memref<103x1x94xf32, #tpu.memory_space<vmem>>, vector<1x1x94xf32>
    %247 = vector.shape_cast %246 : vector<1x1x94xf32> to vector<1x94xf32>
    %248 = vector.shape_cast %247 : vector<1x94xf32> to vector<1x1x94xf32>
    %249 = vector.broadcast %248 : vector<1x1x94xf32> to vector<1x16x94xf32>
    %250 = arith.mulf %245, %249 : vector<1x16x94xf32>
    %251 = arith.addf %244, %250 : vector<1x16x94xf32>
    %c1_192 = arith.constant 1 : index
    %c10_193 = arith.constant 10 : index
    %c10_194 = arith.constant 10 : index
    %252 = vector.load %arg7[%c1_192, %c10_193, %c10_194] : memref<2x36x114xf32, #tpu.memory_space<vmem>>, vector<1x16x94xf32>
    tpu.vector_store %arg7[%c1_192, %c10_193, %c10_194], %251 {strides = array<i32>} : memref<2x36x114xf32, #tpu.memory_space<vmem>>, vector<1x16x94xf32>,
    %c1_195 = arith.constant 1 : index
    %c7_196 = arith.constant 7 : index
    %c10_197 = arith.constant 10 : index
    %253 = vector.load %arg7[%c1_195, %c7_196, %c10_197] : memref<2x36x114xf32, #tpu.memory_space<vmem>>, vector<1x16x94xf32>
    %c64 = arith.constant 64 : index
    %c0_198 = arith.constant 0 : index
    %c0_199 = arith.constant 0 : index
    %254 = vector.load %arg2[%c64, %c0_198, %c0_199] : memref<103x1x94xf32, #tpu.memory_space<vmem>>, vector<1x1x94xf32>
    %255 = vector.shape_cast %254 : vector<1x1x94xf32> to vector<1x94xf32>
    %256 = vector.shape_cast %255 : vector<1x94xf32> to vector<1x1x94xf32>
    %257 = vector.broadcast %256 : vector<1x1x94xf32> to vector<1x16x94xf32>
    %258 = arith.mulf %253, %257 : vector<1x16x94xf32>
    %259 = arith.addf %198, %258 : vector<1x16x94xf32>
    %c1_200 = arith.constant 1 : index
    %c8_201 = arith.constant 8 : index
    %c10_202 = arith.constant 10 : index
    %260 = vector.load %arg7[%c1_200, %c8_201, %c10_202] : memref<2x36x114xf32, #tpu.memory_space<vmem>>, vector<1x16x94xf32>
    %c65 = arith.constant 65 : index
    %c0_203 = arith.constant 0 : index
    %c0_204 = arith.constant 0 : index
    %261 = vector.load %arg2[%c65, %c0_203, %c0_204] : memref<103x1x94xf32, #tpu.memory_space<vmem>>, vector<1x1x94xf32>
    %262 = vector.shape_cast %261 : vector<1x1x94xf32> to vector<1x94xf32>
    %263 = vector.shape_cast %262 : vector<1x94xf32> to vector<1x1x94xf32>
    %264 = vector.broadcast %263 : vector<1x1x94xf32> to vector<1x16x94xf32>
    %265 = arith.mulf %260, %264 : vector<1x16x94xf32>
    %266 = arith.addf %259, %265 : vector<1x16x94xf32>
    %c1_205 = arith.constant 1 : index
    %c9_206 = arith.constant 9 : index
    %c10_207 = arith.constant 10 : index
    %267 = vector.load %arg7[%c1_205, %c9_206, %c10_207] : memref<2x36x114xf32, #tpu.memory_space<vmem>>, vector<1x16x94xf32>
    %c66 = arith.constant 66 : index
    %c0_208 = arith.constant 0 : index
    %c0_209 = arith.constant 0 : index
    %268 = vector.load %arg2[%c66, %c0_208, %c0_209] : memref<103x1x94xf32, #tpu.memory_space<vmem>>, vector<1x1x94xf32>
    %269 = vector.shape_cast %268 : vector<1x1x94xf32> to vector<1x94xf32>
    %270 = vector.shape_cast %269 : vector<1x94xf32> to vector<1x1x94xf32>
    %271 = vector.broadcast %270 : vector<1x1x94xf32> to vector<1x16x94xf32>
    %272 = arith.mulf %267, %271 : vector<1x16x94xf32>
    %273 = arith.addf %266, %272 : vector<1x16x94xf32>
    %c1_210 = arith.constant 1 : index
    %c10_211 = arith.constant 10 : index
    %c10_212 = arith.constant 10 : index
    %274 = vector.load %arg7[%c1_210, %c10_211, %c10_212] : memref<2x36x114xf32, #tpu.memory_space<vmem>>, vector<1x16x94xf32>
    %c67 = arith.constant 67 : index
    %c0_213 = arith.constant 0 : index
    %c0_214 = arith.constant 0 : index
    %275 = vector.load %arg2[%c67, %c0_213, %c0_214] : memref<103x1x94xf32, #tpu.memory_space<vmem>>, vector<1x1x94xf32>
    %276 = vector.shape_cast %275 : vector<1x1x94xf32> to vector<1x94xf32>
    %277 = vector.shape_cast %276 : vector<1x94xf32> to vector<1x1x94xf32>
    %278 = vector.broadcast %277 : vector<1x1x94xf32> to vector<1x16x94xf32>
    %279 = arith.mulf %274, %278 : vector<1x16x94xf32>
    %280 = arith.addf %273, %279 : vector<1x16x94xf32>
    %c1_215 = arith.constant 1 : index
    %c11_216 = arith.constant 11 : index
    %c10_217 = arith.constant 10 : index
    %281 = vector.load %arg7[%c1_215, %c11_216, %c10_217] : memref<2x36x114xf32, #tpu.memory_space<vmem>>, vector<1x16x94xf32>
    %c68 = arith.constant 68 : index
    %c0_218 = arith.constant 0 : index
    %c0_219 = arith.constant 0 : index
    %282 = vector.load %arg2[%c68, %c0_218, %c0_219] : memref<103x1x94xf32, #tpu.memory_space<vmem>>, vector<1x1x94xf32>
    %283 = vector.shape_cast %282 : vector<1x1x94xf32> to vector<1x94xf32>
    %284 = vector.shape_cast %283 : vector<1x94xf32> to vector<1x1x94xf32>
    %285 = vector.broadcast %284 : vector<1x1x94xf32> to vector<1x16x94xf32>
    %286 = arith.mulf %281, %285 : vector<1x16x94xf32>
    %287 = arith.addf %280, %286 : vector<1x16x94xf32>
    %c1_220 = arith.constant 1 : index
    %c12_221 = arith.constant 12 : index
    %c10_222 = arith.constant 10 : index
    %288 = vector.load %arg7[%c1_220, %c12_221, %c10_222] : memref<2x36x114xf32, #tpu.memory_space<vmem>>, vector<1x16x94xf32>
    %c69 = arith.constant 69 : index
    %c0_223 = arith.constant 0 : index
    %c0_224 = arith.constant 0 : index
    %289 = vector.load %arg2[%c69, %c0_223, %c0_224] : memref<103x1x94xf32, #tpu.memory_space<vmem>>, vector<1x1x94xf32>
    %290 = vector.shape_cast %289 : vector<1x1x94xf32> to vector<1x94xf32>
    %291 = vector.shape_cast %290 : vector<1x94xf32> to vector<1x1x94xf32>
    %292 = vector.broadcast %291 : vector<1x1x94xf32> to vector<1x16x94xf32>
    %293 = arith.mulf %288, %292 : vector<1x16x94xf32>
    %294 = arith.addf %287, %293 : vector<1x16x94xf32>
    %c1_225 = arith.constant 1 : index
    %c13_226 = arith.constant 13 : index
    %c10_227 = arith.constant 10 : index
    %295 = vector.load %arg7[%c1_225, %c13_226, %c10_227] : memref<2x36x114xf32, #tpu.memory_space<vmem>>, vector<1x16x94xf32>
    %c70 = arith.constant 70 : index
    %c0_228 = arith.constant 0 : index
    %c0_229 = arith.constant 0 : index
    %296 = vector.load %arg2[%c70, %c0_228, %c0_229] : memref<103x1x94xf32, #tpu.memory_space<vmem>>, vector<1x1x94xf32>
    %297 = vector.shape_cast %296 : vector<1x1x94xf32> to vector<1x94xf32>
    %298 = vector.shape_cast %297 : vector<1x94xf32> to vector<1x1x94xf32>
    %299 = vector.broadcast %298 : vector<1x1x94xf32> to vector<1x16x94xf32>
    %300 = arith.mulf %295, %299 : vector<1x16x94xf32>
    %301 = arith.addf %294, %300 : vector<1x16x94xf32>
    %c0_230 = arith.constant 0 : index
    %c10_231 = arith.constant 10 : index
    %c5_232 = arith.constant 5 : index
    %302 = vector.load %arg7[%c0_230, %c10_231, %c5_232] : memref<2x36x114xf32, #tpu.memory_space<vmem>>, vector<1x16x94xf32>
    %c32 = arith.constant 32 : index
    %c0_233 = arith.constant 0 : index
    %c0_234 = arith.constant 0 : index
    %303 = vector.load %arg2[%c32, %c0_233, %c0_234] : memref<103x1x94xf32, #tpu.memory_space<vmem>>, vector<1x1x94xf32>
    %304 = vector.shape_cast %303 : vector<1x1x94xf32> to vector<1x94xf32>
    %305 = vector.shape_cast %304 : vector<1x94xf32> to vector<1x1x94xf32>
    %306 = vector.broadcast %305 : vector<1x1x94xf32> to vector<1x16x94xf32>
    %307 = arith.mulf %302, %306 : vector<1x16x94xf32>
    %c2_235 = arith.constant 2 : index
    %c0_236 = arith.constant 0 : index
    %c0_237 = arith.constant 0 : index
    %308 = vector.load %arg3[%c2_235, %c0_236, %c0_237] : memref<7x1x94xf32, #tpu.memory_space<vmem>>, vector<1x1x94xf32>
    %309 = vector.shape_cast %308 : vector<1x1x94xf32> to vector<1x94xf32>
    %310 = vector.shape_cast %309 : vector<1x94xf32> to vector<1x1x94xf32>
    %311 = vector.broadcast %310 : vector<1x1x94xf32> to vector<1x16x94xf32>
    %312 = arith.addf %307, %311 : vector<1x16x94xf32>
    %c0_238 = arith.constant 0 : index
    %c10_239 = arith.constant 10 : index
    %c6_240 = arith.constant 6 : index
    %313 = vector.load %arg7[%c0_238, %c10_239, %c6_240] : memref<2x36x114xf32, #tpu.memory_space<vmem>>, vector<1x16x94xf32>
    %c33 = arith.constant 33 : index
    %c0_241 = arith.constant 0 : index
    %c0_242 = arith.constant 0 : index
    %314 = vector.load %arg2[%c33, %c0_241, %c0_242] : memref<103x1x94xf32, #tpu.memory_space<vmem>>, vector<1x1x94xf32>
    %315 = vector.shape_cast %314 : vector<1x1x94xf32> to vector<1x94xf32>
    %316 = vector.shape_cast %315 : vector<1x94xf32> to vector<1x1x94xf32>
    %317 = vector.broadcast %316 : vector<1x1x94xf32> to vector<1x16x94xf32>
    %318 = arith.mulf %313, %317 : vector<1x16x94xf32>
    %319 = arith.addf %312, %318 : vector<1x16x94xf32>
    %c0_243 = arith.constant 0 : index
    %c10_244 = arith.constant 10 : index
    %c7_245 = arith.constant 7 : index
    %320 = vector.load %arg7[%c0_243, %c10_244, %c7_245] : memref<2x36x114xf32, #tpu.memory_space<vmem>>, vector<1x16x94xf32>
    %c34 = arith.constant 34 : index
    %c0_246 = arith.constant 0 : index
    %c0_247 = arith.constant 0 : index
    %321 = vector.load %arg2[%c34, %c0_246, %c0_247] : memref<103x1x94xf32, #tpu.memory_space<vmem>>, vector<1x1x94xf32>
    %322 = vector.shape_cast %321 : vector<1x1x94xf32> to vector<1x94xf32>
    %323 = vector.shape_cast %322 : vector<1x94xf32> to vector<1x1x94xf32>
    %324 = vector.broadcast %323 : vector<1x1x94xf32> to vector<1x16x94xf32>
    %325 = arith.mulf %320, %324 : vector<1x16x94xf32>
    %326 = arith.addf %319, %325 : vector<1x16x94xf32>
    %c0_248 = arith.constant 0 : index
    %c10_249 = arith.constant 10 : index
    %c8_250 = arith.constant 8 : index
    %327 = vector.load %arg7[%c0_248, %c10_249, %c8_250] : memref<2x36x114xf32, #tpu.memory_space<vmem>>, vector<1x16x94xf32>
    %c35 = arith.constant 35 : index
    %c0_251 = arith.constant 0 : index
    %c0_252 = arith.constant 0 : index
    %328 = vector.load %arg2[%c35, %c0_251, %c0_252] : memref<103x1x94xf32, #tpu.memory_space<vmem>>, vector<1x1x94xf32>
    %329 = vector.shape_cast %328 : vector<1x1x94xf32> to vector<1x94xf32>
    %330 = vector.shape_cast %329 : vector<1x94xf32> to vector<1x1x94xf32>
    %331 = vector.broadcast %330 : vector<1x1x94xf32> to vector<1x16x94xf32>
    %332 = arith.mulf %327, %331 : vector<1x16x94xf32>
    %333 = arith.addf %326, %332 : vector<1x16x94xf32>
    %c0_253 = arith.constant 0 : index
    %c10_254 = arith.constant 10 : index
    %c9_255 = arith.constant 9 : index
    %334 = vector.load %arg7[%c0_253, %c10_254, %c9_255] : memref<2x36x114xf32, #tpu.memory_space<vmem>>, vector<1x16x94xf32>
    %c36 = arith.constant 36 : index
    %c0_256 = arith.constant 0 : index
    %c0_257 = arith.constant 0 : index
    %335 = vector.load %arg2[%c36, %c0_256, %c0_257] : memref<103x1x94xf32, #tpu.memory_space<vmem>>, vector<1x1x94xf32>
    %336 = vector.shape_cast %335 : vector<1x1x94xf32> to vector<1x94xf32>
    %337 = vector.shape_cast %336 : vector<1x94xf32> to vector<1x1x94xf32>
    %338 = vector.broadcast %337 : vector<1x1x94xf32> to vector<1x16x94xf32>
    %339 = arith.mulf %334, %338 : vector<1x16x94xf32>
    %340 = arith.addf %333, %339 : vector<1x16x94xf32>
    %c0_258 = arith.constant 0 : index
    %c10_259 = arith.constant 10 : index
    %c10_260 = arith.constant 10 : index
    %341 = vector.load %arg7[%c0_258, %c10_259, %c10_260] : memref<2x36x114xf32, #tpu.memory_space<vmem>>, vector<1x16x94xf32>
    %c37 = arith.constant 37 : index
    %c0_261 = arith.constant 0 : index
    %c0_262 = arith.constant 0 : index
    %342 = vector.load %arg2[%c37, %c0_261, %c0_262] : memref<103x1x94xf32, #tpu.memory_space<vmem>>, vector<1x1x94xf32>
    %343 = vector.shape_cast %342 : vector<1x1x94xf32> to vector<1x94xf32>
    %344 = vector.shape_cast %343 : vector<1x94xf32> to vector<1x1x94xf32>
    %345 = vector.broadcast %344 : vector<1x1x94xf32> to vector<1x16x94xf32>
    %346 = arith.mulf %341, %345 : vector<1x16x94xf32>
    %347 = arith.addf %340, %346 : vector<1x16x94xf32>
    %c0_263 = arith.constant 0 : index
    %c10_264 = arith.constant 10 : index
    %c11_265 = arith.constant 11 : index
    %348 = vector.load %arg7[%c0_263, %c10_264, %c11_265] : memref<2x36x114xf32, #tpu.memory_space<vmem>>, vector<1x16x94xf32>
    %c38 = arith.constant 38 : index
    %c0_266 = arith.constant 0 : index
    %c0_267 = arith.constant 0 : index
    %349 = vector.load %arg2[%c38, %c0_266, %c0_267] : memref<103x1x94xf32, #tpu.memory_space<vmem>>, vector<1x1x94xf32>
    %350 = vector.shape_cast %349 : vector<1x1x94xf32> to vector<1x94xf32>
    %351 = vector.shape_cast %350 : vector<1x94xf32> to vector<1x1x94xf32>
    %352 = vector.broadcast %351 : vector<1x1x94xf32> to vector<1x16x94xf32>
    %353 = arith.mulf %348, %352 : vector<1x16x94xf32>
    %354 = arith.addf %347, %353 : vector<1x16x94xf32>
    %c0_268 = arith.constant 0 : index
    %c10_269 = arith.constant 10 : index
    %c12_270 = arith.constant 12 : index
    %355 = vector.load %arg7[%c0_268, %c10_269, %c12_270] : memref<2x36x114xf32, #tpu.memory_space<vmem>>, vector<1x16x94xf32>
    %c39 = arith.constant 39 : index
    %c0_271 = arith.constant 0 : index
    %c0_272 = arith.constant 0 : index
    %356 = vector.load %arg2[%c39, %c0_271, %c0_272] : memref<103x1x94xf32, #tpu.memory_space<vmem>>, vector<1x1x94xf32>
    %357 = vector.shape_cast %356 : vector<1x1x94xf32> to vector<1x94xf32>
    %358 = vector.shape_cast %357 : vector<1x94xf32> to vector<1x1x94xf32>
    %359 = vector.broadcast %358 : vector<1x1x94xf32> to vector<1x16x94xf32>
    %360 = arith.mulf %355, %359 : vector<1x16x94xf32>
    %361 = arith.addf %354, %360 : vector<1x16x94xf32>
    %c0_273 = arith.constant 0 : index
    %c10_274 = arith.constant 10 : index
    %c13_275 = arith.constant 13 : index
    %362 = vector.load %arg7[%c0_273, %c10_274, %c13_275] : memref<2x36x114xf32, #tpu.memory_space<vmem>>, vector<1x16x94xf32>
    %c40 = arith.constant 40 : index
    %c0_276 = arith.constant 0 : index
    %c0_277 = arith.constant 0 : index
    %363 = vector.load %arg2[%c40, %c0_276, %c0_277] : memref<103x1x94xf32, #tpu.memory_space<vmem>>, vector<1x1x94xf32>
    %364 = vector.shape_cast %363 : vector<1x1x94xf32> to vector<1x94xf32>
    %365 = vector.shape_cast %364 : vector<1x94xf32> to vector<1x1x94xf32>
    %366 = vector.broadcast %365 : vector<1x1x94xf32> to vector<1x16x94xf32>
    %367 = arith.mulf %362, %366 : vector<1x16x94xf32>
    %368 = arith.addf %361, %367 : vector<1x16x94xf32>
    %c0_278 = arith.constant 0 : index
    %c10_279 = arith.constant 10 : index
    %c14_280 = arith.constant 14 : index
    %369 = vector.load %arg7[%c0_278, %c10_279, %c14_280] : memref<2x36x114xf32, #tpu.memory_space<vmem>>, vector<1x16x94xf32>
    %c41 = arith.constant 41 : index
    %c0_281 = arith.constant 0 : index
    %c0_282 = arith.constant 0 : index
    %370 = vector.load %arg2[%c41, %c0_281, %c0_282] : memref<103x1x94xf32, #tpu.memory_space<vmem>>, vector<1x1x94xf32>
    %371 = vector.shape_cast %370 : vector<1x1x94xf32> to vector<1x94xf32>
    %372 = vector.shape_cast %371 : vector<1x94xf32> to vector<1x1x94xf32>
    %373 = vector.broadcast %372 : vector<1x1x94xf32> to vector<1x16x94xf32>
    %374 = arith.mulf %369, %373 : vector<1x16x94xf32>
    %375 = arith.addf %368, %374 : vector<1x16x94xf32>
    %c0_283 = arith.constant 0 : index
    %c10_284 = arith.constant 10 : index
    %c15_285 = arith.constant 15 : index
    %376 = vector.load %arg7[%c0_283, %c10_284, %c15_285] : memref<2x36x114xf32, #tpu.memory_space<vmem>>, vector<1x16x94xf32>
    %c42 = arith.constant 42 : index
    %c0_286 = arith.constant 0 : index
    %c0_287 = arith.constant 0 : index
    %377 = vector.load %arg2[%c42, %c0_286, %c0_287] : memref<103x1x94xf32, #tpu.memory_space<vmem>>, vector<1x1x94xf32>
    %378 = vector.shape_cast %377 : vector<1x1x94xf32> to vector<1x94xf32>
    %379 = vector.shape_cast %378 : vector<1x94xf32> to vector<1x1x94xf32>
    %380 = vector.broadcast %379 : vector<1x1x94xf32> to vector<1x16x94xf32>
    %381 = arith.mulf %376, %380 : vector<1x16x94xf32>
    %382 = arith.addf %375, %381 : vector<1x16x94xf32>
    %c1_288 = arith.constant 1 : index
    %c10_289 = arith.constant 10 : index
    %c10_290 = arith.constant 10 : index
    %383 = vector.load %arg7[%c1_288, %c10_289, %c10_290] : memref<2x36x114xf32, #tpu.memory_space<vmem>>, vector<1x16x94xf32>
    tpu.vector_store %arg7[%c1_288, %c10_289, %c10_290], %382 {strides = array<i32>} : memref<2x36x114xf32, #tpu.memory_space<vmem>>, vector<1x16x94xf32>,
    %c1_291 = arith.constant 1 : index
    %c5_292 = arith.constant 5 : index
    %c10_293 = arith.constant 10 : index
    %384 = vector.load %arg7[%c1_291, %c5_292, %c10_293] : memref<2x36x114xf32, #tpu.memory_space<vmem>>, vector<1x16x94xf32>
    %c71 = arith.constant 71 : index
    %c0_294 = arith.constant 0 : index
    %c0_295 = arith.constant 0 : index
    %385 = vector.load %arg2[%c71, %c0_294, %c0_295] : memref<103x1x94xf32, #tpu.memory_space<vmem>>, vector<1x1x94xf32>
    %386 = vector.shape_cast %385 : vector<1x1x94xf32> to vector<1x94xf32>
    %387 = vector.shape_cast %386 : vector<1x94xf32> to vector<1x1x94xf32>
    %388 = vector.broadcast %387 : vector<1x1x94xf32> to vector<1x16x94xf32>
    %389 = arith.mulf %384, %388 : vector<1x16x94xf32>
    %390 = arith.addf %301, %389 : vector<1x16x94xf32>
    %c1_296 = arith.constant 1 : index
    %c6_297 = arith.constant 6 : index
    %c10_298 = arith.constant 10 : index
    %391 = vector.load %arg7[%c1_296, %c6_297, %c10_298] : memref<2x36x114xf32, #tpu.memory_space<vmem>>, vector<1x16x94xf32>
    %c72 = arith.constant 72 : index
    %c0_299 = arith.constant 0 : index
    %c0_300 = arith.constant 0 : index
    %392 = vector.load %arg2[%c72, %c0_299, %c0_300] : memref<103x1x94xf32, #tpu.memory_space<vmem>>, vector<1x1x94xf32>
    %393 = vector.shape_cast %392 : vector<1x1x94xf32> to vector<1x94xf32>
    %394 = vector.shape_cast %393 : vector<1x94xf32> to vector<1x1x94xf32>
    %395 = vector.broadcast %394 : vector<1x1x94xf32> to vector<1x16x94xf32>
    %396 = arith.mulf %391, %395 : vector<1x16x94xf32>
    %397 = arith.addf %390, %396 : vector<1x16x94xf32>
    %c1_301 = arith.constant 1 : index
    %c7_302 = arith.constant 7 : index
    %c10_303 = arith.constant 10 : index
    %398 = vector.load %arg7[%c1_301, %c7_302, %c10_303] : memref<2x36x114xf32, #tpu.memory_space<vmem>>, vector<1x16x94xf32>
    %c73 = arith.constant 73 : index
    %c0_304 = arith.constant 0 : index
    %c0_305 = arith.constant 0 : index
    %399 = vector.load %arg2[%c73, %c0_304, %c0_305] : memref<103x1x94xf32, #tpu.memory_space<vmem>>, vector<1x1x94xf32>
    %400 = vector.shape_cast %399 : vector<1x1x94xf32> to vector<1x94xf32>
    %401 = vector.shape_cast %400 : vector<1x94xf32> to vector<1x1x94xf32>
    %402 = vector.broadcast %401 : vector<1x1x94xf32> to vector<1x16x94xf32>
    %403 = arith.mulf %398, %402 : vector<1x16x94xf32>
    %404 = arith.addf %397, %403 : vector<1x16x94xf32>
    %c1_306 = arith.constant 1 : index
    %c8_307 = arith.constant 8 : index
    %c10_308 = arith.constant 10 : index
    %405 = vector.load %arg7[%c1_306, %c8_307, %c10_308] : memref<2x36x114xf32, #tpu.memory_space<vmem>>, vector<1x16x94xf32>
    %c74 = arith.constant 74 : index
    %c0_309 = arith.constant 0 : index
    %c0_310 = arith.constant 0 : index
    %406 = vector.load %arg2[%c74, %c0_309, %c0_310] : memref<103x1x94xf32, #tpu.memory_space<vmem>>, vector<1x1x94xf32>
    %407 = vector.shape_cast %406 : vector<1x1x94xf32> to vector<1x94xf32>
    %408 = vector.shape_cast %407 : vector<1x94xf32> to vector<1x1x94xf32>
    %409 = vector.broadcast %408 : vector<1x1x94xf32> to vector<1x16x94xf32>
    %410 = arith.mulf %405, %409 : vector<1x16x94xf32>
    %411 = arith.addf %404, %410 : vector<1x16x94xf32>
    %c1_311 = arith.constant 1 : index
    %c9_312 = arith.constant 9 : index
    %c10_313 = arith.constant 10 : index
    %412 = vector.load %arg7[%c1_311, %c9_312, %c10_313] : memref<2x36x114xf32, #tpu.memory_space<vmem>>, vector<1x16x94xf32>
    %c75 = arith.constant 75 : index
    %c0_314 = arith.constant 0 : index
    %c0_315 = arith.constant 0 : index
    %413 = vector.load %arg2[%c75, %c0_314, %c0_315] : memref<103x1x94xf32, #tpu.memory_space<vmem>>, vector<1x1x94xf32>
    %414 = vector.shape_cast %413 : vector<1x1x94xf32> to vector<1x94xf32>
    %415 = vector.shape_cast %414 : vector<1x94xf32> to vector<1x1x94xf32>
    %416 = vector.broadcast %415 : vector<1x1x94xf32> to vector<1x16x94xf32>
    %417 = arith.mulf %412, %416 : vector<1x16x94xf32>
    %418 = arith.addf %411, %417 : vector<1x16x94xf32>
    %c1_316 = arith.constant 1 : index
    %c10_317 = arith.constant 10 : index
    %c10_318 = arith.constant 10 : index
    %419 = vector.load %arg7[%c1_316, %c10_317, %c10_318] : memref<2x36x114xf32, #tpu.memory_space<vmem>>, vector<1x16x94xf32>
    %c76 = arith.constant 76 : index
    %c0_319 = arith.constant 0 : index
    %c0_320 = arith.constant 0 : index
    %420 = vector.load %arg2[%c76, %c0_319, %c0_320] : memref<103x1x94xf32, #tpu.memory_space<vmem>>, vector<1x1x94xf32>
    %421 = vector.shape_cast %420 : vector<1x1x94xf32> to vector<1x94xf32>
    %422 = vector.shape_cast %421 : vector<1x94xf32> to vector<1x1x94xf32>
    %423 = vector.broadcast %422 : vector<1x1x94xf32> to vector<1x16x94xf32>
    %424 = arith.mulf %419, %423 : vector<1x16x94xf32>
    %425 = arith.addf %418, %424 : vector<1x16x94xf32>
    %c1_321 = arith.constant 1 : index
    %c11_322 = arith.constant 11 : index
    %c10_323 = arith.constant 10 : index
    %426 = vector.load %arg7[%c1_321, %c11_322, %c10_323] : memref<2x36x114xf32, #tpu.memory_space<vmem>>, vector<1x16x94xf32>
    %c77 = arith.constant 77 : index
    %c0_324 = arith.constant 0 : index
    %c0_325 = arith.constant 0 : index
    %427 = vector.load %arg2[%c77, %c0_324, %c0_325] : memref<103x1x94xf32, #tpu.memory_space<vmem>>, vector<1x1x94xf32>
    %428 = vector.shape_cast %427 : vector<1x1x94xf32> to vector<1x94xf32>
    %429 = vector.shape_cast %428 : vector<1x94xf32> to vector<1x1x94xf32>
    %430 = vector.broadcast %429 : vector<1x1x94xf32> to vector<1x16x94xf32>
    %431 = arith.mulf %426, %430 : vector<1x16x94xf32>
    %432 = arith.addf %425, %431 : vector<1x16x94xf32>
    %c1_326 = arith.constant 1 : index
    %c12_327 = arith.constant 12 : index
    %c10_328 = arith.constant 10 : index
    %433 = vector.load %arg7[%c1_326, %c12_327, %c10_328] : memref<2x36x114xf32, #tpu.memory_space<vmem>>, vector<1x16x94xf32>
    %c78 = arith.constant 78 : index
    %c0_329 = arith.constant 0 : index
    %c0_330 = arith.constant 0 : index
    %434 = vector.load %arg2[%c78, %c0_329, %c0_330] : memref<103x1x94xf32, #tpu.memory_space<vmem>>, vector<1x1x94xf32>
    %435 = vector.shape_cast %434 : vector<1x1x94xf32> to vector<1x94xf32>
    %436 = vector.shape_cast %435 : vector<1x94xf32> to vector<1x1x94xf32>
    %437 = vector.broadcast %436 : vector<1x1x94xf32> to vector<1x16x94xf32>
    %438 = arith.mulf %433, %437 : vector<1x16x94xf32>
    %439 = arith.addf %432, %438 : vector<1x16x94xf32>
    %c1_331 = arith.constant 1 : index
    %c13_332 = arith.constant 13 : index
    %c10_333 = arith.constant 10 : index
    %440 = vector.load %arg7[%c1_331, %c13_332, %c10_333] : memref<2x36x114xf32, #tpu.memory_space<vmem>>, vector<1x16x94xf32>
    %c79 = arith.constant 79 : index
    %c0_334 = arith.constant 0 : index
    %c0_335 = arith.constant 0 : index
    %441 = vector.load %arg2[%c79, %c0_334, %c0_335] : memref<103x1x94xf32, #tpu.memory_space<vmem>>, vector<1x1x94xf32>
    %442 = vector.shape_cast %441 : vector<1x1x94xf32> to vector<1x94xf32>
    %443 = vector.shape_cast %442 : vector<1x94xf32> to vector<1x1x94xf32>
    %444 = vector.broadcast %443 : vector<1x1x94xf32> to vector<1x16x94xf32>
    %445 = arith.mulf %440, %444 : vector<1x16x94xf32>
    %446 = arith.addf %439, %445 : vector<1x16x94xf32>
    %c1_336 = arith.constant 1 : index
    %c14_337 = arith.constant 14 : index
    %c10_338 = arith.constant 10 : index
    %447 = vector.load %arg7[%c1_336, %c14_337, %c10_338] : memref<2x36x114xf32, #tpu.memory_space<vmem>>, vector<1x16x94xf32>
    %c80 = arith.constant 80 : index
    %c0_339 = arith.constant 0 : index
    %c0_340 = arith.constant 0 : index
    %448 = vector.load %arg2[%c80, %c0_339, %c0_340] : memref<103x1x94xf32, #tpu.memory_space<vmem>>, vector<1x1x94xf32>
    %449 = vector.shape_cast %448 : vector<1x1x94xf32> to vector<1x94xf32>
    %450 = vector.shape_cast %449 : vector<1x94xf32> to vector<1x1x94xf32>
    %451 = vector.broadcast %450 : vector<1x1x94xf32> to vector<1x16x94xf32>
    %452 = arith.mulf %447, %451 : vector<1x16x94xf32>
    %453 = arith.addf %446, %452 : vector<1x16x94xf32>
    %c1_341 = arith.constant 1 : index
    %c15_342 = arith.constant 15 : index
    %c10_343 = arith.constant 10 : index
    %454 = vector.load %arg7[%c1_341, %c15_342, %c10_343] : memref<2x36x114xf32, #tpu.memory_space<vmem>>, vector<1x16x94xf32>
    %c81 = arith.constant 81 : index
    %c0_344 = arith.constant 0 : index
    %c0_345 = arith.constant 0 : index
    %455 = vector.load %arg2[%c81, %c0_344, %c0_345] : memref<103x1x94xf32, #tpu.memory_space<vmem>>, vector<1x1x94xf32>
    %456 = vector.shape_cast %455 : vector<1x1x94xf32> to vector<1x94xf32>
    %457 = vector.shape_cast %456 : vector<1x94xf32> to vector<1x1x94xf32>
    %458 = vector.broadcast %457 : vector<1x1x94xf32> to vector<1x16x94xf32>
    %459 = arith.mulf %454, %458 : vector<1x16x94xf32>
    %460 = arith.addf %453, %459 : vector<1x16x94xf32>
    %c0_346 = arith.constant 0 : index
    %c10_347 = arith.constant 10 : index
    %c0_348 = arith.constant 0 : index
    %461 = vector.load %arg7[%c0_346, %c10_347, %c0_348] : memref<2x36x114xf32, #tpu.memory_space<vmem>>, vector<1x16x94xf32>
    %c43 = arith.constant 43 : index
    %c0_349 = arith.constant 0 : index
    %c0_350 = arith.constant 0 : index
    %462 = vector.load %arg2[%c43, %c0_349, %c0_350] : memref<103x1x94xf32, #tpu.memory_space<vmem>>, vector<1x1x94xf32>
    %463 = vector.shape_cast %462 : vector<1x1x94xf32> to vector<1x94xf32>
    %464 = vector.shape_cast %463 : vector<1x94xf32> to vector<1x1x94xf32>
    %465 = vector.broadcast %464 : vector<1x1x94xf32> to vector<1x16x94xf32>
    %466 = arith.mulf %461, %465 : vector<1x16x94xf32>
    %c3_351 = arith.constant 3 : index
    %c0_352 = arith.constant 0 : index
    %c0_353 = arith.constant 0 : index
    %467 = vector.load %arg3[%c3_351, %c0_352, %c0_353] : memref<7x1x94xf32, #tpu.memory_space<vmem>>, vector<1x1x94xf32>
    %468 = vector.shape_cast %467 : vector<1x1x94xf32> to vector<1x94xf32>
    %469 = vector.shape_cast %468 : vector<1x94xf32> to vector<1x1x94xf32>
    %470 = vector.broadcast %469 : vector<1x1x94xf32> to vector<1x16x94xf32>
    %471 = arith.addf %466, %470 : vector<1x16x94xf32>
    %c0_354 = arith.constant 0 : index
    %c10_355 = arith.constant 10 : index
    %c1_356 = arith.constant 1 : index
    %472 = vector.load %arg7[%c0_354, %c10_355, %c1_356] : memref<2x36x114xf32, #tpu.memory_space<vmem>>, vector<1x16x94xf32>
    %c44 = arith.constant 44 : index
    %c0_357 = arith.constant 0 : index
    %c0_358 = arith.constant 0 : index
    %473 = vector.load %arg2[%c44, %c0_357, %c0_358] : memref<103x1x94xf32, #tpu.memory_space<vmem>>, vector<1x1x94xf32>
    %474 = vector.shape_cast %473 : vector<1x1x94xf32> to vector<1x94xf32>
    %475 = vector.shape_cast %474 : vector<1x94xf32> to vector<1x1x94xf32>
    %476 = vector.broadcast %475 : vector<1x1x94xf32> to vector<1x16x94xf32>
    %477 = arith.mulf %472, %476 : vector<1x16x94xf32>
    %478 = arith.addf %471, %477 : vector<1x16x94xf32>
    %c0_359 = arith.constant 0 : index
    %c10_360 = arith.constant 10 : index
    %c2_361 = arith.constant 2 : index
    %479 = vector.load %arg7[%c0_359, %c10_360, %c2_361] : memref<2x36x114xf32, #tpu.memory_space<vmem>>, vector<1x16x94xf32>
    %c45 = arith.constant 45 : index
    %c0_362 = arith.constant 0 : index
    %c0_363 = arith.constant 0 : index
    %480 = vector.load %arg2[%c45, %c0_362, %c0_363] : memref<103x1x94xf32, #tpu.memory_space<vmem>>, vector<1x1x94xf32>
    %481 = vector.shape_cast %480 : vector<1x1x94xf32> to vector<1x94xf32>
    %482 = vector.shape_cast %481 : vector<1x94xf32> to vector<1x1x94xf32>
    %483 = vector.broadcast %482 : vector<1x1x94xf32> to vector<1x16x94xf32>
    %484 = arith.mulf %479, %483 : vector<1x16x94xf32>
    %485 = arith.addf %478, %484 : vector<1x16x94xf32>
    %c0_364 = arith.constant 0 : index
    %c10_365 = arith.constant 10 : index
    %c3_366 = arith.constant 3 : index
    %486 = vector.load %arg7[%c0_364, %c10_365, %c3_366] : memref<2x36x114xf32, #tpu.memory_space<vmem>>, vector<1x16x94xf32>
    %c46 = arith.constant 46 : index
    %c0_367 = arith.constant 0 : index
    %c0_368 = arith.constant 0 : index
    %487 = vector.load %arg2[%c46, %c0_367, %c0_368] : memref<103x1x94xf32, #tpu.memory_space<vmem>>, vector<1x1x94xf32>
    %488 = vector.shape_cast %487 : vector<1x1x94xf32> to vector<1x94xf32>
    %489 = vector.shape_cast %488 : vector<1x94xf32> to vector<1x1x94xf32>
    %490 = vector.broadcast %489 : vector<1x1x94xf32> to vector<1x16x94xf32>
    %491 = arith.mulf %486, %490 : vector<1x16x94xf32>
    %492 = arith.addf %485, %491 : vector<1x16x94xf32>
    %c0_369 = arith.constant 0 : index
    %c10_370 = arith.constant 10 : index
    %c4_371 = arith.constant 4 : index
    %493 = vector.load %arg7[%c0_369, %c10_370, %c4_371] : memref<2x36x114xf32, #tpu.memory_space<vmem>>, vector<1x16x94xf32>
    %c47 = arith.constant 47 : index
    %c0_372 = arith.constant 0 : index
    %c0_373 = arith.constant 0 : index
    %494 = vector.load %arg2[%c47, %c0_372, %c0_373] : memref<103x1x94xf32, #tpu.memory_space<vmem>>, vector<1x1x94xf32>
    %495 = vector.shape_cast %494 : vector<1x1x94xf32> to vector<1x94xf32>
    %496 = vector.shape_cast %495 : vector<1x94xf32> to vector<1x1x94xf32>
    %497 = vector.broadcast %496 : vector<1x1x94xf32> to vector<1x16x94xf32>
    %498 = arith.mulf %493, %497 : vector<1x16x94xf32>
    %499 = arith.addf %492, %498 : vector<1x16x94xf32>
    %c0_374 = arith.constant 0 : index
    %c10_375 = arith.constant 10 : index
    %c5_376 = arith.constant 5 : index
    %500 = vector.load %arg7[%c0_374, %c10_375, %c5_376] : memref<2x36x114xf32, #tpu.memory_space<vmem>>, vector<1x16x94xf32>
    %c48 = arith.constant 48 : index
    %c0_377 = arith.constant 0 : index
    %c0_378 = arith.constant 0 : index
    %501 = vector.load %arg2[%c48, %c0_377, %c0_378] : memref<103x1x94xf32, #tpu.memory_space<vmem>>, vector<1x1x94xf32>
    %502 = vector.shape_cast %501 : vector<1x1x94xf32> to vector<1x94xf32>
    %503 = vector.shape_cast %502 : vector<1x94xf32> to vector<1x1x94xf32>
    %504 = vector.broadcast %503 : vector<1x1x94xf32> to vector<1x16x94xf32>
    %505 = arith.mulf %500, %504 : vector<1x16x94xf32>
    %506 = arith.addf %499, %505 : vector<1x16x94xf32>
    %c0_379 = arith.constant 0 : index
    %c10_380 = arith.constant 10 : index
    %c6_381 = arith.constant 6 : index
    %507 = vector.load %arg7[%c0_379, %c10_380, %c6_381] : memref<2x36x114xf32, #tpu.memory_space<vmem>>, vector<1x16x94xf32>
    %c49 = arith.constant 49 : index
    %c0_382 = arith.constant 0 : index
    %c0_383 = arith.constant 0 : index
    %508 = vector.load %arg2[%c49, %c0_382, %c0_383] : memref<103x1x94xf32, #tpu.memory_space<vmem>>, vector<1x1x94xf32>
    %509 = vector.shape_cast %508 : vector<1x1x94xf32> to vector<1x94xf32>
    %510 = vector.shape_cast %509 : vector<1x94xf32> to vector<1x1x94xf32>
    %511 = vector.broadcast %510 : vector<1x1x94xf32> to vector<1x16x94xf32>
    %512 = arith.mulf %507, %511 : vector<1x16x94xf32>
    %513 = arith.addf %506, %512 : vector<1x16x94xf32>
    %c0_384 = arith.constant 0 : index
    %c10_385 = arith.constant 10 : index
    %c7_386 = arith.constant 7 : index
    %514 = vector.load %arg7[%c0_384, %c10_385, %c7_386] : memref<2x36x114xf32, #tpu.memory_space<vmem>>, vector<1x16x94xf32>
    %c50 = arith.constant 50 : index
    %c0_387 = arith.constant 0 : index
    %c0_388 = arith.constant 0 : index
    %515 = vector.load %arg2[%c50, %c0_387, %c0_388] : memref<103x1x94xf32, #tpu.memory_space<vmem>>, vector<1x1x94xf32>
    %516 = vector.shape_cast %515 : vector<1x1x94xf32> to vector<1x94xf32>
    %517 = vector.shape_cast %516 : vector<1x94xf32> to vector<1x1x94xf32>
    %518 = vector.broadcast %517 : vector<1x1x94xf32> to vector<1x16x94xf32>
    %519 = arith.mulf %514, %518 : vector<1x16x94xf32>
    %520 = arith.addf %513, %519 : vector<1x16x94xf32>
    %c0_389 = arith.constant 0 : index
    %c10_390 = arith.constant 10 : index
    %c8_391 = arith.constant 8 : index
    %521 = vector.load %arg7[%c0_389, %c10_390, %c8_391] : memref<2x36x114xf32, #tpu.memory_space<vmem>>, vector<1x16x94xf32>
    %c51 = arith.constant 51 : index
    %c0_392 = arith.constant 0 : index
    %c0_393 = arith.constant 0 : index
    %522 = vector.load %arg2[%c51, %c0_392, %c0_393] : memref<103x1x94xf32, #tpu.memory_space<vmem>>, vector<1x1x94xf32>
    %523 = vector.shape_cast %522 : vector<1x1x94xf32> to vector<1x94xf32>
    %524 = vector.shape_cast %523 : vector<1x94xf32> to vector<1x1x94xf32>
    %525 = vector.broadcast %524 : vector<1x1x94xf32> to vector<1x16x94xf32>
    %526 = arith.mulf %521, %525 : vector<1x16x94xf32>
    %527 = arith.addf %520, %526 : vector<1x16x94xf32>
    %c0_394 = arith.constant 0 : index
    %c10_395 = arith.constant 10 : index
    %c9_396 = arith.constant 9 : index
    %528 = vector.load %arg7[%c0_394, %c10_395, %c9_396] : memref<2x36x114xf32, #tpu.memory_space<vmem>>, vector<1x16x94xf32>
    %c52 = arith.constant 52 : index
    %c0_397 = arith.constant 0 : index
    %c0_398 = arith.constant 0 : index
    %529 = vector.load %arg2[%c52, %c0_397, %c0_398] : memref<103x1x94xf32, #tpu.memory_space<vmem>>, vector<1x1x94xf32>
    %530 = vector.shape_cast %529 : vector<1x1x94xf32> to vector<1x94xf32>
    %531 = vector.shape_cast %530 : vector<1x94xf32> to vector<1x1x94xf32>
    %532 = vector.broadcast %531 : vector<1x1x94xf32> to vector<1x16x94xf32>
    %533 = arith.mulf %528, %532 : vector<1x16x94xf32>
    %534 = arith.addf %527, %533 : vector<1x16x94xf32>
    %c0_399 = arith.constant 0 : index
    %c10_400 = arith.constant 10 : index
    %c10_401 = arith.constant 10 : index
    %535 = vector.load %arg7[%c0_399, %c10_400, %c10_401] : memref<2x36x114xf32, #tpu.memory_space<vmem>>, vector<1x16x94xf32>
    %c53 = arith.constant 53 : index
    %c0_402 = arith.constant 0 : index
    %c0_403 = arith.constant 0 : index
    %536 = vector.load %arg2[%c53, %c0_402, %c0_403] : memref<103x1x94xf32, #tpu.memory_space<vmem>>, vector<1x1x94xf32>
    %537 = vector.shape_cast %536 : vector<1x1x94xf32> to vector<1x94xf32>
    %538 = vector.shape_cast %537 : vector<1x94xf32> to vector<1x1x94xf32>
    %539 = vector.broadcast %538 : vector<1x1x94xf32> to vector<1x16x94xf32>
    %540 = arith.mulf %535, %539 : vector<1x16x94xf32>
    %541 = arith.addf %534, %540 : vector<1x16x94xf32>
    %c0_404 = arith.constant 0 : index
    %c10_405 = arith.constant 10 : index
    %c11_406 = arith.constant 11 : index
    %542 = vector.load %arg7[%c0_404, %c10_405, %c11_406] : memref<2x36x114xf32, #tpu.memory_space<vmem>>, vector<1x16x94xf32>
    %c54 = arith.constant 54 : index
    %c0_407 = arith.constant 0 : index
    %c0_408 = arith.constant 0 : index
    %543 = vector.load %arg2[%c54, %c0_407, %c0_408] : memref<103x1x94xf32, #tpu.memory_space<vmem>>, vector<1x1x94xf32>
    %544 = vector.shape_cast %543 : vector<1x1x94xf32> to vector<1x94xf32>
    %545 = vector.shape_cast %544 : vector<1x94xf32> to vector<1x1x94xf32>
    %546 = vector.broadcast %545 : vector<1x1x94xf32> to vector<1x16x94xf32>
    %547 = arith.mulf %542, %546 : vector<1x16x94xf32>
    %548 = arith.addf %541, %547 : vector<1x16x94xf32>
    %c0_409 = arith.constant 0 : index
    %c10_410 = arith.constant 10 : index
    %c12_411 = arith.constant 12 : index
    %549 = vector.load %arg7[%c0_409, %c10_410, %c12_411] : memref<2x36x114xf32, #tpu.memory_space<vmem>>, vector<1x16x94xf32>
    %c55 = arith.constant 55 : index
    %c0_412 = arith.constant 0 : index
    %c0_413 = arith.constant 0 : index
    %550 = vector.load %arg2[%c55, %c0_412, %c0_413] : memref<103x1x94xf32, #tpu.memory_space<vmem>>, vector<1x1x94xf32>
    %551 = vector.shape_cast %550 : vector<1x1x94xf32> to vector<1x94xf32>
    %552 = vector.shape_cast %551 : vector<1x94xf32> to vector<1x1x94xf32>
    %553 = vector.broadcast %552 : vector<1x1x94xf32> to vector<1x16x94xf32>
    %554 = arith.mulf %549, %553 : vector<1x16x94xf32>
    %555 = arith.addf %548, %554 : vector<1x16x94xf32>
    %c0_414 = arith.constant 0 : index
    %c10_415 = arith.constant 10 : index
    %c13_416 = arith.constant 13 : index
    %556 = vector.load %arg7[%c0_414, %c10_415, %c13_416] : memref<2x36x114xf32, #tpu.memory_space<vmem>>, vector<1x16x94xf32>
    %c56 = arith.constant 56 : index
    %c0_417 = arith.constant 0 : index
    %c0_418 = arith.constant 0 : index
    %557 = vector.load %arg2[%c56, %c0_417, %c0_418] : memref<103x1x94xf32, #tpu.memory_space<vmem>>, vector<1x1x94xf32>
    %558 = vector.shape_cast %557 : vector<1x1x94xf32> to vector<1x94xf32>
    %559 = vector.shape_cast %558 : vector<1x94xf32> to vector<1x1x94xf32>
    %560 = vector.broadcast %559 : vector<1x1x94xf32> to vector<1x16x94xf32>
    %561 = arith.mulf %556, %560 : vector<1x16x94xf32>
    %562 = arith.addf %555, %561 : vector<1x16x94xf32>
    %c0_419 = arith.constant 0 : index
    %c10_420 = arith.constant 10 : index
    %c14_421 = arith.constant 14 : index
    %563 = vector.load %arg7[%c0_419, %c10_420, %c14_421] : memref<2x36x114xf32, #tpu.memory_space<vmem>>, vector<1x16x94xf32>
    %c57 = arith.constant 57 : index
    %c0_422 = arith.constant 0 : index
    %c0_423 = arith.constant 0 : index
    %564 = vector.load %arg2[%c57, %c0_422, %c0_423] : memref<103x1x94xf32, #tpu.memory_space<vmem>>, vector<1x1x94xf32>
    %565 = vector.shape_cast %564 : vector<1x1x94xf32> to vector<1x94xf32>
    %566 = vector.shape_cast %565 : vector<1x94xf32> to vector<1x1x94xf32>
    %567 = vector.broadcast %566 : vector<1x1x94xf32> to vector<1x16x94xf32>
    %568 = arith.mulf %563, %567 : vector<1x16x94xf32>
    %569 = arith.addf %562, %568 : vector<1x16x94xf32>
    %c0_424 = arith.constant 0 : index
    %c10_425 = arith.constant 10 : index
    %c15_426 = arith.constant 15 : index
    %570 = vector.load %arg7[%c0_424, %c10_425, %c15_426] : memref<2x36x114xf32, #tpu.memory_space<vmem>>, vector<1x16x94xf32>
    %c58 = arith.constant 58 : index
    %c0_427 = arith.constant 0 : index
    %c0_428 = arith.constant 0 : index
    %571 = vector.load %arg2[%c58, %c0_427, %c0_428] : memref<103x1x94xf32, #tpu.memory_space<vmem>>, vector<1x1x94xf32>
    %572 = vector.shape_cast %571 : vector<1x1x94xf32> to vector<1x94xf32>
    %573 = vector.shape_cast %572 : vector<1x94xf32> to vector<1x1x94xf32>
    %574 = vector.broadcast %573 : vector<1x1x94xf32> to vector<1x16x94xf32>
    %575 = arith.mulf %570, %574 : vector<1x16x94xf32>
    %576 = arith.addf %569, %575 : vector<1x16x94xf32>
    %c0_429 = arith.constant 0 : index
    %c10_430 = arith.constant 10 : index
    %c16_431 = arith.constant 16 : index
    %577 = vector.load %arg7[%c0_429, %c10_430, %c16_431] : memref<2x36x114xf32, #tpu.memory_space<vmem>>, vector<1x16x94xf32>
    %c59 = arith.constant 59 : index
    %c0_432 = arith.constant 0 : index
    %c0_433 = arith.constant 0 : index
    %578 = vector.load %arg2[%c59, %c0_432, %c0_433] : memref<103x1x94xf32, #tpu.memory_space<vmem>>, vector<1x1x94xf32>
    %579 = vector.shape_cast %578 : vector<1x1x94xf32> to vector<1x94xf32>
    %580 = vector.shape_cast %579 : vector<1x94xf32> to vector<1x1x94xf32>
    %581 = vector.broadcast %580 : vector<1x1x94xf32> to vector<1x16x94xf32>
    %582 = arith.mulf %577, %581 : vector<1x16x94xf32>
    %583 = arith.addf %576, %582 : vector<1x16x94xf32>
    %c0_434 = arith.constant 0 : index
    %c10_435 = arith.constant 10 : index
    %c17_436 = arith.constant 17 : index
    %584 = vector.load %arg7[%c0_434, %c10_435, %c17_436] : memref<2x36x114xf32, #tpu.memory_space<vmem>>, vector<1x16x94xf32>
    %c60 = arith.constant 60 : index
    %c0_437 = arith.constant 0 : index
    %c0_438 = arith.constant 0 : index
    %585 = vector.load %arg2[%c60, %c0_437, %c0_438] : memref<103x1x94xf32, #tpu.memory_space<vmem>>, vector<1x1x94xf32>
    %586 = vector.shape_cast %585 : vector<1x1x94xf32> to vector<1x94xf32>
    %587 = vector.shape_cast %586 : vector<1x94xf32> to vector<1x1x94xf32>
    %588 = vector.broadcast %587 : vector<1x1x94xf32> to vector<1x16x94xf32>
    %589 = arith.mulf %584, %588 : vector<1x16x94xf32>
    %590 = arith.addf %583, %589 : vector<1x16x94xf32>
    %c0_439 = arith.constant 0 : index
    %c10_440 = arith.constant 10 : index
    %c18_441 = arith.constant 18 : index
    %591 = vector.load %arg7[%c0_439, %c10_440, %c18_441] : memref<2x36x114xf32, #tpu.memory_space<vmem>>, vector<1x16x94xf32>
    %c61 = arith.constant 61 : index
    %c0_442 = arith.constant 0 : index
    %c0_443 = arith.constant 0 : index
    %592 = vector.load %arg2[%c61, %c0_442, %c0_443] : memref<103x1x94xf32, #tpu.memory_space<vmem>>, vector<1x1x94xf32>
    %593 = vector.shape_cast %592 : vector<1x1x94xf32> to vector<1x94xf32>
    %594 = vector.shape_cast %593 : vector<1x94xf32> to vector<1x1x94xf32>
    %595 = vector.broadcast %594 : vector<1x1x94xf32> to vector<1x16x94xf32>
    %596 = arith.mulf %591, %595 : vector<1x16x94xf32>
    %597 = arith.addf %590, %596 : vector<1x16x94xf32>
    %c0_444 = arith.constant 0 : index
    %c10_445 = arith.constant 10 : index
    %c19_446 = arith.constant 19 : index
    %598 = vector.load %arg7[%c0_444, %c10_445, %c19_446] : memref<2x36x114xf32, #tpu.memory_space<vmem>>, vector<1x16x94xf32>
    %c62 = arith.constant 62 : index
    %c0_447 = arith.constant 0 : index
    %c0_448 = arith.constant 0 : index
    %599 = vector.load %arg2[%c62, %c0_447, %c0_448] : memref<103x1x94xf32, #tpu.memory_space<vmem>>, vector<1x1x94xf32>
    %600 = vector.shape_cast %599 : vector<1x1x94xf32> to vector<1x94xf32>
    %601 = vector.shape_cast %600 : vector<1x94xf32> to vector<1x1x94xf32>
    %602 = vector.broadcast %601 : vector<1x1x94xf32> to vector<1x16x94xf32>
    %603 = arith.mulf %598, %602 : vector<1x16x94xf32>
    %604 = arith.addf %597, %603 : vector<1x16x94xf32>
    %c0_449 = arith.constant 0 : index
    %c10_450 = arith.constant 10 : index
    %c20_451 = arith.constant 20 : index
    %605 = vector.load %arg7[%c0_449, %c10_450, %c20_451] : memref<2x36x114xf32, #tpu.memory_space<vmem>>, vector<1x16x94xf32>
    %c63 = arith.constant 63 : index
    %c0_452 = arith.constant 0 : index
    %c0_453 = arith.constant 0 : index
    %606 = vector.load %arg2[%c63, %c0_452, %c0_453] : memref<103x1x94xf32, #tpu.memory_space<vmem>>, vector<1x1x94xf32>
    %607 = vector.shape_cast %606 : vector<1x1x94xf32> to vector<1x94xf32>
    %608 = vector.shape_cast %607 : vector<1x94xf32> to vector<1x1x94xf32>
    %609 = vector.broadcast %608 : vector<1x1x94xf32> to vector<1x16x94xf32>
    %610 = arith.mulf %605, %609 : vector<1x16x94xf32>
    %611 = arith.addf %604, %610 : vector<1x16x94xf32>
    %c1_454 = arith.constant 1 : index
    %c10_455 = arith.constant 10 : index
    %c10_456 = arith.constant 10 : index
    %612 = vector.load %arg7[%c1_454, %c10_455, %c10_456] : memref<2x36x114xf32, #tpu.memory_space<vmem>>, vector<1x16x94xf32>
    tpu.vector_store %arg7[%c1_454, %c10_455, %c10_456], %611 {strides = array<i32>} : memref<2x36x114xf32, #tpu.memory_space<vmem>>, vector<1x16x94xf32>,
    %c1_457 = arith.constant 1 : index
    %c0_458 = arith.constant 0 : index
    %c10_459 = arith.constant 10 : index
    %613 = vector.load %arg7[%c1_457, %c0_458, %c10_459] : memref<2x36x114xf32, #tpu.memory_space<vmem>>, vector<1x16x94xf32>
    %c82 = arith.constant 82 : index
    %c0_460 = arith.constant 0 : index
    %c0_461 = arith.constant 0 : index
    %614 = vector.load %arg2[%c82, %c0_460, %c0_461] : memref<103x1x94xf32, #tpu.memory_space<vmem>>, vector<1x1x94xf32>
    %615 = vector.shape_cast %614 : vector<1x1x94xf32> to vector<1x94xf32>
    %616 = vector.shape_cast %615 : vector<1x94xf32> to vector<1x1x94xf32>
    %617 = vector.broadcast %616 : vector<1x1x94xf32> to vector<1x16x94xf32>
    %618 = arith.mulf %613, %617 : vector<1x16x94xf32>
    %619 = arith.addf %460, %618 : vector<1x16x94xf32>
    %c1_462 = arith.constant 1 : index
    %c1_463 = arith.constant 1 : index
    %c10_464 = arith.constant 10 : index
    %620 = vector.load %arg7[%c1_462, %c1_463, %c10_464] : memref<2x36x114xf32, #tpu.memory_space<vmem>>, vector<1x16x94xf32>
    %c83 = arith.constant 83 : index
    %c0_465 = arith.constant 0 : index
    %c0_466 = arith.constant 0 : index
    %621 = vector.load %arg2[%c83, %c0_465, %c0_466] : memref<103x1x94xf32, #tpu.memory_space<vmem>>, vector<1x1x94xf32>
    %622 = vector.shape_cast %621 : vector<1x1x94xf32> to vector<1x94xf32>
    %623 = vector.shape_cast %622 : vector<1x94xf32> to vector<1x1x94xf32>
    %624 = vector.broadcast %623 : vector<1x1x94xf32> to vector<1x16x94xf32>
    %625 = arith.mulf %620, %624 : vector<1x16x94xf32>
    %626 = arith.addf %619, %625 : vector<1x16x94xf32>
    %c1_467 = arith.constant 1 : index
    %c2_468 = arith.constant 2 : index
    %c10_469 = arith.constant 10 : index
    %627 = vector.load %arg7[%c1_467, %c2_468, %c10_469] : memref<2x36x114xf32, #tpu.memory_space<vmem>>, vector<1x16x94xf32>
    %c84 = arith.constant 84 : index
    %c0_470 = arith.constant 0 : index
    %c0_471 = arith.constant 0 : index
    %628 = vector.load %arg2[%c84, %c0_470, %c0_471] : memref<103x1x94xf32, #tpu.memory_space<vmem>>, vector<1x1x94xf32>
    %629 = vector.shape_cast %628 : vector<1x1x94xf32> to vector<1x94xf32>
    %630 = vector.shape_cast %629 : vector<1x94xf32> to vector<1x1x94xf32>
    %631 = vector.broadcast %630 : vector<1x1x94xf32> to vector<1x16x94xf32>
    %632 = arith.mulf %627, %631 : vector<1x16x94xf32>
    %633 = arith.addf %626, %632 : vector<1x16x94xf32>
    %c1_472 = arith.constant 1 : index
    %c3_473 = arith.constant 3 : index
    %c10_474 = arith.constant 10 : index
    %634 = vector.load %arg7[%c1_472, %c3_473, %c10_474] : memref<2x36x114xf32, #tpu.memory_space<vmem>>, vector<1x16x94xf32>
    %c85 = arith.constant 85 : index
    %c0_475 = arith.constant 0 : index
    %c0_476 = arith.constant 0 : index
    %635 = vector.load %arg2[%c85, %c0_475, %c0_476] : memref<103x1x94xf32, #tpu.memory_space<vmem>>, vector<1x1x94xf32>
    %636 = vector.shape_cast %635 : vector<1x1x94xf32> to vector<1x94xf32>
    %637 = vector.shape_cast %636 : vector<1x94xf32> to vector<1x1x94xf32>
    %638 = vector.broadcast %637 : vector<1x1x94xf32> to vector<1x16x94xf32>
    %639 = arith.mulf %634, %638 : vector<1x16x94xf32>
    %640 = arith.addf %633, %639 : vector<1x16x94xf32>
    %c1_477 = arith.constant 1 : index
    %c4_478 = arith.constant 4 : index
    %c10_479 = arith.constant 10 : index
    %641 = vector.load %arg7[%c1_477, %c4_478, %c10_479] : memref<2x36x114xf32, #tpu.memory_space<vmem>>, vector<1x16x94xf32>
    %c86 = arith.constant 86 : index
    %c0_480 = arith.constant 0 : index
    %c0_481 = arith.constant 0 : index
    %642 = vector.load %arg2[%c86, %c0_480, %c0_481] : memref<103x1x94xf32, #tpu.memory_space<vmem>>, vector<1x1x94xf32>
    %643 = vector.shape_cast %642 : vector<1x1x94xf32> to vector<1x94xf32>
    %644 = vector.shape_cast %643 : vector<1x94xf32> to vector<1x1x94xf32>
    %645 = vector.broadcast %644 : vector<1x1x94xf32> to vector<1x16x94xf32>
    %646 = arith.mulf %641, %645 : vector<1x16x94xf32>
    %647 = arith.addf %640, %646 : vector<1x16x94xf32>
    %c1_482 = arith.constant 1 : index
    %c5_483 = arith.constant 5 : index
    %c10_484 = arith.constant 10 : index
    %648 = vector.load %arg7[%c1_482, %c5_483, %c10_484] : memref<2x36x114xf32, #tpu.memory_space<vmem>>, vector<1x16x94xf32>
    %c87 = arith.constant 87 : index
    %c0_485 = arith.constant 0 : index
    %c0_486 = arith.constant 0 : index
    %649 = vector.load %arg2[%c87, %c0_485, %c0_486] : memref<103x1x94xf32, #tpu.memory_space<vmem>>, vector<1x1x94xf32>
    %650 = vector.shape_cast %649 : vector<1x1x94xf32> to vector<1x94xf32>
    %651 = vector.shape_cast %650 : vector<1x94xf32> to vector<1x1x94xf32>
    %652 = vector.broadcast %651 : vector<1x1x94xf32> to vector<1x16x94xf32>
    %653 = arith.mulf %648, %652 : vector<1x16x94xf32>
    %654 = arith.addf %647, %653 : vector<1x16x94xf32>
    %c1_487 = arith.constant 1 : index
    %c6_488 = arith.constant 6 : index
    %c10_489 = arith.constant 10 : index
    %655 = vector.load %arg7[%c1_487, %c6_488, %c10_489] : memref<2x36x114xf32, #tpu.memory_space<vmem>>, vector<1x16x94xf32>
    %c88 = arith.constant 88 : index
    %c0_490 = arith.constant 0 : index
    %c0_491 = arith.constant 0 : index
    %656 = vector.load %arg2[%c88, %c0_490, %c0_491] : memref<103x1x94xf32, #tpu.memory_space<vmem>>, vector<1x1x94xf32>
    %657 = vector.shape_cast %656 : vector<1x1x94xf32> to vector<1x94xf32>
    %658 = vector.shape_cast %657 : vector<1x94xf32> to vector<1x1x94xf32>
    %659 = vector.broadcast %658 : vector<1x1x94xf32> to vector<1x16x94xf32>
    %660 = arith.mulf %655, %659 : vector<1x16x94xf32>
    %661 = arith.addf %654, %660 : vector<1x16x94xf32>
    %c1_492 = arith.constant 1 : index
    %c7_493 = arith.constant 7 : index
    %c10_494 = arith.constant 10 : index
    %662 = vector.load %arg7[%c1_492, %c7_493, %c10_494] : memref<2x36x114xf32, #tpu.memory_space<vmem>>, vector<1x16x94xf32>
    %c89 = arith.constant 89 : index
    %c0_495 = arith.constant 0 : index
    %c0_496 = arith.constant 0 : index
    %663 = vector.load %arg2[%c89, %c0_495, %c0_496] : memref<103x1x94xf32, #tpu.memory_space<vmem>>, vector<1x1x94xf32>
    %664 = vector.shape_cast %663 : vector<1x1x94xf32> to vector<1x94xf32>
    %665 = vector.shape_cast %664 : vector<1x94xf32> to vector<1x1x94xf32>
    %666 = vector.broadcast %665 : vector<1x1x94xf32> to vector<1x16x94xf32>
    %667 = arith.mulf %662, %666 : vector<1x16x94xf32>
    %668 = arith.addf %661, %667 : vector<1x16x94xf32>
    %c1_497 = arith.constant 1 : index
    %c8_498 = arith.constant 8 : index
    %c10_499 = arith.constant 10 : index
    %669 = vector.load %arg7[%c1_497, %c8_498, %c10_499] : memref<2x36x114xf32, #tpu.memory_space<vmem>>, vector<1x16x94xf32>
    %c90 = arith.constant 90 : index
    %c0_500 = arith.constant 0 : index
    %c0_501 = arith.constant 0 : index
    %670 = vector.load %arg2[%c90, %c0_500, %c0_501] : memref<103x1x94xf32, #tpu.memory_space<vmem>>, vector<1x1x94xf32>
    %671 = vector.shape_cast %670 : vector<1x1x94xf32> to vector<1x94xf32>
    %672 = vector.shape_cast %671 : vector<1x94xf32> to vector<1x1x94xf32>
    %673 = vector.broadcast %672 : vector<1x1x94xf32> to vector<1x16x94xf32>
    %674 = arith.mulf %669, %673 : vector<1x16x94xf32>
    %675 = arith.addf %668, %674 : vector<1x16x94xf32>
    %c1_502 = arith.constant 1 : index
    %c9_503 = arith.constant 9 : index
    %c10_504 = arith.constant 10 : index
    %676 = vector.load %arg7[%c1_502, %c9_503, %c10_504] : memref<2x36x114xf32, #tpu.memory_space<vmem>>, vector<1x16x94xf32>
    %c91 = arith.constant 91 : index
    %c0_505 = arith.constant 0 : index
    %c0_506 = arith.constant 0 : index
    %677 = vector.load %arg2[%c91, %c0_505, %c0_506] : memref<103x1x94xf32, #tpu.memory_space<vmem>>, vector<1x1x94xf32>
    %678 = vector.shape_cast %677 : vector<1x1x94xf32> to vector<1x94xf32>
    %679 = vector.shape_cast %678 : vector<1x94xf32> to vector<1x1x94xf32>
    %680 = vector.broadcast %679 : vector<1x1x94xf32> to vector<1x16x94xf32>
    %681 = arith.mulf %676, %680 : vector<1x16x94xf32>
    %682 = arith.addf %675, %681 : vector<1x16x94xf32>
    %c1_507 = arith.constant 1 : index
    %c10_508 = arith.constant 10 : index
    %c10_509 = arith.constant 10 : index
    %683 = vector.load %arg7[%c1_507, %c10_508, %c10_509] : memref<2x36x114xf32, #tpu.memory_space<vmem>>, vector<1x16x94xf32>
    %c92 = arith.constant 92 : index
    %c0_510 = arith.constant 0 : index
    %c0_511 = arith.constant 0 : index
    %684 = vector.load %arg2[%c92, %c0_510, %c0_511] : memref<103x1x94xf32, #tpu.memory_space<vmem>>, vector<1x1x94xf32>
    %685 = vector.shape_cast %684 : vector<1x1x94xf32> to vector<1x94xf32>
    %686 = vector.shape_cast %685 : vector<1x94xf32> to vector<1x1x94xf32>
    %687 = vector.broadcast %686 : vector<1x1x94xf32> to vector<1x16x94xf32>
    %688 = arith.mulf %683, %687 : vector<1x16x94xf32>
    %689 = arith.addf %682, %688 : vector<1x16x94xf32>
    %c1_512 = arith.constant 1 : index
    %c11_513 = arith.constant 11 : index
    %c10_514 = arith.constant 10 : index
    %690 = vector.load %arg7[%c1_512, %c11_513, %c10_514] : memref<2x36x114xf32, #tpu.memory_space<vmem>>, vector<1x16x94xf32>
    %c93 = arith.constant 93 : index
    %c0_515 = arith.constant 0 : index
    %c0_516 = arith.constant 0 : index
    %691 = vector.load %arg2[%c93, %c0_515, %c0_516] : memref<103x1x94xf32, #tpu.memory_space<vmem>>, vector<1x1x94xf32>
    %692 = vector.shape_cast %691 : vector<1x1x94xf32> to vector<1x94xf32>
    %693 = vector.shape_cast %692 : vector<1x94xf32> to vector<1x1x94xf32>
    %694 = vector.broadcast %693 : vector<1x1x94xf32> to vector<1x16x94xf32>
    %695 = arith.mulf %690, %694 : vector<1x16x94xf32>
    %696 = arith.addf %689, %695 : vector<1x16x94xf32>
    %c1_517 = arith.constant 1 : index
    %c12_518 = arith.constant 12 : index
    %c10_519 = arith.constant 10 : index
    %697 = vector.load %arg7[%c1_517, %c12_518, %c10_519] : memref<2x36x114xf32, #tpu.memory_space<vmem>>, vector<1x16x94xf32>
    %c94 = arith.constant 94 : index
    %c0_520 = arith.constant 0 : index
    %c0_521 = arith.constant 0 : index
    %698 = vector.load %arg2[%c94, %c0_520, %c0_521] : memref<103x1x94xf32, #tpu.memory_space<vmem>>, vector<1x1x94xf32>
    %699 = vector.shape_cast %698 : vector<1x1x94xf32> to vector<1x94xf32>
    %700 = vector.shape_cast %699 : vector<1x94xf32> to vector<1x1x94xf32>
    %701 = vector.broadcast %700 : vector<1x1x94xf32> to vector<1x16x94xf32>
    %702 = arith.mulf %697, %701 : vector<1x16x94xf32>
    %703 = arith.addf %696, %702 : vector<1x16x94xf32>
    %c1_522 = arith.constant 1 : index
    %c13_523 = arith.constant 13 : index
    %c10_524 = arith.constant 10 : index
    %704 = vector.load %arg7[%c1_522, %c13_523, %c10_524] : memref<2x36x114xf32, #tpu.memory_space<vmem>>, vector<1x16x94xf32>
    %c95 = arith.constant 95 : index
    %c0_525 = arith.constant 0 : index
    %c0_526 = arith.constant 0 : index
    %705 = vector.load %arg2[%c95, %c0_525, %c0_526] : memref<103x1x94xf32, #tpu.memory_space<vmem>>, vector<1x1x94xf32>
    %706 = vector.shape_cast %705 : vector<1x1x94xf32> to vector<1x94xf32>
    %707 = vector.shape_cast %706 : vector<1x94xf32> to vector<1x1x94xf32>
    %708 = vector.broadcast %707 : vector<1x1x94xf32> to vector<1x16x94xf32>
    %709 = arith.mulf %704, %708 : vector<1x16x94xf32>
    %710 = arith.addf %703, %709 : vector<1x16x94xf32>
    %c1_527 = arith.constant 1 : index
    %c14_528 = arith.constant 14 : index
    %c10_529 = arith.constant 10 : index
    %711 = vector.load %arg7[%c1_527, %c14_528, %c10_529] : memref<2x36x114xf32, #tpu.memory_space<vmem>>, vector<1x16x94xf32>
    %c96 = arith.constant 96 : index
    %c0_530 = arith.constant 0 : index
    %c0_531 = arith.constant 0 : index
    %712 = vector.load %arg2[%c96, %c0_530, %c0_531] : memref<103x1x94xf32, #tpu.memory_space<vmem>>, vector<1x1x94xf32>
    %713 = vector.shape_cast %712 : vector<1x1x94xf32> to vector<1x94xf32>
    %714 = vector.shape_cast %713 : vector<1x94xf32> to vector<1x1x94xf32>
    %715 = vector.broadcast %714 : vector<1x1x94xf32> to vector<1x16x94xf32>
    %716 = arith.mulf %711, %715 : vector<1x16x94xf32>
    %717 = arith.addf %710, %716 : vector<1x16x94xf32>
    %c1_532 = arith.constant 1 : index
    %c15_533 = arith.constant 15 : index
    %c10_534 = arith.constant 10 : index
    %718 = vector.load %arg7[%c1_532, %c15_533, %c10_534] : memref<2x36x114xf32, #tpu.memory_space<vmem>>, vector<1x16x94xf32>
    %c97 = arith.constant 97 : index
    %c0_535 = arith.constant 0 : index
    %c0_536 = arith.constant 0 : index
    %719 = vector.load %arg2[%c97, %c0_535, %c0_536] : memref<103x1x94xf32, #tpu.memory_space<vmem>>, vector<1x1x94xf32>
    %720 = vector.shape_cast %719 : vector<1x1x94xf32> to vector<1x94xf32>
    %721 = vector.shape_cast %720 : vector<1x94xf32> to vector<1x1x94xf32>
    %722 = vector.broadcast %721 : vector<1x1x94xf32> to vector<1x16x94xf32>
    %723 = arith.mulf %718, %722 : vector<1x16x94xf32>
    %724 = arith.addf %717, %723 : vector<1x16x94xf32>
    %c1_537 = arith.constant 1 : index
    %c16_538 = arith.constant 16 : index
    %c10_539 = arith.constant 10 : index
    %725 = vector.load %arg7[%c1_537, %c16_538, %c10_539] : memref<2x36x114xf32, #tpu.memory_space<vmem>>, vector<1x16x94xf32>
    %c98 = arith.constant 98 : index
    %c0_540 = arith.constant 0 : index
    %c0_541 = arith.constant 0 : index
    %726 = vector.load %arg2[%c98, %c0_540, %c0_541] : memref<103x1x94xf32, #tpu.memory_space<vmem>>, vector<1x1x94xf32>
    %727 = vector.shape_cast %726 : vector<1x1x94xf32> to vector<1x94xf32>
    %728 = vector.shape_cast %727 : vector<1x94xf32> to vector<1x1x94xf32>
    %729 = vector.broadcast %728 : vector<1x1x94xf32> to vector<1x16x94xf32>
    %730 = arith.mulf %725, %729 : vector<1x16x94xf32>
    %731 = arith.addf %724, %730 : vector<1x16x94xf32>
    %c1_542 = arith.constant 1 : index
    %c17_543 = arith.constant 17 : index
    %c10_544 = arith.constant 10 : index
    %732 = vector.load %arg7[%c1_542, %c17_543, %c10_544] : memref<2x36x114xf32, #tpu.memory_space<vmem>>, vector<1x16x94xf32>
    %c99 = arith.constant 99 : index
    %c0_545 = arith.constant 0 : index
    %c0_546 = arith.constant 0 : index
    %733 = vector.load %arg2[%c99, %c0_545, %c0_546] : memref<103x1x94xf32, #tpu.memory_space<vmem>>, vector<1x1x94xf32>
    %734 = vector.shape_cast %733 : vector<1x1x94xf32> to vector<1x94xf32>
    %735 = vector.shape_cast %734 : vector<1x94xf32> to vector<1x1x94xf32>
    %736 = vector.broadcast %735 : vector<1x1x94xf32> to vector<1x16x94xf32>
    %737 = arith.mulf %732, %736 : vector<1x16x94xf32>
    %738 = arith.addf %731, %737 : vector<1x16x94xf32>
    %c1_547 = arith.constant 1 : index
    %c18_548 = arith.constant 18 : index
    %c10_549 = arith.constant 10 : index
    %739 = vector.load %arg7[%c1_547, %c18_548, %c10_549] : memref<2x36x114xf32, #tpu.memory_space<vmem>>, vector<1x16x94xf32>
    %c100 = arith.constant 100 : index
    %c0_550 = arith.constant 0 : index
    %c0_551 = arith.constant 0 : index
    %740 = vector.load %arg2[%c100, %c0_550, %c0_551] : memref<103x1x94xf32, #tpu.memory_space<vmem>>, vector<1x1x94xf32>
    %741 = vector.shape_cast %740 : vector<1x1x94xf32> to vector<1x94xf32>
    %742 = vector.shape_cast %741 : vector<1x94xf32> to vector<1x1x94xf32>
    %743 = vector.broadcast %742 : vector<1x1x94xf32> to vector<1x16x94xf32>
    %744 = arith.mulf %739, %743 : vector<1x16x94xf32>
    %745 = arith.addf %738, %744 : vector<1x16x94xf32>
    %c1_552 = arith.constant 1 : index
    %c19_553 = arith.constant 19 : index
    %c10_554 = arith.constant 10 : index
    %746 = vector.load %arg7[%c1_552, %c19_553, %c10_554] : memref<2x36x114xf32, #tpu.memory_space<vmem>>, vector<1x16x94xf32>
    %c101 = arith.constant 101 : index
    %c0_555 = arith.constant 0 : index
    %c0_556 = arith.constant 0 : index
    %747 = vector.load %arg2[%c101, %c0_555, %c0_556] : memref<103x1x94xf32, #tpu.memory_space<vmem>>, vector<1x1x94xf32>
    %748 = vector.shape_cast %747 : vector<1x1x94xf32> to vector<1x94xf32>
    %749 = vector.shape_cast %748 : vector<1x94xf32> to vector<1x1x94xf32>
    %750 = vector.broadcast %749 : vector<1x1x94xf32> to vector<1x16x94xf32>
    %751 = arith.mulf %746, %750 : vector<1x16x94xf32>
    %752 = arith.addf %745, %751 : vector<1x16x94xf32>
    %c1_557 = arith.constant 1 : index
    %c20_558 = arith.constant 20 : index
    %c10_559 = arith.constant 10 : index
    %753 = vector.load %arg7[%c1_557, %c20_558, %c10_559] : memref<2x36x114xf32, #tpu.memory_space<vmem>>, vector<1x16x94xf32>
    %c102 = arith.constant 102 : index
    %c0_560 = arith.constant 0 : index
    %c0_561 = arith.constant 0 : index
    %754 = vector.load %arg2[%c102, %c0_560, %c0_561] : memref<103x1x94xf32, #tpu.memory_space<vmem>>, vector<1x1x94xf32>
    %755 = vector.shape_cast %754 : vector<1x1x94xf32> to vector<1x94xf32>
    %756 = vector.shape_cast %755 : vector<1x94xf32> to vector<1x1x94xf32>
    %757 = vector.broadcast %756 : vector<1x1x94xf32> to vector<1x16x94xf32>
    %758 = arith.mulf %753, %757 : vector<1x16x94xf32>
    %759 = arith.addf %752, %758 : vector<1x16x94xf32>
    %c0_562 = arith.constant 0 : index
    %c10_563 = arith.constant 10 : index
    %c10_564 = arith.constant 10 : index
    %760 = vector.load %arg7[%c0_562, %c10_563, %c10_564] : memref<2x36x114xf32, #tpu.memory_space<vmem>>, vector<1x16x94xf32>
    tpu.vector_store %arg7[%c0_562, %c10_563, %c10_564], %759 {strides = array<i32>} : memref<2x36x114xf32, #tpu.memory_space<vmem>>, vector<1x16x94xf32>,
    %cst_565 = arith.constant 0.000000e+00 : f32
    %761 = vector.broadcast %cst_565 : f32 to vector<16x16xf32>
    %cst_566 = arith.constant 0xFF800000 : f32
    %762 = vector.broadcast %cst_566 : f32 to vector<16x16xf32>
    %c0_567 = arith.constant 0 : index
    %c4_568 = arith.constant 4 : index
    %763 = memref.load %arg5[%c0_567, %c4_568] : memref<4x5xf32, #tpu.memory_space<smem>>
    %764 = vector.broadcast %763 : f32 to vector<16x16xf32>
    %c0_569 = arith.constant 0 : index
    %c10_570 = arith.constant 10 : index
    %c10_571 = arith.constant 10 : index
    %765 = vector.load %arg7[%c0_569, %c10_570, %c10_571] : memref<2x36x114xf32, #tpu.memory_space<vmem>>, vector<1x16x16xf32>
    %766 = vector.shape_cast %765 : vector<1x16x16xf32> to vector<16x16xf32>
    %c0_572 = arith.constant 0 : index
    %c0_573 = arith.constant 0 : index
    %767 = memref.load %arg5[%c0_572, %c0_573] : memref<4x5xf32, #tpu.memory_space<smem>>
    %768 = vector.broadcast %767 : f32 to vector<16x16xf32>
    %769 = arith.mulf %766, %768 : vector<16x16xf32>
    %770 = arith.addf %764, %769 : vector<16x16xf32>
    %c0_574 = arith.constant 0 : index
    %c10_575 = arith.constant 10 : index
    %c36_576 = arith.constant 36 : index
    %771 = vector.load %arg7[%c0_574, %c10_575, %c36_576] : memref<2x36x114xf32, #tpu.memory_space<vmem>>, vector<1x16x16xf32>
    %772 = vector.shape_cast %771 : vector<1x16x16xf32> to vector<16x16xf32>
    %c0_577 = arith.constant 0 : index
    %c1_578 = arith.constant 1 : index
    %773 = memref.load %arg5[%c0_577, %c1_578] : memref<4x5xf32, #tpu.memory_space<smem>>
    %774 = vector.broadcast %773 : f32 to vector<16x16xf32>
    %775 = arith.mulf %772, %774 : vector<16x16xf32>
    %776 = arith.addf %770, %775 : vector<16x16xf32>
    %c0_579 = arith.constant 0 : index
    %c10_580 = arith.constant 10 : index
    %c62_581 = arith.constant 62 : index
    %777 = vector.load %arg7[%c0_579, %c10_580, %c62_581] : memref<2x36x114xf32, #tpu.memory_space<vmem>>, vector<1x16x16xf32>
    %778 = vector.shape_cast %777 : vector<1x16x16xf32> to vector<16x16xf32>
    %c0_582 = arith.constant 0 : index
    %c2_583 = arith.constant 2 : index
    %779 = memref.load %arg5[%c0_582, %c2_583] : memref<4x5xf32, #tpu.memory_space<smem>>
    %780 = vector.broadcast %779 : f32 to vector<16x16xf32>
    %781 = arith.mulf %778, %780 : vector<16x16xf32>
    %782 = arith.addf %776, %781 : vector<16x16xf32>
    %c0_584 = arith.constant 0 : index
    %c10_585 = arith.constant 10 : index
    %c88_586 = arith.constant 88 : index
    %783 = vector.load %arg7[%c0_584, %c10_585, %c88_586] : memref<2x36x114xf32, #tpu.memory_space<vmem>>, vector<1x16x16xf32>
    %784 = vector.shape_cast %783 : vector<1x16x16xf32> to vector<16x16xf32>
    %c0_587 = arith.constant 0 : index
    %c3_588 = arith.constant 3 : index
    %785 = memref.load %arg5[%c0_587, %c3_588] : memref<4x5xf32, #tpu.memory_space<smem>>
    %786 = vector.broadcast %785 : f32 to vector<16x16xf32>
    %787 = arith.mulf %784, %786 : vector<16x16xf32>
    %788 = arith.addf %782, %787 : vector<16x16xf32>
    %c0_589 = arith.constant 0 : index
    %c10_590 = arith.constant 10 : index
    %c10_591 = arith.constant 10 : index
    %789 = vector.load %arg1[%c0_589, %c10_590, %c10_591] : memref<1x36x114xf32, #tpu.memory_space<vmem>>, vector<1x16x16xf32>
    %790 = vector.shape_cast %789 : vector<1x16x16xf32> to vector<16x16xf32>
    %791 = arith.mulf %788, %790 : vector<16x16xf32>
    %792 = vector.shape_cast %791 : vector<16x16xf32> to vector<1x16x16xf32>
    %c0_592 = arith.constant 0 : index
    %c0_593 = arith.constant 0 : index
    %c0_594 = arith.constant 0 : index
    %793 = vector.load %arg8[%c0_592, %c0_593, %c0_594] : memref<4x16x16xf32, #tpu.memory_space<vmem>>, vector<1x16x16xf32>
    tpu.vector_store %arg8[%c0_592, %c0_593, %c0_594], %792 {strides = array<i32>} : memref<4x16x16xf32, #tpu.memory_space<vmem>>, vector<1x16x16xf32>,
    %794 = arith.addf %761, %791 : vector<16x16xf32>
    %795 = arith.maximumf %762, %791 : vector<16x16xf32>
    %c1_595 = arith.constant 1 : index
    %c4_596 = arith.constant 4 : index
    %796 = memref.load %arg5[%c1_595, %c4_596] : memref<4x5xf32, #tpu.memory_space<smem>>
    %797 = vector.broadcast %796 : f32 to vector<16x16xf32>
    %c0_597 = arith.constant 0 : index
    %c10_598 = arith.constant 10 : index
    %c10_599 = arith.constant 10 : index
    %798 = vector.load %arg7[%c0_597, %c10_598, %c10_599] : memref<2x36x114xf32, #tpu.memory_space<vmem>>, vector<1x16x16xf32>
    %799 = vector.shape_cast %798 : vector<1x16x16xf32> to vector<16x16xf32>
    %c1_600 = arith.constant 1 : index
    %c0_601 = arith.constant 0 : index
    %800 = memref.load %arg5[%c1_600, %c0_601] : memref<4x5xf32, #tpu.memory_space<smem>>
    %801 = vector.broadcast %800 : f32 to vector<16x16xf32>
    %802 = arith.mulf %799, %801 : vector<16x16xf32>
    %803 = arith.addf %797, %802 : vector<16x16xf32>
    %c0_602 = arith.constant 0 : index
    %c10_603 = arith.constant 10 : index
    %c36_604 = arith.constant 36 : index
    %804 = vector.load %arg7[%c0_602, %c10_603, %c36_604] : memref<2x36x114xf32, #tpu.memory_space<vmem>>, vector<1x16x16xf32>
    %805 = vector.shape_cast %804 : vector<1x16x16xf32> to vector<16x16xf32>
    %c1_605 = arith.constant 1 : index
    %c1_606 = arith.constant 1 : index
    %806 = memref.load %arg5[%c1_605, %c1_606] : memref<4x5xf32, #tpu.memory_space<smem>>
    %807 = vector.broadcast %806 : f32 to vector<16x16xf32>
    %808 = arith.mulf %805, %807 : vector<16x16xf32>
    %809 = arith.addf %803, %808 : vector<16x16xf32>
    %c0_607 = arith.constant 0 : index
    %c10_608 = arith.constant 10 : index
    %c62_609 = arith.constant 62 : index
    %810 = vector.load %arg7[%c0_607, %c10_608, %c62_609] : memref<2x36x114xf32, #tpu.memory_space<vmem>>, vector<1x16x16xf32>
    %811 = vector.shape_cast %810 : vector<1x16x16xf32> to vector<16x16xf32>
    %c1_610 = arith.constant 1 : index
    %c2_611 = arith.constant 2 : index
    %812 = memref.load %arg5[%c1_610, %c2_611] : memref<4x5xf32, #tpu.memory_space<smem>>
    %813 = vector.broadcast %812 : f32 to vector<16x16xf32>
    %814 = arith.mulf %811, %813 : vector<16x16xf32>
    %815 = arith.addf %809, %814 : vector<16x16xf32>
    %c0_612 = arith.constant 0 : index
    %c10_613 = arith.constant 10 : index
    %c88_614 = arith.constant 88 : index
    %816 = vector.load %arg7[%c0_612, %c10_613, %c88_614] : memref<2x36x114xf32, #tpu.memory_space<vmem>>, vector<1x16x16xf32>
    %817 = vector.shape_cast %816 : vector<1x16x16xf32> to vector<16x16xf32>
    %c1_615 = arith.constant 1 : index
    %c3_616 = arith.constant 3 : index
    %818 = memref.load %arg5[%c1_615, %c3_616] : memref<4x5xf32, #tpu.memory_space<smem>>
    %819 = vector.broadcast %818 : f32 to vector<16x16xf32>
    %820 = arith.mulf %817, %819 : vector<16x16xf32>
    %821 = arith.addf %815, %820 : vector<16x16xf32>
    %c0_617 = arith.constant 0 : index
    %c10_618 = arith.constant 10 : index
    %c36_619 = arith.constant 36 : index
    %822 = vector.load %arg1[%c0_617, %c10_618, %c36_619] : memref<1x36x114xf32, #tpu.memory_space<vmem>>, vector<1x16x16xf32>
    %823 = vector.shape_cast %822 : vector<1x16x16xf32> to vector<16x16xf32>
    %824 = arith.mulf %821, %823 : vector<16x16xf32>
    %825 = vector.shape_cast %824 : vector<16x16xf32> to vector<1x16x16xf32>
    %c1_620 = arith.constant 1 : index
    %c0_621 = arith.constant 0 : index
    %c0_622 = arith.constant 0 : index
    %826 = vector.load %arg8[%c1_620, %c0_621, %c0_622] : memref<4x16x16xf32, #tpu.memory_space<vmem>>, vector<1x16x16xf32>
    tpu.vector_store %arg8[%c1_620, %c0_621, %c0_622], %825 {strides = array<i32>} : memref<4x16x16xf32, #tpu.memory_space<vmem>>, vector<1x16x16xf32>,
    %827 = arith.addf %794, %824 : vector<16x16xf32>
    %828 = arith.maximumf %795, %824 : vector<16x16xf32>
    %c2_623 = arith.constant 2 : index
    %c4_624 = arith.constant 4 : index
    %829 = memref.load %arg5[%c2_623, %c4_624] : memref<4x5xf32, #tpu.memory_space<smem>>
    %830 = vector.broadcast %829 : f32 to vector<16x16xf32>
    %c0_625 = arith.constant 0 : index
    %c10_626 = arith.constant 10 : index
    %c10_627 = arith.constant 10 : index
    %831 = vector.load %arg7[%c0_625, %c10_626, %c10_627] : memref<2x36x114xf32, #tpu.memory_space<vmem>>, vector<1x16x16xf32>
    %832 = vector.shape_cast %831 : vector<1x16x16xf32> to vector<16x16xf32>
    %c2_628 = arith.constant 2 : index
    %c0_629 = arith.constant 0 : index
    %833 = memref.load %arg5[%c2_628, %c0_629] : memref<4x5xf32, #tpu.memory_space<smem>>
    %834 = vector.broadcast %833 : f32 to vector<16x16xf32>
    %835 = arith.mulf %832, %834 : vector<16x16xf32>
    %836 = arith.addf %830, %835 : vector<16x16xf32>
    %c0_630 = arith.constant 0 : index
    %c10_631 = arith.constant 10 : index
    %c36_632 = arith.constant 36 : index
    %837 = vector.load %arg7[%c0_630, %c10_631, %c36_632] : memref<2x36x114xf32, #tpu.memory_space<vmem>>, vector<1x16x16xf32>
    %838 = vector.shape_cast %837 : vector<1x16x16xf32> to vector<16x16xf32>
    %c2_633 = arith.constant 2 : index
    %c1_634 = arith.constant 1 : index
    %839 = memref.load %arg5[%c2_633, %c1_634] : memref<4x5xf32, #tpu.memory_space<smem>>
    %840 = vector.broadcast %839 : f32 to vector<16x16xf32>
    %841 = arith.mulf %838, %840 : vector<16x16xf32>
    %842 = arith.addf %836, %841 : vector<16x16xf32>
    %c0_635 = arith.constant 0 : index
    %c10_636 = arith.constant 10 : index
    %c62_637 = arith.constant 62 : index
    %843 = vector.load %arg7[%c0_635, %c10_636, %c62_637] : memref<2x36x114xf32, #tpu.memory_space<vmem>>, vector<1x16x16xf32>
    %844 = vector.shape_cast %843 : vector<1x16x16xf32> to vector<16x16xf32>
    %c2_638 = arith.constant 2 : index
    %c2_639 = arith.constant 2 : index
    %845 = memref.load %arg5[%c2_638, %c2_639] : memref<4x5xf32, #tpu.memory_space<smem>>
    %846 = vector.broadcast %845 : f32 to vector<16x16xf32>
    %847 = arith.mulf %844, %846 : vector<16x16xf32>
    %848 = arith.addf %842, %847 : vector<16x16xf32>
    %c0_640 = arith.constant 0 : index
    %c10_641 = arith.constant 10 : index
    %c88_642 = arith.constant 88 : index
    %849 = vector.load %arg7[%c0_640, %c10_641, %c88_642] : memref<2x36x114xf32, #tpu.memory_space<vmem>>, vector<1x16x16xf32>
    %850 = vector.shape_cast %849 : vector<1x16x16xf32> to vector<16x16xf32>
    %c2_643 = arith.constant 2 : index
    %c3_644 = arith.constant 3 : index
    %851 = memref.load %arg5[%c2_643, %c3_644] : memref<4x5xf32, #tpu.memory_space<smem>>
    %852 = vector.broadcast %851 : f32 to vector<16x16xf32>
    %853 = arith.mulf %850, %852 : vector<16x16xf32>
    %854 = arith.addf %848, %853 : vector<16x16xf32>
    %c0_645 = arith.constant 0 : index
    %c10_646 = arith.constant 10 : index
    %c62_647 = arith.constant 62 : index
    %855 = vector.load %arg1[%c0_645, %c10_646, %c62_647] : memref<1x36x114xf32, #tpu.memory_space<vmem>>, vector<1x16x16xf32>
    %856 = vector.shape_cast %855 : vector<1x16x16xf32> to vector<16x16xf32>
    %857 = arith.mulf %854, %856 : vector<16x16xf32>
    %858 = vector.shape_cast %857 : vector<16x16xf32> to vector<1x16x16xf32>
    %c2_648 = arith.constant 2 : index
    %c0_649 = arith.constant 0 : index
    %c0_650 = arith.constant 0 : index
    %859 = vector.load %arg8[%c2_648, %c0_649, %c0_650] : memref<4x16x16xf32, #tpu.memory_space<vmem>>, vector<1x16x16xf32>
    tpu.vector_store %arg8[%c2_648, %c0_649, %c0_650], %858 {strides = array<i32>} : memref<4x16x16xf32, #tpu.memory_space<vmem>>, vector<1x16x16xf32>,
    %860 = arith.addf %827, %857 : vector<16x16xf32>
    %861 = arith.maximumf %828, %857 : vector<16x16xf32>
    %c3_651 = arith.constant 3 : index
    %c4_652 = arith.constant 4 : index
    %862 = memref.load %arg5[%c3_651, %c4_652] : memref<4x5xf32, #tpu.memory_space<smem>>
    %863 = vector.broadcast %862 : f32 to vector<16x16xf32>
    %c0_653 = arith.constant 0 : index
    %c10_654 = arith.constant 10 : index
    %c10_655 = arith.constant 10 : index
    %864 = vector.load %arg7[%c0_653, %c10_654, %c10_655] : memref<2x36x114xf32, #tpu.memory_space<vmem>>, vector<1x16x16xf32>
    %865 = vector.shape_cast %864 : vector<1x16x16xf32> to vector<16x16xf32>
    %c3_656 = arith.constant 3 : index
    %c0_657 = arith.constant 0 : index
    %866 = memref.load %arg5[%c3_656, %c0_657] : memref<4x5xf32, #tpu.memory_space<smem>>
    %867 = vector.broadcast %866 : f32 to vector<16x16xf32>
    %868 = arith.mulf %865, %867 : vector<16x16xf32>
    %869 = arith.addf %863, %868 : vector<16x16xf32>
    %c0_658 = arith.constant 0 : index
    %c10_659 = arith.constant 10 : index
    %c36_660 = arith.constant 36 : index
    %870 = vector.load %arg7[%c0_658, %c10_659, %c36_660] : memref<2x36x114xf32, #tpu.memory_space<vmem>>, vector<1x16x16xf32>
    %871 = vector.shape_cast %870 : vector<1x16x16xf32> to vector<16x16xf32>
    %c3_661 = arith.constant 3 : index
    %c1_662 = arith.constant 1 : index
    %872 = memref.load %arg5[%c3_661, %c1_662] : memref<4x5xf32, #tpu.memory_space<smem>>
    %873 = vector.broadcast %872 : f32 to vector<16x16xf32>
    %874 = arith.mulf %871, %873 : vector<16x16xf32>
    %875 = arith.addf %869, %874 : vector<16x16xf32>
    %c0_663 = arith.constant 0 : index
    %c10_664 = arith.constant 10 : index
    %c62_665 = arith.constant 62 : index
    %876 = vector.load %arg7[%c0_663, %c10_664, %c62_665] : memref<2x36x114xf32, #tpu.memory_space<vmem>>, vector<1x16x16xf32>
    %877 = vector.shape_cast %876 : vector<1x16x16xf32> to vector<16x16xf32>
    %c3_666 = arith.constant 3 : index
    %c2_667 = arith.constant 2 : index
    %878 = memref.load %arg5[%c3_666, %c2_667] : memref<4x5xf32, #tpu.memory_space<smem>>
    %879 = vector.broadcast %878 : f32 to vector<16x16xf32>
    %880 = arith.mulf %877, %879 : vector<16x16xf32>
    %881 = arith.addf %875, %880 : vector<16x16xf32>
    %c0_668 = arith.constant 0 : index
    %c10_669 = arith.constant 10 : index
    %c88_670 = arith.constant 88 : index
    %882 = vector.load %arg7[%c0_668, %c10_669, %c88_670] : memref<2x36x114xf32, #tpu.memory_space<vmem>>, vector<1x16x16xf32>
    %883 = vector.shape_cast %882 : vector<1x16x16xf32> to vector<16x16xf32>
    %c3_671 = arith.constant 3 : index
    %c3_672 = arith.constant 3 : index
    %884 = memref.load %arg5[%c3_671, %c3_672] : memref<4x5xf32, #tpu.memory_space<smem>>
    %885 = vector.broadcast %884 : f32 to vector<16x16xf32>
    %886 = arith.mulf %883, %885 : vector<16x16xf32>
    %887 = arith.addf %881, %886 : vector<16x16xf32>
    %c0_673 = arith.constant 0 : index
    %c10_674 = arith.constant 10 : index
    %c88_675 = arith.constant 88 : index
    %888 = vector.load %arg1[%c0_673, %c10_674, %c88_675] : memref<1x36x114xf32, #tpu.memory_space<vmem>>, vector<1x16x16xf32>
    %889 = vector.shape_cast %888 : vector<1x16x16xf32> to vector<16x16xf32>
    %890 = arith.mulf %887, %889 : vector<16x16xf32>
    %891 = vector.shape_cast %890 : vector<16x16xf32> to vector<1x16x16xf32>
    %c3_676 = arith.constant 3 : index
    %c0_677 = arith.constant 0 : index
    %c0_678 = arith.constant 0 : index
    %892 = vector.load %arg8[%c3_676, %c0_677, %c0_678] : memref<4x16x16xf32, #tpu.memory_space<vmem>>, vector<1x16x16xf32>
    tpu.vector_store %arg8[%c3_676, %c0_677, %c0_678], %891 {strides = array<i32>} : memref<4x16x16xf32, #tpu.memory_space<vmem>>, vector<1x16x16xf32>,
    %893 = arith.addf %860, %890 : vector<16x16xf32>
    %894 = arith.maximumf %861, %890 : vector<16x16xf32>
    %cst_679 = arith.constant 2.500000e-01 : f32
    %895 = vector.broadcast %cst_679 : f32 to vector<16x16xf32>
    %896 = arith.mulf %893, %895 : vector<16x16xf32>
    %897 = vector.shape_cast %896 : vector<16x16xf32> to vector<1x16x16xf32>
    %c1_680 = arith.constant 1 : index
    %c10_681 = arith.constant 10 : index
    %c10_682 = arith.constant 10 : index
    %898 = vector.load %arg7[%c1_680, %c10_681, %c10_682] : memref<2x36x114xf32, #tpu.memory_space<vmem>>, vector<1x16x16xf32>
    tpu.vector_store %arg7[%c1_680, %c10_681, %c10_682], %897 {strides = array<i32>} : memref<2x36x114xf32, #tpu.memory_space<vmem>>, vector<1x16x16xf32>,
    %899 = vector.shape_cast %894 : vector<16x16xf32> to vector<1x16x16xf32>
    %c1_683 = arith.constant 1 : index
    %c10_684 = arith.constant 10 : index
    %c36_685 = arith.constant 36 : index
    %900 = vector.load %arg7[%c1_683, %c10_684, %c36_685] : memref<2x36x114xf32, #tpu.memory_space<vmem>>, vector<1x16x16xf32>
    tpu.vector_store %arg7[%c1_683, %c10_684, %c36_685], %899 {strides = array<i32>} : memref<2x36x114xf32, #tpu.memory_space<vmem>>, vector<1x16x16xf32>,
    %c1_686 = arith.constant 1 : index
    %c7_687 = arith.constant 7 : index
    %c7_688 = arith.constant 7 : index
    %901 = vector.load %arg7[%c1_686, %c7_687, %c7_688] : memref<2x36x114xf32, #tpu.memory_space<vmem>>, vector<1x16x94xf32>
    %c0_689 = arith.constant 0 : index
    %c0_690 = arith.constant 0 : index
    %c0_691 = arith.constant 0 : index
    %902 = vector.load %arg4[%c0_689, %c0_690, %c0_691] : memref<49x1x94xf32, #tpu.memory_space<vmem>>, vector<1x1x94xf32>
    %903 = vector.shape_cast %902 : vector<1x1x94xf32> to vector<1x94xf32>
    %904 = vector.shape_cast %903 : vector<1x94xf32> to vector<1x1x94xf32>
    %905 = vector.broadcast %904 : vector<1x1x94xf32> to vector<1x16x94xf32>
    %906 = arith.mulf %901, %905 : vector<1x16x94xf32>
    %c1_692 = arith.constant 1 : index
    %c7_693 = arith.constant 7 : index
    %c8_694 = arith.constant 8 : index
    %907 = vector.load %arg7[%c1_692, %c7_693, %c8_694] : memref<2x36x114xf32, #tpu.memory_space<vmem>>, vector<1x16x94xf32>
    %c1_695 = arith.constant 1 : index
    %c0_696 = arith.constant 0 : index
    %c0_697 = arith.constant 0 : index
    %908 = vector.load %arg4[%c1_695, %c0_696, %c0_697] : memref<49x1x94xf32, #tpu.memory_space<vmem>>, vector<1x1x94xf32>
    %909 = vector.shape_cast %908 : vector<1x1x94xf32> to vector<1x94xf32>
    %910 = vector.shape_cast %909 : vector<1x94xf32> to vector<1x1x94xf32>
    %911 = vector.broadcast %910 : vector<1x1x94xf32> to vector<1x16x94xf32>
    %912 = arith.mulf %907, %911 : vector<1x16x94xf32>
    %913 = arith.addf %906, %912 : vector<1x16x94xf32>
    %c1_698 = arith.constant 1 : index
    %c7_699 = arith.constant 7 : index
    %c9_700 = arith.constant 9 : index
    %914 = vector.load %arg7[%c1_698, %c7_699, %c9_700] : memref<2x36x114xf32, #tpu.memory_space<vmem>>, vector<1x16x94xf32>
    %c2_701 = arith.constant 2 : index
    %c0_702 = arith.constant 0 : index
    %c0_703 = arith.constant 0 : index
    %915 = vector.load %arg4[%c2_701, %c0_702, %c0_703] : memref<49x1x94xf32, #tpu.memory_space<vmem>>, vector<1x1x94xf32>
    %916 = vector.shape_cast %915 : vector<1x1x94xf32> to vector<1x94xf32>
    %917 = vector.shape_cast %916 : vector<1x94xf32> to vector<1x1x94xf32>
    %918 = vector.broadcast %917 : vector<1x1x94xf32> to vector<1x16x94xf32>
    %919 = arith.mulf %914, %918 : vector<1x16x94xf32>
    %920 = arith.addf %913, %919 : vector<1x16x94xf32>
    %c1_704 = arith.constant 1 : index
    %c7_705 = arith.constant 7 : index
    %c10_706 = arith.constant 10 : index
    %921 = vector.load %arg7[%c1_704, %c7_705, %c10_706] : memref<2x36x114xf32, #tpu.memory_space<vmem>>, vector<1x16x94xf32>
    %c3_707 = arith.constant 3 : index
    %c0_708 = arith.constant 0 : index
    %c0_709 = arith.constant 0 : index
    %922 = vector.load %arg4[%c3_707, %c0_708, %c0_709] : memref<49x1x94xf32, #tpu.memory_space<vmem>>, vector<1x1x94xf32>
    %923 = vector.shape_cast %922 : vector<1x1x94xf32> to vector<1x94xf32>
    %924 = vector.shape_cast %923 : vector<1x94xf32> to vector<1x1x94xf32>
    %925 = vector.broadcast %924 : vector<1x1x94xf32> to vector<1x16x94xf32>
    %926 = arith.mulf %921, %925 : vector<1x16x94xf32>
    %927 = arith.addf %920, %926 : vector<1x16x94xf32>
    %c1_710 = arith.constant 1 : index
    %c7_711 = arith.constant 7 : index
    %c11_712 = arith.constant 11 : index
    %928 = vector.load %arg7[%c1_710, %c7_711, %c11_712] : memref<2x36x114xf32, #tpu.memory_space<vmem>>, vector<1x16x94xf32>
    %c4_713 = arith.constant 4 : index
    %c0_714 = arith.constant 0 : index
    %c0_715 = arith.constant 0 : index
    %929 = vector.load %arg4[%c4_713, %c0_714, %c0_715] : memref<49x1x94xf32, #tpu.memory_space<vmem>>, vector<1x1x94xf32>
    %930 = vector.shape_cast %929 : vector<1x1x94xf32> to vector<1x94xf32>
    %931 = vector.shape_cast %930 : vector<1x94xf32> to vector<1x1x94xf32>
    %932 = vector.broadcast %931 : vector<1x1x94xf32> to vector<1x16x94xf32>
    %933 = arith.mulf %928, %932 : vector<1x16x94xf32>
    %934 = arith.addf %927, %933 : vector<1x16x94xf32>
    %c1_716 = arith.constant 1 : index
    %c7_717 = arith.constant 7 : index
    %c12_718 = arith.constant 12 : index
    %935 = vector.load %arg7[%c1_716, %c7_717, %c12_718] : memref<2x36x114xf32, #tpu.memory_space<vmem>>, vector<1x16x94xf32>
    %c5_719 = arith.constant 5 : index
    %c0_720 = arith.constant 0 : index
    %c0_721 = arith.constant 0 : index
    %936 = vector.load %arg4[%c5_719, %c0_720, %c0_721] : memref<49x1x94xf32, #tpu.memory_space<vmem>>, vector<1x1x94xf32>
    %937 = vector.shape_cast %936 : vector<1x1x94xf32> to vector<1x94xf32>
    %938 = vector.shape_cast %937 : vector<1x94xf32> to vector<1x1x94xf32>
    %939 = vector.broadcast %938 : vector<1x1x94xf32> to vector<1x16x94xf32>
    %940 = arith.mulf %935, %939 : vector<1x16x94xf32>
    %941 = arith.addf %934, %940 : vector<1x16x94xf32>
    %c1_722 = arith.constant 1 : index
    %c7_723 = arith.constant 7 : index
    %c13_724 = arith.constant 13 : index
    %942 = vector.load %arg7[%c1_722, %c7_723, %c13_724] : memref<2x36x114xf32, #tpu.memory_space<vmem>>, vector<1x16x94xf32>
    %c6_725 = arith.constant 6 : index
    %c0_726 = arith.constant 0 : index
    %c0_727 = arith.constant 0 : index
    %943 = vector.load %arg4[%c6_725, %c0_726, %c0_727] : memref<49x1x94xf32, #tpu.memory_space<vmem>>, vector<1x1x94xf32>
    %944 = vector.shape_cast %943 : vector<1x1x94xf32> to vector<1x94xf32>
    %945 = vector.shape_cast %944 : vector<1x94xf32> to vector<1x1x94xf32>
    %946 = vector.broadcast %945 : vector<1x1x94xf32> to vector<1x16x94xf32>
    %947 = arith.mulf %942, %946 : vector<1x16x94xf32>
    %948 = arith.addf %941, %947 : vector<1x16x94xf32>
    %c1_728 = arith.constant 1 : index
    %c8_729 = arith.constant 8 : index
    %c7_730 = arith.constant 7 : index
    %949 = vector.load %arg7[%c1_728, %c8_729, %c7_730] : memref<2x36x114xf32, #tpu.memory_space<vmem>>, vector<1x16x94xf32>
    %c7_731 = arith.constant 7 : index
    %c0_732 = arith.constant 0 : index
    %c0_733 = arith.constant 0 : index
    %950 = vector.load %arg4[%c7_731, %c0_732, %c0_733] : memref<49x1x94xf32, #tpu.memory_space<vmem>>, vector<1x1x94xf32>
    %951 = vector.shape_cast %950 : vector<1x1x94xf32> to vector<1x94xf32>
    %952 = vector.shape_cast %951 : vector<1x94xf32> to vector<1x1x94xf32>
    %953 = vector.broadcast %952 : vector<1x1x94xf32> to vector<1x16x94xf32>
    %954 = arith.mulf %949, %953 : vector<1x16x94xf32>
    %955 = arith.addf %948, %954 : vector<1x16x94xf32>
    %c1_734 = arith.constant 1 : index
    %c8_735 = arith.constant 8 : index
    %c8_736 = arith.constant 8 : index
    %956 = vector.load %arg7[%c1_734, %c8_735, %c8_736] : memref<2x36x114xf32, #tpu.memory_space<vmem>>, vector<1x16x94xf32>
    %c8_737 = arith.constant 8 : index
    %c0_738 = arith.constant 0 : index
    %c0_739 = arith.constant 0 : index
    %957 = vector.load %arg4[%c8_737, %c0_738, %c0_739] : memref<49x1x94xf32, #tpu.memory_space<vmem>>, vector<1x1x94xf32>
    %958 = vector.shape_cast %957 : vector<1x1x94xf32> to vector<1x94xf32>
    %959 = vector.shape_cast %958 : vector<1x94xf32> to vector<1x1x94xf32>
    %960 = vector.broadcast %959 : vector<1x1x94xf32> to vector<1x16x94xf32>
    %961 = arith.mulf %956, %960 : vector<1x16x94xf32>
    %962 = arith.addf %955, %961 : vector<1x16x94xf32>
    %c1_740 = arith.constant 1 : index
    %c8_741 = arith.constant 8 : index
    %c9_742 = arith.constant 9 : index
    %963 = vector.load %arg7[%c1_740, %c8_741, %c9_742] : memref<2x36x114xf32, #tpu.memory_space<vmem>>, vector<1x16x94xf32>
    %c9_743 = arith.constant 9 : index
    %c0_744 = arith.constant 0 : index
    %c0_745 = arith.constant 0 : index
    %964 = vector.load %arg4[%c9_743, %c0_744, %c0_745] : memref<49x1x94xf32, #tpu.memory_space<vmem>>, vector<1x1x94xf32>
    %965 = vector.shape_cast %964 : vector<1x1x94xf32> to vector<1x94xf32>
    %966 = vector.shape_cast %965 : vector<1x94xf32> to vector<1x1x94xf32>
    %967 = vector.broadcast %966 : vector<1x1x94xf32> to vector<1x16x94xf32>
    %968 = arith.mulf %963, %967 : vector<1x16x94xf32>
    %969 = arith.addf %962, %968 : vector<1x16x94xf32>
    %c1_746 = arith.constant 1 : index
    %c8_747 = arith.constant 8 : index
    %c10_748 = arith.constant 10 : index
    %970 = vector.load %arg7[%c1_746, %c8_747, %c10_748] : memref<2x36x114xf32, #tpu.memory_space<vmem>>, vector<1x16x94xf32>
    %c10_749 = arith.constant 10 : index
    %c0_750 = arith.constant 0 : index
    %c0_751 = arith.constant 0 : index
    %971 = vector.load %arg4[%c10_749, %c0_750, %c0_751] : memref<49x1x94xf32, #tpu.memory_space<vmem>>, vector<1x1x94xf32>
    %972 = vector.shape_cast %971 : vector<1x1x94xf32> to vector<1x94xf32>
    %973 = vector.shape_cast %972 : vector<1x94xf32> to vector<1x1x94xf32>
    %974 = vector.broadcast %973 : vector<1x1x94xf32> to vector<1x16x94xf32>
    %975 = arith.mulf %970, %974 : vector<1x16x94xf32>
    %976 = arith.addf %969, %975 : vector<1x16x94xf32>
    %c1_752 = arith.constant 1 : index
    %c8_753 = arith.constant 8 : index
    %c11_754 = arith.constant 11 : index
    %977 = vector.load %arg7[%c1_752, %c8_753, %c11_754] : memref<2x36x114xf32, #tpu.memory_space<vmem>>, vector<1x16x94xf32>
    %c11_755 = arith.constant 11 : index
    %c0_756 = arith.constant 0 : index
    %c0_757 = arith.constant 0 : index
    %978 = vector.load %arg4[%c11_755, %c0_756, %c0_757] : memref<49x1x94xf32, #tpu.memory_space<vmem>>, vector<1x1x94xf32>
    %979 = vector.shape_cast %978 : vector<1x1x94xf32> to vector<1x94xf32>
    %980 = vector.shape_cast %979 : vector<1x94xf32> to vector<1x1x94xf32>
    %981 = vector.broadcast %980 : vector<1x1x94xf32> to vector<1x16x94xf32>
    %982 = arith.mulf %977, %981 : vector<1x16x94xf32>
    %983 = arith.addf %976, %982 : vector<1x16x94xf32>
    %c1_758 = arith.constant 1 : index
    %c8_759 = arith.constant 8 : index
    %c12_760 = arith.constant 12 : index
    %984 = vector.load %arg7[%c1_758, %c8_759, %c12_760] : memref<2x36x114xf32, #tpu.memory_space<vmem>>, vector<1x16x94xf32>
    %c12_761 = arith.constant 12 : index
    %c0_762 = arith.constant 0 : index
    %c0_763 = arith.constant 0 : index
    %985 = vector.load %arg4[%c12_761, %c0_762, %c0_763] : memref<49x1x94xf32, #tpu.memory_space<vmem>>, vector<1x1x94xf32>
    %986 = vector.shape_cast %985 : vector<1x1x94xf32> to vector<1x94xf32>
    %987 = vector.shape_cast %986 : vector<1x94xf32> to vector<1x1x94xf32>
    %988 = vector.broadcast %987 : vector<1x1x94xf32> to vector<1x16x94xf32>
    %989 = arith.mulf %984, %988 : vector<1x16x94xf32>
    %990 = arith.addf %983, %989 : vector<1x16x94xf32>
    %c1_764 = arith.constant 1 : index
    %c8_765 = arith.constant 8 : index
    %c13_766 = arith.constant 13 : index
    %991 = vector.load %arg7[%c1_764, %c8_765, %c13_766] : memref<2x36x114xf32, #tpu.memory_space<vmem>>, vector<1x16x94xf32>
    %c13_767 = arith.constant 13 : index
    %c0_768 = arith.constant 0 : index
    %c0_769 = arith.constant 0 : index
    %992 = vector.load %arg4[%c13_767, %c0_768, %c0_769] : memref<49x1x94xf32, #tpu.memory_space<vmem>>, vector<1x1x94xf32>
    %993 = vector.shape_cast %992 : vector<1x1x94xf32> to vector<1x94xf32>
    %994 = vector.shape_cast %993 : vector<1x94xf32> to vector<1x1x94xf32>
    %995 = vector.broadcast %994 : vector<1x1x94xf32> to vector<1x16x94xf32>
    %996 = arith.mulf %991, %995 : vector<1x16x94xf32>
    %997 = arith.addf %990, %996 : vector<1x16x94xf32>
    %c1_770 = arith.constant 1 : index
    %c9_771 = arith.constant 9 : index
    %c7_772 = arith.constant 7 : index
    %998 = vector.load %arg7[%c1_770, %c9_771, %c7_772] : memref<2x36x114xf32, #tpu.memory_space<vmem>>, vector<1x16x94xf32>
    %c14_773 = arith.constant 14 : index
    %c0_774 = arith.constant 0 : index
    %c0_775 = arith.constant 0 : index
    %999 = vector.load %arg4[%c14_773, %c0_774, %c0_775] : memref<49x1x94xf32, #tpu.memory_space<vmem>>, vector<1x1x94xf32>
    %1000 = vector.shape_cast %999 : vector<1x1x94xf32> to vector<1x94xf32>
    %1001 = vector.shape_cast %1000 : vector<1x94xf32> to vector<1x1x94xf32>
    %1002 = vector.broadcast %1001 : vector<1x1x94xf32> to vector<1x16x94xf32>
    %1003 = arith.mulf %998, %1002 : vector<1x16x94xf32>
    %1004 = arith.addf %997, %1003 : vector<1x16x94xf32>
    %c1_776 = arith.constant 1 : index
    %c9_777 = arith.constant 9 : index
    %c8_778 = arith.constant 8 : index
    %1005 = vector.load %arg7[%c1_776, %c9_777, %c8_778] : memref<2x36x114xf32, #tpu.memory_space<vmem>>, vector<1x16x94xf32>
    %c15_779 = arith.constant 15 : index
    %c0_780 = arith.constant 0 : index
    %c0_781 = arith.constant 0 : index
    %1006 = vector.load %arg4[%c15_779, %c0_780, %c0_781] : memref<49x1x94xf32, #tpu.memory_space<vmem>>, vector<1x1x94xf32>
    %1007 = vector.shape_cast %1006 : vector<1x1x94xf32> to vector<1x94xf32>
    %1008 = vector.shape_cast %1007 : vector<1x94xf32> to vector<1x1x94xf32>
    %1009 = vector.broadcast %1008 : vector<1x1x94xf32> to vector<1x16x94xf32>
    %1010 = arith.mulf %1005, %1009 : vector<1x16x94xf32>
    %1011 = arith.addf %1004, %1010 : vector<1x16x94xf32>
    %c1_782 = arith.constant 1 : index
    %c9_783 = arith.constant 9 : index
    %c9_784 = arith.constant 9 : index
    %1012 = vector.load %arg7[%c1_782, %c9_783, %c9_784] : memref<2x36x114xf32, #tpu.memory_space<vmem>>, vector<1x16x94xf32>
    %c16_785 = arith.constant 16 : index
    %c0_786 = arith.constant 0 : index
    %c0_787 = arith.constant 0 : index
    %1013 = vector.load %arg4[%c16_785, %c0_786, %c0_787] : memref<49x1x94xf32, #tpu.memory_space<vmem>>, vector<1x1x94xf32>
    %1014 = vector.shape_cast %1013 : vector<1x1x94xf32> to vector<1x94xf32>
    %1015 = vector.shape_cast %1014 : vector<1x94xf32> to vector<1x1x94xf32>
    %1016 = vector.broadcast %1015 : vector<1x1x94xf32> to vector<1x16x94xf32>
    %1017 = arith.mulf %1012, %1016 : vector<1x16x94xf32>
    %1018 = arith.addf %1011, %1017 : vector<1x16x94xf32>
    %c1_788 = arith.constant 1 : index
    %c9_789 = arith.constant 9 : index
    %c10_790 = arith.constant 10 : index
    %1019 = vector.load %arg7[%c1_788, %c9_789, %c10_790] : memref<2x36x114xf32, #tpu.memory_space<vmem>>, vector<1x16x94xf32>
    %c17_791 = arith.constant 17 : index
    %c0_792 = arith.constant 0 : index
    %c0_793 = arith.constant 0 : index
    %1020 = vector.load %arg4[%c17_791, %c0_792, %c0_793] : memref<49x1x94xf32, #tpu.memory_space<vmem>>, vector<1x1x94xf32>
    %1021 = vector.shape_cast %1020 : vector<1x1x94xf32> to vector<1x94xf32>
    %1022 = vector.shape_cast %1021 : vector<1x94xf32> to vector<1x1x94xf32>
    %1023 = vector.broadcast %1022 : vector<1x1x94xf32> to vector<1x16x94xf32>
    %1024 = arith.mulf %1019, %1023 : vector<1x16x94xf32>
    %1025 = arith.addf %1018, %1024 : vector<1x16x94xf32>
    %c1_794 = arith.constant 1 : index
    %c9_795 = arith.constant 9 : index
    %c11_796 = arith.constant 11 : index
    %1026 = vector.load %arg7[%c1_794, %c9_795, %c11_796] : memref<2x36x114xf32, #tpu.memory_space<vmem>>, vector<1x16x94xf32>
    %c18_797 = arith.constant 18 : index
    %c0_798 = arith.constant 0 : index
    %c0_799 = arith.constant 0 : index
    %1027 = vector.load %arg4[%c18_797, %c0_798, %c0_799] : memref<49x1x94xf32, #tpu.memory_space<vmem>>, vector<1x1x94xf32>
    %1028 = vector.shape_cast %1027 : vector<1x1x94xf32> to vector<1x94xf32>
    %1029 = vector.shape_cast %1028 : vector<1x94xf32> to vector<1x1x94xf32>
    %1030 = vector.broadcast %1029 : vector<1x1x94xf32> to vector<1x16x94xf32>
    %1031 = arith.mulf %1026, %1030 : vector<1x16x94xf32>
    %1032 = arith.addf %1025, %1031 : vector<1x16x94xf32>
    %c1_800 = arith.constant 1 : index
    %c9_801 = arith.constant 9 : index
    %c12_802 = arith.constant 12 : index
    %1033 = vector.load %arg7[%c1_800, %c9_801, %c12_802] : memref<2x36x114xf32, #tpu.memory_space<vmem>>, vector<1x16x94xf32>
    %c19_803 = arith.constant 19 : index
    %c0_804 = arith.constant 0 : index
    %c0_805 = arith.constant 0 : index
    %1034 = vector.load %arg4[%c19_803, %c0_804, %c0_805] : memref<49x1x94xf32, #tpu.memory_space<vmem>>, vector<1x1x94xf32>
    %1035 = vector.shape_cast %1034 : vector<1x1x94xf32> to vector<1x94xf32>
    %1036 = vector.shape_cast %1035 : vector<1x94xf32> to vector<1x1x94xf32>
    %1037 = vector.broadcast %1036 : vector<1x1x94xf32> to vector<1x16x94xf32>
    %1038 = arith.mulf %1033, %1037 : vector<1x16x94xf32>
    %1039 = arith.addf %1032, %1038 : vector<1x16x94xf32>
    %c1_806 = arith.constant 1 : index
    %c9_807 = arith.constant 9 : index
    %c13_808 = arith.constant 13 : index
    %1040 = vector.load %arg7[%c1_806, %c9_807, %c13_808] : memref<2x36x114xf32, #tpu.memory_space<vmem>>, vector<1x16x94xf32>
    %c20_809 = arith.constant 20 : index
    %c0_810 = arith.constant 0 : index
    %c0_811 = arith.constant 0 : index
    %1041 = vector.load %arg4[%c20_809, %c0_810, %c0_811] : memref<49x1x94xf32, #tpu.memory_space<vmem>>, vector<1x1x94xf32>
    %1042 = vector.shape_cast %1041 : vector<1x1x94xf32> to vector<1x94xf32>
    %1043 = vector.shape_cast %1042 : vector<1x94xf32> to vector<1x1x94xf32>
    %1044 = vector.broadcast %1043 : vector<1x1x94xf32> to vector<1x16x94xf32>
    %1045 = arith.mulf %1040, %1044 : vector<1x16x94xf32>
    %1046 = arith.addf %1039, %1045 : vector<1x16x94xf32>
    %c1_812 = arith.constant 1 : index
    %c10_813 = arith.constant 10 : index
    %c7_814 = arith.constant 7 : index
    %1047 = vector.load %arg7[%c1_812, %c10_813, %c7_814] : memref<2x36x114xf32, #tpu.memory_space<vmem>>, vector<1x16x94xf32>
    %c21_815 = arith.constant 21 : index
    %c0_816 = arith.constant 0 : index
    %c0_817 = arith.constant 0 : index
    %1048 = vector.load %arg4[%c21_815, %c0_816, %c0_817] : memref<49x1x94xf32, #tpu.memory_space<vmem>>, vector<1x1x94xf32>
    %1049 = vector.shape_cast %1048 : vector<1x1x94xf32> to vector<1x94xf32>
    %1050 = vector.shape_cast %1049 : vector<1x94xf32> to vector<1x1x94xf32>
    %1051 = vector.broadcast %1050 : vector<1x1x94xf32> to vector<1x16x94xf32>
    %1052 = arith.mulf %1047, %1051 : vector<1x16x94xf32>
    %1053 = arith.addf %1046, %1052 : vector<1x16x94xf32>
    %c1_818 = arith.constant 1 : index
    %c10_819 = arith.constant 10 : index
    %c8_820 = arith.constant 8 : index
    %1054 = vector.load %arg7[%c1_818, %c10_819, %c8_820] : memref<2x36x114xf32, #tpu.memory_space<vmem>>, vector<1x16x94xf32>
    %c22_821 = arith.constant 22 : index
    %c0_822 = arith.constant 0 : index
    %c0_823 = arith.constant 0 : index
    %1055 = vector.load %arg4[%c22_821, %c0_822, %c0_823] : memref<49x1x94xf32, #tpu.memory_space<vmem>>, vector<1x1x94xf32>
    %1056 = vector.shape_cast %1055 : vector<1x1x94xf32> to vector<1x94xf32>
    %1057 = vector.shape_cast %1056 : vector<1x94xf32> to vector<1x1x94xf32>
    %1058 = vector.broadcast %1057 : vector<1x1x94xf32> to vector<1x16x94xf32>
    %1059 = arith.mulf %1054, %1058 : vector<1x16x94xf32>
    %1060 = arith.addf %1053, %1059 : vector<1x16x94xf32>
    %c1_824 = arith.constant 1 : index
    %c10_825 = arith.constant 10 : index
    %c9_826 = arith.constant 9 : index
    %1061 = vector.load %arg7[%c1_824, %c10_825, %c9_826] : memref<2x36x114xf32, #tpu.memory_space<vmem>>, vector<1x16x94xf32>
    %c23_827 = arith.constant 23 : index
    %c0_828 = arith.constant 0 : index
    %c0_829 = arith.constant 0 : index
    %1062 = vector.load %arg4[%c23_827, %c0_828, %c0_829] : memref<49x1x94xf32, #tpu.memory_space<vmem>>, vector<1x1x94xf32>
    %1063 = vector.shape_cast %1062 : vector<1x1x94xf32> to vector<1x94xf32>
    %1064 = vector.shape_cast %1063 : vector<1x94xf32> to vector<1x1x94xf32>
    %1065 = vector.broadcast %1064 : vector<1x1x94xf32> to vector<1x16x94xf32>
    %1066 = arith.mulf %1061, %1065 : vector<1x16x94xf32>
    %1067 = arith.addf %1060, %1066 : vector<1x16x94xf32>
    %c1_830 = arith.constant 1 : index
    %c10_831 = arith.constant 10 : index
    %c10_832 = arith.constant 10 : index
    %1068 = vector.load %arg7[%c1_830, %c10_831, %c10_832] : memref<2x36x114xf32, #tpu.memory_space<vmem>>, vector<1x16x94xf32>
    %c24_833 = arith.constant 24 : index
    %c0_834 = arith.constant 0 : index
    %c0_835 = arith.constant 0 : index
    %1069 = vector.load %arg4[%c24_833, %c0_834, %c0_835] : memref<49x1x94xf32, #tpu.memory_space<vmem>>, vector<1x1x94xf32>
    %1070 = vector.shape_cast %1069 : vector<1x1x94xf32> to vector<1x94xf32>
    %1071 = vector.shape_cast %1070 : vector<1x94xf32> to vector<1x1x94xf32>
    %1072 = vector.broadcast %1071 : vector<1x1x94xf32> to vector<1x16x94xf32>
    %1073 = arith.mulf %1068, %1072 : vector<1x16x94xf32>
    %1074 = arith.addf %1067, %1073 : vector<1x16x94xf32>
    %c1_836 = arith.constant 1 : index
    %c10_837 = arith.constant 10 : index
    %c11_838 = arith.constant 11 : index
    %1075 = vector.load %arg7[%c1_836, %c10_837, %c11_838] : memref<2x36x114xf32, #tpu.memory_space<vmem>>, vector<1x16x94xf32>
    %c25_839 = arith.constant 25 : index
    %c0_840 = arith.constant 0 : index
    %c0_841 = arith.constant 0 : index
    %1076 = vector.load %arg4[%c25_839, %c0_840, %c0_841] : memref<49x1x94xf32, #tpu.memory_space<vmem>>, vector<1x1x94xf32>
    %1077 = vector.shape_cast %1076 : vector<1x1x94xf32> to vector<1x94xf32>
    %1078 = vector.shape_cast %1077 : vector<1x94xf32> to vector<1x1x94xf32>
    %1079 = vector.broadcast %1078 : vector<1x1x94xf32> to vector<1x16x94xf32>
    %1080 = arith.mulf %1075, %1079 : vector<1x16x94xf32>
    %1081 = arith.addf %1074, %1080 : vector<1x16x94xf32>
    %c1_842 = arith.constant 1 : index
    %c10_843 = arith.constant 10 : index
    %c12_844 = arith.constant 12 : index
    %1082 = vector.load %arg7[%c1_842, %c10_843, %c12_844] : memref<2x36x114xf32, #tpu.memory_space<vmem>>, vector<1x16x94xf32>
    %c26_845 = arith.constant 26 : index
    %c0_846 = arith.constant 0 : index
    %c0_847 = arith.constant 0 : index
    %1083 = vector.load %arg4[%c26_845, %c0_846, %c0_847] : memref<49x1x94xf32, #tpu.memory_space<vmem>>, vector<1x1x94xf32>
    %1084 = vector.shape_cast %1083 : vector<1x1x94xf32> to vector<1x94xf32>
    %1085 = vector.shape_cast %1084 : vector<1x94xf32> to vector<1x1x94xf32>
    %1086 = vector.broadcast %1085 : vector<1x1x94xf32> to vector<1x16x94xf32>
    %1087 = arith.mulf %1082, %1086 : vector<1x16x94xf32>
    %1088 = arith.addf %1081, %1087 : vector<1x16x94xf32>
    %c1_848 = arith.constant 1 : index
    %c10_849 = arith.constant 10 : index
    %c13_850 = arith.constant 13 : index
    %1089 = vector.load %arg7[%c1_848, %c10_849, %c13_850] : memref<2x36x114xf32, #tpu.memory_space<vmem>>, vector<1x16x94xf32>
    %c27_851 = arith.constant 27 : index
    %c0_852 = arith.constant 0 : index
    %c0_853 = arith.constant 0 : index
    %1090 = vector.load %arg4[%c27_851, %c0_852, %c0_853] : memref<49x1x94xf32, #tpu.memory_space<vmem>>, vector<1x1x94xf32>
    %1091 = vector.shape_cast %1090 : vector<1x1x94xf32> to vector<1x94xf32>
    %1092 = vector.shape_cast %1091 : vector<1x94xf32> to vector<1x1x94xf32>
    %1093 = vector.broadcast %1092 : vector<1x1x94xf32> to vector<1x16x94xf32>
    %1094 = arith.mulf %1089, %1093 : vector<1x16x94xf32>
    %1095 = arith.addf %1088, %1094 : vector<1x16x94xf32>
    %c1_854 = arith.constant 1 : index
    %c11_855 = arith.constant 11 : index
    %c7_856 = arith.constant 7 : index
    %1096 = vector.load %arg7[%c1_854, %c11_855, %c7_856] : memref<2x36x114xf32, #tpu.memory_space<vmem>>, vector<1x16x94xf32>
    %c28_857 = arith.constant 28 : index
    %c0_858 = arith.constant 0 : index
    %c0_859 = arith.constant 0 : index
    %1097 = vector.load %arg4[%c28_857, %c0_858, %c0_859] : memref<49x1x94xf32, #tpu.memory_space<vmem>>, vector<1x1x94xf32>
    %1098 = vector.shape_cast %1097 : vector<1x1x94xf32> to vector<1x94xf32>
    %1099 = vector.shape_cast %1098 : vector<1x94xf32> to vector<1x1x94xf32>
    %1100 = vector.broadcast %1099 : vector<1x1x94xf32> to vector<1x16x94xf32>
    %1101 = arith.mulf %1096, %1100 : vector<1x16x94xf32>
    %1102 = arith.addf %1095, %1101 : vector<1x16x94xf32>
    %c1_860 = arith.constant 1 : index
    %c11_861 = arith.constant 11 : index
    %c8_862 = arith.constant 8 : index
    %1103 = vector.load %arg7[%c1_860, %c11_861, %c8_862] : memref<2x36x114xf32, #tpu.memory_space<vmem>>, vector<1x16x94xf32>
    %c29_863 = arith.constant 29 : index
    %c0_864 = arith.constant 0 : index
    %c0_865 = arith.constant 0 : index
    %1104 = vector.load %arg4[%c29_863, %c0_864, %c0_865] : memref<49x1x94xf32, #tpu.memory_space<vmem>>, vector<1x1x94xf32>
    %1105 = vector.shape_cast %1104 : vector<1x1x94xf32> to vector<1x94xf32>
    %1106 = vector.shape_cast %1105 : vector<1x94xf32> to vector<1x1x94xf32>
    %1107 = vector.broadcast %1106 : vector<1x1x94xf32> to vector<1x16x94xf32>
    %1108 = arith.mulf %1103, %1107 : vector<1x16x94xf32>
    %1109 = arith.addf %1102, %1108 : vector<1x16x94xf32>
    %c1_866 = arith.constant 1 : index
    %c11_867 = arith.constant 11 : index
    %c9_868 = arith.constant 9 : index
    %1110 = vector.load %arg7[%c1_866, %c11_867, %c9_868] : memref<2x36x114xf32, #tpu.memory_space<vmem>>, vector<1x16x94xf32>
    %c30_869 = arith.constant 30 : index
    %c0_870 = arith.constant 0 : index
    %c0_871 = arith.constant 0 : index
    %1111 = vector.load %arg4[%c30_869, %c0_870, %c0_871] : memref<49x1x94xf32, #tpu.memory_space<vmem>>, vector<1x1x94xf32>
    %1112 = vector.shape_cast %1111 : vector<1x1x94xf32> to vector<1x94xf32>
    %1113 = vector.shape_cast %1112 : vector<1x94xf32> to vector<1x1x94xf32>
    %1114 = vector.broadcast %1113 : vector<1x1x94xf32> to vector<1x16x94xf32>
    %1115 = arith.mulf %1110, %1114 : vector<1x16x94xf32>
    %1116 = arith.addf %1109, %1115 : vector<1x16x94xf32>
    %c1_872 = arith.constant 1 : index
    %c11_873 = arith.constant 11 : index
    %c10_874 = arith.constant 10 : index
    %1117 = vector.load %arg7[%c1_872, %c11_873, %c10_874] : memref<2x36x114xf32, #tpu.memory_space<vmem>>, vector<1x16x94xf32>
    %c31_875 = arith.constant 31 : index
    %c0_876 = arith.constant 0 : index
    %c0_877 = arith.constant 0 : index
    %1118 = vector.load %arg4[%c31_875, %c0_876, %c0_877] : memref<49x1x94xf32, #tpu.memory_space<vmem>>, vector<1x1x94xf32>
    %1119 = vector.shape_cast %1118 : vector<1x1x94xf32> to vector<1x94xf32>
    %1120 = vector.shape_cast %1119 : vector<1x94xf32> to vector<1x1x94xf32>
    %1121 = vector.broadcast %1120 : vector<1x1x94xf32> to vector<1x16x94xf32>
    %1122 = arith.mulf %1117, %1121 : vector<1x16x94xf32>
    %1123 = arith.addf %1116, %1122 : vector<1x16x94xf32>
    %c1_878 = arith.constant 1 : index
    %c11_879 = arith.constant 11 : index
    %c11_880 = arith.constant 11 : index
    %1124 = vector.load %arg7[%c1_878, %c11_879, %c11_880] : memref<2x36x114xf32, #tpu.memory_space<vmem>>, vector<1x16x94xf32>
    %c32_881 = arith.constant 32 : index
    %c0_882 = arith.constant 0 : index
    %c0_883 = arith.constant 0 : index
    %1125 = vector.load %arg4[%c32_881, %c0_882, %c0_883] : memref<49x1x94xf32, #tpu.memory_space<vmem>>, vector<1x1x94xf32>
    %1126 = vector.shape_cast %1125 : vector<1x1x94xf32> to vector<1x94xf32>
    %1127 = vector.shape_cast %1126 : vector<1x94xf32> to vector<1x1x94xf32>
    %1128 = vector.broadcast %1127 : vector<1x1x94xf32> to vector<1x16x94xf32>
    %1129 = arith.mulf %1124, %1128 : vector<1x16x94xf32>
    %1130 = arith.addf %1123, %1129 : vector<1x16x94xf32>
    %c1_884 = arith.constant 1 : index
    %c11_885 = arith.constant 11 : index
    %c12_886 = arith.constant 12 : index
    %1131 = vector.load %arg7[%c1_884, %c11_885, %c12_886] : memref<2x36x114xf32, #tpu.memory_space<vmem>>, vector<1x16x94xf32>
    %c33_887 = arith.constant 33 : index
    %c0_888 = arith.constant 0 : index
    %c0_889 = arith.constant 0 : index
    %1132 = vector.load %arg4[%c33_887, %c0_888, %c0_889] : memref<49x1x94xf32, #tpu.memory_space<vmem>>, vector<1x1x94xf32>
    %1133 = vector.shape_cast %1132 : vector<1x1x94xf32> to vector<1x94xf32>
    %1134 = vector.shape_cast %1133 : vector<1x94xf32> to vector<1x1x94xf32>
    %1135 = vector.broadcast %1134 : vector<1x1x94xf32> to vector<1x16x94xf32>
    %1136 = arith.mulf %1131, %1135 : vector<1x16x94xf32>
    %1137 = arith.addf %1130, %1136 : vector<1x16x94xf32>
    %c1_890 = arith.constant 1 : index
    %c11_891 = arith.constant 11 : index
    %c13_892 = arith.constant 13 : index
    %1138 = vector.load %arg7[%c1_890, %c11_891, %c13_892] : memref<2x36x114xf32, #tpu.memory_space<vmem>>, vector<1x16x94xf32>
    %c34_893 = arith.constant 34 : index
    %c0_894 = arith.constant 0 : index
    %c0_895 = arith.constant 0 : index
    %1139 = vector.load %arg4[%c34_893, %c0_894, %c0_895] : memref<49x1x94xf32, #tpu.memory_space<vmem>>, vector<1x1x94xf32>
    %1140 = vector.shape_cast %1139 : vector<1x1x94xf32> to vector<1x94xf32>
    %1141 = vector.shape_cast %1140 : vector<1x94xf32> to vector<1x1x94xf32>
    %1142 = vector.broadcast %1141 : vector<1x1x94xf32> to vector<1x16x94xf32>
    %1143 = arith.mulf %1138, %1142 : vector<1x16x94xf32>
    %1144 = arith.addf %1137, %1143 : vector<1x16x94xf32>
    %c1_896 = arith.constant 1 : index
    %c12_897 = arith.constant 12 : index
    %c7_898 = arith.constant 7 : index
    %1145 = vector.load %arg7[%c1_896, %c12_897, %c7_898] : memref<2x36x114xf32, #tpu.memory_space<vmem>>, vector<1x16x94xf32>
    %c35_899 = arith.constant 35 : index
    %c0_900 = arith.constant 0 : index
    %c0_901 = arith.constant 0 : index
    %1146 = vector.load %arg4[%c35_899, %c0_900, %c0_901] : memref<49x1x94xf32, #tpu.memory_space<vmem>>, vector<1x1x94xf32>
    %1147 = vector.shape_cast %1146 : vector<1x1x94xf32> to vector<1x94xf32>
    %1148 = vector.shape_cast %1147 : vector<1x94xf32> to vector<1x1x94xf32>
    %1149 = vector.broadcast %1148 : vector<1x1x94xf32> to vector<1x16x94xf32>
    %1150 = arith.mulf %1145, %1149 : vector<1x16x94xf32>
    %1151 = arith.addf %1144, %1150 : vector<1x16x94xf32>
    %c1_902 = arith.constant 1 : index
    %c12_903 = arith.constant 12 : index
    %c8_904 = arith.constant 8 : index
    %1152 = vector.load %arg7[%c1_902, %c12_903, %c8_904] : memref<2x36x114xf32, #tpu.memory_space<vmem>>, vector<1x16x94xf32>
    %c36_905 = arith.constant 36 : index
    %c0_906 = arith.constant 0 : index
    %c0_907 = arith.constant 0 : index
    %1153 = vector.load %arg4[%c36_905, %c0_906, %c0_907] : memref<49x1x94xf32, #tpu.memory_space<vmem>>, vector<1x1x94xf32>
    %1154 = vector.shape_cast %1153 : vector<1x1x94xf32> to vector<1x94xf32>
    %1155 = vector.shape_cast %1154 : vector<1x94xf32> to vector<1x1x94xf32>
    %1156 = vector.broadcast %1155 : vector<1x1x94xf32> to vector<1x16x94xf32>
    %1157 = arith.mulf %1152, %1156 : vector<1x16x94xf32>
    %1158 = arith.addf %1151, %1157 : vector<1x16x94xf32>
    %c1_908 = arith.constant 1 : index
    %c12_909 = arith.constant 12 : index
    %c9_910 = arith.constant 9 : index
    %1159 = vector.load %arg7[%c1_908, %c12_909, %c9_910] : memref<2x36x114xf32, #tpu.memory_space<vmem>>, vector<1x16x94xf32>
    %c37_911 = arith.constant 37 : index
    %c0_912 = arith.constant 0 : index
    %c0_913 = arith.constant 0 : index
    %1160 = vector.load %arg4[%c37_911, %c0_912, %c0_913] : memref<49x1x94xf32, #tpu.memory_space<vmem>>, vector<1x1x94xf32>
    %1161 = vector.shape_cast %1160 : vector<1x1x94xf32> to vector<1x94xf32>
    %1162 = vector.shape_cast %1161 : vector<1x94xf32> to vector<1x1x94xf32>
    %1163 = vector.broadcast %1162 : vector<1x1x94xf32> to vector<1x16x94xf32>
    %1164 = arith.mulf %1159, %1163 : vector<1x16x94xf32>
    %1165 = arith.addf %1158, %1164 : vector<1x16x94xf32>
    %c1_914 = arith.constant 1 : index
    %c12_915 = arith.constant 12 : index
    %c10_916 = arith.constant 10 : index
    %1166 = vector.load %arg7[%c1_914, %c12_915, %c10_916] : memref<2x36x114xf32, #tpu.memory_space<vmem>>, vector<1x16x94xf32>
    %c38_917 = arith.constant 38 : index
    %c0_918 = arith.constant 0 : index
    %c0_919 = arith.constant 0 : index
    %1167 = vector.load %arg4[%c38_917, %c0_918, %c0_919] : memref<49x1x94xf32, #tpu.memory_space<vmem>>, vector<1x1x94xf32>
    %1168 = vector.shape_cast %1167 : vector<1x1x94xf32> to vector<1x94xf32>
    %1169 = vector.shape_cast %1168 : vector<1x94xf32> to vector<1x1x94xf32>
    %1170 = vector.broadcast %1169 : vector<1x1x94xf32> to vector<1x16x94xf32>
    %1171 = arith.mulf %1166, %1170 : vector<1x16x94xf32>
    %1172 = arith.addf %1165, %1171 : vector<1x16x94xf32>
    %c1_920 = arith.constant 1 : index
    %c12_921 = arith.constant 12 : index
    %c11_922 = arith.constant 11 : index
    %1173 = vector.load %arg7[%c1_920, %c12_921, %c11_922] : memref<2x36x114xf32, #tpu.memory_space<vmem>>, vector<1x16x94xf32>
    %c39_923 = arith.constant 39 : index
    %c0_924 = arith.constant 0 : index
    %c0_925 = arith.constant 0 : index
    %1174 = vector.load %arg4[%c39_923, %c0_924, %c0_925] : memref<49x1x94xf32, #tpu.memory_space<vmem>>, vector<1x1x94xf32>
    %1175 = vector.shape_cast %1174 : vector<1x1x94xf32> to vector<1x94xf32>
    %1176 = vector.shape_cast %1175 : vector<1x94xf32> to vector<1x1x94xf32>
    %1177 = vector.broadcast %1176 : vector<1x1x94xf32> to vector<1x16x94xf32>
    %1178 = arith.mulf %1173, %1177 : vector<1x16x94xf32>
    %1179 = arith.addf %1172, %1178 : vector<1x16x94xf32>
    %c1_926 = arith.constant 1 : index
    %c12_927 = arith.constant 12 : index
    %c12_928 = arith.constant 12 : index
    %1180 = vector.load %arg7[%c1_926, %c12_927, %c12_928] : memref<2x36x114xf32, #tpu.memory_space<vmem>>, vector<1x16x94xf32>
    %c40_929 = arith.constant 40 : index
    %c0_930 = arith.constant 0 : index
    %c0_931 = arith.constant 0 : index
    %1181 = vector.load %arg4[%c40_929, %c0_930, %c0_931] : memref<49x1x94xf32, #tpu.memory_space<vmem>>, vector<1x1x94xf32>
    %1182 = vector.shape_cast %1181 : vector<1x1x94xf32> to vector<1x94xf32>
    %1183 = vector.shape_cast %1182 : vector<1x94xf32> to vector<1x1x94xf32>
    %1184 = vector.broadcast %1183 : vector<1x1x94xf32> to vector<1x16x94xf32>
    %1185 = arith.mulf %1180, %1184 : vector<1x16x94xf32>
    %1186 = arith.addf %1179, %1185 : vector<1x16x94xf32>
    %c1_932 = arith.constant 1 : index
    %c12_933 = arith.constant 12 : index
    %c13_934 = arith.constant 13 : index
    %1187 = vector.load %arg7[%c1_932, %c12_933, %c13_934] : memref<2x36x114xf32, #tpu.memory_space<vmem>>, vector<1x16x94xf32>
    %c41_935 = arith.constant 41 : index
    %c0_936 = arith.constant 0 : index
    %c0_937 = arith.constant 0 : index
    %1188 = vector.load %arg4[%c41_935, %c0_936, %c0_937] : memref<49x1x94xf32, #tpu.memory_space<vmem>>, vector<1x1x94xf32>
    %1189 = vector.shape_cast %1188 : vector<1x1x94xf32> to vector<1x94xf32>
    %1190 = vector.shape_cast %1189 : vector<1x94xf32> to vector<1x1x94xf32>
    %1191 = vector.broadcast %1190 : vector<1x1x94xf32> to vector<1x16x94xf32>
    %1192 = arith.mulf %1187, %1191 : vector<1x16x94xf32>
    %1193 = arith.addf %1186, %1192 : vector<1x16x94xf32>
    %c1_938 = arith.constant 1 : index
    %c13_939 = arith.constant 13 : index
    %c7_940 = arith.constant 7 : index
    %1194 = vector.load %arg7[%c1_938, %c13_939, %c7_940] : memref<2x36x114xf32, #tpu.memory_space<vmem>>, vector<1x16x94xf32>
    %c42_941 = arith.constant 42 : index
    %c0_942 = arith.constant 0 : index
    %c0_943 = arith.constant 0 : index
    %1195 = vector.load %arg4[%c42_941, %c0_942, %c0_943] : memref<49x1x94xf32, #tpu.memory_space<vmem>>, vector<1x1x94xf32>
    %1196 = vector.shape_cast %1195 : vector<1x1x94xf32> to vector<1x94xf32>
    %1197 = vector.shape_cast %1196 : vector<1x94xf32> to vector<1x1x94xf32>
    %1198 = vector.broadcast %1197 : vector<1x1x94xf32> to vector<1x16x94xf32>
    %1199 = arith.mulf %1194, %1198 : vector<1x16x94xf32>
    %1200 = arith.addf %1193, %1199 : vector<1x16x94xf32>
    %c1_944 = arith.constant 1 : index
    %c13_945 = arith.constant 13 : index
    %c8_946 = arith.constant 8 : index
    %1201 = vector.load %arg7[%c1_944, %c13_945, %c8_946] : memref<2x36x114xf32, #tpu.memory_space<vmem>>, vector<1x16x94xf32>
    %c43_947 = arith.constant 43 : index
    %c0_948 = arith.constant 0 : index
    %c0_949 = arith.constant 0 : index
    %1202 = vector.load %arg4[%c43_947, %c0_948, %c0_949] : memref<49x1x94xf32, #tpu.memory_space<vmem>>, vector<1x1x94xf32>
    %1203 = vector.shape_cast %1202 : vector<1x1x94xf32> to vector<1x94xf32>
    %1204 = vector.shape_cast %1203 : vector<1x94xf32> to vector<1x1x94xf32>
    %1205 = vector.broadcast %1204 : vector<1x1x94xf32> to vector<1x16x94xf32>
    %1206 = arith.mulf %1201, %1205 : vector<1x16x94xf32>
    %1207 = arith.addf %1200, %1206 : vector<1x16x94xf32>
    %c1_950 = arith.constant 1 : index
    %c13_951 = arith.constant 13 : index
    %c9_952 = arith.constant 9 : index
    %1208 = vector.load %arg7[%c1_950, %c13_951, %c9_952] : memref<2x36x114xf32, #tpu.memory_space<vmem>>, vector<1x16x94xf32>
    %c44_953 = arith.constant 44 : index
    %c0_954 = arith.constant 0 : index
    %c0_955 = arith.constant 0 : index
    %1209 = vector.load %arg4[%c44_953, %c0_954, %c0_955] : memref<49x1x94xf32, #tpu.memory_space<vmem>>, vector<1x1x94xf32>
    %1210 = vector.shape_cast %1209 : vector<1x1x94xf32> to vector<1x94xf32>
    %1211 = vector.shape_cast %1210 : vector<1x94xf32> to vector<1x1x94xf32>
    %1212 = vector.broadcast %1211 : vector<1x1x94xf32> to vector<1x16x94xf32>
    %1213 = arith.mulf %1208, %1212 : vector<1x16x94xf32>
    %1214 = arith.addf %1207, %1213 : vector<1x16x94xf32>
    %c1_956 = arith.constant 1 : index
    %c13_957 = arith.constant 13 : index
    %c10_958 = arith.constant 10 : index
    %1215 = vector.load %arg7[%c1_956, %c13_957, %c10_958] : memref<2x36x114xf32, #tpu.memory_space<vmem>>, vector<1x16x94xf32>
    %c45_959 = arith.constant 45 : index
    %c0_960 = arith.constant 0 : index
    %c0_961 = arith.constant 0 : index
    %1216 = vector.load %arg4[%c45_959, %c0_960, %c0_961] : memref<49x1x94xf32, #tpu.memory_space<vmem>>, vector<1x1x94xf32>
    %1217 = vector.shape_cast %1216 : vector<1x1x94xf32> to vector<1x94xf32>
    %1218 = vector.shape_cast %1217 : vector<1x94xf32> to vector<1x1x94xf32>
    %1219 = vector.broadcast %1218 : vector<1x1x94xf32> to vector<1x16x94xf32>
    %1220 = arith.mulf %1215, %1219 : vector<1x16x94xf32>
    %1221 = arith.addf %1214, %1220 : vector<1x16x94xf32>
    %c1_962 = arith.constant 1 : index
    %c13_963 = arith.constant 13 : index
    %c11_964 = arith.constant 11 : index
    %1222 = vector.load %arg7[%c1_962, %c13_963, %c11_964] : memref<2x36x114xf32, #tpu.memory_space<vmem>>, vector<1x16x94xf32>
    %c46_965 = arith.constant 46 : index
    %c0_966 = arith.constant 0 : index
    %c0_967 = arith.constant 0 : index
    %1223 = vector.load %arg4[%c46_965, %c0_966, %c0_967] : memref<49x1x94xf32, #tpu.memory_space<vmem>>, vector<1x1x94xf32>
    %1224 = vector.shape_cast %1223 : vector<1x1x94xf32> to vector<1x94xf32>
    %1225 = vector.shape_cast %1224 : vector<1x94xf32> to vector<1x1x94xf32>
    %1226 = vector.broadcast %1225 : vector<1x1x94xf32> to vector<1x16x94xf32>
    %1227 = arith.mulf %1222, %1226 : vector<1x16x94xf32>
    %1228 = arith.addf %1221, %1227 : vector<1x16x94xf32>
    %c1_968 = arith.constant 1 : index
    %c13_969 = arith.constant 13 : index
    %c12_970 = arith.constant 12 : index
    %1229 = vector.load %arg7[%c1_968, %c13_969, %c12_970] : memref<2x36x114xf32, #tpu.memory_space<vmem>>, vector<1x16x94xf32>
    %c47_971 = arith.constant 47 : index
    %c0_972 = arith.constant 0 : index
    %c0_973 = arith.constant 0 : index
    %1230 = vector.load %arg4[%c47_971, %c0_972, %c0_973] : memref<49x1x94xf32, #tpu.memory_space<vmem>>, vector<1x1x94xf32>
    %1231 = vector.shape_cast %1230 : vector<1x1x94xf32> to vector<1x94xf32>
    %1232 = vector.shape_cast %1231 : vector<1x94xf32> to vector<1x1x94xf32>
    %1233 = vector.broadcast %1232 : vector<1x1x94xf32> to vector<1x16x94xf32>
    %1234 = arith.mulf %1229, %1233 : vector<1x16x94xf32>
    %1235 = arith.addf %1228, %1234 : vector<1x16x94xf32>
    %c1_974 = arith.constant 1 : index
    %c13_975 = arith.constant 13 : index
    %c13_976 = arith.constant 13 : index
    %1236 = vector.load %arg7[%c1_974, %c13_975, %c13_976] : memref<2x36x114xf32, #tpu.memory_space<vmem>>, vector<1x16x94xf32>
    %c48_977 = arith.constant 48 : index
    %c0_978 = arith.constant 0 : index
    %c0_979 = arith.constant 0 : index
    %1237 = vector.load %arg4[%c48_977, %c0_978, %c0_979] : memref<49x1x94xf32, #tpu.memory_space<vmem>>, vector<1x1x94xf32>
    %1238 = vector.shape_cast %1237 : vector<1x1x94xf32> to vector<1x94xf32>
    %1239 = vector.shape_cast %1238 : vector<1x94xf32> to vector<1x1x94xf32>
    %1240 = vector.broadcast %1239 : vector<1x1x94xf32> to vector<1x16x94xf32>
    %1241 = arith.mulf %1236, %1240 : vector<1x16x94xf32>
    %1242 = arith.addf %1235, %1241 : vector<1x16x94xf32>
    %1243 = vector.extract_strided_slice %1242 {offsets = [0, 0, 0], sizes = [1, 16, 16], strides = [1, 1, 1]} : vector<1x16x94xf32> to vector<1x16x16xf32>
    %1244 = vector.shape_cast %1243 : vector<1x16x16xf32> to vector<16x16xf32>
    %1245 = vector.extract_strided_slice %1242 {offsets = [0, 0, 26], sizes = [1, 16, 16], strides = [1, 1, 1]} : vector<1x16x94xf32> to vector<1x16x16xf32>
    %1246 = vector.shape_cast %1245 : vector<1x16x16xf32> to vector<16x16xf32>
    %1247 = arith.addf %1244, %1246 : vector<16x16xf32>
    %cst_980 = arith.constant 5.000000e-01 : f32
    %1248 = vector.broadcast %cst_980 : f32 to vector<16x16xf32>
    %1249 = arith.mulf %1248, %1247 : vector<16x16xf32>
    %1250 = math.tanh %1249 : vector<16x16xf32>
    %cst_981 = arith.constant 1.000000e+00 : f32
    %1251 = vector.broadcast %cst_981 : f32 to vector<16x16xf32>
    %1252 = arith.addf %1250, %1251 : vector<16x16xf32>
    %cst_982 = arith.constant 5.000000e-01 : f32
    %1253 = vector.broadcast %cst_982 : f32 to vector<16x16xf32>
    %1254 = arith.mulf %1253, %1252 : vector<16x16xf32>
    %c0_983 = arith.constant 0 : index
    %c0_984 = arith.constant 0 : index
    %c0_985 = arith.constant 0 : index
    %1255 = vector.load %arg8[%c0_983, %c0_984, %c0_985] : memref<4x16x16xf32, #tpu.memory_space<vmem>>, vector<1x16x16xf32>
    %1256 = vector.shape_cast %1255 : vector<1x16x16xf32> to vector<16x16xf32>
    %1257 = arith.mulf %1256, %1254 : vector<16x16xf32>
    %1258 = vector.shape_cast %1257 : vector<16x16xf32> to vector<1x1x16x16xf32>
    %c0_986 = arith.constant 0 : index
    %c0_987 = arith.constant 0 : index
    %c0_988 = arith.constant 0 : index
    %c0_989 = arith.constant 0 : index
    %1259 = vector.load %arg6[%c0_986, %c0_987, %c0_988, %c0_989] : memref<1x4x16x16xf32, #tpu.memory_space<vmem>>, vector<1x1x16x16xf32>
    tpu.vector_store %arg6[%c0_986, %c0_987, %c0_988, %c0_989], %1258 {strides = array<i32>} : memref<1x4x16x16xf32, #tpu.memory_space<vmem>>, vector<1x1x16x16xf32>,
    %c1_990 = arith.constant 1 : index
    %c0_991 = arith.constant 0 : index
    %c0_992 = arith.constant 0 : index
    %1260 = vector.load %arg8[%c1_990, %c0_991, %c0_992] : memref<4x16x16xf32, #tpu.memory_space<vmem>>, vector<1x16x16xf32>
    %1261 = vector.shape_cast %1260 : vector<1x16x16xf32> to vector<16x16xf32>
    %1262 = arith.mulf %1261, %1254 : vector<16x16xf32>
    %1263 = vector.shape_cast %1262 : vector<16x16xf32> to vector<1x1x16x16xf32>
    %c0_993 = arith.constant 0 : index
    %c1_994 = arith.constant 1 : index
    %c0_995 = arith.constant 0 : index
    %c0_996 = arith.constant 0 : index
    %1264 = vector.load %arg6[%c0_993, %c1_994, %c0_995, %c0_996] : memref<1x4x16x16xf32, #tpu.memory_space<vmem>>, vector<1x1x16x16xf32>
    tpu.vector_store %arg6[%c0_993, %c1_994, %c0_995, %c0_996], %1263 {strides = array<i32>} : memref<1x4x16x16xf32, #tpu.memory_space<vmem>>, vector<1x1x16x16xf32>,
    %c2_997 = arith.constant 2 : index
    %c0_998 = arith.constant 0 : index
    %c0_999 = arith.constant 0 : index
    %1265 = vector.load %arg8[%c2_997, %c0_998, %c0_999] : memref<4x16x16xf32, #tpu.memory_space<vmem>>, vector<1x16x16xf32>
    %1266 = vector.shape_cast %1265 : vector<1x16x16xf32> to vector<16x16xf32>
    %1267 = arith.mulf %1266, %1254 : vector<16x16xf32>
    %1268 = vector.shape_cast %1267 : vector<16x16xf32> to vector<1x1x16x16xf32>
    %c0_1000 = arith.constant 0 : index
    %c2_1001 = arith.constant 2 : index
    %c0_1002 = arith.constant 0 : index
    %c0_1003 = arith.constant 0 : index
    %1269 = vector.load %arg6[%c0_1000, %c2_1001, %c0_1002, %c0_1003] : memref<1x4x16x16xf32, #tpu.memory_space<vmem>>, vector<1x1x16x16xf32>
    tpu.vector_store %arg6[%c0_1000, %c2_1001, %c0_1002, %c0_1003], %1268 {strides = array<i32>} : memref<1x4x16x16xf32, #tpu.memory_space<vmem>>, vector<1x1x16x16xf32>,
    %c3_1004 = arith.constant 3 : index
    %c0_1005 = arith.constant 0 : index
    %c0_1006 = arith.constant 0 : index
    %1270 = vector.load %arg8[%c3_1004, %c0_1005, %c0_1006] : memref<4x16x16xf32, #tpu.memory_space<vmem>>, vector<1x16x16xf32>
    %1271 = vector.shape_cast %1270 : vector<1x16x16xf32> to vector<16x16xf32>
    %1272 = arith.mulf %1271, %1254 : vector<16x16xf32>
    %1273 = vector.shape_cast %1272 : vector<16x16xf32> to vector<1x1x16x16xf32>
    %c0_1007 = arith.constant 0 : index
    %c3_1008 = arith.constant 3 : index
    %c0_1009 = arith.constant 0 : index
    %c0_1010 = arith.constant 0 : index
    %1274 = vector.load %arg6[%c0_1007, %c3_1008, %c0_1009, %c0_1010] : memref<1x4x16x16xf32, #tpu.memory_space<vmem>>, vector<1x1x16x16xf32>
    tpu.vector_store %arg6[%c0_1007, %c3_1008, %c0_1009, %c0_1010], %1273 {strides = array<i32>} : memref<1x4x16x16xf32, #tpu.memory_space<vmem>>, vector<1x1x16x16xf32>,
    return
  }
  func.func @transform_0(%arg0: i32) -> (i32, i32, i32) {
    %c0_i32 = arith.constant 0 : i32
    %c0_i32_0 = arith.constant 0 : i32
    %c0_i32_1 = arith.constant 0 : i32
    return %arg0, %c0_i32, %c0_i32_0 : i32, i32, i32
  }
  func.func @transform_1(%arg0: i32) -> (i32, i32, i32) {
    %c0_i32 = arith.constant 0 : i32
    %c0_i32_0 = arith.constant 0 : i32
    %c0_i32_1 = arith.constant 0 : i32
    %c0_i32_2 = arith.constant 0 : i32
    return %c0_i32, %c0_i32_0, %c0_i32_1 : i32, i32, i32
  }
  func.func @transform_2(%arg0: i32) -> (i32, i32, i32) {
    %c0_i32 = arith.constant 0 : i32
    %c0_i32_0 = arith.constant 0 : i32
    %c0_i32_1 = arith.constant 0 : i32
    %c0_i32_2 = arith.constant 0 : i32
    return %c0_i32, %c0_i32_0, %c0_i32_1 : i32, i32, i32
  }
  func.func @transform_3(%arg0: i32) -> (i32, i32, i32) {
    %c0_i32 = arith.constant 0 : i32
    %c0_i32_0 = arith.constant 0 : i32
    %c0_i32_1 = arith.constant 0 : i32
    %c0_i32_2 = arith.constant 0 : i32
    return %c0_i32, %c0_i32_0, %c0_i32_1 : i32, i32, i32
  }
  func.func @transform_4(%arg0: i32) -> (i32, i32) {
    %c0_i32 = arith.constant 0 : i32
    %c0_i32_0 = arith.constant 0 : i32
    %c0_i32_1 = arith.constant 0 : i32
    return %c0_i32, %c0_i32_0 : i32, i32
  }
  func.func @transform_5(%arg0: i32) -> (i32, i32, i32, i32) {
    %c0_i32 = arith.constant 0 : i32
    %c0_i32_0 = arith.constant 0 : i32
    %c0_i32_1 = arith.constant 0 : i32
    %c0_i32_2 = arith.constant 0 : i32
    return %arg0, %c0_i32, %c0_i32_0, %c0_i32_1 : i32, i32, i32, i32
  }
}

</mosaic_0001>

<llo_original>
// kernel: tpu_custom_call.1
$region0: #{tpu_custom_call.1}
  #allocation0 [shape = 'u32[]', space=smem, size = 0x4, offset = 0x4, fixed_abs, tag = 'smem constant byte address 0x4 - core index']
  #allocation1 [shape = 'u32[144,128]{1,0:T(1,128)}', space=vmem, size = 0x12000, scoped, tag = 'internal scratch']
  #allocation2 [shape = 'f32[2,36,114]{2,1,0:T(8,128)}', space=vmem, size = 0xa000, scoped, tag = 'scratch operand']
  #allocation3 [shape = 'f32[4,16,16]{2,1,0:T(8,128)}', space=vmem, size = 0x8000, scoped, tag = 'scratch operand']
  %s0 = inlined_call_operand.vmem [shape: f32[2,36,114], index: 0, kind: input, shape index: {}]
  %s1 = inlined_call_operand.vmem [shape: f32[103,1,94], index: 1, kind: input, shape index: {}]
  %s2 = inlined_call_operand.vmem [shape: f32[7,1,94], index: 2, kind: input, shape index: {}]
  %s3 = inlined_call_operand.vmem [shape: f32[49,1,94], index: 3, kind: input, shape index: {}]
  %s4 = inlined_call_operand.vmem [shape: f32[4,5], index: 4, kind: input, shape index: {}]
  %s5 = inlined_call_operand.hbm [shape: f32[2,4,16,16], index: 5, kind: output, shape index: {}]
  %s6 = sld [smem:[#allocation0]]
  $region57: #{tpu_custom_call.1} parent=0
    _
  %s8 = ssub.s32 1, %s6
  %s9 = scalar_select 0, %s8, %s6
  $region1: #{tpu_custom_call.1} parent=0
    #allocation4 [shape = 'u8[2048]{0}', space=smem, size = 0x800, scoped, tag = 'input window, operand 4, single buffered']
    #allocation5 [shape = 's32[2]{0}', space=sflag, size = 0x8, scoped, tag = 'scoped memory for tpu_custom_call.1']
    #allocation6 [shape = 's32[2]{0}', space=sflag, size = 0x8, scoped, tag = 'scoped memory for tpu_custom_call.1']
    #allocation7 [shape = 'u8[65536]{0}', space=vmem, size = 0x10000, scoped, tag = 'output window, operand 0']
    %10 = vsyncpa [#allocation6], 0
    %11 = vsyncpa [#allocation5], 0
    %s12 = scalar_lea.sflag [#allocation5], 1
    %13 = vsyncpa %s12, 0
    loop: start=0, step=1, limit=4
    $region2: #{tpu_custom_call.1} parent=1 // loop_pre_header
      _
    $region3: #{tpu_custom_call.1} parent=1 // loop_header
      %s15 = sphi 0, %s19
      %p16 = scmp.ge.s32.totalorder %s15, 4
      %s25 = sphi 0, %s27
      %s28 = sphi 0, %s25
      %s29 = sphi 0, %s28
      %s45 = sphi 0, %s29
      %s49 = sphi 0, %s49
      %s51 = sphi 0, %s49
      %s52 = sphi 0, %s51
      %s66 = sphi 0, %s52
      %s70 = sphi 0, %s70
      %s72 = sphi 0, %s70
      %s73 = sphi 0, %s72
      %s87 = sphi 0, %s73
      %s91 = sphi 0, %s91
      %s93 = sphi 0, %s91
      %s94 = sphi 0, %s93
      %s108 = sphi 0, %s94
      %s112 = sphi 0, %s112
      %s114 = sphi 0, %s112
      %s115 = sphi 0, %s114
      %s129 = sphi 0, %s115
      %s135 = sphi 0, %s137
      %s138 = sphi 0, %s135
      %s139 = sphi 0, %s138
      %s155 = sphi 0, %s139
    $region4: #{tpu_custom_call.1} parent=1 // loop_header_branch
      %18 = sbr.rel (%p16) target = $region8
    $region5: #{tpu_custom_call.1} parent=1 // loop_body
      %s20 = ssub.s32 %s15, 1
      %s21 = ssub.s32 %s15, 2
      %s22 = sadd.s32 %s15, 1
      %s23 = ssub.s32 %s15, %s22
      %p24 = scmp.eq.s32.totalorder %s23, 0
      %s26 = sadd.s32 %s25, 1
      %s27 = scalar_select %p24, %s25, %s26
      %p30 = pneg %p24
      %p31 = scmp.eq.s32.totalorder %s15, 1
      %p32 = por %p30, %p31
      %p33 = scmp.ne.s32.totalorder %s25, %s28
      %p34 = scmp.eq.s32.totalorder %s15, 0
      %p35 = por %p33, %p34
      %p36 = scmp.ne.s32.totalorder %s25, %s28
      %p37 = scmp.eq.s32.totalorder %s20, 1
      %p38 = por %p36, %p37
      %p39 = scmp.ne.s32.totalorder %s28, %s29
      %p40 = scmp.eq.s32.totalorder %s20, 0
      %p41 = por %p39, %p40
      %p42 = scmp.ne.s32.totalorder %s28, %s29
      %p43 = scmp.eq.s32.totalorder %s21, 1
      %p44 = por %p42, %p43
      %p46 = scmp.ne.s32.totalorder %s29, %s45
      %p47 = scmp.eq.s32.totalorder %s21, 0
      %p48 = por %p46, %p47
      %s50 = sadd.s32 %s49, 1
      %p53 = scmp.eq.s32.totalorder %s15, 1
      %p54 = scmp.ne.s32.totalorder %s49, %s51
      %p55 = scmp.eq.s32.totalorder %s15, 0
      %p56 = por %p54, %p55
      %p57 = scmp.ne.s32.totalorder %s49, %s51
      %p58 = scmp.eq.s32.totalorder %s20, 1
      %p59 = por %p57, %p58
      %p60 = scmp.ne.s32.totalorder %s51, %s52
      %p61 = scmp.eq.s32.totalorder %s20, 0
      %p62 = por %p60, %p61
      %p63 = scmp.ne.s32.totalorder %s51, %s52
      %p64 = scmp.eq.s32.totalorder %s21, 1
      %p65 = por %p63, %p64
      %p67 = scmp.ne.s32.totalorder %s52, %s66
      %p68 = scmp.eq.s32.totalorder %s21, 0
      %p69 = por %p67, %p68
      %s71 = sadd.s32 %s70, 1
      %p74 = scmp.eq.s32.totalorder %s15, 1
      %p75 = scmp.ne.s32.totalorder %s70, %s72
      %p76 = scmp.eq.s32.totalorder %s15, 0
      %p77 = por %p75, %p76
      %p78 = scmp.ne.s32.totalorder %s70, %s72
      %p79 = scmp.eq.s32.totalorder %s20, 1
      %p80 = por %p78, %p79
      %p81 = scmp.ne.s32.totalorder %s72, %s73
      %p82 = scmp.eq.s32.totalorder %s20, 0
      %p83 = por %p81, %p82
      %p84 = scmp.ne.s32.totalorder %s72, %s73
      %p85 = scmp.eq.s32.totalorder %s21, 1
      %p86 = por %p84, %p85
      %p88 = scmp.ne.s32.totalorder %s73, %s87
      %p89 = scmp.eq.s32.totalorder %s21, 0
      %p90 = por %p88, %p89
      %s92 = sadd.s32 %s91, 1
      %p95 = scmp.eq.s32.totalorder %s15, 1
      %p96 = scmp.ne.s32.totalorder %s91, %s93
      %p97 = scmp.eq.s32.totalorder %s15, 0
      %p98 = por %p96, %p97
      %p99 = scmp.ne.s32.totalorder %s91, %s93
      %p100 = scmp.eq.s32.totalorder %s20, 1
      %p101 = por %p99, %p100
      %p102 = scmp.ne.s32.totalorder %s93, %s94
      %p103 = scmp.eq.s32.totalorder %s20, 0
      %p104 = por %p102, %p103
      %p105 = scmp.ne.s32.totalorder %s93, %s94
      %p106 = scmp.eq.s32.totalorder %s21, 1
      %p107 = por %p105, %p106
      %p109 = scmp.ne.s32.totalorder %s94, %s108
      %p110 = scmp.eq.s32.totalorder %s21, 0
      %p111 = por %p109, %p110
      %s113 = sadd.s32 %s112, 1
      %p116 = scmp.eq.s32.totalorder %s15, 1
      %p117 = scmp.ne.s32.totalorder %s112, %s114
      %p118 = scmp.eq.s32.totalorder %s15, 0
      %p119 = por %p117, %p118
      %p120 = scmp.ne.s32.totalorder %s112, %s114
      %p121 = scmp.eq.s32.totalorder %s20, 1
      %p122 = por %p120, %p121
      %p123 = scmp.ne.s32.totalorder %s114, %s115
      %p124 = scmp.eq.s32.totalorder %s20, 0
      %p125 = por %p123, %p124
      %p126 = scmp.ne.s32.totalorder %s114, %s115
      %p127 = scmp.eq.s32.totalorder %s21, 1
      %p128 = por %p126, %p127
      %p130 = scmp.ne.s32.totalorder %s115, %s129
      %p131 = scmp.eq.s32.totalorder %s21, 0
      %p132 = por %p130, %p131
      %s133 = ssub.s32 %s15, %s22
      %p134 = scmp.eq.s32.totalorder %s133, 0
      %s136 = sadd.s32 %s135, 1
      %s137 = scalar_select %p134, %s135, %s136
      %p140 = pneg %p134
      %p141 = scmp.eq.s32.totalorder %s15, 1
      %p142 = por %p140, %p141
      %p143 = scmp.ne.s32.totalorder %s135, %s138
      %p144 = scmp.eq.s32.totalorder %s15, 0
      %p145 = por %p143, %p144
      %p146 = scmp.ne.s32.totalorder %s135, %s138
      %p147 = scmp.eq.s32.totalorder %s20, 1
      %p148 = por %p146, %p147
      %p149 = scmp.ne.s32.totalorder %s138, %s139
      %p150 = scmp.eq.s32.totalorder %s20, 0
      %p151 = por %p149, %p150
      %p152 = scmp.ne.s32.totalorder %s138, %s139
      %p153 = scmp.eq.s32.totalorder %s21, 1
      %p154 = por %p152, %p153
      %p156 = scmp.ne.s32.totalorder %s139, %s155
      %p157 = scmp.eq.s32.totalorder %s21, 0
      %p158 = por %p156, %p157
      %p159 = scmp.le.s32.totalorder 1, %s15
      %p160 = scmp.lt.s32.totalorder %s15, 3
      %p161 = pnand %p159, %p160
      %p162 = pneg %p161
      // Predicated region
      $region9: #{tpu_custom_call.1} parent=5 // pred_check
        _
      $region10: #{tpu_custom_call.1} parent=5 // pred_check_branch
        %164 = sbr.rel (%p161) target = $region12
      $region11: #{tpu_custom_call.1} parent=5 // pred_region
        %s165 = ssub.s32 %s15, 1
        // Predicated region
        $region13: #{tpu_custom_call.1} parent=11 // pred_check
          %p166 = pneg %p62
        $region14: #{tpu_custom_call.1} parent=11 // pred_check_branch
          %168 = sbr.rel (%p166) target = $region16
        $region15: #{tpu_custom_call.1} parent=11 // pred_region
          _
        $region16: #{tpu_custom_call.1} parent=11 // pred_fallthru
          _
        // Predicated region
        $region17: #{tpu_custom_call.1} parent=11 // pred_check
          %p169 = pneg %p83
        $region18: #{tpu_custom_call.1} parent=11 // pred_check_branch
          %171 = sbr.rel (%p169) target = $region20
        $region19: #{tpu_custom_call.1} parent=11 // pred_region
          _
        $region20: #{tpu_custom_call.1} parent=11 // pred_fallthru
          _
        // Predicated region
        $region21: #{tpu_custom_call.1} parent=11 // pred_check
          %p172 = pneg %p104
        $region22: #{tpu_custom_call.1} parent=11 // pred_check_branch
          %174 = sbr.rel (%p172) target = $region24
        $region23: #{tpu_custom_call.1} parent=11 // pred_region
          _
        $region24: #{tpu_custom_call.1} parent=11 // pred_fallthru
          _
        // Predicated region
        $region25: #{tpu_custom_call.1} parent=11 // pred_check
          %p175 = pneg %p125
        $region26: #{tpu_custom_call.1} parent=11 // pred_check_branch
          %177 = sbr.rel (%p175) target = $region28
        $region27: #{tpu_custom_call.1} parent=11 // pred_region
          %s179 = ssub.s32 64, 64
          %180 = vsyncadd [#allocation6], %s179
          %s182 = sshll.u32 %s4, 4
          %s183 = int_to_ptr.vmem [resolvable:$true] %s182
          %185 = dma.vmem_to_smem %s183, 64, [#allocation4], [#allocation6]
        $region28: #{tpu_custom_call.1} parent=11 // pred_fallthru
          _
      $region12: #{tpu_custom_call.1} parent=5 // pred_fallthru
        _
      %p186 = scmp.lt.s32.totalorder %s15, 2
      // Predicated region
      $region29: #{tpu_custom_call.1} parent=5 // pred_check
        %p187 = pneg %p186
      $region30: #{tpu_custom_call.1} parent=5 // pred_check_branch
        %189 = sbr.rel (%p187) target = $region32
      $region31: #{tpu_custom_call.1} parent=5 // pred_region
        // Predicated region
        $region33: #{tpu_custom_call.1} parent=31 // pred_check
          %p190 = pneg %p35
        $region34: #{tpu_custom_call.1} parent=31 // pred_check_branch
          %192 = sbr.rel (%p190) target = $region36
        $region35: #{tpu_custom_call.1} parent=31 // pred_region
          %p193 = scmp.lt.s32.totalorder %s15, 1
          %s194 = scalar_select %p193, %s15, 1
          %s195 = smul.addr %s194, 5
          %s196 = smul.addr %s195, 8
          %s197 = scalar_lea.vmem %s0, %s196
        $region36: #{tpu_custom_call.1} parent=31 // pred_fallthru
          _
      $region32: #{tpu_custom_call.1} parent=5 // pred_fallthru
        _
      %p198 = scmp.le.s32.totalorder 1, %s15
      %p199 = scmp.lt.s32.totalorder %s15, 3
      %p200 = pnand %p198, %p199
      %p201 = pneg %p200
      // Predicated region
      $region37: #{tpu_custom_call.1} parent=5 // pred_check
        _
      $region38: #{tpu_custom_call.1} parent=5 // pred_check_branch
        %203 = sbr.rel (%p200) target = $region40
      $region39: #{tpu_custom_call.1} parent=5 // pred_region
        %s204 = ssub.s32 %s15, 1
        // Predicated region
        $region41: #{tpu_custom_call.1} parent=39 // pred_check
          %p205 = pneg %p125
        $region42: #{tpu_custom_call.1} parent=39 // pred_check_branch
          %207 = sbr.rel (%p205) target = $region44
        $region43: #{tpu_custom_call.1} parent=39 // pred_region
          %208 = dma.done [#allocation6], 64
        $region44: #{tpu_custom_call.1} parent=39 // pred_fallthru
          _
        %209 = sfence
        %p210 = scmp.lt.s32.totalorder %s20, 1
        %s211 = scalar_select %p210, %s20, 1
        %s212 = smul.addr %s211, 5
        %s213 = smul.addr %s212, 8
        %s214 = scalar_lea.vmem %s0, %s213
        %p215 = pneg %p41
        %p216 = pneg %p38
        %p217 = pneg %p62
        %p218 = pneg %p59
        %p219 = pneg %p83
        %p220 = pneg %p80
        %p221 = pneg %p104
        %p222 = pneg %p101
        %p223 = pneg %p125
        %p224 = pneg %p122
        %p225 = pneg %p151
        %p226 = pneg %p148
        %s227 = sand.u32 %s138, 1
        %s228 = scalar_lea.sflag [#allocation5], %s227
        %s229 = sand.u32 %s138, 1
        %s230 = smul.addr %s229, 64
        %s231 = scalar_lea.vmem [#allocation7], %s230
        %p232 = scmp.lt.s32.totalorder %s20, 1
        %s233 = scalar_select %p232, %s20, 1
        %s234 = smul.addr %s233, 5
        %s235 = smul.addr %s234, 8
        %s236 = scalar_lea.vmem %s0, %s235
        %vm237 = vcmask 932864
        %238 = vst.msk [vmem:[#allocation2] sm:$0xff] %vm237, 0.0
        %vm239 = vcmask 926720
        %240 = vst.msk [vmem:[#allocation2 + $0x8] sm:$0x3] %vm239, 0.0
        %241 = vst.msk [vmem:[#allocation2 + $0x28] sm:$0xff] %vm237, 0.0
        %242 = vst.msk [vmem:[#allocation2 + $0x30] sm:$0x3] %vm239, 0.0
        %243 = vst.msk [vmem:[#allocation2 + $0x1a] sm:$0xff] %vm237, 0.0
        %244 = vst.msk [vmem:[#allocation2 + $0x22] sm:$0x3] %vm239, 0.0
        %245 = vst.msk [vmem:[#allocation2 + $0x42] sm:$0xff] %vm237, 0.0
        %246 = vst.msk [vmem:[#allocation2 + $0x4a] sm:$0x3] %vm239, 0.0
        %vm247 = vcmask 80896
        %248 = vst.msk [vmem:[#allocation2 + $0xa] sm:$0xff] %vm247, 0.0
        %249 = vst.msk [vmem:[#allocation2 + $0x12] sm:$0xff] %vm247, 0.0
        %250 = vst.msk [vmem:[#allocation2 + $0x32] sm:$0xff] %vm247, 0.0
        %251 = vst.msk [vmem:[#allocation2 + $0x3a] sm:$0xff] %vm247, 0.0
        %vm252 = vcmask 933696
        %253 = vst.msk [vmem:[#allocation2 + $0xa] sm:$0xff] %vm252, 0.0
        %254 = vst.msk [vmem:[#allocation2 + $0x12] sm:$0xff] %vm252, 0.0
        %255 = vst.msk [vmem:[#allocation2 + $0x32] sm:$0xff] %vm252, 0.0
        %256 = vst.msk [vmem:[#allocation2 + $0x3a] sm:$0xff] %vm252, 0.0
        %v257 = vld [vmem:[%s236 + $0x8] sm:$0xff]
        %v258 = vld [vmem:[%s236 + $0x10] sm:$0xff]
        %v259 = vld [vmem:[%s1] sm:$0x1]
        %v261 = vlaneseq
        %v262 = vshrl.u32 %v261, 7
        %v263 = vsub.s32 0, %v262
        %v264 = vrot.slane %v259, %v263
        %265 = vrot.lane.b32.xlu0 %v264, 8
        %v266 = vpop.permute.xlu0 %265
        %v268 = vmul.f32 %v257, %v266
        %v269 = vmul.f32 %v258, %v266
        %v270 = vld [vmem:[%s2] sm:$0x1]
        %v272 = vlaneseq
        %v273 = vshrl.u32 %v272, 7
        %v274 = vsub.s32 0, %v273
        %v275 = vrot.slane %v270, %v274
        %276 = vrot.lane.b32.xlu0 %v275, 8
        %v277 = vpop.permute.xlu0 %276
        %v279 = vadd.f32 %v268, %v277
        %v280 = vadd.f32 %v269, %v277
        %s281 = scalar_lea.vmem %s1, 1
        %v282 = vld [vmem:[%s281] sm:$0x1]
        %v284 = vlaneseq
        %v285 = vshrl.u32 %v284, 7
        %v286 = vsub.s32 0, %v285
        %v287 = vrot.slane %v282, %v286
        %288 = vrot.lane.b32.xlu0 %v287, 9
        %v289 = vpop.permute.xlu0 %288
        %v291 = vmul.f32 %v257, %v289
        %v292 = vmul.f32 %v258, %v289
        %295 = vrot.lane.b32.xlu0 %v291, 127
        %v296 = vpop.permute.xlu0 %295
        %297 = vrot.lane.b32.xlu0 %v292, 127
        %v298 = vpop.permute.xlu0 %297
        %v301 = vadd.f32 %v279, %v296
        %v302 = vadd.f32 %v280, %v298
        %s303 = scalar_lea.vmem %s1, 2
        %v304 = vld [vmem:[%s303] sm:$0x1]
        %v306 = vlaneseq
        %v307 = vshrl.u32 %v306, 7
        %v308 = vsub.s32 0, %v307
        %v309 = vrot.slane %v304, %v308
        %310 = vrot.lane.b32.xlu0 %v309, 10
        %v311 = vpop.permute.xlu0 %310
        %v313 = vmul.f32 %v257, %v311
        %v314 = vmul.f32 %v258, %v311
        %317 = vrot.lane.b32.xlu0 %v313, 126
        %v318 = vpop.permute.xlu0 %317
        %319 = vrot.lane.b32.xlu0 %v314, 126
        %v320 = vpop.permute.xlu0 %319
        %v323 = vadd.f32 %v301, %v318
        %v324 = vadd.f32 %v302, %v320
        %s325 = scalar_lea.vmem %s1, 3
        %v326 = vld [vmem:[%s325] sm:$0x1]
        %v328 = vlaneseq
        %v329 = vshrl.u32 %v328, 7
        %v330 = vsub.s32 0, %v329
        %v331 = vrot.slane %v326, %v330
        %332 = vrot.lane.b32.xlu0 %v331, 11
        %v333 = vpop.permute.xlu0 %332
        %v335 = vmul.f32 %v257, %v333
        %v336 = vmul.f32 %v258, %v333
        %339 = vrot.lane.b32.xlu0 %v335, 125
        %v340 = vpop.permute.xlu0 %339
        %341 = vrot.lane.b32.xlu0 %v336, 125
        %v342 = vpop.permute.xlu0 %341
        %v345 = vadd.f32 %v323, %v340
        %v346 = vadd.f32 %v324, %v342
        %s347 = scalar_lea.vmem %s1, 4
        %v348 = vld [vmem:[%s347] sm:$0x1]
        %v350 = vlaneseq
        %v351 = vshrl.u32 %v350, 7
        %v352 = vsub.s32 0, %v351
        %v353 = vrot.slane %v348, %v352
        %354 = vrot.lane.b32.xlu0 %v353, 12
        %v355 = vpop.permute.xlu0 %354
        %v357 = vmul.f32 %v257, %v355
        %v358 = vmul.f32 %v258, %v355
        %361 = vrot.lane.b32.xlu0 %v357, 124
        %v362 = vpop.permute.xlu0 %361
        %363 = vrot.lane.b32.xlu0 %v358, 124
        %v364 = vpop.permute.xlu0 %363
        %v367 = vadd.f32 %v345, %v362
        %v368 = vadd.f32 %v346, %v364
        %v369 = vld [vmem:[%s236 + $0x9] sm:$0xff]
        %v370 = vld [vmem:[%s236 + $0x11] sm:$0xff]
        %s371 = scalar_lea.vmem %s1, 5
        %v372 = vld [vmem:[%s371] sm:$0x1]
        %v374 = vlaneseq
        %v375 = vshrl.u32 %v374, 7
        %v376 = vsub.s32 0, %v375
        %v377 = vrot.slane %v372, %v376
        %378 = vrot.lane.b32.xlu0 %v377, 8
        %v379 = vpop.permute.xlu0 %378
        %v381 = vmul.f32 %v369, %v379
        %v382 = vmul.f32 %v370, %v379
        %v383 = vadd.f32 %v367, %v381
        %v384 = vadd.f32 %v368, %v382
        %s385 = scalar_lea.vmem %s1, 6
        %v386 = vld [vmem:[%s385] sm:$0x1]
        %v388 = vlaneseq
        %v389 = vshrl.u32 %v388, 7
        %v390 = vsub.s32 0, %v389
        %v391 = vrot.slane %v386, %v390
        %392 = vrot.lane.b32.xlu0 %v391, 9
        %v393 = vpop.permute.xlu0 %392
        %v395 = vmul.f32 %v369, %v393
        %v396 = vmul.f32 %v370, %v393
        %399 = vrot.lane.b32.xlu0 %v395, 127
        %v400 = vpop.permute.xlu0 %399
        %401 = vrot.lane.b32.xlu0 %v396, 127
        %v402 = vpop.permute.xlu0 %401
        %v405 = vadd.f32 %v383, %v400
        %v406 = vadd.f32 %v384, %v402
        %s407 = scalar_lea.vmem %s1, 7
        %v408 = vld [vmem:[%s407] sm:$0x1]
        %v410 = vlaneseq
        %v411 = vshrl.u32 %v410, 7
        %v412 = vsub.s32 0, %v411
        %v413 = vrot.slane %v408, %v412
        %414 = vrot.lane.b32.xlu0 %v413, 10
        %v415 = vpop.permute.xlu0 %414
        %v417 = vmul.f32 %v369, %v415
        %v418 = vmul.f32 %v370, %v415
        %421 = vrot.lane.b32.xlu0 %v417, 126
        %v422 = vpop.permute.xlu0 %421
        %423 = vrot.lane.b32.xlu0 %v418, 126
        %v424 = vpop.permute.xlu0 %423
        %v427 = vadd.f32 %v405, %v422
        %v428 = vadd.f32 %v406, %v424
        %s429 = scalar_lea.vmem %s1, 8
        %v430 = vld [vmem:[%s429] sm:$0x1]
        %v432 = vlaneseq
        %v433 = vshrl.u32 %v432, 7
        %v434 = vsub.s32 0, %v433
        %v435 = vrot.slane %v430, %v434
        %436 = vrot.lane.b32.xlu0 %v435, 11
        %v437 = vpop.permute.xlu0 %436
        %v439 = vmul.f32 %v369, %v437
        %v440 = vmul.f32 %v370, %v437
        %443 = vrot.lane.b32.xlu0 %v439, 125
        %v444 = vpop.permute.xlu0 %443
        %445 = vrot.lane.b32.xlu0 %v440, 125
        %v446 = vpop.permute.xlu0 %445
        %v449 = vadd.f32 %v427, %v444
        %v450 = vadd.f32 %v428, %v446
        %s451 = scalar_lea.vmem %s1, 9
        %v452 = vld [vmem:[%s451] sm:$0x1]
        %v454 = vlaneseq
        %v455 = vshrl.u32 %v454, 7
        %v456 = vsub.s32 0, %v455
        %v457 = vrot.slane %v452, %v456
        %458 = vrot.lane.b32.xlu0 %v457, 12
        %v459 = vpop.permute.xlu0 %458
        %v461 = vmul.f32 %v369, %v459
        %v462 = vmul.f32 %v370, %v459
        %465 = vrot.lane.b32.xlu0 %v461, 124
        %v466 = vpop.permute.xlu0 %465
        %467 = vrot.lane.b32.xlu0 %v462, 124
        %v468 = vpop.permute.xlu0 %467
        %v471 = vadd.f32 %v449, %v466
        %v472 = vadd.f32 %v450, %v468
        %v473 = vld [vmem:[%s236 + $0xa] sm:$0xff]
        %v474 = vld [vmem:[%s236 + $0x12] sm:$0xff]
        %s475 = scalar_lea.vmem %s1, 10
        %v476 = vld [vmem:[%s475] sm:$0x1]
        %v478 = vlaneseq
        %v479 = vshrl.u32 %v478, 7
        %v480 = vsub.s32 0, %v479
        %v481 = vrot.slane %v476, %v480
        %482 = vrot.lane.b32.xlu0 %v481, 8
        %v483 = vpop.permute.xlu0 %482
        %v485 = vmul.f32 %v473, %v483
        %v486 = vmul.f32 %v474, %v483
        %v487 = vadd.f32 %v471, %v485
        %v488 = vadd.f32 %v472, %v486
        %s489 = scalar_lea.vmem %s1, 11
        %v490 = vld [vmem:[%s489] sm:$0x1]
        %v492 = vlaneseq
        %v493 = vshrl.u32 %v492, 7
        %v494 = vsub.s32 0, %v493
        %v495 = vrot.slane %v490, %v494
        %496 = vrot.lane.b32.xlu0 %v495, 9
        %v497 = vpop.permute.xlu0 %496
        %v499 = vmul.f32 %v473, %v497
        %v500 = vmul.f32 %v474, %v497
        %503 = vrot.lane.b32.xlu0 %v499, 127
        %v504 = vpop.permute.xlu0 %503
        %505 = vrot.lane.b32.xlu0 %v500, 127
        %v506 = vpop.permute.xlu0 %505
        %v509 = vadd.f32 %v487, %v504
        %v510 = vadd.f32 %v488, %v506
        %s511 = scalar_lea.vmem %s1, 12
        %v512 = vld [vmem:[%s511] sm:$0x1]
        %v514 = vlaneseq
        %v515 = vshrl.u32 %v514, 7
        %v516 = vsub.s32 0, %v515
        %v517 = vrot.slane %v512, %v516
        %518 = vrot.lane.b32.xlu0 %v517, 10
        %v519 = vpop.permute.xlu0 %518
        %v521 = vmul.f32 %v473, %v519
        %v522 = vmul.f32 %v474, %v519
        %525 = vrot.lane.b32.xlu0 %v521, 126
        %v526 = vpop.permute.xlu0 %525
        %527 = vrot.lane.b32.xlu0 %v522, 126
        %v528 = vpop.permute.xlu0 %527
        %v531 = vadd.f32 %v509, %v526
        %v532 = vadd.f32 %v510, %v528
        %s533 = scalar_lea.vmem %s1, 13
        %v534 = vld [vmem:[%s533] sm:$0x1]
        %v536 = vlaneseq
        %v537 = vshrl.u32 %v536, 7
        %v538 = vsub.s32 0, %v537
        %v539 = vrot.slane %v534, %v538
        %540 = vrot.lane.b32.xlu0 %v539, 11
        %v541 = vpop.permute.xlu0 %540
        %v543 = vmul.f32 %v473, %v541
        %v544 = vmul.f32 %v474, %v541
        %547 = vrot.lane.b32.xlu0 %v543, 125
        %v548 = vpop.permute.xlu0 %547
        %549 = vrot.lane.b32.xlu0 %v544, 125
        %v550 = vpop.permute.xlu0 %549
        %v553 = vadd.f32 %v531, %v548
        %v554 = vadd.f32 %v532, %v550
        %s555 = scalar_lea.vmem %s1, 14
        %v556 = vld [vmem:[%s555] sm:$0x1]
        %v558 = vlaneseq
        %v559 = vshrl.u32 %v558, 7
        %v560 = vsub.s32 0, %v559
        %v561 = vrot.slane %v556, %v560
        %562 = vrot.lane.b32.xlu0 %v561, 12
        %v563 = vpop.permute.xlu0 %562
        %v565 = vmul.f32 %v473, %v563
        %v566 = vmul.f32 %v474, %v563
        %569 = vrot.lane.b32.xlu0 %v565, 124
        %v570 = vpop.permute.xlu0 %569
        %571 = vrot.lane.b32.xlu0 %v566, 124
        %v572 = vpop.permute.xlu0 %571
        %v575 = vadd.f32 %v553, %v570
        %v576 = vadd.f32 %v554, %v572
        %v577 = vld [vmem:[%s236 + $0xb] sm:$0xff]
        %v578 = vld [vmem:[%s236 + $0x13] sm:$0xff]
        %s579 = scalar_lea.vmem %s1, 15
        %v580 = vld [vmem:[%s579] sm:$0x1]
        %v582 = vlaneseq
        %v583 = vshrl.u32 %v582, 7
        %v584 = vsub.s32 0, %v583
        %v585 = vrot.slane %v580, %v584
        %586 = vrot.lane.b32.xlu0 %v585, 8
        %v587 = vpop.permute.xlu0 %586
        %v589 = vmul.f32 %v577, %v587
        %v590 = vmul.f32 %v578, %v587
        %v591 = vadd.f32 %v575, %v589
        %v592 = vadd.f32 %v576, %v590
        %s593 = scalar_lea.vmem %s1, 16
        %v594 = vld [vmem:[%s593] sm:$0x1]
        %v596 = vlaneseq
        %v597 = vshrl.u32 %v596, 7
        %v598 = vsub.s32 0, %v597
        %v599 = vrot.slane %v594, %v598
        %600 = vrot.lane.b32.xlu0 %v599, 9
        %v601 = vpop.permute.xlu0 %600
        %v603 = vmul.f32 %v577, %v601
        %v604 = vmul.f32 %v578, %v601
        %607 = vrot.lane.b32.xlu0 %v603, 127
        %v608 = vpop.permute.xlu0 %607
        %609 = vrot.lane.b32.xlu0 %v604, 127
        %v610 = vpop.permute.xlu0 %609
        %v613 = vadd.f32 %v591, %v608
        %v614 = vadd.f32 %v592, %v610
        %s615 = scalar_lea.vmem %s1, 17
        %v616 = vld [vmem:[%s615] sm:$0x1]
        %v618 = vlaneseq
        %v619 = vshrl.u32 %v618, 7
        %v620 = vsub.s32 0, %v619
        %v621 = vrot.slane %v616, %v620
        %622 = vrot.lane.b32.xlu0 %v621, 10
        %v623 = vpop.permute.xlu0 %622
        %v625 = vmul.f32 %v577, %v623
        %v626 = vmul.f32 %v578, %v623
        %629 = vrot.lane.b32.xlu0 %v625, 126
        %v630 = vpop.permute.xlu0 %629
        %631 = vrot.lane.b32.xlu0 %v626, 126
        %v632 = vpop.permute.xlu0 %631
        %v635 = vadd.f32 %v613, %v630
        %v636 = vadd.f32 %v614, %v632
        %s637 = scalar_lea.vmem %s1, 18
        %v638 = vld [vmem:[%s637] sm:$0x1]
        %v640 = vlaneseq
        %v641 = vshrl.u32 %v640, 7
        %v642 = vsub.s32 0, %v641
        %v643 = vrot.slane %v638, %v642
        %644 = vrot.lane.b32.xlu0 %v643, 11
        %v645 = vpop.permute.xlu0 %644
        %v647 = vmul.f32 %v577, %v645
        %v648 = vmul.f32 %v578, %v645
        %651 = vrot.lane.b32.xlu0 %v647, 125
        %v652 = vpop.permute.xlu0 %651
        %653 = vrot.lane.b32.xlu0 %v648, 125
        %v654 = vpop.permute.xlu0 %653
        %v657 = vadd.f32 %v635, %v652
        %v658 = vadd.f32 %v636, %v654
        %s659 = scalar_lea.vmem %s1, 19
        %v660 = vld [vmem:[%s659] sm:$0x1]
        %v662 = vlaneseq
        %v663 = vshrl.u32 %v662, 7
        %v664 = vsub.s32 0, %v663
        %v665 = vrot.slane %v660, %v664
        %666 = vrot.lane.b32.xlu0 %v665, 12
        %v667 = vpop.permute.xlu0 %666
        %v669 = vmul.f32 %v577, %v667
        %v670 = vmul.f32 %v578, %v667
        %673 = vrot.lane.b32.xlu0 %v669, 124
        %v674 = vpop.permute.xlu0 %673
        %675 = vrot.lane.b32.xlu0 %v670, 124
        %v676 = vpop.permute.xlu0 %675
        %v679 = vadd.f32 %v657, %v674
        %v680 = vadd.f32 %v658, %v676
        %v681 = vld [vmem:[%s236 + $0xc] sm:$0xff]
        %v682 = vld [vmem:[%s236 + $0x14] sm:$0xff]
        %s683 = scalar_lea.vmem %s1, 20
        %v684 = vld [vmem:[%s683] sm:$0x1]
        %v686 = vlaneseq
        %v687 = vshrl.u32 %v686, 7
        %v688 = vsub.s32 0, %v687
        %v689 = vrot.slane %v684, %v688
        %690 = vrot.lane.b32.xlu0 %v689, 8
        %v691 = vpop.permute.xlu0 %690
        %v693 = vmul.f32 %v681, %v691
        %v694 = vmul.f32 %v682, %v691
        %v695 = vadd.f32 %v679, %v693
        %v696 = vadd.f32 %v680, %v694
        %s697 = scalar_lea.vmem %s1, 21
        %v698 = vld [vmem:[%s697] sm:$0x1]
        %v700 = vlaneseq
        %v701 = vshrl.u32 %v700, 7
        %v702 = vsub.s32 0, %v701
        %v703 = vrot.slane %v698, %v702
        %704 = vrot.lane.b32.xlu0 %v703, 9
        %v705 = vpop.permute.xlu0 %704
        %v707 = vmul.f32 %v681, %v705
        %v708 = vmul.f32 %v682, %v705
        %711 = vrot.lane.b32.xlu0 %v707, 127
        %v712 = vpop.permute.xlu0 %711
        %713 = vrot.lane.b32.xlu0 %v708, 127
        %v714 = vpop.permute.xlu0 %713
        %v717 = vadd.f32 %v695, %v712
        %v718 = vadd.f32 %v696, %v714
        %s719 = scalar_lea.vmem %s1, 22
        %v720 = vld [vmem:[%s719] sm:$0x1]
        %v722 = vlaneseq
        %v723 = vshrl.u32 %v722, 7
        %v724 = vsub.s32 0, %v723
        %v725 = vrot.slane %v720, %v724
        %726 = vrot.lane.b32.xlu0 %v725, 10
        %v727 = vpop.permute.xlu0 %726
        %v729 = vmul.f32 %v681, %v727
        %v730 = vmul.f32 %v682, %v727
        %733 = vrot.lane.b32.xlu0 %v729, 126
        %v734 = vpop.permute.xlu0 %733
        %735 = vrot.lane.b32.xlu0 %v730, 126
        %v736 = vpop.permute.xlu0 %735
        %v739 = vadd.f32 %v717, %v734
        %v740 = vadd.f32 %v718, %v736
        %s741 = scalar_lea.vmem %s1, 23
        %v742 = vld [vmem:[%s741] sm:$0x1]
        %v744 = vlaneseq
        %v745 = vshrl.u32 %v744, 7
        %v746 = vsub.s32 0, %v745
        %v747 = vrot.slane %v742, %v746
        %748 = vrot.lane.b32.xlu0 %v747, 11
        %v749 = vpop.permute.xlu0 %748
        %v751 = vmul.f32 %v681, %v749
        %v752 = vmul.f32 %v682, %v749
        %755 = vrot.lane.b32.xlu0 %v751, 125
        %v756 = vpop.permute.xlu0 %755
        %757 = vrot.lane.b32.xlu0 %v752, 125
        %v758 = vpop.permute.xlu0 %757
        %v761 = vadd.f32 %v739, %v756
        %v762 = vadd.f32 %v740, %v758
        %s763 = scalar_lea.vmem %s1, 24
        %v764 = vld [vmem:[%s763] sm:$0x1]
        %v766 = vlaneseq
        %v767 = vshrl.u32 %v766, 7
        %v768 = vsub.s32 0, %v767
        %v769 = vrot.slane %v764, %v768
        %770 = vrot.lane.b32.xlu0 %v769, 12
        %v771 = vpop.permute.xlu0 %770
        %v773 = vmul.f32 %v681, %v771
        %v774 = vmul.f32 %v682, %v771
        %777 = vrot.lane.b32.xlu0 %v773, 124
        %v778 = vpop.permute.xlu0 %777
        %779 = vrot.lane.b32.xlu0 %v774, 124
        %v780 = vpop.permute.xlu0 %779
        %v783 = vadd.f32 %v761, %v778
        %v784 = vadd.f32 %v762, %v780
        %787 = vrot.lane.b32.xlu0 %v783, 2
        %v788 = vpop.permute.xlu0 %787
        %789 = vrot.lane.b32.xlu0 %v784, 2
        %v790 = vpop.permute.xlu0 %789
        %vm793 = vcmask 851024
        %794 = vst.msk [vmem:[#allocation2 + $0xa] sm:$0xff] %vm793, %v788
        %795 = vst.msk [vmem:[#allocation2 + $0x12] sm:$0xff] %vm793, %v790
        %s796 = scalar_lea.vmem %s2, 4
        %v797 = vld [vmem:[%s796] sm:$0x1]
        %s798 = scalar_lea.vmem %s2, 5
        %v799 = vld [vmem:[%s798] sm:$0x1]
        %v800 = vadd.f32 %v797, %v799
        %s801 = scalar_lea.vmem %s2, 6
        %v802 = vld [vmem:[%s801] sm:$0x1]
        %v803 = vadd.f32 %v800, %v802
        %v805 = vlaneseq
        %v806 = vshrl.u32 %v805, 7
        %v807 = vsub.s32 0, %v806
        %v808 = vrot.slane %v803, %v807
        %809 = vrot.lane.b32.xlu0 %v808, 8
        %v810 = vpop.permute.xlu0 %809
        %v812 = vadd.f32 %v783, %v810
        %v813 = vadd.f32 %v784, %v810
        %v814 = vld [vmem:[#allocation2 + $0xa] sm:$0xff]
        %v815 = vld [vmem:[#allocation2 + $0x12] sm:$0xff]
        %s816 = scalar_lea.vmem %s1, 25
        %v817 = vld [vmem:[%s816] sm:$0x1]
        %v819 = vlaneseq
        %v820 = vshrl.u32 %v819, 7
        %v821 = vsub.s32 0, %v820
        %v822 = vrot.slane %v817, %v821
        %823 = vrot.lane.b32.xlu0 %v822, 7
        %v824 = vpop.permute.xlu0 %823
        %v826 = vmul.f32 %v814, %v824
        %v827 = vmul.f32 %v815, %v824
        %s828 = scalar_lea.vmem %s2, 1
        %v829 = vld [vmem:[%s828] sm:$0x1]
        %v831 = vlaneseq
        %v832 = vshrl.u32 %v831, 7
        %v833 = vsub.s32 0, %v832
        %v834 = vrot.slane %v829, %v833
        %835 = vrot.lane.b32.xlu0 %v834, 7
        %v836 = vpop.permute.xlu0 %835
        %v838 = vadd.f32 %v826, %v836
        %v839 = vadd.f32 %v827, %v836
        %s840 = scalar_lea.vmem %s1, 26
        %v841 = vld [vmem:[%s840] sm:$0x1]
        %v843 = vlaneseq
        %v844 = vshrl.u32 %v843, 7
        %v845 = vsub.s32 0, %v844
        %v846 = vrot.slane %v841, %v845
        %847 = vrot.lane.b32.xlu0 %v846, 8
        %v848 = vpop.permute.xlu0 %847
        %v850 = vmul.f32 %v814, %v848
        %v851 = vmul.f32 %v815, %v848
        %854 = vrot.lane.b32.xlu0 %v850, 127
        %v855 = vpop.permute.xlu0 %854
        %856 = vrot.lane.b32.xlu0 %v851, 127
        %v857 = vpop.permute.xlu0 %856
        %v860 = vadd.f32 %v838, %v855
        %v861 = vadd.f32 %v839, %v857
        %s862 = scalar_lea.vmem %s1, 27
        %v863 = vld [vmem:[%s862] sm:$0x1]
        %v865 = vlaneseq
        %v866 = vshrl.u32 %v865, 7
        %v867 = vsub.s32 0, %v866
        %v868 = vrot.slane %v863, %v867
        %869 = vrot.lane.b32.xlu0 %v868, 9
        %v870 = vpop.permute.xlu0 %869
        %v872 = vmul.f32 %v814, %v870
        %v873 = vmul.f32 %v815, %v870
        %876 = vrot.lane.b32.xlu0 %v872, 126
        %v877 = vpop.permute.xlu0 %876
        %878 = vrot.lane.b32.xlu0 %v873, 126
        %v879 = vpop.permute.xlu0 %878
        %v882 = vadd.f32 %v860, %v877
        %v883 = vadd.f32 %v861, %v879
        %s884 = scalar_lea.vmem %s1, 28
        %v885 = vld [vmem:[%s884] sm:$0x1]
        %v887 = vlaneseq
        %v888 = vshrl.u32 %v887, 7
        %v889 = vsub.s32 0, %v888
        %v890 = vrot.slane %v885, %v889
        %891 = vrot.lane.b32.xlu0 %v890, 10
        %v892 = vpop.permute.xlu0 %891
        %v894 = vmul.f32 %v814, %v892
        %v895 = vmul.f32 %v815, %v892
        %898 = vrot.lane.b32.xlu0 %v894, 125
        %v899 = vpop.permute.xlu0 %898
        %900 = vrot.lane.b32.xlu0 %v895, 125
        %v901 = vpop.permute.xlu0 %900
        %v904 = vadd.f32 %v882, %v899
        %v905 = vadd.f32 %v883, %v901
        %s906 = scalar_lea.vmem %s1, 29
        %v907 = vld [vmem:[%s906] sm:$0x1]
        %v909 = vlaneseq
        %v910 = vshrl.u32 %v909, 7
        %v911 = vsub.s32 0, %v910
        %v912 = vrot.slane %v907, %v911
        %913 = vrot.lane.b32.xlu0 %v912, 11
        %v914 = vpop.permute.xlu0 %913
        %v916 = vmul.f32 %v814, %v914
        %v917 = vmul.f32 %v815, %v914
        %920 = vrot.lane.b32.xlu0 %v916, 124
        %v921 = vpop.permute.xlu0 %920
        %922 = vrot.lane.b32.xlu0 %v917, 124
        %v923 = vpop.permute.xlu0 %922
        %v926 = vadd.f32 %v904, %v921
        %v927 = vadd.f32 %v905, %v923
        %s928 = scalar_lea.vmem %s1, 30
        %v929 = vld [vmem:[%s928] sm:$0x1]
        %v931 = vlaneseq
        %v932 = vshrl.u32 %v931, 7
        %v933 = vsub.s32 0, %v932
        %v934 = vrot.slane %v929, %v933
        %935 = vrot.lane.b32.xlu0 %v934, 12
        %v936 = vpop.permute.xlu0 %935
        %v938 = vmul.f32 %v814, %v936
        %v939 = vmul.f32 %v815, %v936
        %942 = vrot.lane.b32.xlu0 %v938, 123
        %v943 = vpop.permute.xlu0 %942
        %944 = vrot.lane.b32.xlu0 %v939, 123
        %v945 = vpop.permute.xlu0 %944
        %v948 = vadd.f32 %v926, %v943
        %v949 = vadd.f32 %v927, %v945
        %s950 = scalar_lea.vmem %s1, 31
        %v951 = vld [vmem:[%s950] sm:$0x1]
        %v953 = vlaneseq
        %v954 = vshrl.u32 %v953, 7
        %v955 = vsub.s32 0, %v954
        %v956 = vrot.slane %v951, %v955
        %957 = vrot.lane.b32.xlu0 %v956, 13
        %v958 = vpop.permute.xlu0 %957
        %v960 = vmul.f32 %v814, %v958
        %v961 = vmul.f32 %v815, %v958
        %964 = vrot.lane.b32.xlu0 %v960, 122
        %v965 = vpop.permute.xlu0 %964
        %966 = vrot.lane.b32.xlu0 %v961, 122
        %v967 = vpop.permute.xlu0 %966
        %v970 = vadd.f32 %v948, %v965
        %v971 = vadd.f32 %v949, %v967
        %974 = vrot.lane.b32.xlu0 %v970, 3
        %v975 = vpop.permute.xlu0 %974
        %976 = vrot.lane.b32.xlu0 %v971, 3
        %v977 = vpop.permute.xlu0 %976
        %s980 = scalar_lea.vmem [#allocation2], 40
        %981 = vst.msk [vmem:[%s980 + $0xa] sm:$0xff] %vm793, %v975
        %982 = vst.msk [vmem:[%s980 + $0x12] sm:$0xff] %vm793, %v977
        %v983 = vld [vmem:[%s980 + $0x7] sm:$0xff]
        %v984 = vld [vmem:[%s980 + $0xf] sm:$0xff]
        %s985 = scalar_lea.vmem %s1, 64
        %v986 = vld [vmem:[%s985] sm:$0x1]
        %v988 = vlaneseq
        %v989 = vshrl.u32 %v988, 7
        %v990 = vsub.s32 0, %v989
        %v991 = vrot.slane %v986, %v990
        %992 = vrot.lane.b32.xlu0 %v991, 10
        %v993 = vpop.permute.xlu0 %992
        %v995 = vmul.f32 %v983, %v993
        %v996 = vmul.f32 %v984, %v993
        %999 = vrot.lane.b32.xlu0 %v995, 126
        %v1000 = vpop.permute.xlu0 %999
        %1001 = vrot.lane.b32.xlu0 %v996, 126
        %v1002 = vpop.permute.xlu0 %1001
        %v1005 = vadd.f32 %v812, %v1000
        %v1006 = vadd.f32 %v813, %v1002
        %v1007 = vld [vmem:[%s980 + $0x8] sm:$0xff]
        %v1008 = vld [vmem:[%s980 + $0x10] sm:$0xff]
        %s1009 = scalar_lea.vmem %s1, 65
        %v1010 = vld [vmem:[%s1009] sm:$0x1]
        %v1012 = vlaneseq
        %v1013 = vshrl.u32 %v1012, 7
        %v1014 = vsub.s32 0, %v1013
        %v1015 = vrot.slane %v1010, %v1014
        %1016 = vrot.lane.b32.xlu0 %v1015, 10
        %v1017 = vpop.permute.xlu0 %1016
        %v1019 = vmul.f32 %v1007, %v1017
        %v1020 = vmul.f32 %v1008, %v1017
        %1023 = vrot.lane.b32.xlu0 %v1019, 126
        %v1024 = vpop.permute.xlu0 %1023
        %1025 = vrot.lane.b32.xlu0 %v1020, 126
        %v1026 = vpop.permute.xlu0 %1025
        %v1029 = vadd.f32 %v1005, %v1024
        %v1030 = vadd.f32 %v1006, %v1026
        %v1031 = vld [vmem:[%s980 + $0x9] sm:$0xff]
        %v1032 = vld [vmem:[%s980 + $0x11] sm:$0xff]
        %s1033 = scalar_lea.vmem %s1, 66
        %v1034 = vld [vmem:[%s1033] sm:$0x1]
        %v1036 = vlaneseq
        %v1037 = vshrl.u32 %v1036, 7
        %v1038 = vsub.s32 0, %v1037
        %v1039 = vrot.slane %v1034, %v1038
        %1040 = vrot.lane.b32.xlu0 %v1039, 10
        %v1041 = vpop.permute.xlu0 %1040
        %v1043 = vmul.f32 %v1031, %v1041
        %v1044 = vmul.f32 %v1032, %v1041
        %1047 = vrot.lane.b32.xlu0 %v1043, 126
        %v1048 = vpop.permute.xlu0 %1047
        %1049 = vrot.lane.b32.xlu0 %v1044, 126
        %v1050 = vpop.permute.xlu0 %1049
        %v1053 = vadd.f32 %v1029, %v1048
        %v1054 = vadd.f32 %v1030, %v1050
        %v1055 = vld [vmem:[%s980 + $0xa] sm:$0xff]
        %v1056 = vld [vmem:[%s980 + $0x12] sm:$0xff]
        %s1057 = scalar_lea.vmem %s1, 67
        %v1058 = vld [vmem:[%s1057] sm:$0x1]
        %v1060 = vlaneseq
        %v1061 = vshrl.u32 %v1060, 7
        %v1062 = vsub.s32 0, %v1061
        %v1063 = vrot.slane %v1058, %v1062
        %1064 = vrot.lane.b32.xlu0 %v1063, 10
        %v1065 = vpop.permute.xlu0 %1064
        %v1067 = vmul.f32 %v1055, %v1065
        %v1068 = vmul.f32 %v1056, %v1065
        %1071 = vrot.lane.b32.xlu0 %v1067, 126
        %v1072 = vpop.permute.xlu0 %1071
        %1073 = vrot.lane.b32.xlu0 %v1068, 126
        %v1074 = vpop.permute.xlu0 %1073
        %v1077 = vadd.f32 %v1053, %v1072
        %v1078 = vadd.f32 %v1054, %v1074
        %v1079 = vld [vmem:[%s980 + $0xb] sm:$0xff]
        %v1080 = vld [vmem:[%s980 + $0x13] sm:$0xff]
        %s1081 = scalar_lea.vmem %s1, 68
        %v1082 = vld [vmem:[%s1081] sm:$0x1]
        %v1084 = vlaneseq
        %v1085 = vshrl.u32 %v1084, 7
        %v1086 = vsub.s32 0, %v1085
        %v1087 = vrot.slane %v1082, %v1086
        %1088 = vrot.lane.b32.xlu0 %v1087, 10
        %v1089 = vpop.permute.xlu0 %1088
        %v1091 = vmul.f32 %v1079, %v1089
        %v1092 = vmul.f32 %v1080, %v1089
        %1095 = vrot.lane.b32.xlu0 %v1091, 126
        %v1096 = vpop.permute.xlu0 %1095
        %1097 = vrot.lane.b32.xlu0 %v1092, 126
        %v1098 = vpop.permute.xlu0 %1097
        %v1101 = vadd.f32 %v1077, %v1096
        %v1102 = vadd.f32 %v1078, %v1098
        %v1103 = vld [vmem:[%s980 + $0xc] sm:$0xff]
        %v1104 = vld [vmem:[%s980 + $0x14] sm:$0xff]
        %s1105 = scalar_lea.vmem %s1, 69
        %v1106 = vld [vmem:[%s1105] sm:$0x1]
        %v1108 = vlaneseq
        %v1109 = vshrl.u32 %v1108, 7
        %v1110 = vsub.s32 0, %v1109
        %v1111 = vrot.slane %v1106, %v1110
        %1112 = vrot.lane.b32.xlu0 %v1111, 10
        %v1113 = vpop.permute.xlu0 %1112
        %v1115 = vmul.f32 %v1103, %v1113
        %v1116 = vmul.f32 %v1104, %v1113
        %1119 = vrot.lane.b32.xlu0 %v1115, 126
        %v1120 = vpop.permute.xlu0 %1119
        %1121 = vrot.lane.b32.xlu0 %v1116, 126
        %v1122 = vpop.permute.xlu0 %1121
        %v1125 = vadd.f32 %v1101, %v1120
        %v1126 = vadd.f32 %v1102, %v1122
        %v1127 = vld [vmem:[%s980 + $0xd] sm:$0xff]
        %v1128 = vld [vmem:[%s980 + $0x15] sm:$0xff]
        %s1129 = scalar_lea.vmem %s1, 70
        %v1130 = vld [vmem:[%s1129] sm:$0x1]
        %v1132 = vlaneseq
        %v1133 = vshrl.u32 %v1132, 7
        %v1134 = vsub.s32 0, %v1133
        %v1135 = vrot.slane %v1130, %v1134
        %1136 = vrot.lane.b32.xlu0 %v1135, 10
        %v1137 = vpop.permute.xlu0 %1136
        %v1139 = vmul.f32 %v1127, %v1137
        %v1140 = vmul.f32 %v1128, %v1137
        %1143 = vrot.lane.b32.xlu0 %v1139, 126
        %v1144 = vpop.permute.xlu0 %1143
        %1145 = vrot.lane.b32.xlu0 %v1140, 126
        %v1146 = vpop.permute.xlu0 %1145
        %v1149 = vadd.f32 %v1125, %v1144
        %v1150 = vadd.f32 %v1126, %v1146
        %v1151 = vld [vmem:[#allocation2 + $0xa] sm:$0xff]
        %v1152 = vld [vmem:[#allocation2 + $0x12] sm:$0xff]
        %s1153 = scalar_lea.vmem %s1, 32
        %v1154 = vld [vmem:[%s1153] sm:$0x1]
        %v1156 = vlaneseq
        %v1157 = vshrl.u32 %v1156, 7
        %v1158 = vsub.s32 0, %v1157
        %v1159 = vrot.slane %v1154, %v1158
        %1160 = vrot.lane.b32.xlu0 %v1159, 5
        %v1161 = vpop.permute.xlu0 %1160
        %v1163 = vmul.f32 %v1151, %v1161
        %v1164 = vmul.f32 %v1152, %v1161
        %s1165 = scalar_lea.vmem %s2, 2
        %v1166 = vld [vmem:[%s1165] sm:$0x1]
        %v1168 = vlaneseq
        %v1169 = vshrl.u32 %v1168, 7
        %v1170 = vsub.s32 0, %v1169
        %v1171 = vrot.slane %v1166, %v1170
        %1172 = vrot.lane.b32.xlu0 %v1171, 5
        %v1173 = vpop.permute.xlu0 %1172
        %v1175 = vadd.f32 %v1163, %v1173
        %v1176 = vadd.f32 %v1164, %v1173
        %s1177 = scalar_lea.vmem %s1, 33
        %v1178 = vld [vmem:[%s1177] sm:$0x1]
        %v1180 = vlaneseq
        %v1181 = vshrl.u32 %v1180, 7
        %v1182 = vsub.s32 0, %v1181
        %v1183 = vrot.slane %v1178, %v1182
        %1184 = vrot.lane.b32.xlu0 %v1183, 6
        %v1185 = vpop.permute.xlu0 %1184
        %v1187 = vmul.f32 %v1151, %v1185
        %v1188 = vmul.f32 %v1152, %v1185
        %1191 = vrot.lane.b32.xlu0 %v1187, 127
        %v1192 = vpop.permute.xlu0 %1191
        %1193 = vrot.lane.b32.xlu0 %v1188, 127
        %v1194 = vpop.permute.xlu0 %1193
        %v1197 = vadd.f32 %v1175, %v1192
        %v1198 = vadd.f32 %v1176, %v1194
        %s1199 = scalar_lea.vmem %s1, 34
        %v1200 = vld [vmem:[%s1199] sm:$0x1]
        %v1202 = vlaneseq
        %v1203 = vshrl.u32 %v1202, 7
        %v1204 = vsub.s32 0, %v1203
        %v1205 = vrot.slane %v1200, %v1204
        %1206 = vrot.lane.b32.xlu0 %v1205, 7
        %v1207 = vpop.permute.xlu0 %1206
        %v1209 = vmul.f32 %v1151, %v1207
        %v1210 = vmul.f32 %v1152, %v1207
        %1213 = vrot.lane.b32.xlu0 %v1209, 126
        %v1214 = vpop.permute.xlu0 %1213
        %1215 = vrot.lane.b32.xlu0 %v1210, 126
        %v1216 = vpop.permute.xlu0 %1215
        %v1219 = vadd.f32 %v1197, %v1214
        %v1220 = vadd.f32 %v1198, %v1216
        %s1221 = scalar_lea.vmem %s1, 35
        %v1222 = vld [vmem:[%s1221] sm:$0x1]
        %v1224 = vlaneseq
        %v1225 = vshrl.u32 %v1224, 7
        %v1226 = vsub.s32 0, %v1225
        %v1227 = vrot.slane %v1222, %v1226
        %1228 = vrot.lane.b32.xlu0 %v1227, 8
        %v1229 = vpop.permute.xlu0 %1228
        %v1231 = vmul.f32 %v1151, %v1229
        %v1232 = vmul.f32 %v1152, %v1229
        %1235 = vrot.lane.b32.xlu0 %v1231, 125
        %v1236 = vpop.permute.xlu0 %1235
        %1237 = vrot.lane.b32.xlu0 %v1232, 125
        %v1238 = vpop.permute.xlu0 %1237
        %v1241 = vadd.f32 %v1219, %v1236
        %v1242 = vadd.f32 %v1220, %v1238
        %s1243 = scalar_lea.vmem %s1, 36
        %v1244 = vld [vmem:[%s1243] sm:$0x1]
        %v1246 = vlaneseq
        %v1247 = vshrl.u32 %v1246, 7
        %v1248 = vsub.s32 0, %v1247
        %v1249 = vrot.slane %v1244, %v1248
        %1250 = vrot.lane.b32.xlu0 %v1249, 9
        %v1251 = vpop.permute.xlu0 %1250
        %v1253 = vmul.f32 %v1151, %v1251
        %v1254 = vmul.f32 %v1152, %v1251
        %1257 = vrot.lane.b32.xlu0 %v1253, 124
        %v1258 = vpop.permute.xlu0 %1257
        %1259 = vrot.lane.b32.xlu0 %v1254, 124
        %v1260 = vpop.permute.xlu0 %1259
        %v1263 = vadd.f32 %v1241, %v1258
        %v1264 = vadd.f32 %v1242, %v1260
        %s1265 = scalar_lea.vmem %s1, 37
        %v1266 = vld [vmem:[%s1265] sm:$0x1]
        %v1268 = vlaneseq
        %v1269 = vshrl.u32 %v1268, 7
        %v1270 = vsub.s32 0, %v1269
        %v1271 = vrot.slane %v1266, %v1270
        %1272 = vrot.lane.b32.xlu0 %v1271, 10
        %v1273 = vpop.permute.xlu0 %1272
        %v1275 = vmul.f32 %v1151, %v1273
        %v1276 = vmul.f32 %v1152, %v1273
        %1279 = vrot.lane.b32.xlu0 %v1275, 123
        %v1280 = vpop.permute.xlu0 %1279
        %1281 = vrot.lane.b32.xlu0 %v1276, 123
        %v1282 = vpop.permute.xlu0 %1281
        %v1285 = vadd.f32 %v1263, %v1280
        %v1286 = vadd.f32 %v1264, %v1282
        %s1287 = scalar_lea.vmem %s1, 38
        %v1288 = vld [vmem:[%s1287] sm:$0x1]
        %v1290 = vlaneseq
        %v1291 = vshrl.u32 %v1290, 7
        %v1292 = vsub.s32 0, %v1291
        %v1293 = vrot.slane %v1288, %v1292
        %1294 = vrot.lane.b32.xlu0 %v1293, 11
        %v1295 = vpop.permute.xlu0 %1294
        %v1297 = vmul.f32 %v1151, %v1295
        %v1298 = vmul.f32 %v1152, %v1295
        %1301 = vrot.lane.b32.xlu0 %v1297, 122
        %v1302 = vpop.permute.xlu0 %1301
        %1303 = vrot.lane.b32.xlu0 %v1298, 122
        %v1304 = vpop.permute.xlu0 %1303
        %v1307 = vadd.f32 %v1285, %v1302
        %v1308 = vadd.f32 %v1286, %v1304
        %s1309 = scalar_lea.vmem %s1, 39
        %v1310 = vld [vmem:[%s1309] sm:$0x1]
        %v1312 = vlaneseq
        %v1313 = vshrl.u32 %v1312, 7
        %v1314 = vsub.s32 0, %v1313
        %v1315 = vrot.slane %v1310, %v1314
        %1316 = vrot.lane.b32.xlu0 %v1315, 12
        %v1317 = vpop.permute.xlu0 %1316
        %v1319 = vmul.f32 %v1151, %v1317
        %v1320 = vmul.f32 %v1152, %v1317
        %1323 = vrot.lane.b32.xlu0 %v1319, 121
        %v1324 = vpop.permute.xlu0 %1323
        %1325 = vrot.lane.b32.xlu0 %v1320, 121
        %v1326 = vpop.permute.xlu0 %1325
        %v1329 = vadd.f32 %v1307, %v1324
        %v1330 = vadd.f32 %v1308, %v1326
        %s1331 = scalar_lea.vmem %s1, 40
        %v1332 = vld [vmem:[%s1331] sm:$0x1]
        %v1334 = vlaneseq
        %v1335 = vshrl.u32 %v1334, 7
        %v1336 = vsub.s32 0, %v1335
        %v1337 = vrot.slane %v1332, %v1336
        %1338 = vrot.lane.b32.xlu0 %v1337, 13
        %v1339 = vpop.permute.xlu0 %1338
        %v1341 = vmul.f32 %v1151, %v1339
        %v1342 = vmul.f32 %v1152, %v1339
        %1345 = vrot.lane.b32.xlu0 %v1341, 120
        %v1346 = vpop.permute.xlu0 %1345
        %1347 = vrot.lane.b32.xlu0 %v1342, 120
        %v1348 = vpop.permute.xlu0 %1347
        %v1351 = vadd.f32 %v1329, %v1346
        %v1352 = vadd.f32 %v1330, %v1348
        %s1353 = scalar_lea.vmem %s1, 41
        %v1354 = vld [vmem:[%s1353] sm:$0x1]
        %v1356 = vlaneseq
        %v1357 = vshrl.u32 %v1356, 7
        %v1358 = vsub.s32 0, %v1357
        %v1359 = vrot.slane %v1354, %v1358
        %1360 = vrot.lane.b32.xlu0 %v1359, 14
        %v1361 = vpop.permute.xlu0 %1360
        %v1363 = vmul.f32 %v1151, %v1361
        %v1364 = vmul.f32 %v1152, %v1361
        %1367 = vrot.lane.b32.xlu0 %v1363, 119
        %v1368 = vpop.permute.xlu0 %1367
        %1369 = vrot.lane.b32.xlu0 %v1364, 119
        %v1370 = vpop.permute.xlu0 %1369
        %v1373 = vadd.f32 %v1351, %v1368
        %v1374 = vadd.f32 %v1352, %v1370
        %s1375 = scalar_lea.vmem %s1, 42
        %v1376 = vld [vmem:[%s1375] sm:$0x1]
        %v1378 = vlaneseq
        %v1379 = vshrl.u32 %v1378, 7
        %v1380 = vsub.s32 0, %v1379
        %v1381 = vrot.slane %v1376, %v1380
        %1382 = vrot.lane.b32.xlu0 %v1381, 15
        %v1383 = vpop.permute.xlu0 %1382
        %v1385 = vmul.f32 %v1151, %v1383
        %v1386 = vmul.f32 %v1152, %v1383
        %1389 = vrot.lane.b32.xlu0 %v1385, 118
        %v1390 = vpop.permute.xlu0 %1389
        %1391 = vrot.lane.b32.xlu0 %v1386, 118
        %v1392 = vpop.permute.xlu0 %1391
        %v1395 = vadd.f32 %v1373, %v1390
        %v1396 = vadd.f32 %v1374, %v1392
        %1399 = vrot.lane.b32.xlu0 %v1395, 5
        %v1400 = vpop.permute.xlu0 %1399
        %1401 = vrot.lane.b32.xlu0 %v1396, 5
        %v1402 = vpop.permute.xlu0 %1401
        %1405 = vst.msk [vmem:[%s980 + $0xa] sm:$0xff] %vm793, %v1400
        %1406 = vst.msk [vmem:[%s980 + $0x12] sm:$0xff] %vm793, %v1402
        %v1407 = vld [vmem:[%s980 + $0x5] sm:$0xff]
        %v1408 = vld [vmem:[%s980 + $0xd] sm:$0xff]
        %s1409 = scalar_lea.vmem %s1, 71
        %v1410 = vld [vmem:[%s1409] sm:$0x1]
        %v1412 = vlaneseq
        %v1413 = vshrl.u32 %v1412, 7
        %v1414 = vsub.s32 0, %v1413
        %v1415 = vrot.slane %v1410, %v1414
        %1416 = vrot.lane.b32.xlu0 %v1415, 10
        %v1417 = vpop.permute.xlu0 %1416
        %v1419 = vmul.f32 %v1407, %v1417
        %v1420 = vmul.f32 %v1408, %v1417
        %1423 = vrot.lane.b32.xlu0 %v1419, 126
        %v1424 = vpop.permute.xlu0 %1423
        %1425 = vrot.lane.b32.xlu0 %v1420, 126
        %v1426 = vpop.permute.xlu0 %1425
        %v1429 = vadd.f32 %v1149, %v1424
        %v1430 = vadd.f32 %v1150, %v1426
        %v1431 = vld [vmem:[%s980 + $0x6] sm:$0xff]
        %v1432 = vld [vmem:[%s980 + $0xe] sm:$0xff]
        %s1433 = scalar_lea.vmem %s1, 72
        %v1434 = vld [vmem:[%s1433] sm:$0x1]
        %v1436 = vlaneseq
        %v1437 = vshrl.u32 %v1436, 7
        %v1438 = vsub.s32 0, %v1437
        %v1439 = vrot.slane %v1434, %v1438
        %1440 = vrot.lane.b32.xlu0 %v1439, 10
        %v1441 = vpop.permute.xlu0 %1440
        %v1443 = vmul.f32 %v1431, %v1441
        %v1444 = vmul.f32 %v1432, %v1441
        %1447 = vrot.lane.b32.xlu0 %v1443, 126
        %v1448 = vpop.permute.xlu0 %1447
        %1449 = vrot.lane.b32.xlu0 %v1444, 126
        %v1450 = vpop.permute.xlu0 %1449
        %v1453 = vadd.f32 %v1429, %v1448
        %v1454 = vadd.f32 %v1430, %v1450
        %v1455 = vld [vmem:[%s980 + $0x7] sm:$0xff]
        %v1456 = vld [vmem:[%s980 + $0xf] sm:$0xff]
        %s1457 = scalar_lea.vmem %s1, 73
        %v1458 = vld [vmem:[%s1457] sm:$0x1]
        %v1460 = vlaneseq
        %v1461 = vshrl.u32 %v1460, 7
        %v1462 = vsub.s32 0, %v1461
        %v1463 = vrot.slane %v1458, %v1462
        %1464 = vrot.lane.b32.xlu0 %v1463, 10
        %v1465 = vpop.permute.xlu0 %1464
        %v1467 = vmul.f32 %v1455, %v1465
        %v1468 = vmul.f32 %v1456, %v1465
        %1471 = vrot.lane.b32.xlu0 %v1467, 126
        %v1472 = vpop.permute.xlu0 %1471
        %1473 = vrot.lane.b32.xlu0 %v1468, 126
        %v1474 = vpop.permute.xlu0 %1473
        %v1477 = vadd.f32 %v1453, %v1472
        %v1478 = vadd.f32 %v1454, %v1474
        %v1479 = vld [vmem:[%s980 + $0x8] sm:$0xff]
        %v1480 = vld [vmem:[%s980 + $0x10] sm:$0xff]
        %s1481 = scalar_lea.vmem %s1, 74
        %v1482 = vld [vmem:[%s1481] sm:$0x1]
        %v1484 = vlaneseq
        %v1485 = vshrl.u32 %v1484, 7
        %v1486 = vsub.s32 0, %v1485
        %v1487 = vrot.slane %v1482, %v1486
        %1488 = vrot.lane.b32.xlu0 %v1487, 10
        %v1489 = vpop.permute.xlu0 %1488
        %v1491 = vmul.f32 %v1479, %v1489
        %v1492 = vmul.f32 %v1480, %v1489
        %1495 = vrot.lane.b32.xlu0 %v1491, 126
        %v1496 = vpop.permute.xlu0 %1495
        %1497 = vrot.lane.b32.xlu0 %v1492, 126
        %v1498 = vpop.permute.xlu0 %1497
        %v1501 = vadd.f32 %v1477, %v1496
        %v1502 = vadd.f32 %v1478, %v1498
        %v1503 = vld [vmem:[%s980 + $0x9] sm:$0xff]
        %v1504 = vld [vmem:[%s980 + $0x11] sm:$0xff]
        %s1505 = scalar_lea.vmem %s1, 75
        %v1506 = vld [vmem:[%s1505] sm:$0x1]
        %v1508 = vlaneseq
        %v1509 = vshrl.u32 %v1508, 7
        %v1510 = vsub.s32 0, %v1509
        %v1511 = vrot.slane %v1506, %v1510
        %1512 = vrot.lane.b32.xlu0 %v1511, 10
        %v1513 = vpop.permute.xlu0 %1512
        %v1515 = vmul.f32 %v1503, %v1513
        %v1516 = vmul.f32 %v1504, %v1513
        %1519 = vrot.lane.b32.xlu0 %v1515, 126
        %v1520 = vpop.permute.xlu0 %1519
        %1521 = vrot.lane.b32.xlu0 %v1516, 126
        %v1522 = vpop.permute.xlu0 %1521
        %v1525 = vadd.f32 %v1501, %v1520
        %v1526 = vadd.f32 %v1502, %v1522
        %v1527 = vld [vmem:[%s980 + $0xa] sm:$0xff]
        %v1528 = vld [vmem:[%s980 + $0x12] sm:$0xff]
        %s1529 = scalar_lea.vmem %s1, 76
        %v1530 = vld [vmem:[%s1529] sm:$0x1]
        %v1532 = vlaneseq
        %v1533 = vshrl.u32 %v1532, 7
        %v1534 = vsub.s32 0, %v1533
        %v1535 = vrot.slane %v1530, %v1534
        %1536 = vrot.lane.b32.xlu0 %v1535, 10
        %v1537 = vpop.permute.xlu0 %1536
        %v1539 = vmul.f32 %v1527, %v1537
        %v1540 = vmul.f32 %v1528, %v1537
        %1543 = vrot.lane.b32.xlu0 %v1539, 126
        %v1544 = vpop.permute.xlu0 %1543
        %1545 = vrot.lane.b32.xlu0 %v1540, 126
        %v1546 = vpop.permute.xlu0 %1545
        %v1549 = vadd.f32 %v1525, %v1544
        %v1550 = vadd.f32 %v1526, %v1546
        %v1551 = vld [vmem:[%s980 + $0xb] sm:$0xff]
        %v1552 = vld [vmem:[%s980 + $0x13] sm:$0xff]
        %s1553 = scalar_lea.vmem %s1, 77
        %v1554 = vld [vmem:[%s1553] sm:$0x1]
        %v1556 = vlaneseq
        %v1557 = vshrl.u32 %v1556, 7
        %v1558 = vsub.s32 0, %v1557
        %v1559 = vrot.slane %v1554, %v1558
        %1560 = vrot.lane.b32.xlu0 %v1559, 10
        %v1561 = vpop.permute.xlu0 %1560
        %v1563 = vmul.f32 %v1551, %v1561
        %v1564 = vmul.f32 %v1552, %v1561
        %1567 = vrot.lane.b32.xlu0 %v1563, 126
        %v1568 = vpop.permute.xlu0 %1567
        %1569 = vrot.lane.b32.xlu0 %v1564, 126
        %v1570 = vpop.permute.xlu0 %1569
        %v1573 = vadd.f32 %v1549, %v1568
        %v1574 = vadd.f32 %v1550, %v1570
        %v1575 = vld [vmem:[%s980 + $0xc] sm:$0xff]
        %v1576 = vld [vmem:[%s980 + $0x14] sm:$0xff]
        %s1577 = scalar_lea.vmem %s1, 78
        %v1578 = vld [vmem:[%s1577] sm:$0x1]
        %v1580 = vlaneseq
        %v1581 = vshrl.u32 %v1580, 7
        %v1582 = vsub.s32 0, %v1581
        %v1583 = vrot.slane %v1578, %v1582
        %1584 = vrot.lane.b32.xlu0 %v1583, 10
        %v1585 = vpop.permute.xlu0 %1584
        %v1587 = vmul.f32 %v1575, %v1585
        %v1588 = vmul.f32 %v1576, %v1585
        %1591 = vrot.lane.b32.xlu0 %v1587, 126
        %v1592 = vpop.permute.xlu0 %1591
        %1593 = vrot.lane.b32.xlu0 %v1588, 126
        %v1594 = vpop.permute.xlu0 %1593
        %v1597 = vadd.f32 %v1573, %v1592
        %v1598 = vadd.f32 %v1574, %v1594
        %v1599 = vld [vmem:[%s980 + $0x15] sm:$0xff]
        %s1600 = scalar_lea.vmem %s1, 79
        %v1601 = vld [vmem:[%s1600] sm:$0x1]
        %v1603 = vlaneseq
        %v1604 = vshrl.u32 %v1603, 7
        %v1605 = vsub.s32 0, %v1604
        %v1606 = vrot.slane %v1601, %v1605
        %1607 = vrot.lane.b32.xlu0 %v1606, 10
        %v1608 = vpop.permute.xlu0 %1607
        %v1610 = vmul.f32 %v1408, %v1608
        %v1611 = vmul.f32 %v1599, %v1608
        %1614 = vrot.lane.b32.xlu0 %v1610, 126
        %v1615 = vpop.permute.xlu0 %1614
        %1616 = vrot.lane.b32.xlu0 %v1611, 126
        %v1617 = vpop.permute.xlu0 %1616
        %v1620 = vadd.f32 %v1597, %v1615
        %v1621 = vadd.f32 %v1598, %v1617
        %v1622 = vld [vmem:[%s980 + $0x16] sm:$0xff]
        %s1623 = scalar_lea.vmem %s1, 80
        %v1624 = vld [vmem:[%s1623] sm:$0x1]
        %v1626 = vlaneseq
        %v1627 = vshrl.u32 %v1626, 7
        %v1628 = vsub.s32 0, %v1627
        %v1629 = vrot.slane %v1624, %v1628
        %1630 = vrot.lane.b32.xlu0 %v1629, 10
        %v1631 = vpop.permute.xlu0 %1630
        %v1633 = vmul.f32 %v1432, %v1631
        %v1634 = vmul.f32 %v1622, %v1631
        %1637 = vrot.lane.b32.xlu0 %v1633, 126
        %v1638 = vpop.permute.xlu0 %1637
        %1639 = vrot.lane.b32.xlu0 %v1634, 126
        %v1640 = vpop.permute.xlu0 %1639
        %v1643 = vadd.f32 %v1620, %v1638
        %v1644 = vadd.f32 %v1621, %v1640
        %v1645 = vld [vmem:[%s980 + $0x17] sm:$0xff]
        %s1646 = scalar_lea.vmem %s1, 81
        %v1647 = vld [vmem:[%s1646] sm:$0x1]
        %v1649 = vlaneseq
        %v1650 = vshrl.u32 %v1649, 7
        %v1651 = vsub.s32 0, %v1650
        %v1652 = vrot.slane %v1647, %v1651
        %1653 = vrot.lane.b32.xlu0 %v1652, 10
        %v1654 = vpop.permute.xlu0 %1653
        %v1656 = vmul.f32 %v1456, %v1654
        %v1657 = vmul.f32 %v1645, %v1654
        %1660 = vrot.lane.b32.xlu0 %v1656, 126
        %v1661 = vpop.permute.xlu0 %1660
        %1662 = vrot.lane.b32.xlu0 %v1657, 126
        %v1663 = vpop.permute.xlu0 %1662
        %v1666 = vadd.f32 %v1643, %v1661
        %v1667 = vadd.f32 %v1644, %v1663
        %v1668 = vld [vmem:[#allocation2 + $0xa] sm:$0xff]
        %v1669 = vld [vmem:[#allocation2 + $0x12] sm:$0xff]
        %s1670 = scalar_lea.vmem %s1, 43
        %v1671 = vld [vmem:[%s1670] sm:$0x1]
        %v1673 = vlaneseq
        %v1674 = vshrl.u32 %v1673, 7
        %v1675 = vsub.s32 0, %v1674
        %v1676 = vrot.slane %v1671, %v1675
        %v1678 = vmul.f32 %v1668, %v1676
        %v1679 = vmul.f32 %v1669, %v1676
        %s1680 = scalar_lea.vmem %s2, 3
        %v1681 = vld [vmem:[%s1680] sm:$0x1]
        %v1683 = vlaneseq
        %v1684 = vshrl.u32 %v1683, 7
        %v1685 = vsub.s32 0, %v1684
        %v1686 = vrot.slane %v1681, %v1685
        %v1688 = vadd.f32 %v1678, %v1686
        %v1689 = vadd.f32 %v1679, %v1686
        %s1690 = scalar_lea.vmem %s1, 44
        %v1691 = vld [vmem:[%s1690] sm:$0x1]
        %v1693 = vlaneseq
        %v1694 = vshrl.u32 %v1693, 7
        %v1695 = vsub.s32 0, %v1694
        %v1696 = vrot.slane %v1691, %v1695
        %1697 = vrot.lane.b32.xlu0 %v1696, 1
        %v1698 = vpop.permute.xlu0 %1697
        %v1700 = vmul.f32 %v1668, %v1698
        %v1701 = vmul.f32 %v1669, %v1698
        %1704 = vrot.lane.b32.xlu0 %v1700, 127
        %v1705 = vpop.permute.xlu0 %1704
        %1706 = vrot.lane.b32.xlu0 %v1701, 127
        %v1707 = vpop.permute.xlu0 %1706
        %v1710 = vadd.f32 %v1688, %v1705
        %v1711 = vadd.f32 %v1689, %v1707
        %s1712 = scalar_lea.vmem %s1, 45
        %v1713 = vld [vmem:[%s1712] sm:$0x1]
        %v1715 = vlaneseq
        %v1716 = vshrl.u32 %v1715, 7
        %v1717 = vsub.s32 0, %v1716
        %v1718 = vrot.slane %v1713, %v1717
        %1719 = vrot.lane.b32.xlu0 %v1718, 2
        %v1720 = vpop.permute.xlu0 %1719
        %v1722 = vmul.f32 %v1668, %v1720
        %v1723 = vmul.f32 %v1669, %v1720
        %1726 = vrot.lane.b32.xlu0 %v1722, 126
        %v1727 = vpop.permute.xlu0 %1726
        %1728 = vrot.lane.b32.xlu0 %v1723, 126
        %v1729 = vpop.permute.xlu0 %1728
        %v1732 = vadd.f32 %v1710, %v1727
        %v1733 = vadd.f32 %v1711, %v1729
        %s1734 = scalar_lea.vmem %s1, 46
        %v1735 = vld [vmem:[%s1734] sm:$0x1]
        %v1737 = vlaneseq
        %v1738 = vshrl.u32 %v1737, 7
        %v1739 = vsub.s32 0, %v1738
        %v1740 = vrot.slane %v1735, %v1739
        %1741 = vrot.lane.b32.xlu0 %v1740, 3
        %v1742 = vpop.permute.xlu0 %1741
        %v1744 = vmul.f32 %v1668, %v1742
        %v1745 = vmul.f32 %v1669, %v1742
        %1748 = vrot.lane.b32.xlu0 %v1744, 125
        %v1749 = vpop.permute.xlu0 %1748
        %1750 = vrot.lane.b32.xlu0 %v1745, 125
        %v1751 = vpop.permute.xlu0 %1750
        %v1754 = vadd.f32 %v1732, %v1749
        %v1755 = vadd.f32 %v1733, %v1751
        %s1756 = scalar_lea.vmem %s1, 47
        %v1757 = vld [vmem:[%s1756] sm:$0x1]
        %v1759 = vlaneseq
        %v1760 = vshrl.u32 %v1759, 7
        %v1761 = vsub.s32 0, %v1760
        %v1762 = vrot.slane %v1757, %v1761
        %1763 = vrot.lane.b32.xlu0 %v1762, 4
        %v1764 = vpop.permute.xlu0 %1763
        %v1766 = vmul.f32 %v1668, %v1764
        %v1767 = vmul.f32 %v1669, %v1764
        %1770 = vrot.lane.b32.xlu0 %v1766, 124
        %v1771 = vpop.permute.xlu0 %1770
        %1772 = vrot.lane.b32.xlu0 %v1767, 124
        %v1773 = vpop.permute.xlu0 %1772
        %v1776 = vadd.f32 %v1754, %v1771
        %v1777 = vadd.f32 %v1755, %v1773
        %s1778 = scalar_lea.vmem %s1, 48
        %v1779 = vld [vmem:[%s1778] sm:$0x1]
        %v1781 = vlaneseq
        %v1782 = vshrl.u32 %v1781, 7
        %v1783 = vsub.s32 0, %v1782
        %v1784 = vrot.slane %v1779, %v1783
        %1785 = vrot.lane.b32.xlu0 %v1784, 5
        %v1786 = vpop.permute.xlu0 %1785
        %v1788 = vmul.f32 %v1668, %v1786
        %v1789 = vmul.f32 %v1669, %v1786
        %1792 = vrot.lane.b32.xlu0 %v1788, 123
        %v1793 = vpop.permute.xlu0 %1792
        %1794 = vrot.lane.b32.xlu0 %v1789, 123
        %v1795 = vpop.permute.xlu0 %1794
        %v1798 = vadd.f32 %v1776, %v1793
        %v1799 = vadd.f32 %v1777, %v1795
        %s1800 = scalar_lea.vmem %s1, 49
        %v1801 = vld [vmem:[%s1800] sm:$0x1]
        %v1803 = vlaneseq
        %v1804 = vshrl.u32 %v1803, 7
        %v1805 = vsub.s32 0, %v1804
        %v1806 = vrot.slane %v1801, %v1805
        %1807 = vrot.lane.b32.xlu0 %v1806, 6
        %v1808 = vpop.permute.xlu0 %1807
        %v1810 = vmul.f32 %v1668, %v1808
        %v1811 = vmul.f32 %v1669, %v1808
        %1814 = vrot.lane.b32.xlu0 %v1810, 122
        %v1815 = vpop.permute.xlu0 %1814
        %1816 = vrot.lane.b32.xlu0 %v1811, 122
        %v1817 = vpop.permute.xlu0 %1816
        %v1820 = vadd.f32 %v1798, %v1815
        %v1821 = vadd.f32 %v1799, %v1817
        %s1822 = scalar_lea.vmem %s1, 50
        %v1823 = vld [vmem:[%s1822] sm:$0x1]
        %v1825 = vlaneseq
        %v1826 = vshrl.u32 %v1825, 7
        %v1827 = vsub.s32 0, %v1826
        %v1828 = vrot.slane %v1823, %v1827
        %1829 = vrot.lane.b32.xlu0 %v1828, 7
        %v1830 = vpop.permute.xlu0 %1829
        %v1832 = vmul.f32 %v1668, %v1830
        %v1833 = vmul.f32 %v1669, %v1830
        %1836 = vrot.lane.b32.xlu0 %v1832, 121
        %v1837 = vpop.permute.xlu0 %1836
        %1838 = vrot.lane.b32.xlu0 %v1833, 121
        %v1839 = vpop.permute.xlu0 %1838
        %v1842 = vadd.f32 %v1820, %v1837
        %v1843 = vadd.f32 %v1821, %v1839
        %s1844 = scalar_lea.vmem %s1, 51
        %v1845 = vld [vmem:[%s1844] sm:$0x1]
        %v1847 = vlaneseq
        %v1848 = vshrl.u32 %v1847, 7
        %v1849 = vsub.s32 0, %v1848
        %v1850 = vrot.slane %v1845, %v1849
        %1851 = vrot.lane.b32.xlu0 %v1850, 8
        %v1852 = vpop.permute.xlu0 %1851
        %v1854 = vmul.f32 %v1668, %v1852
        %v1855 = vmul.f32 %v1669, %v1852
        %1858 = vrot.lane.b32.xlu0 %v1854, 120
        %v1859 = vpop.permute.xlu0 %1858
        %1860 = vrot.lane.b32.xlu0 %v1855, 120
        %v1861 = vpop.permute.xlu0 %1860
        %v1864 = vadd.f32 %v1842, %v1859
        %v1865 = vadd.f32 %v1843, %v1861
        %s1866 = scalar_lea.vmem %s1, 52
        %v1867 = vld [vmem:[%s1866] sm:$0x1]
        %v1869 = vlaneseq
        %v1870 = vshrl.u32 %v1869, 7
        %v1871 = vsub.s32 0, %v1870
        %v1872 = vrot.slane %v1867, %v1871
        %1873 = vrot.lane.b32.xlu0 %v1872, 9
        %v1874 = vpop.permute.xlu0 %1873
        %v1876 = vmul.f32 %v1668, %v1874
        %v1877 = vmul.f32 %v1669, %v1874
        %1880 = vrot.lane.b32.xlu0 %v1876, 119
        %v1881 = vpop.permute.xlu0 %1880
        %1882 = vrot.lane.b32.xlu0 %v1877, 119
        %v1883 = vpop.permute.xlu0 %1882
        %v1886 = vadd.f32 %v1864, %v1881
        %v1887 = vadd.f32 %v1865, %v1883
        %s1888 = scalar_lea.vmem %s1, 53
        %v1889 = vld [vmem:[%s1888] sm:$0x1]
        %v1891 = vlaneseq
        %v1892 = vshrl.u32 %v1891, 7
        %v1893 = vsub.s32 0, %v1892
        %v1894 = vrot.slane %v1889, %v1893
        %1895 = vrot.lane.b32.xlu0 %v1894, 10
        %v1896 = vpop.permute.xlu0 %1895
        %v1898 = vmul.f32 %v1668, %v1896
        %v1899 = vmul.f32 %v1669, %v1896
        %1902 = vrot.lane.b32.xlu0 %v1898, 118
        %v1903 = vpop.permute.xlu0 %1902
        %1904 = vrot.lane.b32.xlu0 %v1899, 118
        %v1905 = vpop.permute.xlu0 %1904
        %v1908 = vadd.f32 %v1886, %v1903
        %v1909 = vadd.f32 %v1887, %v1905
        %s1910 = scalar_lea.vmem %s1, 54
        %v1911 = vld [vmem:[%s1910] sm:$0x1]
        %v1913 = vlaneseq
        %v1914 = vshrl.u32 %v1913, 7
        %v1915 = vsub.s32 0, %v1914
        %v1916 = vrot.slane %v1911, %v1915
        %1917 = vrot.lane.b32.xlu0 %v1916, 11
        %v1918 = vpop.permute.xlu0 %1917
        %v1920 = vmul.f32 %v1668, %v1918
        %v1921 = vmul.f32 %v1669, %v1918
        %1924 = vrot.lane.b32.xlu0 %v1920, 117
        %v1925 = vpop.permute.xlu0 %1924
        %1926 = vrot.lane.b32.xlu0 %v1921, 117
        %v1927 = vpop.permute.xlu0 %1926
        %v1930 = vadd.f32 %v1908, %v1925
        %v1931 = vadd.f32 %v1909, %v1927
        %s1932 = scalar_lea.vmem %s1, 55
        %v1933 = vld [vmem:[%s1932] sm:$0x1]
        %v1935 = vlaneseq
        %v1936 = vshrl.u32 %v1935, 7
        %v1937 = vsub.s32 0, %v1936
        %v1938 = vrot.slane %v1933, %v1937
        %1939 = vrot.lane.b32.xlu0 %v1938, 12
        %v1940 = vpop.permute.xlu0 %1939
        %v1942 = vmul.f32 %v1668, %v1940
        %v1943 = vmul.f32 %v1669, %v1940
        %1946 = vrot.lane.b32.xlu0 %v1942, 116
        %v1947 = vpop.permute.xlu0 %1946
        %1948 = vrot.lane.b32.xlu0 %v1943, 116
        %v1949 = vpop.permute.xlu0 %1948
        %v1952 = vadd.f32 %v1930, %v1947
        %v1953 = vadd.f32 %v1931, %v1949
        %s1954 = scalar_lea.vmem %s1, 56
        %v1955 = vld [vmem:[%s1954] sm:$0x1]
        %v1957 = vlaneseq
        %v1958 = vshrl.u32 %v1957, 7
        %v1959 = vsub.s32 0, %v1958
        %v1960 = vrot.slane %v1955, %v1959
        %1961 = vrot.lane.b32.xlu0 %v1960, 13
        %v1962 = vpop.permute.xlu0 %1961
        %v1964 = vmul.f32 %v1668, %v1962
        %v1965 = vmul.f32 %v1669, %v1962
        %1968 = vrot.lane.b32.xlu0 %v1964, 115
        %v1969 = vpop.permute.xlu0 %1968
        %1970 = vrot.lane.b32.xlu0 %v1965, 115
        %v1971 = vpop.permute.xlu0 %1970
        %v1974 = vadd.f32 %v1952, %v1969
        %v1975 = vadd.f32 %v1953, %v1971
        %s1976 = scalar_lea.vmem %s1, 57
        %v1977 = vld [vmem:[%s1976] sm:$0x1]
        %v1979 = vlaneseq
        %v1980 = vshrl.u32 %v1979, 7
        %v1981 = vsub.s32 0, %v1980
        %v1982 = vrot.slane %v1977, %v1981
        %1983 = vrot.lane.b32.xlu0 %v1982, 14
        %v1984 = vpop.permute.xlu0 %1983
        %v1986 = vmul.f32 %v1668, %v1984
        %v1987 = vmul.f32 %v1669, %v1984
        %1990 = vrot.lane.b32.xlu0 %v1986, 114
        %v1991 = vpop.permute.xlu0 %1990
        %1992 = vrot.lane.b32.xlu0 %v1987, 114
        %v1993 = vpop.permute.xlu0 %1992
        %v1996 = vadd.f32 %v1974, %v1991
        %v1997 = vadd.f32 %v1975, %v1993
        %s1998 = scalar_lea.vmem %s1, 58
        %v1999 = vld [vmem:[%s1998] sm:$0x1]
        %v2001 = vlaneseq
        %v2002 = vshrl.u32 %v2001, 7
        %v2003 = vsub.s32 0, %v2002
        %v2004 = vrot.slane %v1999, %v2003
        %2005 = vrot.lane.b32.xlu0 %v2004, 15
        %v2006 = vpop.permute.xlu0 %2005
        %v2008 = vmul.f32 %v1668, %v2006
        %v2009 = vmul.f32 %v1669, %v2006
        %2012 = vrot.lane.b32.xlu0 %v2008, 113
        %v2013 = vpop.permute.xlu0 %2012
        %2014 = vrot.lane.b32.xlu0 %v2009, 113
        %v2015 = vpop.permute.xlu0 %2014
        %v2018 = vadd.f32 %v1996, %v2013
        %v2019 = vadd.f32 %v1997, %v2015
        %s2020 = scalar_lea.vmem %s1, 59
        %v2021 = vld [vmem:[%s2020] sm:$0x1]
        %v2023 = vlaneseq
        %v2024 = vshrl.u32 %v2023, 7
        %v2025 = vsub.s32 0, %v2024
        %v2026 = vrot.slane %v2021, %v2025
        %2027 = vrot.lane.b32.xlu0 %v2026, 16
        %v2028 = vpop.permute.xlu0 %2027
        %v2030 = vmul.f32 %v1668, %v2028
        %v2031 = vmul.f32 %v1669, %v2028
        %2034 = vrot.lane.b32.xlu0 %v2030, 112
        %v2035 = vpop.permute.xlu0 %2034
        %2036 = vrot.lane.b32.xlu0 %v2031, 112
        %v2037 = vpop.permute.xlu0 %2036
        %v2040 = vadd.f32 %v2018, %v2035
        %v2041 = vadd.f32 %v2019, %v2037
        %s2042 = scalar_lea.vmem %s1, 60
        %v2043 = vld [vmem:[%s2042] sm:$0x1]
        %v2045 = vlaneseq
        %v2046 = vshrl.u32 %v2045, 7
        %v2047 = vsub.s32 0, %v2046
        %v2048 = vrot.slane %v2043, %v2047
        %2049 = vrot.lane.b32.xlu0 %v2048, 17
        %v2050 = vpop.permute.xlu0 %2049
        %v2052 = vmul.f32 %v1668, %v2050
        %v2053 = vmul.f32 %v1669, %v2050
        %2056 = vrot.lane.b32.xlu0 %v2052, 111
        %v2057 = vpop.permute.xlu0 %2056
        %2058 = vrot.lane.b32.xlu0 %v2053, 111
        %v2059 = vpop.permute.xlu0 %2058
        %v2062 = vadd.f32 %v2040, %v2057
        %v2063 = vadd.f32 %v2041, %v2059
        %s2064 = scalar_lea.vmem %s1, 61
        %v2065 = vld [vmem:[%s2064] sm:$0x1]
        %v2067 = vlaneseq
        %v2068 = vshrl.u32 %v2067, 7
        %v2069 = vsub.s32 0, %v2068
        %v2070 = vrot.slane %v2065, %v2069
        %2071 = vrot.lane.b32.xlu0 %v2070, 18
        %v2072 = vpop.permute.xlu0 %2071
        %v2074 = vmul.f32 %v1668, %v2072
        %v2075 = vmul.f32 %v1669, %v2072
        %2078 = vrot.lane.b32.xlu0 %v2074, 110
        %v2079 = vpop.permute.xlu0 %2078
        %2080 = vrot.lane.b32.xlu0 %v2075, 110
        %v2081 = vpop.permute.xlu0 %2080
        %v2084 = vadd.f32 %v2062, %v2079
        %v2085 = vadd.f32 %v2063, %v2081
        %s2086 = scalar_lea.vmem %s1, 62
        %v2087 = vld [vmem:[%s2086] sm:$0x1]
        %v2089 = vlaneseq
        %v2090 = vshrl.u32 %v2089, 7
        %v2091 = vsub.s32 0, %v2090
        %v2092 = vrot.slane %v2087, %v2091
        %2093 = vrot.lane.b32.xlu0 %v2092, 19
        %v2094 = vpop.permute.xlu0 %2093
        %v2096 = vmul.f32 %v1668, %v2094
        %v2097 = vmul.f32 %v1669, %v2094
        %2100 = vrot.lane.b32.xlu0 %v2096, 109
        %v2101 = vpop.permute.xlu0 %2100
        %2102 = vrot.lane.b32.xlu0 %v2097, 109
        %v2103 = vpop.permute.xlu0 %2102
        %v2106 = vadd.f32 %v2084, %v2101
        %v2107 = vadd.f32 %v2085, %v2103
        %s2108 = scalar_lea.vmem %s1, 63
        %v2109 = vld [vmem:[%s2108] sm:$0x1]
        %v2111 = vlaneseq
        %v2112 = vshrl.u32 %v2111, 7
        %v2113 = vsub.s32 0, %v2112
        %v2114 = vrot.slane %v2109, %v2113
        %2115 = vrot.lane.b32.xlu0 %v2114, 20
        %v2116 = vpop.permute.xlu0 %2115
        %v2118 = vmul.f32 %v1668, %v2116
        %v2119 = vmul.f32 %v1669, %v2116
        %2122 = vrot.lane.b32.xlu0 %v2118, 108
        %v2123 = vpop.permute.xlu0 %2122
        %2124 = vrot.lane.b32.xlu0 %v2119, 108
        %v2125 = vpop.permute.xlu0 %2124
        %v2128 = vadd.f32 %v2106, %v2123
        %v2129 = vadd.f32 %v2107, %v2125
        %2132 = vrot.lane.b32.xlu0 %v2128, 10
        %v2133 = vpop.permute.xlu0 %2132
        %2134 = vrot.lane.b32.xlu0 %v2129, 10
        %v2135 = vpop.permute.xlu0 %2134
        %2138 = vst.msk [vmem:[%s980 + $0xa] sm:$0xff] %vm793, %v2133
        %2139 = vst.msk [vmem:[%s980 + $0x12] sm:$0xff] %vm793, %v2135
        %v2140 = vld [vmem:[%s980] sm:$0xff]
        %v2141 = vld [vmem:[%s980 + $0x8] sm:$0xff]
        %s2142 = scalar_lea.vmem %s1, 82
        %v2143 = vld [vmem:[%s2142] sm:$0x1]
        %v2145 = vlaneseq
        %v2146 = vshrl.u32 %v2145, 7
        %v2147 = vsub.s32 0, %v2146
        %v2148 = vrot.slane %v2143, %v2147
        %2149 = vrot.lane.b32.xlu0 %v2148, 10
        %v2150 = vpop.permute.xlu0 %2149
        %v2152 = vmul.f32 %v2140, %v2150
        %v2153 = vmul.f32 %v2141, %v2150
        %2156 = vrot.lane.b32.xlu0 %v2152, 126
        %v2157 = vpop.permute.xlu0 %2156
        %2158 = vrot.lane.b32.xlu0 %v2153, 126
        %v2159 = vpop.permute.xlu0 %2158
        %v2162 = vadd.f32 %v1666, %v2157
        %v2163 = vadd.f32 %v1667, %v2159
        %v2164 = vld [vmem:[%s980 + $0x1] sm:$0xff]
        %v2165 = vld [vmem:[%s980 + $0x9] sm:$0xff]
        %s2166 = scalar_lea.vmem %s1, 83
        %v2167 = vld [vmem:[%s2166] sm:$0x1]
        %v2169 = vlaneseq
        %v2170 = vshrl.u32 %v2169, 7
        %v2171 = vsub.s32 0, %v2170
        %v2172 = vrot.slane %v2167, %v2171
        %2173 = vrot.lane.b32.xlu0 %v2172, 10
        %v2174 = vpop.permute.xlu0 %2173
        %v2176 = vmul.f32 %v2164, %v2174
        %v2177 = vmul.f32 %v2165, %v2174
        %2180 = vrot.lane.b32.xlu0 %v2176, 126
        %v2181 = vpop.permute.xlu0 %2180
        %2182 = vrot.lane.b32.xlu0 %v2177, 126
        %v2183 = vpop.permute.xlu0 %2182
        %v2186 = vadd.f32 %v2162, %v2181
        %v2187 = vadd.f32 %v2163, %v2183
        %v2188 = vld [vmem:[%s980 + $0x2] sm:$0xff]
        %v2189 = vld [vmem:[%s980 + $0xa] sm:$0xff]
        %s2190 = scalar_lea.vmem %s1, 84
        %v2191 = vld [vmem:[%s2190] sm:$0x1]
        %v2193 = vlaneseq
        %v2194 = vshrl.u32 %v2193, 7
        %v2195 = vsub.s32 0, %v2194
        %v2196 = vrot.slane %v2191, %v2195
        %2197 = vrot.lane.b32.xlu0 %v2196, 10
        %v2198 = vpop.permute.xlu0 %2197
        %v2200 = vmul.f32 %v2188, %v2198
        %v2201 = vmul.f32 %v2189, %v2198
        %2204 = vrot.lane.b32.xlu0 %v2200, 126
        %v2205 = vpop.permute.xlu0 %2204
        %2206 = vrot.lane.b32.xlu0 %v2201, 126
        %v2207 = vpop.permute.xlu0 %2206
        %v2210 = vadd.f32 %v2186, %v2205
        %v2211 = vadd.f32 %v2187, %v2207
        %v2212 = vld [vmem:[%s980 + $0x3] sm:$0xff]
        %v2213 = vld [vmem:[%s980 + $0xb] sm:$0xff]
        %s2214 = scalar_lea.vmem %s1, 85
        %v2215 = vld [vmem:[%s2214] sm:$0x1]
        %v2217 = vlaneseq
        %v2218 = vshrl.u32 %v2217, 7
        %v2219 = vsub.s32 0, %v2218
        %v2220 = vrot.slane %v2215, %v2219
        %2221 = vrot.lane.b32.xlu0 %v2220, 10
        %v2222 = vpop.permute.xlu0 %2221
        %v2224 = vmul.f32 %v2212, %v2222
        %v2225 = vmul.f32 %v2213, %v2222
        %2228 = vrot.lane.b32.xlu0 %v2224, 126
        %v2229 = vpop.permute.xlu0 %2228
        %2230 = vrot.lane.b32.xlu0 %v2225, 126
        %v2231 = vpop.permute.xlu0 %2230
        %v2234 = vadd.f32 %v2210, %v2229
        %v2235 = vadd.f32 %v2211, %v2231
        %v2236 = vld [vmem:[%s980 + $0x4] sm:$0xff]
        %v2237 = vld [vmem:[%s980 + $0xc] sm:$0xff]
        %s2238 = scalar_lea.vmem %s1, 86
        %v2239 = vld [vmem:[%s2238] sm:$0x1]
        %v2241 = vlaneseq
        %v2242 = vshrl.u32 %v2241, 7
        %v2243 = vsub.s32 0, %v2242
        %v2244 = vrot.slane %v2239, %v2243
        %2245 = vrot.lane.b32.xlu0 %v2244, 10
        %v2246 = vpop.permute.xlu0 %2245
        %v2248 = vmul.f32 %v2236, %v2246
        %v2249 = vmul.f32 %v2237, %v2246
        %2252 = vrot.lane.b32.xlu0 %v2248, 126
        %v2253 = vpop.permute.xlu0 %2252
        %2254 = vrot.lane.b32.xlu0 %v2249, 126
        %v2255 = vpop.permute.xlu0 %2254
        %v2258 = vadd.f32 %v2234, %v2253
        %v2259 = vadd.f32 %v2235, %v2255
        %v2260 = vld [vmem:[%s980 + $0x5] sm:$0xff]
        %v2261 = vld [vmem:[%s980 + $0xd] sm:$0xff]
        %s2262 = scalar_lea.vmem %s1, 87
        %v2263 = vld [vmem:[%s2262] sm:$0x1]
        %v2265 = vlaneseq
        %v2266 = vshrl.u32 %v2265, 7
        %v2267 = vsub.s32 0, %v2266
        %v2268 = vrot.slane %v2263, %v2267
        %2269 = vrot.lane.b32.xlu0 %v2268, 10
        %v2270 = vpop.permute.xlu0 %2269
        %v2272 = vmul.f32 %v2260, %v2270
        %v2273 = vmul.f32 %v2261, %v2270
        %2276 = vrot.lane.b32.xlu0 %v2272, 126
        %v2277 = vpop.permute.xlu0 %2276
        %2278 = vrot.lane.b32.xlu0 %v2273, 126
        %v2279 = vpop.permute.xlu0 %2278
        %v2282 = vadd.f32 %v2258, %v2277
        %v2283 = vadd.f32 %v2259, %v2279
        %v2284 = vld [vmem:[%s980 + $0x6] sm:$0xff]
        %v2285 = vld [vmem:[%s980 + $0xe] sm:$0xff]
        %s2286 = scalar_lea.vmem %s1, 88
        %v2287 = vld [vmem:[%s2286] sm:$0x1]
        %v2289 = vlaneseq
        %v2290 = vshrl.u32 %v2289, 7
        %v2291 = vsub.s32 0, %v2290
        %v2292 = vrot.slane %v2287, %v2291
        %2293 = vrot.lane.b32.xlu0 %v2292, 10
        %v2294 = vpop.permute.xlu0 %2293
        %v2296 = vmul.f32 %v2284, %v2294
        %v2297 = vmul.f32 %v2285, %v2294
        %2300 = vrot.lane.b32.xlu0 %v2296, 126
        %v2301 = vpop.permute.xlu0 %2300
        %2302 = vrot.lane.b32.xlu0 %v2297, 126
        %v2303 = vpop.permute.xlu0 %2302
        %v2306 = vadd.f32 %v2282, %v2301
        %v2307 = vadd.f32 %v2283, %v2303
        %v2308 = vld [vmem:[%s980 + $0x7] sm:$0xff]
        %v2309 = vld [vmem:[%s980 + $0xf] sm:$0xff]
        %s2310 = scalar_lea.vmem %s1, 89
        %v2311 = vld [vmem:[%s2310] sm:$0x1]
        %v2313 = vlaneseq
        %v2314 = vshrl.u32 %v2313, 7
        %v2315 = vsub.s32 0, %v2314
        %v2316 = vrot.slane %v2311, %v2315
        %2317 = vrot.lane.b32.xlu0 %v2316, 10
        %v2318 = vpop.permute.xlu0 %2317
        %v2320 = vmul.f32 %v2308, %v2318
        %v2321 = vmul.f32 %v2309, %v2318
        %2324 = vrot.lane.b32.xlu0 %v2320, 126
        %v2325 = vpop.permute.xlu0 %2324
        %2326 = vrot.lane.b32.xlu0 %v2321, 126
        %v2327 = vpop.permute.xlu0 %2326
        %v2330 = vadd.f32 %v2306, %v2325
        %v2331 = vadd.f32 %v2307, %v2327
        %v2332 = vld [vmem:[%s980 + $0x10] sm:$0xff]
        %s2333 = scalar_lea.vmem %s1, 90
        %v2334 = vld [vmem:[%s2333] sm:$0x1]
        %v2336 = vlaneseq
        %v2337 = vshrl.u32 %v2336, 7
        %v2338 = vsub.s32 0, %v2337
        %v2339 = vrot.slane %v2334, %v2338
        %2340 = vrot.lane.b32.xlu0 %v2339, 10
        %v2341 = vpop.permute.xlu0 %2340
        %v2343 = vmul.f32 %v2141, %v2341
        %v2344 = vmul.f32 %v2332, %v2341
        %2347 = vrot.lane.b32.xlu0 %v2343, 126
        %v2348 = vpop.permute.xlu0 %2347
        %2349 = vrot.lane.b32.xlu0 %v2344, 126
        %v2350 = vpop.permute.xlu0 %2349
        %v2353 = vadd.f32 %v2330, %v2348
        %v2354 = vadd.f32 %v2331, %v2350
        %v2355 = vld [vmem:[%s980 + $0x11] sm:$0xff]
        %s2356 = scalar_lea.vmem %s1, 91
        %v2357 = vld [vmem:[%s2356] sm:$0x1]
        %v2359 = vlaneseq
        %v2360 = vshrl.u32 %v2359, 7
        %v2361 = vsub.s32 0, %v2360
        %v2362 = vrot.slane %v2357, %v2361
        %2363 = vrot.lane.b32.xlu0 %v2362, 10
        %v2364 = vpop.permute.xlu0 %2363
        %v2366 = vmul.f32 %v2165, %v2364
        %v2367 = vmul.f32 %v2355, %v2364
        %2370 = vrot.lane.b32.xlu0 %v2366, 126
        %v2371 = vpop.permute.xlu0 %2370
        %2372 = vrot.lane.b32.xlu0 %v2367, 126
        %v2373 = vpop.permute.xlu0 %2372
        %v2376 = vadd.f32 %v2353, %v2371
        %v2377 = vadd.f32 %v2354, %v2373
        %v2378 = vld [vmem:[%s980 + $0x12] sm:$0xff]
        %s2379 = scalar_lea.vmem %s1, 92
        %v2380 = vld [vmem:[%s2379] sm:$0x1]
        %v2382 = vlaneseq
        %v2383 = vshrl.u32 %v2382, 7
        %v2384 = vsub.s32 0, %v2383
        %v2385 = vrot.slane %v2380, %v2384
        %2386 = vrot.lane.b32.xlu0 %v2385, 10
        %v2387 = vpop.permute.xlu0 %2386
        %v2389 = vmul.f32 %v2189, %v2387
        %v2390 = vmul.f32 %v2378, %v2387
        %2393 = vrot.lane.b32.xlu0 %v2389, 126
        %v2394 = vpop.permute.xlu0 %2393
        %2395 = vrot.lane.b32.xlu0 %v2390, 126
        %v2396 = vpop.permute.xlu0 %2395
        %v2399 = vadd.f32 %v2376, %v2394
        %v2400 = vadd.f32 %v2377, %v2396
        %v2401 = vld [vmem:[%s980 + $0x13] sm:$0xff]
        %s2402 = scalar_lea.vmem %s1, 93
        %v2403 = vld [vmem:[%s2402] sm:$0x1]
        %v2405 = vlaneseq
        %v2406 = vshrl.u32 %v2405, 7
        %v2407 = vsub.s32 0, %v2406
        %v2408 = vrot.slane %v2403, %v2407
        %2409 = vrot.lane.b32.xlu0 %v2408, 10
        %v2410 = vpop.permute.xlu0 %2409
        %v2412 = vmul.f32 %v2213, %v2410
        %v2413 = vmul.f32 %v2401, %v2410
        %2416 = vrot.lane.b32.xlu0 %v2412, 126
        %v2417 = vpop.permute.xlu0 %2416
        %2418 = vrot.lane.b32.xlu0 %v2413, 126
        %v2419 = vpop.permute.xlu0 %2418
        %v2422 = vadd.f32 %v2399, %v2417
        %v2423 = vadd.f32 %v2400, %v2419
        %v2424 = vld [vmem:[%s980 + $0x14] sm:$0xff]
        %s2425 = scalar_lea.vmem %s1, 94
        %v2426 = vld [vmem:[%s2425] sm:$0x1]
        %v2428 = vlaneseq
        %v2429 = vshrl.u32 %v2428, 7
        %v2430 = vsub.s32 0, %v2429
        %v2431 = vrot.slane %v2426, %v2430
        %2432 = vrot.lane.b32.xlu0 %v2431, 10
        %v2433 = vpop.permute.xlu0 %2432
        %v2435 = vmul.f32 %v2237, %v2433
        %v2436 = vmul.f32 %v2424, %v2433
        %2439 = vrot.lane.b32.xlu0 %v2435, 126
        %v2440 = vpop.permute.xlu0 %2439
        %2441 = vrot.lane.b32.xlu0 %v2436, 126
        %v2442 = vpop.permute.xlu0 %2441
        %v2445 = vadd.f32 %v2422, %v2440
        %v2446 = vadd.f32 %v2423, %v2442
        %v2447 = vld [vmem:[%s980 + $0x15] sm:$0xff]
        %s2448 = scalar_lea.vmem %s1, 95
        %v2449 = vld [vmem:[%s2448] sm:$0x1]
        %v2451 = vlaneseq
        %v2452 = vshrl.u32 %v2451, 7
        %v2453 = vsub.s32 0, %v2452
        %v2454 = vrot.slane %v2449, %v2453
        %2455 = vrot.lane.b32.xlu0 %v2454, 10
        %v2456 = vpop.permute.xlu0 %2455
        %v2458 = vmul.f32 %v2261, %v2456
        %v2459 = vmul.f32 %v2447, %v2456
        %2462 = vrot.lane.b32.xlu0 %v2458, 126
        %v2463 = vpop.permute.xlu0 %2462
        %2464 = vrot.lane.b32.xlu0 %v2459, 126
        %v2465 = vpop.permute.xlu0 %2464
        %v2468 = vadd.f32 %v2445, %v2463
        %v2469 = vadd.f32 %v2446, %v2465
        %v2470 = vld [vmem:[%s980 + $0x16] sm:$0xff]
        %s2471 = scalar_lea.vmem %s1, 96
        %v2472 = vld [vmem:[%s2471] sm:$0x1]
        %v2474 = vlaneseq
        %v2475 = vshrl.u32 %v2474, 7
        %v2476 = vsub.s32 0, %v2475
        %v2477 = vrot.slane %v2472, %v2476
        %2478 = vrot.lane.b32.xlu0 %v2477, 10
        %v2479 = vpop.permute.xlu0 %2478
        %v2481 = vmul.f32 %v2285, %v2479
        %v2482 = vmul.f32 %v2470, %v2479
        %2485 = vrot.lane.b32.xlu0 %v2481, 126
        %v2486 = vpop.permute.xlu0 %2485
        %2487 = vrot.lane.b32.xlu0 %v2482, 126
        %v2488 = vpop.permute.xlu0 %2487
        %v2491 = vadd.f32 %v2468, %v2486
        %v2492 = vadd.f32 %v2469, %v2488
        %v2493 = vld [vmem:[%s980 + $0x17] sm:$0xff]
        %s2494 = scalar_lea.vmem %s1, 97
        %v2495 = vld [vmem:[%s2494] sm:$0x1]
        %v2497 = vlaneseq
        %v2498 = vshrl.u32 %v2497, 7
        %v2499 = vsub.s32 0, %v2498
        %v2500 = vrot.slane %v2495, %v2499
        %2501 = vrot.lane.b32.xlu0 %v2500, 10
        %v2502 = vpop.permute.xlu0 %2501
        %v2504 = vmul.f32 %v2309, %v2502
        %v2505 = vmul.f32 %v2493, %v2502
        %2508 = vrot.lane.b32.xlu0 %v2504, 126
        %v2509 = vpop.permute.xlu0 %2508
        %2510 = vrot.lane.b32.xlu0 %v2505, 126
        %v2511 = vpop.permute.xlu0 %2510
        %v2514 = vadd.f32 %v2491, %v2509
        %v2515 = vadd.f32 %v2492, %v2511
        %v2516 = vld [vmem:[%s980 + $0x18] sm:$0xff]
        %s2517 = scalar_lea.vmem %s1, 98
        %v2518 = vld [vmem:[%s2517] sm:$0x1]
        %v2520 = vlaneseq
        %v2521 = vshrl.u32 %v2520, 7
        %v2522 = vsub.s32 0, %v2521
        %v2523 = vrot.slane %v2518, %v2522
        %2524 = vrot.lane.b32.xlu0 %v2523, 10
        %v2525 = vpop.permute.xlu0 %2524
        %v2527 = vmul.f32 %v2332, %v2525
        %v2528 = vmul.f32 %v2516, %v2525
        %2531 = vrot.lane.b32.xlu0 %v2527, 126
        %v2532 = vpop.permute.xlu0 %2531
        %2533 = vrot.lane.b32.xlu0 %v2528, 126
        %v2534 = vpop.permute.xlu0 %2533
        %v2537 = vadd.f32 %v2514, %v2532
        %v2538 = vadd.f32 %v2515, %v2534
        %v2539 = vld [vmem:[%s980 + $0x19] sm:$0xff]
        %s2540 = scalar_lea.vmem %s1, 99
        %v2541 = vld [vmem:[%s2540] sm:$0x1]
        %v2543 = vlaneseq
        %v2544 = vshrl.u32 %v2543, 7
        %v2545 = vsub.s32 0, %v2544
        %v2546 = vrot.slane %v2541, %v2545
        %2547 = vrot.lane.b32.xlu0 %v2546, 10
        %v2548 = vpop.permute.xlu0 %2547
        %v2550 = vmul.f32 %v2355, %v2548
        %v2551 = vmul.f32 %v2539, %v2548
        %2554 = vrot.lane.b32.xlu0 %v2550, 126
        %v2555 = vpop.permute.xlu0 %2554
        %2556 = vrot.lane.b32.xlu0 %v2551, 126
        %v2557 = vpop.permute.xlu0 %2556
        %v2560 = vadd.f32 %v2537, %v2555
        %v2561 = vadd.f32 %v2538, %v2557
        %v2562 = vld [vmem:[%s980 + $0x1a] sm:$0xff]
        %s2563 = scalar_lea.vmem %s1, 100
        %v2564 = vld [vmem:[%s2563] sm:$0x1]
        %v2566 = vlaneseq
        %v2567 = vshrl.u32 %v2566, 7
        %v2568 = vsub.s32 0, %v2567
        %v2569 = vrot.slane %v2564, %v2568
        %2570 = vrot.lane.b32.xlu0 %v2569, 10
        %v2571 = vpop.permute.xlu0 %2570
        %v2573 = vmul.f32 %v2378, %v2571
        %v2574 = vmul.f32 %v2562, %v2571
        %2577 = vrot.lane.b32.xlu0 %v2573, 126
        %v2578 = vpop.permute.xlu0 %2577
        %2579 = vrot.lane.b32.xlu0 %v2574, 126
        %v2580 = vpop.permute.xlu0 %2579
        %v2583 = vadd.f32 %v2560, %v2578
        %v2584 = vadd.f32 %v2561, %v2580
        %v2585 = vld [vmem:[%s980 + $0x1b] sm:$0xff]
        %s2586 = scalar_lea.vmem %s1, 101
        %v2587 = vld [vmem:[%s2586] sm:$0x1]
        %v2589 = vlaneseq
        %v2590 = vshrl.u32 %v2589, 7
        %v2591 = vsub.s32 0, %v2590
        %v2592 = vrot.slane %v2587, %v2591
        %2593 = vrot.lane.b32.xlu0 %v2592, 10
        %v2594 = vpop.permute.xlu0 %2593
        %v2596 = vmul.f32 %v2401, %v2594
        %v2597 = vmul.f32 %v2585, %v2594
        %2600 = vrot.lane.b32.xlu0 %v2596, 126
        %v2601 = vpop.permute.xlu0 %2600
        %2602 = vrot.lane.b32.xlu0 %v2597, 126
        %v2603 = vpop.permute.xlu0 %2602
        %v2606 = vadd.f32 %v2583, %v2601
        %v2607 = vadd.f32 %v2584, %v2603
        %v2608 = vld [vmem:[%s980 + $0x1c] sm:$0xff]
        %s2609 = scalar_lea.vmem %s1, 102
        %v2610 = vld [vmem:[%s2609] sm:$0x1]
        %v2612 = vlaneseq
        %v2613 = vshrl.u32 %v2612, 7
        %v2614 = vsub.s32 0, %v2613
        %v2615 = vrot.slane %v2610, %v2614
        %2616 = vrot.lane.b32.xlu0 %v2615, 10
        %v2617 = vpop.permute.xlu0 %2616
        %v2619 = vmul.f32 %v2424, %v2617
        %v2620 = vmul.f32 %v2608, %v2617
        %2623 = vrot.lane.b32.xlu0 %v2619, 126
        %v2624 = vpop.permute.xlu0 %2623
        %2625 = vrot.lane.b32.xlu0 %v2620, 126
        %v2626 = vpop.permute.xlu0 %2625
        %v2629 = vadd.f32 %v2606, %v2624
        %v2630 = vadd.f32 %v2607, %v2626
        %2633 = vrot.lane.b32.xlu0 %v2629, 2
        %v2634 = vpop.permute.xlu0 %2633
        %2635 = vrot.lane.b32.xlu0 %v2630, 2
        %v2636 = vpop.permute.xlu0 %2635
        %2639 = vst.msk [vmem:[#allocation2 + $0xa] sm:$0xff] %vm793, %v2634
        %2640 = vst.msk [vmem:[#allocation2 + $0x12] sm:$0xff] %vm793, %v2636
        %s2641 = sld [smem:[#allocation4 + $0x4]]
        %v2642 = vstv %s2641
        %v2643 = vld [vmem:[#allocation2 + $0xa] sm:$0xff]
        %v2644 = vld [vmem:[#allocation2 + $0x12] sm:$0xff]
        %s2645 = sld [smem:[#allocation4]]
        %v2646 = vstv %s2645
        %v2647 = vmul.f32 %v2643, %v2646
        %v2648 = vmul.f32 %v2644, %v2646
        %v2649 = vadd.f32 %v2642, %v2647
        %v2650 = vadd.f32 %v2642, %v2648
        %s2651 = sld [smem:[#allocation4 + $0x1]]
        %v2652 = vstv %s2651
        %v2653 = vmul.f32 %v2643, %v2652
        %v2654 = vmul.f32 %v2644, %v2652
        %2657 = vrot.lane.b32.xlu0 %v2653, 102
        %v2658 = vpop.permute.xlu0 %2657
        %2659 = vrot.lane.b32.xlu0 %v2654, 102
        %v2660 = vpop.permute.xlu0 %2659
        %v2663 = vadd.f32 %v2649, %v2658
        %v2664 = vadd.f32 %v2650, %v2660
        %s2665 = sld [smem:[#allocation4 + $0x2]]
        %v2666 = vstv %s2665
        %v2667 = vmul.f32 %v2643, %v2666
        %v2668 = vmul.f32 %v2644, %v2666
        %2671 = vrot.lane.b32.xlu0 %v2667, 76
        %v2672 = vpop.permute.xlu0 %2671
        %2673 = vrot.lane.b32.xlu0 %v2668, 76
        %v2674 = vpop.permute.xlu0 %2673
        %v2677 = vadd.f32 %v2663, %v2672
        %v2678 = vadd.f32 %v2664, %v2674
        %s2679 = sld [smem:[#allocation4 + $0x3]]
        %v2680 = vstv %s2679
        %v2681 = vmul.f32 %v2643, %v2680
        %v2682 = vmul.f32 %v2644, %v2680
        %2685 = vrot.lane.b32.xlu0 %v2681, 50
        %v2686 = vpop.permute.xlu0 %2685
        %2687 = vrot.lane.b32.xlu0 %v2682, 50
        %v2688 = vpop.permute.xlu0 %2687
        %v2691 = vadd.f32 %v2677, %v2686
        %v2692 = vadd.f32 %v2678, %v2688
        %v2693 = vld [vmem:[%s236 + $0xa] sm:$0xff]
        %v2694 = vld [vmem:[%s236 + $0x12] sm:$0xff]
        %v2695 = vmul.f32 %v2691, %v2693
        %v2696 = vmul.f32 %v2692, %v2694
        %2699 = vrot.lane.b32.xlu0 %v2695, 118
        %v2700 = vpop.permute.xlu0 %2699
        %2701 = vrot.lane.b32.xlu0 %v2696, 118
        %v2702 = vpop.permute.xlu0 %2701
        %vm2705 = vcmask 130048
        %2706 = vst.msk [vmem:[#allocation3] sm:$0xff] %vm2705, %v2700
        %2707 = vst.msk [vmem:[#allocation3 + $0x8] sm:$0xff] %vm2705, %v2702
        %v2708 = vadd.f32 %v2695, 0.0
        %v2709 = vadd.f32 %v2696, 0.0
        %s2710 = sld [smem:[#allocation4 + $0x84]]
        %v2711 = vstv %s2710
        %v2712 = vld [vmem:[#allocation2 + $0xa] sm:$0xff]
        %v2713 = vld [vmem:[#allocation2 + $0x12] sm:$0xff]
        %s2714 = sld [smem:[#allocation4 + $0x80]]
        %v2715 = vstv %s2714
        %v2716 = vmul.f32 %v2712, %v2715
        %v2717 = vmul.f32 %v2713, %v2715
        %v2718 = vadd.f32 %v2711, %v2716
        %v2719 = vadd.f32 %v2711, %v2717
        %s2720 = sld [smem:[#allocation4 + $0x81]]
        %v2721 = vstv %s2720
        %v2722 = vmul.f32 %v2712, %v2721
        %v2723 = vmul.f32 %v2713, %v2721
        %2726 = vrot.lane.b32.xlu0 %v2722, 102
        %v2727 = vpop.permute.xlu0 %2726
        %2728 = vrot.lane.b32.xlu0 %v2723, 102
        %v2729 = vpop.permute.xlu0 %2728
        %v2732 = vadd.f32 %v2718, %v2727
        %v2733 = vadd.f32 %v2719, %v2729
        %s2734 = sld [smem:[#allocation4 + $0x82]]
        %v2735 = vstv %s2734
        %v2736 = vmul.f32 %v2712, %v2735
        %v2737 = vmul.f32 %v2713, %v2735
        %2740 = vrot.lane.b32.xlu0 %v2736, 76
        %v2741 = vpop.permute.xlu0 %2740
        %2742 = vrot.lane.b32.xlu0 %v2737, 76
        %v2743 = vpop.permute.xlu0 %2742
        %v2746 = vadd.f32 %v2732, %v2741
        %v2747 = vadd.f32 %v2733, %v2743
        %s2748 = sld [smem:[#allocation4 + $0x83]]
        %v2749 = vstv %s2748
        %v2750 = vmul.f32 %v2712, %v2749
        %v2751 = vmul.f32 %v2713, %v2749
        %2754 = vrot.lane.b32.xlu0 %v2750, 50
        %v2755 = vpop.permute.xlu0 %2754
        %2756 = vrot.lane.b32.xlu0 %v2751, 50
        %v2757 = vpop.permute.xlu0 %2756
        %v2760 = vadd.f32 %v2746, %v2755
        %v2761 = vadd.f32 %v2747, %v2757
        %v2762 = vld [vmem:[%s236 + $0xa] sm:$0xff]
        %v2763 = vld [vmem:[%s236 + $0x12] sm:$0xff]
        %2766 = vrot.lane.b32.xlu0 %v2762, 102
        %v2767 = vpop.permute.xlu0 %2766
        %2768 = vrot.lane.b32.xlu0 %v2763, 102
        %v2769 = vpop.permute.xlu0 %2768
        %v2772 = vmul.f32 %v2760, %v2767
        %v2773 = vmul.f32 %v2761, %v2769
        %2776 = vrot.lane.b32.xlu0 %v2772, 118
        %v2777 = vpop.permute.xlu0 %2776
        %2778 = vrot.lane.b32.xlu0 %v2773, 118
        %v2779 = vpop.permute.xlu0 %2778
        %s2782 = scalar_lea.vmem [#allocation3], 16
        %2783 = vst.msk [vmem:[%s2782] sm:$0xff] %vm2705, %v2777
        %2784 = vst.msk [vmem:[%s2782 + $0x8] sm:$0xff] %vm2705, %v2779
        %v2785 = vadd.f32 %v2708, %v2772
        %v2786 = vadd.f32 %v2709, %v2773
        %v2787 = vmax.f32 %v2695, %v2772
        %v2788 = vmax.f32 %v2696, %v2773
        %s2789 = sld [smem:[#allocation4 + $0x104]]
        %v2790 = vstv %s2789
        %v2791 = vld [vmem:[#allocation2 + $0xa] sm:$0xff]
        %v2792 = vld [vmem:[#allocation2 + $0x12] sm:$0xff]
        %s2793 = sld [smem:[#allocation4 + $0x100]]
        %v2794 = vstv %s2793
        %v2795 = vmul.f32 %v2791, %v2794
        %v2796 = vmul.f32 %v2792, %v2794
        %v2797 = vadd.f32 %v2790, %v2795
        %v2798 = vadd.f32 %v2790, %v2796
        %s2799 = sld [smem:[#allocation4 + $0x101]]
        %v2800 = vstv %s2799
        %v2801 = vmul.f32 %v2791, %v2800
        %v2802 = vmul.f32 %v2792, %v2800
        %2805 = vrot.lane.b32.xlu0 %v2801, 102
        %v2806 = vpop.permute.xlu0 %2805
        %2807 = vrot.lane.b32.xlu0 %v2802, 102
        %v2808 = vpop.permute.xlu0 %2807
        %v2811 = vadd.f32 %v2797, %v2806
        %v2812 = vadd.f32 %v2798, %v2808
        %s2813 = sld [smem:[#allocation4 + $0x102]]
        %v2814 = vstv %s2813
        %v2815 = vmul.f32 %v2791, %v2814
        %v2816 = vmul.f32 %v2792, %v2814
        %2819 = vrot.lane.b32.xlu0 %v2815, 76
        %v2820 = vpop.permute.xlu0 %2819
        %2821 = vrot.lane.b32.xlu0 %v2816, 76
        %v2822 = vpop.permute.xlu0 %2821
        %v2825 = vadd.f32 %v2811, %v2820
        %v2826 = vadd.f32 %v2812, %v2822
        %s2827 = sld [smem:[#allocation4 + $0x103]]
        %v2828 = vstv %s2827
        %v2829 = vmul.f32 %v2791, %v2828
        %v2830 = vmul.f32 %v2792, %v2828
        %2833 = vrot.lane.b32.xlu0 %v2829, 50
        %v2834 = vpop.permute.xlu0 %2833
        %2835 = vrot.lane.b32.xlu0 %v2830, 50
        %v2836 = vpop.permute.xlu0 %2835
        %v2839 = vadd.f32 %v2825, %v2834
        %v2840 = vadd.f32 %v2826, %v2836
        %v2841 = vld [vmem:[%s236 + $0xa] sm:$0xff]
        %v2842 = vld [vmem:[%s236 + $0x12] sm:$0xff]
        %2845 = vrot.lane.b32.xlu0 %v2841, 76
        %v2846 = vpop.permute.xlu0 %2845
        %2847 = vrot.lane.b32.xlu0 %v2842, 76
        %v2848 = vpop.permute.xlu0 %2847
        %v2851 = vmul.f32 %v2839, %v2846
        %v2852 = vmul.f32 %v2840, %v2848
        %2855 = vrot.lane.b32.xlu0 %v2851, 118
        %v2856 = vpop.permute.xlu0 %2855
        %2857 = vrot.lane.b32.xlu0 %v2852, 118
        %v2858 = vpop.permute.xlu0 %2857
        %s2861 = scalar_lea.vmem [#allocation3], 32
        %2862 = vst.msk [vmem:[%s2861] sm:$0xff] %vm2705, %v2856
        %2863 = vst.msk [vmem:[%s2861 + $0x8] sm:$0xff] %vm2705, %v2858
        %v2864 = vadd.f32 %v2785, %v2851
        %v2865 = vadd.f32 %v2786, %v2852
        %v2866 = vmax.f32 %v2787, %v2851
        %v2867 = vmax.f32 %v2788, %v2852
        %s2868 = sld [smem:[#allocation4 + $0x184]]
        %v2869 = vstv %s2868
        %v2870 = vld [vmem:[#allocation2 + $0xa] sm:$0xff]
        %v2871 = vld [vmem:[#allocation2 + $0x12] sm:$0xff]
        %s2872 = sld [smem:[#allocation4 + $0x180]]
        %v2873 = vstv %s2872
        %v2874 = vmul.f32 %v2870, %v2873
        %v2875 = vmul.f32 %v2871, %v2873
        %v2876 = vadd.f32 %v2869, %v2874
        %v2877 = vadd.f32 %v2869, %v2875
        %s2878 = sld [smem:[#allocation4 + $0x181]]
        %v2879 = vstv %s2878
        %v2880 = vmul.f32 %v2870, %v2879
        %v2881 = vmul.f32 %v2871, %v2879
        %2884 = vrot.lane.b32.xlu0 %v2880, 102
        %v2885 = vpop.permute.xlu0 %2884
        %2886 = vrot.lane.b32.xlu0 %v2881, 102
        %v2887 = vpop.permute.xlu0 %2886
        %v2890 = vadd.f32 %v2876, %v2885
        %v2891 = vadd.f32 %v2877, %v2887
        %s2892 = sld [smem:[#allocation4 + $0x182]]
        %v2893 = vstv %s2892
        %v2894 = vmul.f32 %v2870, %v2893
        %v2895 = vmul.f32 %v2871, %v2893
        %2898 = vrot.lane.b32.xlu0 %v2894, 76
        %v2899 = vpop.permute.xlu0 %2898
        %2900 = vrot.lane.b32.xlu0 %v2895, 76
        %v2901 = vpop.permute.xlu0 %2900
        %v2904 = vadd.f32 %v2890, %v2899
        %v2905 = vadd.f32 %v2891, %v2901
        %s2906 = sld [smem:[#allocation4 + $0x183]]
        %v2907 = vstv %s2906
        %v2908 = vmul.f32 %v2870, %v2907
        %v2909 = vmul.f32 %v2871, %v2907
        %2912 = vrot.lane.b32.xlu0 %v2908, 50
        %v2913 = vpop.permute.xlu0 %2912
        %2914 = vrot.lane.b32.xlu0 %v2909, 50
        %v2915 = vpop.permute.xlu0 %2914
        %v2918 = vadd.f32 %v2904, %v2913
        %v2919 = vadd.f32 %v2905, %v2915
        %v2920 = vld [vmem:[%s236 + $0xa] sm:$0xff]
        %v2921 = vld [vmem:[%s236 + $0x12] sm:$0xff]
        %2924 = vrot.lane.b32.xlu0 %v2920, 50
        %v2925 = vpop.permute.xlu0 %2924
        %2926 = vrot.lane.b32.xlu0 %v2921, 50
        %v2927 = vpop.permute.xlu0 %2926
        %v2930 = vmul.f32 %v2918, %v2925
        %v2931 = vmul.f32 %v2919, %v2927
        %2934 = vrot.lane.b32.xlu0 %v2930, 118
        %v2935 = vpop.permute.xlu0 %2934
        %2936 = vrot.lane.b32.xlu0 %v2931, 118
        %v2937 = vpop.permute.xlu0 %2936
        %s2940 = scalar_lea.vmem [#allocation3], 48
        %2941 = vst.msk [vmem:[%s2940] sm:$0xff] %vm2705, %v2935
        %2942 = vst.msk [vmem:[%s2940 + $0x8] sm:$0xff] %vm2705, %v2937
        %v2943 = vadd.f32 %v2864, %v2930
        %v2944 = vadd.f32 %v2865, %v2931
        %v2945 = vmax.f32 %v2866, %v2930
        %v2946 = vmax.f32 %v2867, %v2931
        %v2947 = vmul.f32 %v2943, 0.25
        %v2948 = vmul.f32 %v2944, 0.25
        %vm2949 = vcmask 212048
        %2950 = vst.msk [vmem:[%s980 + $0xa] sm:$0xff] %vm2949, %v2947
        %2951 = vst.msk [vmem:[%s980 + $0x12] sm:$0xff] %vm2949, %v2948
        %2954 = vrot.lane.b32.xlu0 %v2945, 26
        %v2955 = vpop.permute.xlu0 %2954
        %2956 = vrot.lane.b32.xlu0 %v2946, 26
        %v2957 = vpop.permute.xlu0 %2956
        %vm2960 = vcmask 425248
        %2961 = vst.msk [vmem:[%s980 + $0xa] sm:$0xff] %vm2960, %v2955
        %2962 = vst.msk [vmem:[%s980 + $0x12] sm:$0xff] %vm2960, %v2957
        %v2963 = vld [vmem:[%s980 + $0x7] sm:$0xff]
        %v2964 = vld [vmem:[%s980 + $0xf] sm:$0xff]
        %v2965 = vld [vmem:[%s3] sm:$0x1]
        %v2967 = vlaneseq
        %v2968 = vshrl.u32 %v2967, 7
        %v2969 = vsub.s32 0, %v2968
        %v2970 = vrot.slane %v2965, %v2969
        %2971 = vrot.lane.b32.xlu0 %v2970, 7
        %v2972 = vpop.permute.xlu0 %2971
        %v2974 = vmul.f32 %v2963, %v2972
        %v2975 = vmul.f32 %v2964, %v2972
        %s2976 = scalar_lea.vmem %s3, 1
        %v2977 = vld [vmem:[%s2976] sm:$0x1]
        %v2979 = vlaneseq
        %v2980 = vshrl.u32 %v2979, 7
        %v2981 = vsub.s32 0, %v2980
        %v2982 = vrot.slane %v2977, %v2981
        %2983 = vrot.lane.b32.xlu0 %v2982, 8
        %v2984 = vpop.permute.xlu0 %2983
        %v2986 = vmul.f32 %v2963, %v2984
        %v2987 = vmul.f32 %v2964, %v2984
        %2990 = vrot.lane.b32.xlu0 %v2986, 127
        %v2991 = vpop.permute.xlu0 %2990
        %2992 = vrot.lane.b32.xlu0 %v2987, 127
        %v2993 = vpop.permute.xlu0 %2992
        %v2996 = vadd.f32 %v2974, %v2991
        %v2997 = vadd.f32 %v2975, %v2993
        %s2998 = scalar_lea.vmem %s3, 2
        %v2999 = vld [vmem:[%s2998] sm:$0x1]
        %v3001 = vlaneseq
        %v3002 = vshrl.u32 %v3001, 7
        %v3003 = vsub.s32 0, %v3002
        %v3004 = vrot.slane %v2999, %v3003
        %3005 = vrot.lane.b32.xlu0 %v3004, 9
        %v3006 = vpop.permute.xlu0 %3005
        %v3008 = vmul.f32 %v2963, %v3006
        %v3009 = vmul.f32 %v2964, %v3006
        %3012 = vrot.lane.b32.xlu0 %v3008, 126
        %v3013 = vpop.permute.xlu0 %3012
        %3014 = vrot.lane.b32.xlu0 %v3009, 126
        %v3015 = vpop.permute.xlu0 %3014
        %v3018 = vadd.f32 %v2996, %v3013
        %v3019 = vadd.f32 %v2997, %v3015
        %s3020 = scalar_lea.vmem %s3, 3
        %v3021 = vld [vmem:[%s3020] sm:$0x1]
        %v3023 = vlaneseq
        %v3024 = vshrl.u32 %v3023, 7
        %v3025 = vsub.s32 0, %v3024
        %v3026 = vrot.slane %v3021, %v3025
        %3027 = vrot.lane.b32.xlu0 %v3026, 10
        %v3028 = vpop.permute.xlu0 %3027
        %v3030 = vmul.f32 %v2963, %v3028
        %v3031 = vmul.f32 %v2964, %v3028
        %3034 = vrot.lane.b32.xlu0 %v3030, 125
        %v3035 = vpop.permute.xlu0 %3034
        %3036 = vrot.lane.b32.xlu0 %v3031, 125
        %v3037 = vpop.permute.xlu0 %3036
        %v3040 = vadd.f32 %v3018, %v3035
        %v3041 = vadd.f32 %v3019, %v3037
        %s3042 = scalar_lea.vmem %s3, 4
        %v3043 = vld [vmem:[%s3042] sm:$0x1]
        %v3045 = vlaneseq
        %v3046 = vshrl.u32 %v3045, 7
        %v3047 = vsub.s32 0, %v3046
        %v3048 = vrot.slane %v3043, %v3047
        %3049 = vrot.lane.b32.xlu0 %v3048, 11
        %v3050 = vpop.permute.xlu0 %3049
        %v3052 = vmul.f32 %v2963, %v3050
        %v3053 = vmul.f32 %v2964, %v3050
        %3056 = vrot.lane.b32.xlu0 %v3052, 124
        %v3057 = vpop.permute.xlu0 %3056
        %3058 = vrot.lane.b32.xlu0 %v3053, 124
        %v3059 = vpop.permute.xlu0 %3058
        %v3062 = vadd.f32 %v3040, %v3057
        %v3063 = vadd.f32 %v3041, %v3059
        %s3064 = scalar_lea.vmem %s3, 5
        %v3065 = vld [vmem:[%s3064] sm:$0x1]
        %v3067 = vlaneseq
        %v3068 = vshrl.u32 %v3067, 7
        %v3069 = vsub.s32 0, %v3068
        %v3070 = vrot.slane %v3065, %v3069
        %3071 = vrot.lane.b32.xlu0 %v3070, 12
        %v3072 = vpop.permute.xlu0 %3071
        %v3074 = vmul.f32 %v2963, %v3072
        %v3075 = vmul.f32 %v2964, %v3072
        %3078 = vrot.lane.b32.xlu0 %v3074, 123
        %v3079 = vpop.permute.xlu0 %3078
        %3080 = vrot.lane.b32.xlu0 %v3075, 123
        %v3081 = vpop.permute.xlu0 %3080
        %v3084 = vadd.f32 %v3062, %v3079
        %v3085 = vadd.f32 %v3063, %v3081
        %s3086 = scalar_lea.vmem %s3, 6
        %v3087 = vld [vmem:[%s3086] sm:$0x1]
        %v3089 = vlaneseq
        %v3090 = vshrl.u32 %v3089, 7
        %v3091 = vsub.s32 0, %v3090
        %v3092 = vrot.slane %v3087, %v3091
        %3093 = vrot.lane.b32.xlu0 %v3092, 13
        %v3094 = vpop.permute.xlu0 %3093
        %v3096 = vmul.f32 %v2963, %v3094
        %v3097 = vmul.f32 %v2964, %v3094
        %3100 = vrot.lane.b32.xlu0 %v3096, 122
        %v3101 = vpop.permute.xlu0 %3100
        %3102 = vrot.lane.b32.xlu0 %v3097, 122
        %v3103 = vpop.permute.xlu0 %3102
        %v3106 = vadd.f32 %v3084, %v3101
        %v3107 = vadd.f32 %v3085, %v3103
        %v3108 = vld [vmem:[%s980 + $0x8] sm:$0xff]
        %v3109 = vld [vmem:[%s980 + $0x10] sm:$0xff]
        %s3110 = scalar_lea.vmem %s3, 7
        %v3111 = vld [vmem:[%s3110] sm:$0x1]
        %v3113 = vlaneseq
        %v3114 = vshrl.u32 %v3113, 7
        %v3115 = vsub.s32 0, %v3114
        %v3116 = vrot.slane %v3111, %v3115
        %3117 = vrot.lane.b32.xlu0 %v3116, 7
        %v3118 = vpop.permute.xlu0 %3117
        %v3120 = vmul.f32 %v3108, %v3118
        %v3121 = vmul.f32 %v3109, %v3118
        %v3122 = vadd.f32 %v3106, %v3120
        %v3123 = vadd.f32 %v3107, %v3121
        %s3124 = scalar_lea.vmem %s3, 8
        %v3125 = vld [vmem:[%s3124] sm:$0x1]
        %v3127 = vlaneseq
        %v3128 = vshrl.u32 %v3127, 7
        %v3129 = vsub.s32 0, %v3128
        %v3130 = vrot.slane %v3125, %v3129
        %3131 = vrot.lane.b32.xlu0 %v3130, 8
        %v3132 = vpop.permute.xlu0 %3131
        %v3134 = vmul.f32 %v3108, %v3132
        %v3135 = vmul.f32 %v3109, %v3132
        %3138 = vrot.lane.b32.xlu0 %v3134, 127
        %v3139 = vpop.permute.xlu0 %3138
        %3140 = vrot.lane.b32.xlu0 %v3135, 127
        %v3141 = vpop.permute.xlu0 %3140
        %v3144 = vadd.f32 %v3122, %v3139
        %v3145 = vadd.f32 %v3123, %v3141
        %s3146 = scalar_lea.vmem %s3, 9
        %v3147 = vld [vmem:[%s3146] sm:$0x1]
        %v3149 = vlaneseq
        %v3150 = vshrl.u32 %v3149, 7
        %v3151 = vsub.s32 0, %v3150
        %v3152 = vrot.slane %v3147, %v3151
        %3153 = vrot.lane.b32.xlu0 %v3152, 9
        %v3154 = vpop.permute.xlu0 %3153
        %v3156 = vmul.f32 %v3108, %v3154
        %v3157 = vmul.f32 %v3109, %v3154
        %3160 = vrot.lane.b32.xlu0 %v3156, 126
        %v3161 = vpop.permute.xlu0 %3160
        %3162 = vrot.lane.b32.xlu0 %v3157, 126
        %v3163 = vpop.permute.xlu0 %3162
        %v3166 = vadd.f32 %v3144, %v3161
        %v3167 = vadd.f32 %v3145, %v3163
        %s3168 = scalar_lea.vmem %s3, 10
        %v3169 = vld [vmem:[%s3168] sm:$0x1]
        %v3171 = vlaneseq
        %v3172 = vshrl.u32 %v3171, 7
        %v3173 = vsub.s32 0, %v3172
        %v3174 = vrot.slane %v3169, %v3173
        %3175 = vrot.lane.b32.xlu0 %v3174, 10
        %v3176 = vpop.permute.xlu0 %3175
        %v3178 = vmul.f32 %v3108, %v3176
        %v3179 = vmul.f32 %v3109, %v3176
        %3182 = vrot.lane.b32.xlu0 %v3178, 125
        %v3183 = vpop.permute.xlu0 %3182
        %3184 = vrot.lane.b32.xlu0 %v3179, 125
        %v3185 = vpop.permute.xlu0 %3184
        %v3188 = vadd.f32 %v3166, %v3183
        %v3189 = vadd.f32 %v3167, %v3185
        %s3190 = scalar_lea.vmem %s3, 11
        %v3191 = vld [vmem:[%s3190] sm:$0x1]
        %v3193 = vlaneseq
        %v3194 = vshrl.u32 %v3193, 7
        %v3195 = vsub.s32 0, %v3194
        %v3196 = vrot.slane %v3191, %v3195
        %3197 = vrot.lane.b32.xlu0 %v3196, 11
        %v3198 = vpop.permute.xlu0 %3197
        %v3200 = vmul.f32 %v3108, %v3198
        %v3201 = vmul.f32 %v3109, %v3198
        %3204 = vrot.lane.b32.xlu0 %v3200, 124
        %v3205 = vpop.permute.xlu0 %3204
        %3206 = vrot.lane.b32.xlu0 %v3201, 124
        %v3207 = vpop.permute.xlu0 %3206
        %v3210 = vadd.f32 %v3188, %v3205
        %v3211 = vadd.f32 %v3189, %v3207
        %s3212 = scalar_lea.vmem %s3, 12
        %v3213 = vld [vmem:[%s3212] sm:$0x1]
        %v3215 = vlaneseq
        %v3216 = vshrl.u32 %v3215, 7
        %v3217 = vsub.s32 0, %v3216
        %v3218 = vrot.slane %v3213, %v3217
        %3219 = vrot.lane.b32.xlu0 %v3218, 12
        %v3220 = vpop.permute.xlu0 %3219
        %v3222 = vmul.f32 %v3108, %v3220
        %v3223 = vmul.f32 %v3109, %v3220
        %3226 = vrot.lane.b32.xlu0 %v3222, 123
        %v3227 = vpop.permute.xlu0 %3226
        %3228 = vrot.lane.b32.xlu0 %v3223, 123
        %v3229 = vpop.permute.xlu0 %3228
        %v3232 = vadd.f32 %v3210, %v3227
        %v3233 = vadd.f32 %v3211, %v3229
        %s3234 = scalar_lea.vmem %s3, 13
        %v3235 = vld [vmem:[%s3234] sm:$0x1]
        %v3237 = vlaneseq
        %v3238 = vshrl.u32 %v3237, 7
        %v3239 = vsub.s32 0, %v3238
        %v3240 = vrot.slane %v3235, %v3239
        %3241 = vrot.lane.b32.xlu0 %v3240, 13
        %v3242 = vpop.permute.xlu0 %3241
        %v3244 = vmul.f32 %v3108, %v3242
        %v3245 = vmul.f32 %v3109, %v3242
        %3248 = vrot.lane.b32.xlu0 %v3244, 122
        %v3249 = vpop.permute.xlu0 %3248
        %3250 = vrot.lane.b32.xlu0 %v3245, 122
        %v3251 = vpop.permute.xlu0 %3250
        %v3254 = vadd.f32 %v3232, %v3249
        %v3255 = vadd.f32 %v3233, %v3251
        %v3256 = vld [vmem:[%s980 + $0x9] sm:$0xff]
        %v3257 = vld [vmem:[%s980 + $0x11] sm:$0xff]
        %s3258 = scalar_lea.vmem %s3, 14
        %v3259 = vld [vmem:[%s3258] sm:$0x1]
        %v3261 = vlaneseq
        %v3262 = vshrl.u32 %v3261, 7
        %v3263 = vsub.s32 0, %v3262
        %v3264 = vrot.slane %v3259, %v3263
        %3265 = vrot.lane.b32.xlu0 %v3264, 7
        %v3266 = vpop.permute.xlu0 %3265
        %v3268 = vmul.f32 %v3256, %v3266
        %v3269 = vmul.f32 %v3257, %v3266
        %v3270 = vadd.f32 %v3254, %v3268
        %v3271 = vadd.f32 %v3255, %v3269
        %s3272 = scalar_lea.vmem %s3, 15
        %v3273 = vld [vmem:[%s3272] sm:$0x1]
        %v3275 = vlaneseq
        %v3276 = vshrl.u32 %v3275, 7
        %v3277 = vsub.s32 0, %v3276
        %v3278 = vrot.slane %v3273, %v3277
        %3279 = vrot.lane.b32.xlu0 %v3278, 8
        %v3280 = vpop.permute.xlu0 %3279
        %v3282 = vmul.f32 %v3256, %v3280
        %v3283 = vmul.f32 %v3257, %v3280
        %3286 = vrot.lane.b32.xlu0 %v3282, 127
        %v3287 = vpop.permute.xlu0 %3286
        %3288 = vrot.lane.b32.xlu0 %v3283, 127
        %v3289 = vpop.permute.xlu0 %3288
        %v3292 = vadd.f32 %v3270, %v3287
        %v3293 = vadd.f32 %v3271, %v3289
        %s3294 = scalar_lea.vmem %s3, 16
        %v3295 = vld [vmem:[%s3294] sm:$0x1]
        %v3297 = vlaneseq
        %v3298 = vshrl.u32 %v3297, 7
        %v3299 = vsub.s32 0, %v3298
        %v3300 = vrot.slane %v3295, %v3299
        %3301 = vrot.lane.b32.xlu0 %v3300, 9
        %v3302 = vpop.permute.xlu0 %3301
        %v3304 = vmul.f32 %v3256, %v3302
        %v3305 = vmul.f32 %v3257, %v3302
        %3308 = vrot.lane.b32.xlu0 %v3304, 126
        %v3309 = vpop.permute.xlu0 %3308
        %3310 = vrot.lane.b32.xlu0 %v3305, 126
        %v3311 = vpop.permute.xlu0 %3310
        %v3314 = vadd.f32 %v3292, %v3309
        %v3315 = vadd.f32 %v3293, %v3311
        %s3316 = scalar_lea.vmem %s3, 17
        %v3317 = vld [vmem:[%s3316] sm:$0x1]
        %v3319 = vlaneseq
        %v3320 = vshrl.u32 %v3319, 7
        %v3321 = vsub.s32 0, %v3320
        %v3322 = vrot.slane %v3317, %v3321
        %3323 = vrot.lane.b32.xlu0 %v3322, 10
        %v3324 = vpop.permute.xlu0 %3323
        %v3326 = vmul.f32 %v3256, %v3324
        %v3327 = vmul.f32 %v3257, %v3324
        %3330 = vrot.lane.b32.xlu0 %v3326, 125
        %v3331 = vpop.permute.xlu0 %3330
        %3332 = vrot.lane.b32.xlu0 %v3327, 125
        %v3333 = vpop.permute.xlu0 %3332
        %v3336 = vadd.f32 %v3314, %v3331
        %v3337 = vadd.f32 %v3315, %v3333
        %s3338 = scalar_lea.vmem %s3, 18
        %v3339 = vld [vmem:[%s3338] sm:$0x1]
        %v3341 = vlaneseq
        %v3342 = vshrl.u32 %v3341, 7
        %v3343 = vsub.s32 0, %v3342
        %v3344 = vrot.slane %v3339, %v3343
        %3345 = vrot.lane.b32.xlu0 %v3344, 11
        %v3346 = vpop.permute.xlu0 %3345
        %v3348 = vmul.f32 %v3256, %v3346
        %v3349 = vmul.f32 %v3257, %v3346
        %3352 = vrot.lane.b32.xlu0 %v3348, 124
        %v3353 = vpop.permute.xlu0 %3352
        %3354 = vrot.lane.b32.xlu0 %v3349, 124
        %v3355 = vpop.permute.xlu0 %3354
        %v3358 = vadd.f32 %v3336, %v3353
        %v3359 = vadd.f32 %v3337, %v3355
        %s3360 = scalar_lea.vmem %s3, 19
        %v3361 = vld [vmem:[%s3360] sm:$0x1]
        %v3363 = vlaneseq
        %v3364 = vshrl.u32 %v3363, 7
        %v3365 = vsub.s32 0, %v3364
        %v3366 = vrot.slane %v3361, %v3365
        %3367 = vrot.lane.b32.xlu0 %v3366, 12
        %v3368 = vpop.permute.xlu0 %3367
        %v3370 = vmul.f32 %v3256, %v3368
        %v3371 = vmul.f32 %v3257, %v3368
        %3374 = vrot.lane.b32.xlu0 %v3370, 123
        %v3375 = vpop.permute.xlu0 %3374
        %3376 = vrot.lane.b32.xlu0 %v3371, 123
        %v3377 = vpop.permute.xlu0 %3376
        %v3380 = vadd.f32 %v3358, %v3375
        %v3381 = vadd.f32 %v3359, %v3377
        %s3382 = scalar_lea.vmem %s3, 20
        %v3383 = vld [vmem:[%s3382] sm:$0x1]
        %v3385 = vlaneseq
        %v3386 = vshrl.u32 %v3385, 7
        %v3387 = vsub.s32 0, %v3386
        %v3388 = vrot.slane %v3383, %v3387
        %3389 = vrot.lane.b32.xlu0 %v3388, 13
        %v3390 = vpop.permute.xlu0 %3389
        %v3392 = vmul.f32 %v3256, %v3390
        %v3393 = vmul.f32 %v3257, %v3390
        %3396 = vrot.lane.b32.xlu0 %v3392, 122
        %v3397 = vpop.permute.xlu0 %3396
        %3398 = vrot.lane.b32.xlu0 %v3393, 122
        %v3399 = vpop.permute.xlu0 %3398
        %v3402 = vadd.f32 %v3380, %v3397
        %v3403 = vadd.f32 %v3381, %v3399
        %v3404 = vld [vmem:[%s980 + $0xa] sm:$0xff]
        %v3405 = vld [vmem:[%s980 + $0x12] sm:$0xff]
        %s3406 = scalar_lea.vmem %s3, 21
        %v3407 = vld [vmem:[%s3406] sm:$0x1]
        %v3409 = vlaneseq
        %v3410 = vshrl.u32 %v3409, 7
        %v3411 = vsub.s32 0, %v3410
        %v3412 = vrot.slane %v3407, %v3411
        %3413 = vrot.lane.b32.xlu0 %v3412, 7
        %v3414 = vpop.permute.xlu0 %3413
        %v3416 = vmul.f32 %v3404, %v3414
        %v3417 = vmul.f32 %v3405, %v3414
        %v3418 = vadd.f32 %v3402, %v3416
        %v3419 = vadd.f32 %v3403, %v3417
        %s3420 = scalar_lea.vmem %s3, 22
        %v3421 = vld [vmem:[%s3420] sm:$0x1]
        %v3423 = vlaneseq
        %v3424 = vshrl.u32 %v3423, 7
        %v3425 = vsub.s32 0, %v3424
        %v3426 = vrot.slane %v3421, %v3425
        %3427 = vrot.lane.b32.xlu0 %v3426, 8
        %v3428 = vpop.permute.xlu0 %3427
        %v3430 = vmul.f32 %v3404, %v3428
        %v3431 = vmul.f32 %v3405, %v3428
        %3434 = vrot.lane.b32.xlu0 %v3430, 127
        %v3435 = vpop.permute.xlu0 %3434
        %3436 = vrot.lane.b32.xlu0 %v3431, 127
        %v3437 = vpop.permute.xlu0 %3436
        %v3440 = vadd.f32 %v3418, %v3435
        %v3441 = vadd.f32 %v3419, %v3437
        %s3442 = scalar_lea.vmem %s3, 23
        %v3443 = vld [vmem:[%s3442] sm:$0x1]
        %v3445 = vlaneseq
        %v3446 = vshrl.u32 %v3445, 7
        %v3447 = vsub.s32 0, %v3446
        %v3448 = vrot.slane %v3443, %v3447
        %3449 = vrot.lane.b32.xlu0 %v3448, 9
        %v3450 = vpop.permute.xlu0 %3449
        %v3452 = vmul.f32 %v3404, %v3450
        %v3453 = vmul.f32 %v3405, %v3450
        %3456 = vrot.lane.b32.xlu0 %v3452, 126
        %v3457 = vpop.permute.xlu0 %3456
        %3458 = vrot.lane.b32.xlu0 %v3453, 126
        %v3459 = vpop.permute.xlu0 %3458
        %v3462 = vadd.f32 %v3440, %v3457
        %v3463 = vadd.f32 %v3441, %v3459
        %s3464 = scalar_lea.vmem %s3, 24
        %v3465 = vld [vmem:[%s3464] sm:$0x1]
        %v3467 = vlaneseq
        %v3468 = vshrl.u32 %v3467, 7
        %v3469 = vsub.s32 0, %v3468
        %v3470 = vrot.slane %v3465, %v3469
        %3471 = vrot.lane.b32.xlu0 %v3470, 10
        %v3472 = vpop.permute.xlu0 %3471
        %v3474 = vmul.f32 %v3404, %v3472
        %v3475 = vmul.f32 %v3405, %v3472
        %3478 = vrot.lane.b32.xlu0 %v3474, 125
        %v3479 = vpop.permute.xlu0 %3478
        %3480 = vrot.lane.b32.xlu0 %v3475, 125
        %v3481 = vpop.permute.xlu0 %3480
        %v3484 = vadd.f32 %v3462, %v3479
        %v3485 = vadd.f32 %v3463, %v3481
        %s3486 = scalar_lea.vmem %s3, 25
        %v3487 = vld [vmem:[%s3486] sm:$0x1]
        %v3489 = vlaneseq
        %v3490 = vshrl.u32 %v3489, 7
        %v3491 = vsub.s32 0, %v3490
        %v3492 = vrot.slane %v3487, %v3491
        %3493 = vrot.lane.b32.xlu0 %v3492, 11
        %v3494 = vpop.permute.xlu0 %3493
        %v3496 = vmul.f32 %v3404, %v3494
        %v3497 = vmul.f32 %v3405, %v3494
        %3500 = vrot.lane.b32.xlu0 %v3496, 124
        %v3501 = vpop.permute.xlu0 %3500
        %3502 = vrot.lane.b32.xlu0 %v3497, 124
        %v3503 = vpop.permute.xlu0 %3502
        %v3506 = vadd.f32 %v3484, %v3501
        %v3507 = vadd.f32 %v3485, %v3503
        %s3508 = scalar_lea.vmem %s3, 26
        %v3509 = vld [vmem:[%s3508] sm:$0x1]
        %v3511 = vlaneseq
        %v3512 = vshrl.u32 %v3511, 7
        %v3513 = vsub.s32 0, %v3512
        %v3514 = vrot.slane %v3509, %v3513
        %3515 = vrot.lane.b32.xlu0 %v3514, 12
        %v3516 = vpop.permute.xlu0 %3515
        %v3518 = vmul.f32 %v3404, %v3516
        %v3519 = vmul.f32 %v3405, %v3516
        %3522 = vrot.lane.b32.xlu0 %v3518, 123
        %v3523 = vpop.permute.xlu0 %3522
        %3524 = vrot.lane.b32.xlu0 %v3519, 123
        %v3525 = vpop.permute.xlu0 %3524
        %v3528 = vadd.f32 %v3506, %v3523
        %v3529 = vadd.f32 %v3507, %v3525
        %s3530 = scalar_lea.vmem %s3, 27
        %v3531 = vld [vmem:[%s3530] sm:$0x1]
        %v3533 = vlaneseq
        %v3534 = vshrl.u32 %v3533, 7
        %v3535 = vsub.s32 0, %v3534
        %v3536 = vrot.slane %v3531, %v3535
        %3537 = vrot.lane.b32.xlu0 %v3536, 13
        %v3538 = vpop.permute.xlu0 %3537
        %v3540 = vmul.f32 %v3404, %v3538
        %v3541 = vmul.f32 %v3405, %v3538
        %3544 = vrot.lane.b32.xlu0 %v3540, 122
        %v3545 = vpop.permute.xlu0 %3544
        %3546 = vrot.lane.b32.xlu0 %v3541, 122
        %v3547 = vpop.permute.xlu0 %3546
        %v3550 = vadd.f32 %v3528, %v3545
        %v3551 = vadd.f32 %v3529, %v3547
        %v3552 = vld [vmem:[%s980 + $0xb] sm:$0xff]
        %v3553 = vld [vmem:[%s980 + $0x13] sm:$0xff]
        %s3554 = scalar_lea.vmem %s3, 28
        %v3555 = vld [vmem:[%s3554] sm:$0x1]
        %v3557 = vlaneseq
        %v3558 = vshrl.u32 %v3557, 7
        %v3559 = vsub.s32 0, %v3558
        %v3560 = vrot.slane %v3555, %v3559
        %3561 = vrot.lane.b32.xlu0 %v3560, 7
        %v3562 = vpop.permute.xlu0 %3561
        %v3564 = vmul.f32 %v3552, %v3562
        %v3565 = vmul.f32 %v3553, %v3562
        %v3566 = vadd.f32 %v3550, %v3564
        %v3567 = vadd.f32 %v3551, %v3565
        %s3568 = scalar_lea.vmem %s3, 29
        %v3569 = vld [vmem:[%s3568] sm:$0x1]
        %v3571 = vlaneseq
        %v3572 = vshrl.u32 %v3571, 7
        %v3573 = vsub.s32 0, %v3572
        %v3574 = vrot.slane %v3569, %v3573
        %3575 = vrot.lane.b32.xlu0 %v3574, 8
        %v3576 = vpop.permute.xlu0 %3575
        %v3578 = vmul.f32 %v3552, %v3576
        %v3579 = vmul.f32 %v3553, %v3576
        %3582 = vrot.lane.b32.xlu0 %v3578, 127
        %v3583 = vpop.permute.xlu0 %3582
        %3584 = vrot.lane.b32.xlu0 %v3579, 127
        %v3585 = vpop.permute.xlu0 %3584
        %v3588 = vadd.f32 %v3566, %v3583
        %v3589 = vadd.f32 %v3567, %v3585
        %s3590 = scalar_lea.vmem %s3, 30
        %v3591 = vld [vmem:[%s3590] sm:$0x1]
        %v3593 = vlaneseq
        %v3594 = vshrl.u32 %v3593, 7
        %v3595 = vsub.s32 0, %v3594
        %v3596 = vrot.slane %v3591, %v3595
        %3597 = vrot.lane.b32.xlu0 %v3596, 9
        %v3598 = vpop.permute.xlu0 %3597
        %v3600 = vmul.f32 %v3552, %v3598
        %v3601 = vmul.f32 %v3553, %v3598
        %3604 = vrot.lane.b32.xlu0 %v3600, 126
        %v3605 = vpop.permute.xlu0 %3604
        %3606 = vrot.lane.b32.xlu0 %v3601, 126
        %v3607 = vpop.permute.xlu0 %3606
        %v3610 = vadd.f32 %v3588, %v3605
        %v3611 = vadd.f32 %v3589, %v3607
        %s3612 = scalar_lea.vmem %s3, 31
        %v3613 = vld [vmem:[%s3612] sm:$0x1]
        %v3615 = vlaneseq
        %v3616 = vshrl.u32 %v3615, 7
        %v3617 = vsub.s32 0, %v3616
        %v3618 = vrot.slane %v3613, %v3617
        %3619 = vrot.lane.b32.xlu0 %v3618, 10
        %v3620 = vpop.permute.xlu0 %3619
        %v3622 = vmul.f32 %v3552, %v3620
        %v3623 = vmul.f32 %v3553, %v3620
        %3626 = vrot.lane.b32.xlu0 %v3622, 125
        %v3627 = vpop.permute.xlu0 %3626
        %3628 = vrot.lane.b32.xlu0 %v3623, 125
        %v3629 = vpop.permute.xlu0 %3628
        %v3632 = vadd.f32 %v3610, %v3627
        %v3633 = vadd.f32 %v3611, %v3629
        %s3634 = scalar_lea.vmem %s3, 32
        %v3635 = vld [vmem:[%s3634] sm:$0x1]
        %v3637 = vlaneseq
        %v3638 = vshrl.u32 %v3637, 7
        %v3639 = vsub.s32 0, %v3638
        %v3640 = vrot.slane %v3635, %v3639
        %3641 = vrot.lane.b32.xlu0 %v3640, 11
        %v3642 = vpop.permute.xlu0 %3641
        %v3644 = vmul.f32 %v3552, %v3642
        %v3645 = vmul.f32 %v3553, %v3642
        %3648 = vrot.lane.b32.xlu0 %v3644, 124
        %v3649 = vpop.permute.xlu0 %3648
        %3650 = vrot.lane.b32.xlu0 %v3645, 124
        %v3651 = vpop.permute.xlu0 %3650
        %v3654 = vadd.f32 %v3632, %v3649
        %v3655 = vadd.f32 %v3633, %v3651
        %s3656 = scalar_lea.vmem %s3, 33
        %v3657 = vld [vmem:[%s3656] sm:$0x1]
        %v3659 = vlaneseq
        %v3660 = vshrl.u32 %v3659, 7
        %v3661 = vsub.s32 0, %v3660
        %v3662 = vrot.slane %v3657, %v3661
        %3663 = vrot.lane.b32.xlu0 %v3662, 12
        %v3664 = vpop.permute.xlu0 %3663
        %v3666 = vmul.f32 %v3552, %v3664
        %v3667 = vmul.f32 %v3553, %v3664
        %3670 = vrot.lane.b32.xlu0 %v3666, 123
        %v3671 = vpop.permute.xlu0 %3670
        %3672 = vrot.lane.b32.xlu0 %v3667, 123
        %v3673 = vpop.permute.xlu0 %3672
        %v3676 = vadd.f32 %v3654, %v3671
        %v3677 = vadd.f32 %v3655, %v3673
        %s3678 = scalar_lea.vmem %s3, 34
        %v3679 = vld [vmem:[%s3678] sm:$0x1]
        %v3681 = vlaneseq
        %v3682 = vshrl.u32 %v3681, 7
        %v3683 = vsub.s32 0, %v3682
        %v3684 = vrot.slane %v3679, %v3683
        %3685 = vrot.lane.b32.xlu0 %v3684, 13
        %v3686 = vpop.permute.xlu0 %3685
        %v3688 = vmul.f32 %v3552, %v3686
        %v3689 = vmul.f32 %v3553, %v3686
        %3692 = vrot.lane.b32.xlu0 %v3688, 122
        %v3693 = vpop.permute.xlu0 %3692
        %3694 = vrot.lane.b32.xlu0 %v3689, 122
        %v3695 = vpop.permute.xlu0 %3694
        %v3698 = vadd.f32 %v3676, %v3693
        %v3699 = vadd.f32 %v3677, %v3695
        %v3700 = vld [vmem:[%s980 + $0xc] sm:$0xff]
        %v3701 = vld [vmem:[%s980 + $0x14] sm:$0xff]
        %s3702 = scalar_lea.vmem %s3, 35
        %v3703 = vld [vmem:[%s3702] sm:$0x1]
        %v3705 = vlaneseq
        %v3706 = vshrl.u32 %v3705, 7
        %v3707 = vsub.s32 0, %v3706
        %v3708 = vrot.slane %v3703, %v3707
        %3709 = vrot.lane.b32.xlu0 %v3708, 7
        %v3710 = vpop.permute.xlu0 %3709
        %v3712 = vmul.f32 %v3700, %v3710
        %v3713 = vmul.f32 %v3701, %v3710
        %v3714 = vadd.f32 %v3698, %v3712
        %v3715 = vadd.f32 %v3699, %v3713
        %s3716 = scalar_lea.vmem %s3, 36
        %v3717 = vld [vmem:[%s3716] sm:$0x1]
        %v3719 = vlaneseq
        %v3720 = vshrl.u32 %v3719, 7
        %v3721 = vsub.s32 0, %v3720
        %v3722 = vrot.slane %v3717, %v3721
        %3723 = vrot.lane.b32.xlu0 %v3722, 8
        %v3724 = vpop.permute.xlu0 %3723
        %v3726 = vmul.f32 %v3700, %v3724
        %v3727 = vmul.f32 %v3701, %v3724
        %3730 = vrot.lane.b32.xlu0 %v3726, 127
        %v3731 = vpop.permute.xlu0 %3730
        %3732 = vrot.lane.b32.xlu0 %v3727, 127
        %v3733 = vpop.permute.xlu0 %3732
        %v3736 = vadd.f32 %v3714, %v3731
        %v3737 = vadd.f32 %v3715, %v3733
        %s3738 = scalar_lea.vmem %s3, 37
        %v3739 = vld [vmem:[%s3738] sm:$0x1]
        %v3741 = vlaneseq
        %v3742 = vshrl.u32 %v3741, 7
        %v3743 = vsub.s32 0, %v3742
        %v3744 = vrot.slane %v3739, %v3743
        %3745 = vrot.lane.b32.xlu0 %v3744, 9
        %v3746 = vpop.permute.xlu0 %3745
        %v3748 = vmul.f32 %v3700, %v3746
        %v3749 = vmul.f32 %v3701, %v3746
        %3752 = vrot.lane.b32.xlu0 %v3748, 126
        %v3753 = vpop.permute.xlu0 %3752
        %3754 = vrot.lane.b32.xlu0 %v3749, 126
        %v3755 = vpop.permute.xlu0 %3754
        %v3758 = vadd.f32 %v3736, %v3753
        %v3759 = vadd.f32 %v3737, %v3755
        %s3760 = scalar_lea.vmem %s3, 38
        %v3761 = vld [vmem:[%s3760] sm:$0x1]
        %v3763 = vlaneseq
        %v3764 = vshrl.u32 %v3763, 7
        %v3765 = vsub.s32 0, %v3764
        %v3766 = vrot.slane %v3761, %v3765
        %3767 = vrot.lane.b32.xlu0 %v3766, 10
        %v3768 = vpop.permute.xlu0 %3767
        %v3770 = vmul.f32 %v3700, %v3768
        %v3771 = vmul.f32 %v3701, %v3768
        %3774 = vrot.lane.b32.xlu0 %v3770, 125
        %v3775 = vpop.permute.xlu0 %3774
        %3776 = vrot.lane.b32.xlu0 %v3771, 125
        %v3777 = vpop.permute.xlu0 %3776
        %v3780 = vadd.f32 %v3758, %v3775
        %v3781 = vadd.f32 %v3759, %v3777
        %s3782 = scalar_lea.vmem %s3, 39
        %v3783 = vld [vmem:[%s3782] sm:$0x1]
        %v3785 = vlaneseq
        %v3786 = vshrl.u32 %v3785, 7
        %v3787 = vsub.s32 0, %v3786
        %v3788 = vrot.slane %v3783, %v3787
        %3789 = vrot.lane.b32.xlu0 %v3788, 11
        %v3790 = vpop.permute.xlu0 %3789
        %v3792 = vmul.f32 %v3700, %v3790
        %v3793 = vmul.f32 %v3701, %v3790
        %3796 = vrot.lane.b32.xlu0 %v3792, 124
        %v3797 = vpop.permute.xlu0 %3796
        %3798 = vrot.lane.b32.xlu0 %v3793, 124
        %v3799 = vpop.permute.xlu0 %3798
        %v3802 = vadd.f32 %v3780, %v3797
        %v3803 = vadd.f32 %v3781, %v3799
        %s3804 = scalar_lea.vmem %s3, 40
        %v3805 = vld [vmem:[%s3804] sm:$0x1]
        %v3807 = vlaneseq
        %v3808 = vshrl.u32 %v3807, 7
        %v3809 = vsub.s32 0, %v3808
        %v3810 = vrot.slane %v3805, %v3809
        %3811 = vrot.lane.b32.xlu0 %v3810, 12
        %v3812 = vpop.permute.xlu0 %3811
        %v3814 = vmul.f32 %v3700, %v3812
        %v3815 = vmul.f32 %v3701, %v3812
        %3818 = vrot.lane.b32.xlu0 %v3814, 123
        %v3819 = vpop.permute.xlu0 %3818
        %3820 = vrot.lane.b32.xlu0 %v3815, 123
        %v3821 = vpop.permute.xlu0 %3820
        %v3824 = vadd.f32 %v3802, %v3819
        %v3825 = vadd.f32 %v3803, %v3821
        %s3826 = scalar_lea.vmem %s3, 41
        %v3827 = vld [vmem:[%s3826] sm:$0x1]
        %v3829 = vlaneseq
        %v3830 = vshrl.u32 %v3829, 7
        %v3831 = vsub.s32 0, %v3830
        %v3832 = vrot.slane %v3827, %v3831
        %3833 = vrot.lane.b32.xlu0 %v3832, 13
        %v3834 = vpop.permute.xlu0 %3833
        %v3836 = vmul.f32 %v3700, %v3834
        %v3837 = vmul.f32 %v3701, %v3834
        %3840 = vrot.lane.b32.xlu0 %v3836, 122
        %v3841 = vpop.permute.xlu0 %3840
        %3842 = vrot.lane.b32.xlu0 %v3837, 122
        %v3843 = vpop.permute.xlu0 %3842
        %v3846 = vadd.f32 %v3824, %v3841
        %v3847 = vadd.f32 %v3825, %v3843
        %v3848 = vld [vmem:[%s980 + $0xd] sm:$0xff]
        %v3849 = vld [vmem:[%s980 + $0x15] sm:$0xff]
        %s3850 = scalar_lea.vmem %s3, 42
        %v3851 = vld [vmem:[%s3850] sm:$0x1]
        %v3853 = vlaneseq
        %v3854 = vshrl.u32 %v3853, 7
        %v3855 = vsub.s32 0, %v3854
        %v3856 = vrot.slane %v3851, %v3855
        %3857 = vrot.lane.b32.xlu0 %v3856, 7
        %v3858 = vpop.permute.xlu0 %3857
        %v3860 = vmul.f32 %v3848, %v3858
        %v3861 = vmul.f32 %v3849, %v3858
        %v3862 = vadd.f32 %v3846, %v3860
        %v3863 = vadd.f32 %v3847, %v3861
        %s3864 = scalar_lea.vmem %s3, 43
        %v3865 = vld [vmem:[%s3864] sm:$0x1]
        %v3867 = vlaneseq
        %v3868 = vshrl.u32 %v3867, 7
        %v3869 = vsub.s32 0, %v3868
        %v3870 = vrot.slane %v3865, %v3869
        %3871 = vrot.lane.b32.xlu0 %v3870, 8
        %v3872 = vpop.permute.xlu0 %3871
        %v3874 = vmul.f32 %v3848, %v3872
        %v3875 = vmul.f32 %v3849, %v3872
        %3878 = vrot.lane.b32.xlu0 %v3874, 127
        %v3879 = vpop.permute.xlu0 %3878
        %3880 = vrot.lane.b32.xlu0 %v3875, 127
        %v3881 = vpop.permute.xlu0 %3880
        %v3884 = vadd.f32 %v3862, %v3879
        %v3885 = vadd.f32 %v3863, %v3881
        %s3886 = scalar_lea.vmem %s3, 44
        %v3887 = vld [vmem:[%s3886] sm:$0x1]
        %v3889 = vlaneseq
        %v3890 = vshrl.u32 %v3889, 7
        %v3891 = vsub.s32 0, %v3890
        %v3892 = vrot.slane %v3887, %v3891
        %3893 = vrot.lane.b32.xlu0 %v3892, 9
        %v3894 = vpop.permute.xlu0 %3893
        %v3896 = vmul.f32 %v3848, %v3894
        %v3897 = vmul.f32 %v3849, %v3894
        %3900 = vrot.lane.b32.xlu0 %v3896, 126
        %v3901 = vpop.permute.xlu0 %3900
        %3902 = vrot.lane.b32.xlu0 %v3897, 126
        %v3903 = vpop.permute.xlu0 %3902
        %v3906 = vadd.f32 %v3884, %v3901
        %v3907 = vadd.f32 %v3885, %v3903
        %s3908 = scalar_lea.vmem %s3, 45
        %v3909 = vld [vmem:[%s3908] sm:$0x1]
        %v3911 = vlaneseq
        %v3912 = vshrl.u32 %v3911, 7
        %v3913 = vsub.s32 0, %v3912
        %v3914 = vrot.slane %v3909, %v3913
        %3915 = vrot.lane.b32.xlu0 %v3914, 10
        %v3916 = vpop.permute.xlu0 %3915
        %v3918 = vmul.f32 %v3848, %v3916
        %v3919 = vmul.f32 %v3849, %v3916
        %3922 = vrot.lane.b32.xlu0 %v3918, 125
        %v3923 = vpop.permute.xlu0 %3922
        %3924 = vrot.lane.b32.xlu0 %v3919, 125
        %v3925 = vpop.permute.xlu0 %3924
        %v3928 = vadd.f32 %v3906, %v3923
        %v3929 = vadd.f32 %v3907, %v3925
        %s3930 = scalar_lea.vmem %s3, 46
        %v3931 = vld [vmem:[%s3930] sm:$0x1]
        %v3933 = vlaneseq
        %v3934 = vshrl.u32 %v3933, 7
        %v3935 = vsub.s32 0, %v3934
        %v3936 = vrot.slane %v3931, %v3935
        %3937 = vrot.lane.b32.xlu0 %v3936, 11
        %v3938 = vpop.permute.xlu0 %3937
        %v3940 = vmul.f32 %v3848, %v3938
        %v3941 = vmul.f32 %v3849, %v3938
        %3944 = vrot.lane.b32.xlu0 %v3940, 124
        %v3945 = vpop.permute.xlu0 %3944
        %3946 = vrot.lane.b32.xlu0 %v3941, 124
        %v3947 = vpop.permute.xlu0 %3946
        %v3950 = vadd.f32 %v3928, %v3945
        %v3951 = vadd.f32 %v3929, %v3947
        %s3952 = scalar_lea.vmem %s3, 47
        %v3953 = vld [vmem:[%s3952] sm:$0x1]
        %v3955 = vlaneseq
        %v3956 = vshrl.u32 %v3955, 7
        %v3957 = vsub.s32 0, %v3956
        %v3958 = vrot.slane %v3953, %v3957
        %3959 = vrot.lane.b32.xlu0 %v3958, 12
        %v3960 = vpop.permute.xlu0 %3959
        %v3962 = vmul.f32 %v3848, %v3960
        %v3963 = vmul.f32 %v3849, %v3960
        %3966 = vrot.lane.b32.xlu0 %v3962, 123
        %v3967 = vpop.permute.xlu0 %3966
        %3968 = vrot.lane.b32.xlu0 %v3963, 123
        %v3969 = vpop.permute.xlu0 %3968
        %v3972 = vadd.f32 %v3950, %v3967
        %v3973 = vadd.f32 %v3951, %v3969
        %s3974 = scalar_lea.vmem %s3, 48
        %v3975 = vld [vmem:[%s3974] sm:$0x1]
        %v3977 = vlaneseq
        %v3978 = vshrl.u32 %v3977, 7
        %v3979 = vsub.s32 0, %v3978
        %v3980 = vrot.slane %v3975, %v3979
        %3981 = vrot.lane.b32.xlu0 %v3980, 13
        %v3982 = vpop.permute.xlu0 %3981
        %v3984 = vmul.f32 %v3848, %v3982
        %v3985 = vmul.f32 %v3849, %v3982
        %3988 = vrot.lane.b32.xlu0 %v3984, 122
        %v3989 = vpop.permute.xlu0 %3988
        %3990 = vrot.lane.b32.xlu0 %v3985, 122
        %v3991 = vpop.permute.xlu0 %3990
        %v3994 = vadd.f32 %v3972, %v3989
        %v3995 = vadd.f32 %v3973, %v3991
        %3998 = vrot.lane.b32.xlu0 %v3994, 102
        %v3999 = vpop.permute.xlu0 %3998
        %4000 = vrot.lane.b32.xlu0 %v3995, 102
        %v4001 = vpop.permute.xlu0 %4000
        %v4004 = vadd.f32 %v3994, %v3999
        %v4005 = vadd.f32 %v3995, %v4001
        %v4006 = vmul.f32 %v4004, 0.5
        %v4007 = vmul.f32 %v4005, 0.5
        %v4008 = vtanh.pop %v4006
        %v4009 = vtanh.pop %v4007
        %v4010 = vadd.f32 %v4008, 1.0
        %v4011 = vadd.f32 %v4009, 1.0
        %v4012 = vmul.f32 %v4010, 0.5
        %v4013 = vmul.f32 %v4011, 0.5
        %v4014 = vld [vmem:[#allocation3] sm:$0xff]
        %v4015 = vld [vmem:[#allocation3 + $0x8] sm:$0xff]
        %4018 = vrot.lane.b32.xlu0 %v4012, 121
        %v4019 = vpop.permute.xlu0 %4018
        %4020 = vrot.lane.b32.xlu0 %v4013, 121
        %v4021 = vpop.permute.xlu0 %4020
        %v4024 = vmul.f32 %v4014, %v4019
        %v4025 = vmul.f32 %v4015, %v4021
        %4026 = vst.msk [vmem:[%s231] sm:$0xff] %vm2705, %v4024
        %4027 = vst.msk [vmem:[%s231 + $0x8] sm:$0xff] %vm2705, %v4025
        %v4028 = vld [vmem:[%s2782] sm:$0xff]
        %v4029 = vld [vmem:[%s2782 + $0x8] sm:$0xff]
        %v4030 = vmul.f32 %v4028, %v4019
        %v4031 = vmul.f32 %v4029, %v4021
        %s4032 = scalar_lea.vmem %s231, 16 [#allocation7]
        %4033 = vst.msk [vmem:[%s4032] sm:$0xff] %vm2705, %v4030
        %4034 = vst.msk [vmem:[%s4032 + $0x8] sm:$0xff] %vm2705, %v4031
        %v4035 = vld [vmem:[%s2861] sm:$0xff]
        %v4036 = vld [vmem:[%s2861 + $0x8] sm:$0xff]
        %v4037 = vmul.f32 %v4035, %v4019
        %v4038 = vmul.f32 %v4036, %v4021
        %s4039 = scalar_lea.vmem %s231, 32 [#allocation7]
        %4040 = vst.msk [vmem:[%s4039] sm:$0xff] %vm2705, %v4037
        %4041 = vst.msk [vmem:[%s4039 + $0x8] sm:$0xff] %vm2705, %v4038
        %v4042 = vld [vmem:[%s2940] sm:$0xff]
        %v4043 = vld [vmem:[%s2940 + $0x8] sm:$0xff]
        %v4044 = vmul.f32 %v4042, %v4019
        %v4045 = vmul.f32 %v4043, %v4021
        %s4046 = scalar_lea.vmem %s231, 48 [#allocation7]
        %4047 = vst.msk [vmem:[%s4046] sm:$0xff] %vm2705, %v4044
        %4048 = vst.msk [vmem:[%s4046 + $0x8] sm:$0xff] %vm2705, %v4045
        %s4049 = sand.u32 %s138, 1
        %s4050 = scalar_lea.sflag [#allocation5], %s4049
        %s4051 = sand.u32 %s138, 1
        %s4052 = smul.addr %s4051, 64
        %s4053 = scalar_lea.vmem [#allocation7], %s4052
        // Predicated region
        $region45: #{tpu_custom_call.1} parent=39 // pred_check
          %p4054 = pneg %p148
        $region46: #{tpu_custom_call.1} parent=39 // pred_check_branch
          %4056 = sbr.rel (%p4054) target = $region48
        $region47: #{tpu_custom_call.1} parent=39 // pred_region
          %s4058 = ssub.s32 1024, 1024
          %4059 = vsyncadd %s4050, %s4058
          %s4060 = smul.addr %s20, 8
          %s4061 = smul.addr %s4060, 128
          %s4062 = scalar_lea.hbm %s5, %s4061
          %s4063 = sshll.u32 %s4053, 4
          %s4064 = int_to_ptr.vmem [resolvable:$true] %s4063
          %4069 = dma.vmem_to_hbm [thread:$0]  %s4064, 1024, %s4062, %s4050, 128, 128, 8
        $region48: #{tpu_custom_call.1} parent=39 // pred_fallthru
          _
      $region40: #{tpu_custom_call.1} parent=5 // pred_fallthru
        _
      %p4070 = scmp.le.s32.totalorder 2, %s15
      // Predicated region
      $region49: #{tpu_custom_call.1} parent=5 // pred_check
        %p4071 = pneg %p4070
      $region50: #{tpu_custom_call.1} parent=5 // pred_check_branch
        %4073 = sbr.rel (%p4071) target = $region52
      $region51: #{tpu_custom_call.1} parent=5 // pred_region
        %s4074 = ssub.s32 %s15, 2
        // Predicated region
        $region53: #{tpu_custom_call.1} parent=51 // pred_check
          %p4075 = pneg %p154
        $region54: #{tpu_custom_call.1} parent=51 // pred_check_branch
          %4077 = sbr.rel (%p4075) target = $region56
        $region55: #{tpu_custom_call.1} parent=51 // pred_region
          %s4078 = sand.u32 %s139, 1
          %s4079 = scalar_lea.sflag [#allocation5], %s4078
          %s4080 = sand.u32 %s139, 1
          %s4081 = smul.addr %s4080, 64
          %s4082 = scalar_lea.vmem [#allocation7], %s4081
          %4083 = dma.done %s4079, 1024
        $region56: #{tpu_custom_call.1} parent=51 // pred_fallthru
          _
      $region52: #{tpu_custom_call.1} parent=5 // pred_fallthru
        _
    $region6: #{tpu_custom_call.1} parent=1 // loop_footer
      %s19 = sadd.s32 1, %s15
    $region7: #{tpu_custom_call.1} parent=1 // loop_footer_branch
      %14 = sbr.rel target = $region3
    $region8: #{tpu_custom_call.1} parent=1 // loop_exit
      _
    %4084 = vsyncpa [#allocation5], 1
    %s4085 = scalar_lea.sflag [#allocation5], 1
    %4086 = vsyncpa %s4085, 1
    %4087 = vsyncpa [#allocation6], 1
    %s4088 = scalar_lea.sflag [#allocation6], 1
    %4089 = vsyncpa %s4088, 1

</llo_original>
